<compile_context>
chip_gen: v7x
topology: tpu7x:2x2x1
jax: 0.10.0
libtpu: 0.0.40
codegen_flags: <defaults>
</compile_context>

<pallas_src>
import math
import functools

import jax
import jax.numpy as jnp
from jax import lax
from jax.experimental import pallas as pl
from jax.experimental.pallas import tpu as pltpu


# --------------------------------------------------------------------------
# helpers
# --------------------------------------------------------------------------

def _vmem_limit_bytes():
    """Generation-aware scoped-VMEM cap (~50% of physical)."""
    try:
        cap = int(pltpu.get_tpu_info().vmem_capacity_bytes)
        return max(16 << 20, min(cap // 2, 64 << 20))
    except Exception:
        return 32 << 20  # conservative; fine on v5e/v6e/v7x


_VMEM_LIMIT = _vmem_limit_bytes()


def _pick_tm(m, cap=256):
    """Largest multiple of 8 that divides m, capped at `cap` (m must be %8==0)."""
    assert m % 8 == 0, m
    t = min(cap, m)
    t -= t % 8
    while m % t:
        t -= 8
    return t


# --------------------------------------------------------------------------
# Kernel 1: tiled matmul + fused bias + per-256-column-group L2Norm epilogue.
# Serves all three transposed convolutions (p3 polyphase taps, p4, p5).
# --------------------------------------------------------------------------

def _mm_bias_l2_kernel(x_ref, w_ref, b_ref, g_ref, o_ref, acc_ref):
    k = pl.program_id(2)

    @pl.when(k == 0)
    def _():
        acc_ref[...] = jnp.zeros_like(acc_ref)

    acc_ref[...] += jnp.dot(x_ref[...], w_ref[...],
                            preferred_element_type=jnp.float32)

    @pl.when(k == pl.num_programs(2) - 1)
    def _():
        y = acc_ref[...] + b_ref[...]                        # (tm, 256) f32
        # L2Norm over the 256 channels of this output pixel (one group / tile),
        # matching the PyTorch module: x / (sqrt(sum x^2) + 1e-8) * weight[c].
        norm = jnp.sqrt(jnp.sum(y * y, axis=-1, keepdims=True)) + 1e-8
        o_ref[...] = ((y / norm) * g_ref[...]).astype(o_ref.dtype)


def matmul_bias_l2(x, w, bias, gamma, *, tm_cap=256, tk_pref=512):
    """(M,K)@(K,Ncols) + bias[col]; each 256-column group of a row is then
    L2-normalized and scaled by gamma[col].  x/w are bf16; returns bf16."""
    M, K = x.shape
    K2, Ncols = w.shape
    assert K == K2 and Ncols % 256 == 0
    tn = 256                                   # one L2Norm group per column tile
    tk = tk_pref if K % tk_pref == 0 else K
    tm = _pick_tm(M, tm_cap)
    grid = (M // tm, Ncols // tn, K // tk)
    return pl.pallas_call(
        _mm_bias_l2_kernel,
        out_shape=jax.ShapeDtypeStruct((M, Ncols), jnp.bfloat16),
        grid=grid,
        in_specs=[pl.BlockSpec((tm, tk), lambda i, j, k: (i, k)),
                  pl.BlockSpec((tk, tn), lambda i, j, k: (k, j)),
                  pl.BlockSpec((1, tn), lambda i, j, k: (0, j)),
                  pl.BlockSpec((1, tn), lambda i, j, k: (0, j))],
        out_specs=pl.BlockSpec((tm, tn), lambda i, j, k: (i, j)),
        scratch_shapes=[pltpu.VMEM((tm, tn), jnp.float32)],
        compiler_params=pltpu.CompilerParams(
            dimension_semantics=("parallel", "parallel", "arbitrary"),
            vmem_limit_bytes=_VMEM_LIMIT),
    )(x, w,
      bias.reshape(1, Ncols).astype(jnp.float32),
      gamma.reshape(1, Ncols).astype(jnp.float32))


# --------------------------------------------------------------------------
# Kernel 2: 3x3 `feat` conv over the three 256-channel branches (no concat).
# Grid: (N, output row, kh).  kh is the (arbitrary, innermost) reduction axis;
# the kw taps are in-kernel sublane shifts of the full-width padded row.
# --------------------------------------------------------------------------

def _feat_conv_kernel(p3_ref, p4_ref, p5_ref, w3_ref, w4_ref, w5_ref,
                      o_ref, acc_ref, *, W):
    kh = pl.program_id(2)

    @pl.when(kh == 0)
    def _():
        acc_ref[...] = jnp.zeros_like(acc_ref)

    for x_ref, w_ref in ((p3_ref, w3_ref), (p4_ref, w4_ref), (p5_ref, w5_ref)):
        for kw in range(3):
            acc_ref[...] += jnp.dot(x_ref[0, 0, kw:kw + W, :], w_ref[0, kw],
                                    preferred_element_type=jnp.float32)

    @pl.when(kh == pl.num_programs(2) - 1)
    def _():
        o_ref[0, 0] = acc_ref[...].astype(o_ref.dtype)


def feat_conv(p3_pad, p4_pad, p5_pad, w3, w4, w5):
    """Conv2d(768->256, k=3, s=1, p=1, bias=False) computed as three Cin=256
    partial matmuls per tap, accumulated in a VMEM scratch."""
    N, Hp, Wp, C = p3_pad.shape
    H, W = Hp - 2, Wp - 2
    Cout = w3.shape[-1]

    def row_spec():
        return pl.BlockSpec((1, 1, Wp, C), lambda n, io, kh: (n, io + kh, 0, 0))

    def wgt_spec():
        # TODO(synk): for large feature maps keep the (3,3,256,256) weights
        # VMEM-resident (constant index map + dynamic kh ref indexing) instead
        # of re-streaming the kh slice every grid step.
        return pl.BlockSpec((1, 3, C, Cout), lambda n, io, kh: (kh, 0, 0, 0))

    return pl.pallas_call(
        functools.partial(_feat_conv_kernel, W=W),
        out_shape=jax.ShapeDtypeStruct((N, H, W, Cout), jnp.bfloat16),
        grid=(N, H, 3),
        in_specs=[row_spec(), row_spec(), row_spec(),
                  wgt_spec(), wgt_spec(), wgt_spec()],
        out_specs=pl.BlockSpec((1, 1, W, Cout), lambda n, io, kh: (n, io, 0, 0)),
        scratch_shapes=[pltpu.VMEM((W, Cout), jnp.float32)],
        compiler_params=pltpu.CompilerParams(
            dimension_semantics=("parallel", "parallel", "arbitrary"),
            vmem_limit_bytes=_VMEM_LIMIT),
    )(p3_pad, p4_pad, p5_pad, w3, w4, w5)


# --------------------------------------------------------------------------
# Kernel 3: BatchNorm batch statistics (pass 1): per-channel sum / sum-of-sq.
# --------------------------------------------------------------------------

def _bn_stats_kernel(f_ref, s_ref):
    @pl.when(pl.program_id(0) == 0)
    def _():
        s_ref[...] = jnp.zeros_like(s_ref)
    x = f_ref[...].astype(jnp.float32)
    s_ref[0:1, :] += jnp.sum(x, axis=0, keepdims=True)
    s_ref[1:2, :] += jnp.sum(x * x, axis=0, keepdims=True)


def bn_batch_stats(feat_flat, *, tm_cap=512):
    M, C = feat_flat.shape
    tm = _pick_tm(M, tm_cap)
    return pl.pallas_call(
        _bn_stats_kernel,
        out_shape=jax.ShapeDtypeStruct((2, C), jnp.float32),
        grid=(M // tm,),
        in_specs=[pl.BlockSpec((tm, C), lambda i: (i, 0))],
        out_specs=pl.BlockSpec((2, C), lambda i: (0, 0)),
        compiler_params=pltpu.CompilerParams(
            dimension_semantics=("arbitrary",),
            vmem_limit_bytes=_VMEM_LIMIT),
    )(feat_flat)


# --------------------------------------------------------------------------
# Kernel 4 (pass 2): BatchNorm (batch stats, eps=1e-5) + ReLU + the four 1x1
# heads fused as a single (256, 8) matmul with one (M, 8) output.
# --------------------------------------------------------------------------

def _bn_heads_kernel(f_ref, s_ref, g_ref, b_ref, w_ref, hb_ref, o_ref, *, m_total):
    x = f_ref[...].astype(jnp.float32)                       # (tm, 256)
    inv_m = 1.0 / m_total
    mean = s_ref[0:1, :] * inv_m                             # (1, 256)
    var = jnp.maximum(s_ref[1:2, :] * inv_m - mean * mean, 0.0)   # biased var
    xn = (x - mean) * lax.rsqrt(var + 1e-5) * g_ref[...] + b_ref[...]
    act = jnp.maximum(xn, 0.0).astype(jnp.bfloat16)          # ReLU
    o_ref[...] = (jnp.dot(act, w_ref[...], preferred_element_type=jnp.float32)
                  + hb_ref[...])


def bn_relu_heads(feat_flat, stats, bn_g, bn_b, w_heads8, b_heads8, *, tm_cap=512):
    M, C = feat_flat.shape
    tm = _pick_tm(M, tm_cap)
    return pl.pallas_call(
        functools.partial(_bn_heads_kernel, m_total=float(M)),
        out_shape=jax.ShapeDtypeStruct((M, 8), jnp.float32),
        grid=(M // tm,),
        in_specs=[pl.BlockSpec((tm, C), lambda i: (i, 0)),
                  pl.BlockSpec((2, C), lambda i: (0, 0)),
                  pl.BlockSpec((1, C), lambda i: (0, 0)),
                  pl.BlockSpec((1, C), lambda i: (0, 0)),
                  pl.BlockSpec((C, 8), lambda i: (0, 0)),
                  pl.BlockSpec((1, 8), lambda i: (0, 0))],
        out_specs=pl.BlockSpec((tm, 8), lambda i: (i, 0)),
        compiler_params=pltpu.CompilerParams(
            dimension_semantics=("parallel",),
            vmem_limit_bytes=_VMEM_LIMIT),
    )(feat_flat, stats,
      bn_g.reshape(1, C).astype(jnp.float32),
      bn_b.reshape(1, C).astype(jnp.float32),
      w_heads8.astype(jnp.bfloat16),
      b_heads8.reshape(1, 8).astype(jnp.float32))


# --------------------------------------------------------------------------
# JAX glue: transposed-conv rewrites (polyphase / depth-to-space), padding.
# --------------------------------------------------------------------------

def conv_transpose_s2_polyphase(x_nhwc, w, bias, gamma):
    """ConvTranspose2d(k=4, s=2, p=1) + bias + L2Norm via 4 polyphase matmuls.
    x: (N,H,W,Cin) bf16; w: (Cin,Cout,4,4) f32.  Returns (N,2H,2W,Cout) bf16."""
    N, H, W, Cin = x_nhwc.shape
    Cout = w.shape[1]
    xp = jnp.pad(x_nhwc, ((0, 0), (1, 1), (1, 1), (0, 0)))
    w = w.astype(jnp.bfloat16)
    rows = []
    for r in range(2):
        cols = []
        for s in range(2):
            taps_x, taps_w = [], []
            for t in range(2):
                for u in range(2):
                    taps_x.append(xp[:, r + t:r + t + H, s + u:s + u + W, :])
                    taps_w.append(w[:, :, 3 - r - 2 * t, 3 - s - 2 * u])
            xs = jnp.concatenate(taps_x, axis=-1).reshape(N * H * W, 4 * Cin)
            ws = jnp.concatenate(taps_w, axis=0)             # (4*Cin, Cout)
            ph = matmul_bias_l2(xs, ws, bias, gamma)         # (N*H*W, Cout)
            cols.append(ph.reshape(N, H, W, Cout))
        rows.append(jnp.stack(cols, axis=3))                 # (N,H,W,2,Cout)
    y = jnp.stack(rows, axis=2)                              # (N,H,2,W,2,Cout)
    return y.reshape(N, 2 * H, 2 * W, Cout)


def conv_transpose_stride_eq(x_nhwc, w, bias, gamma):
    """ConvTranspose2d(k=4, s=4, p=0) + bias + L2Norm as a per-pixel matmul
    (columns ordered (kh, kw, cout)) + wrapper-side depth-to-space."""
    N, H, W, Cin = x_nhwc.shape
    _, Cout, k, _ = w.shape
    w_mat = jnp.transpose(w, (0, 2, 3, 1)).reshape(Cin, k * k * Cout)
    w_mat = w_mat.astype(jnp.bfloat16)
    b_cols = jnp.tile(bias, k * k)
    g_cols = jnp.tile(gamma, k * k)
    y = matmul_bias_l2(x_nhwc.reshape(N * H * W, Cin), w_mat, b_cols, g_cols)
    y = y.reshape(N, H, W, k, k, Cout)
    y = jnp.transpose(y, (0, 1, 3, 2, 4, 5)).reshape(N, H * k, W * k, Cout)
    return y


def dncnet_forward(params, c3, c4, c5):
    """c3/c4/c5: NCHW backbone features (B,512,H/8,W/8), (B,1024,H/16,W/16),
    (B,2048,H/16,W/16).  Returns (cls, reg, off, den) in NCHW."""
    x3 = jnp.transpose(c3, (0, 2, 3, 1)).astype(jnp.bfloat16)
    x4 = jnp.transpose(c4, (0, 2, 3, 1)).astype(jnp.bfloat16)
    x5 = jnp.transpose(c5, (0, 2, 3, 1)).astype(jnp.bfloat16)

    # Deconv branches with fused bias + L2Norm epilogues.
    p3 = conv_transpose_s2_polyphase(x3, params['p3_w'], params['p3_b'],
                                     params['p3_l2'])
    p4 = conv_transpose_stride_eq(x4, params['p4_w'], params['p4_b'],
                                  params['p4_l2'])
    p5 = conv_transpose_stride_eq(x5, params['p5_w'], params['p5_b'],
                                  params['p5_l2'])

    N, H, W, _ = p3.shape
    assert p4.shape == p3.shape and p5.shape == p3.shape

    # 3x3 feat conv consumes the three 256-channel branches directly (the
    # 768-channel concat is never materialized); the 1-pixel spatial pad fuses
    # into the wrapper-side depth-to-space copies.
    pad1 = lambda t: jnp.pad(t, ((0, 0), (1, 1), (1, 1), (0, 0)))
    wf = params['feat_w'].astype(jnp.bfloat16)               # (256, 768, 3, 3)
    wb = [jnp.transpose(wf[:, b * 256:(b + 1) * 256], (2, 3, 1, 0))
          for b in range(3)]                                 # (3,3,256,256)
    feat = feat_conv(pad1(p3), pad1(p4), pad1(p5), wb[0], wb[1], wb[2])

    feat_flat = feat.reshape(N * H * W, 256)
    stats = bn_batch_stats(feat_flat)

    # 1x1 heads fused into one (256, 8) matmul: [pos | reg(2) | off(2) | den | pad2].
    w8 = jnp.pad(params['heads_w'], ((0, 0), (0, 2)))
    b8 = jnp.pad(params['heads_b'], (0, 2))
    y = bn_relu_heads(feat_flat, stats, params['bn_g'], params['bn_b'], w8, b8)
    y = y.reshape(N, H, W, 8)

    cls = jax.nn.sigmoid(y[..., 0:1])
    reg = y[..., 1:3]
    off = y[..., 3:5]
    den = jnp.abs(y[..., 5:6])

    to_nchw = lambda t: jnp.transpose(t, (0, 3, 1, 2))
    return to_nchw(cls), to_nchw(reg), to_nchw(off), to_nchw(den)


# --------------------------------------------------------------------------
# Deterministic parameter init (matches the module's shapes / init scheme).
# --------------------------------------------------------------------------

def init_params(key):
    ks = jax.random.split(key, 8)

    def xavier(k, shape, fan_in, fan_out):
        std = math.sqrt(2.0 / (fan_in + fan_out))
        return std * jax.random.normal(k, shape, jnp.float32)

    p = {}
    # ConvTranspose2d weights: (Cin, Cout, KH, KW); biases init to 0
    p['p3_w'] = xavier(ks[0], (512, 256, 4, 4), 256 * 16, 512 * 16)
    p['p3_b'] = jnp.zeros((256,), jnp.float32)
    p['p4_w'] = xavier(ks[1], (1024, 256, 4, 4), 256 * 16, 1024 * 16)
    p['p4_b'] = jnp.zeros((256,), jnp.float32)
    p['p5_w'] = xavier(ks[2], (2048, 256, 4, 4), 256 * 16, 2048 * 16)
    p['p5_b'] = jnp.zeros((256,), jnp.float32)
    # L2Norm scales (gamma = 10)
    p['p3_l2'] = jnp.full((256,), 10.0, jnp.float32)
    p['p4_l2'] = jnp.full((256,), 10.0, jnp.float32)
    p['p5_l2'] = jnp.full((256,), 10.0, jnp.float32)
    # feat conv: Conv2d(768, 256, 3, bias=False), PyTorch layout (Cout, Cin, 3, 3)
    p['feat_w'] = xavier(ks[3], (256, 768, 3, 3), 768 * 9, 256 * 9)
    # BatchNorm2d(256) at init: weight=1, bias=0 (training-mode batch stats)
    p['bn_g'] = jnp.ones((256,), jnp.float32)
    p['bn_b'] = jnp.zeros((256,), jnp.float32)
    # 1x1 heads fused into one (256, 6) matrix: [pos(1) | reg(2) | off(2) | den(1)]
    wpos = xavier(ks[4], (256, 1), 256, 1)
    wreg = xavier(ks[5], (256, 2), 256, 2)
    woff = xavier(ks[6], (256, 2), 256, 2)
    wden = xavier(ks[7], (256, 1), 256, 1)
    p['heads_w'] = jnp.concatenate([wpos, wreg, woff, wden], axis=1)
    p['heads_b'] = jnp.concatenate([
        jnp.full((1,), -math.log(0.99 / 0.01), jnp.float32),  # pos_conv bias
        jnp.zeros((2,), jnp.float32),                          # reg_conv bias
        jnp.zeros((2,), jnp.float32),                          # off_conv bias
        jnp.zeros((1,), jnp.float32)], axis=0)                 # den_conv bias
    return p


if __name__ == "__main__":
    key = jax.random.PRNGKey(0)
    kp, k3, k4, k5 = jax.random.split(key, 4)
    params = init_params(kp)

    # Synthetic backbone outputs for a conceptual 32x32 input:
    # c3 @ stride 8, c4 @ stride 16, c5 @ stride 16 (dilated layer4).
    B = 2
    c3 = jax.random.normal(k3, (B, 512, 4, 4), jnp.float32)
    c4 = jax.random.normal(k4, (B, 1024, 2, 2), jnp.float32)
    c5 = jax.random.normal(k5, (B, 2048, 2, 2), jnp.float32)

    fwd = jax.jit(dncnet_forward)
    cls, reg, off, den = fwd(params, c3, c4, c5)
    jax.block_until_ready((cls, reg, off, den))

    assert cls.shape == (B, 1, 8, 8)
    assert reg.shape == (B, 2, 8, 8)
    assert off.shape == (B, 2, 8, 8)
    assert den.shape == (B, 1, 8, 8)
    for t in (cls, reg, off, den):
        assert bool(jnp.all(jnp.isfinite(t)))
    assert bool(jnp.all(cls >= 0.0)) and bool(jnp.all(cls <= 1.0))
    assert bool(jnp.all(den >= 0.0))
    print("KERNEL_OK")
</pallas_src>

<mosaic_0001>
module attributes {stable_mosaic.version = 11 : i64} {
  func.func @_mm_bias_l2_kernel(%arg0: i32, %arg1: i32, %arg2: i32, %arg3: memref<32x512xbf16, #tpu.memory_space<vmem>>, %arg4: memref<512x256xbf16, #tpu.memory_space<vmem>>, %arg5: memref<1x256xf32, #tpu.memory_space<vmem>>, %arg6: memref<1x256xf32, #tpu.memory_space<vmem>>, %arg7: memref<32x256xbf16, #tpu.memory_space<vmem>>, %arg8: memref<32x256xf32, #tpu.memory_space<vmem>>) attributes {dimension_semantics = [#tpu.dimension_semantics<parallel>, #tpu.dimension_semantics<parallel>, #tpu.dimension_semantics<arbitrary>], iteration_bounds = array<i64: 1, 1, 4>, scalar_prefetch = 0 : i64, scratch_operands = 1 : i64, tpu.core_type = #tpu.core_type<tc>, window_params = [{transform_indices = @transform_0, window_bounds = array<i64: 32, 512>}, {transform_indices = @transform_1, window_bounds = array<i64: 512, 256>}, {transform_indices = @transform_2, window_bounds = array<i64: 1, 256>}, {transform_indices = @transform_3, window_bounds = array<i64: 1, 256>}, {transform_indices = @transform_4, window_bounds = array<i64: 32, 256>}]} {
    %c0_i32 = arith.constant 0 : i32
    %0 = arith.cmpi eq, %arg2, %c0_i32 : i32
    %1 = arith.extui %0 : i1 to i32
    %c0_i32_0 = arith.constant 0 : i32
    %2 = arith.cmpi ne, %1, %c0_i32_0 : i32
    scf.if %2 {
      %cst_9 = arith.constant 0.000000e+00 : f32
      %12 = vector.broadcast %cst_9 : f32 to vector<32x256xf32>
      %c0_10 = arith.constant 0 : index
      %c0_11 = arith.constant 0 : index
      %13 = vector.load %arg8[%c0_10, %c0_11] : memref<32x256xf32, #tpu.memory_space<vmem>>, vector<32x256xf32>
      tpu.vector_store %arg8[%c0_10, %c0_11], %12 {strides = array<i32>} : memref<32x256xf32, #tpu.memory_space<vmem>>, vector<32x256xf32>,
    } else {
    }
    %c0 = arith.constant 0 : index
    %c0_1 = arith.constant 0 : index
    %3 = vector.load %arg8[%c0, %c0_1] : memref<32x256xf32, #tpu.memory_space<vmem>>, vector<32x256xf32>
    %c0_2 = arith.constant 0 : index
    %c0_3 = arith.constant 0 : index
    %4 = vector.load %arg3[%c0_2, %c0_3] : memref<32x512xbf16, #tpu.memory_space<vmem>>, vector<32x512xbf16>
    %c0_4 = arith.constant 0 : index
    %c0_5 = arith.constant 0 : index
    %5 = vector.load %arg4[%c0_4, %c0_5] : memref<512x256xbf16, #tpu.memory_space<vmem>>, vector<512x256xbf16>
    %cst = arith.constant dense<0.000000e+00> : vector<32x256xf32>
    %6 = tpu.matmul %4, %5, %cst {dimension_numbers = #tpu.dot_dimension_numbers<[1], [0], [0], [1], [0, 0, 1, 1], [], []>} : vector<32x512xbf16>, vector<512x256xbf16>, vector<32x256xf32> -> vector<32x256xf32>
    %7 = arith.addf %3, %6 : vector<32x256xf32>
    %c0_6 = arith.constant 0 : index
    %c0_7 = arith.constant 0 : index
    %8 = vector.load %arg8[%c0_6, %c0_7] : memref<32x256xf32, #tpu.memory_space<vmem>>, vector<32x256xf32>
    tpu.vector_store %arg8[%c0_6, %c0_7], %7 {strides = array<i32>} : memref<32x256xf32, #tpu.memory_space<vmem>>, vector<32x256xf32>,
    %c3_i32 = arith.constant 3 : i32
    %9 = arith.cmpi eq, %arg2, %c3_i32 : i32
    %10 = arith.extui %9 : i1 to i32
    %c0_i32_8 = arith.constant 0 : i32
    %11 = arith.cmpi ne, %10, %c0_i32_8 : i32
    scf.if %11 {
      %c0_9 = arith.constant 0 : index
      %c0_10 = arith.constant 0 : index
      %12 = vector.load %arg8[%c0_9, %c0_10] : memref<32x256xf32, #tpu.memory_space<vmem>>, vector<32x256xf32>
      %c0_11 = arith.constant 0 : index
      %c0_12 = arith.constant 0 : index
      %13 = vector.load %arg5[%c0_11, %c0_12] : memref<1x256xf32, #tpu.memory_space<vmem>>, vector<1x256xf32>
      %14 = vector.broadcast %13 : vector<1x256xf32> to vector<32x256xf32>
      %15 = arith.addf %12, %14 : vector<32x256xf32>
      %16 = arith.mulf %15, %15 : vector<32x256xf32>
      %cst_13 = arith.constant dense<0.000000e+00> : vector<32xf32>
      %17 = vector.multi_reduction <add>, %16, %cst_13 [1] : vector<32x256xf32> to vector<32xf32>
      %18 = vector.shape_cast %17 : vector<32xf32> to vector<32x1xf32>
      %19 = math.sqrt %18 : vector<32x1xf32>
      %cst_14 = arith.constant 9.99999993E-9 : f32
      %20 = vector.broadcast %cst_14 : f32 to vector<32x1xf32>
      %21 = arith.addf %19, %20 : vector<32x1xf32>
      %22 = vector.broadcast %21 : vector<32x1xf32> to vector<32x256xf32>
      %23 = arith.divf %15, %22 : vector<32x256xf32>
      %c0_15 = arith.constant 0 : index
      %c0_16 = arith.constant 0 : index
      %24 = vector.load %arg6[%c0_15, %c0_16] : memref<1x256xf32, #tpu.memory_space<vmem>>, vector<1x256xf32>
      %25 = vector.broadcast %24 : vector<1x256xf32> to vector<32x256xf32>
      %26 = arith.mulf %23, %25 : vector<32x256xf32>
      %27 = arith.truncf %26 : vector<32x256xf32> to vector<32x256xbf16>
      %c0_17 = arith.constant 0 : index
      %c0_18 = arith.constant 0 : index
      %28 = vector.load %arg7[%c0_17, %c0_18] : memref<32x256xbf16, #tpu.memory_space<vmem>>, vector<32x256xbf16>
      tpu.vector_store %arg7[%c0_17, %c0_18], %27 {strides = array<i32>} : memref<32x256xbf16, #tpu.memory_space<vmem>>, vector<32x256xbf16>,
    } else {
    }
    return
  }
  func.func @transform_0(%arg0: i32, %arg1: i32, %arg2: i32) -> (i32, i32) {
    %c0_i32 = arith.constant 0 : i32
    return %arg0, %arg2 : i32, i32
  }
  func.func @transform_1(%arg0: i32, %arg1: i32, %arg2: i32) -> (i32, i32) {
    %c0_i32 = arith.constant 0 : i32
    return %arg2, %arg1 : i32, i32
  }
  func.func @transform_2(%arg0: i32, %arg1: i32, %arg2: i32) -> (i32, i32) {
    %c0_i32 = arith.constant 0 : i32
    %c0_i32_0 = arith.constant 0 : i32
    return %c0_i32, %arg1 : i32, i32
  }
  func.func @transform_3(%arg0: i32, %arg1: i32, %arg2: i32) -> (i32, i32) {
    %c0_i32 = arith.constant 0 : i32
    %c0_i32_0 = arith.constant 0 : i32
    return %c0_i32, %arg1 : i32, i32
  }
  func.func @transform_4(%arg0: i32, %arg1: i32, %arg2: i32) -> (i32, i32) {
    %c0_i32 = arith.constant 0 : i32
    return %arg0, %arg1 : i32, i32
  }
}

module attributes {stable_mosaic.version = 11 : i64} {
  func.func @_mm_bias_l2_kernel(%arg0: i32, %arg1: i32, %arg2: i32, %arg3: memref<8x512xbf16, #tpu.memory_space<vmem>>, %arg4: memref<512x256xbf16, #tpu.memory_space<vmem>>, %arg5: memref<1x256xf32, #tpu.memory_space<vmem>>, %arg6: memref<1x256xf32, #tpu.memory_space<vmem>>, %arg7: memref<8x256xbf16, #tpu.memory_space<vmem>>, %arg8: memref<8x256xf32, #tpu.memory_space<vmem>>) attributes {dimension_semantics = [#tpu.dimension_semantics<parallel>, #tpu.dimension_semantics<parallel>, #tpu.dimension_semantics<arbitrary>], iteration_bounds = array<i64: 1, 16, 2>, scalar_prefetch = 0 : i64, scratch_operands = 1 : i64, tpu.core_type = #tpu.core_type<tc>, window_params = [{transform_indices = @transform_0, window_bounds = array<i64: 8, 512>}, {transform_indices = @transform_1, window_bounds = array<i64: 512, 256>}, {transform_indices = @transform_2, window_bounds = array<i64: 1, 256>}, {transform_indices = @transform_3, window_bounds = array<i64: 1, 256>}, {transform_indices = @transform_4, window_bounds = array<i64: 8, 256>}]} {
    %c0_i32 = arith.constant 0 : i32
    %0 = arith.cmpi eq, %arg2, %c0_i32 : i32
    %1 = arith.extui %0 : i1 to i32
    %c0_i32_0 = arith.constant 0 : i32
    %2 = arith.cmpi ne, %1, %c0_i32_0 : i32
    scf.if %2 {
      %cst_9 = arith.constant 0.000000e+00 : f32
      %12 = vector.broadcast %cst_9 : f32 to vector<8x256xf32>
      %c0_10 = arith.constant 0 : index
      %c0_11 = arith.constant 0 : index
      %13 = vector.load %arg8[%c0_10, %c0_11] : memref<8x256xf32, #tpu.memory_space<vmem>>, vector<8x256xf32>
      tpu.vector_store %arg8[%c0_10, %c0_11], %12 {strides = array<i32>} : memref<8x256xf32, #tpu.memory_space<vmem>>, vector<8x256xf32>,
    } else {
    }
    %c0 = arith.constant 0 : index
    %c0_1 = arith.constant 0 : index
    %3 = vector.load %arg8[%c0, %c0_1] : memref<8x256xf32, #tpu.memory_space<vmem>>, vector<8x256xf32>
    %c0_2 = arith.constant 0 : index
    %c0_3 = arith.constant 0 : index
    %4 = vector.load %arg3[%c0_2, %c0_3] : memref<8x512xbf16, #tpu.memory_space<vmem>>, vector<8x512xbf16>
    %c0_4 = arith.constant 0 : index
    %c0_5 = arith.constant 0 : index
    %5 = vector.load %arg4[%c0_4, %c0_5] : memref<512x256xbf16, #tpu.memory_space<vmem>>, vector<512x256xbf16>
    %cst = arith.constant dense<0.000000e+00> : vector<8x256xf32>
    %6 = tpu.matmul %4, %5, %cst {dimension_numbers = #tpu.dot_dimension_numbers<[1], [0], [0], [1], [0, 0, 1, 1], [], []>} : vector<8x512xbf16>, vector<512x256xbf16>, vector<8x256xf32> -> vector<8x256xf32>
    %7 = arith.addf %3, %6 : vector<8x256xf32>
    %c0_6 = arith.constant 0 : index
    %c0_7 = arith.constant 0 : index
    %8 = vector.load %arg8[%c0_6, %c0_7] : memref<8x256xf32, #tpu.memory_space<vmem>>, vector<8x256xf32>
    tpu.vector_store %arg8[%c0_6, %c0_7], %7 {strides = array<i32>} : memref<8x256xf32, #tpu.memory_space<vmem>>, vector<8x256xf32>,
    %c1_i32 = arith.constant 1 : i32
    %9 = arith.cmpi eq, %arg2, %c1_i32 : i32
    %10 = arith.extui %9 : i1 to i32
    %c0_i32_8 = arith.constant 0 : i32
    %11 = arith.cmpi ne, %10, %c0_i32_8 : i32
    scf.if %11 {
      %c0_9 = arith.constant 0 : index
      %c0_10 = arith.constant 0 : index
      %12 = vector.load %arg8[%c0_9, %c0_10] : memref<8x256xf32, #tpu.memory_space<vmem>>, vector<8x256xf32>
      %c0_11 = arith.constant 0 : index
      %c0_12 = arith.constant 0 : index
      %13 = vector.load %arg5[%c0_11, %c0_12] : memref<1x256xf32, #tpu.memory_space<vmem>>, vector<1x256xf32>
      %14 = vector.broadcast %13 : vector<1x256xf32> to vector<8x256xf32>
      %15 = arith.addf %12, %14 : vector<8x256xf32>
      %16 = arith.mulf %15, %15 : vector<8x256xf32>
      %cst_13 = arith.constant dense<0.000000e+00> : vector<8xf32>
      %17 = vector.multi_reduction <add>, %16, %cst_13 [1] : vector<8x256xf32> to vector<8xf32>
      %18 = vector.shape_cast %17 : vector<8xf32> to vector<8x1xf32>
      %19 = math.sqrt %18 : vector<8x1xf32>
      %cst_14 = arith.constant 9.99999993E-9 : f32
      %20 = vector.broadcast %cst_14 : f32 to vector<8x1xf32>
      %21 = arith.addf %19, %20 : vector<8x1xf32>
      %22 = vector.broadcast %21 : vector<8x1xf32> to vector<8x256xf32>
      %23 = arith.divf %15, %22 : vector<8x256xf32>
      %c0_15 = arith.constant 0 : index
      %c0_16 = arith.constant 0 : index
      %24 = vector.load %arg6[%c0_15, %c0_16] : memref<1x256xf32, #tpu.memory_space<vmem>>, vector<1x256xf32>
      %25 = vector.broadcast %24 : vector<1x256xf32> to vector<8x256xf32>
      %26 = arith.mulf %23, %25 : vector<8x256xf32>
      %27 = arith.truncf %26 : vector<8x256xf32> to vector<8x256xbf16>
      %c0_17 = arith.constant 0 : index
      %c0_18 = arith.constant 0 : index
      %28 = vector.load %arg7[%c0_17, %c0_18] : memref<8x256xbf16, #tpu.memory_space<vmem>>, vector<8x256xbf16>
      tpu.vector_store %arg7[%c0_17, %c0_18], %27 {strides = array<i32>} : memref<8x256xbf16, #tpu.memory_space<vmem>>, vector<8x256xbf16>,
    } else {
    }
    return
  }
  func.func @transform_0(%arg0: i32, %arg1: i32, %arg2: i32) -> (i32, i32) {
    %c0_i32 = arith.constant 0 : i32
    return %arg0, %arg2 : i32, i32
  }
  func.func @transform_1(%arg0: i32, %arg1: i32, %arg2: i32) -> (i32, i32) {
    %c0_i32 = arith.constant 0 : i32
    return %arg2, %arg1 : i32, i32
  }
  func.func @transform_2(%arg0: i32, %arg1: i32, %arg2: i32) -> (i32, i32) {
    %c0_i32 = arith.constant 0 : i32
    %c0_i32_0 = arith.constant 0 : i32
    return %c0_i32, %arg1 : i32, i32
  }
  func.func @transform_3(%arg0: i32, %arg1: i32, %arg2: i32) -> (i32, i32) {
    %c0_i32 = arith.constant 0 : i32
    %c0_i32_0 = arith.constant 0 : i32
    return %c0_i32, %arg1 : i32, i32
  }
  func.func @transform_4(%arg0: i32, %arg1: i32, %arg2: i32) -> (i32, i32) {
    %c0_i32 = arith.constant 0 : i32
    return %arg0, %arg1 : i32, i32
  }
}

module attributes {stable_mosaic.version = 11 : i64} {
  func.func @_mm_bias_l2_kernel(%arg0: i32, %arg1: i32, %arg2: i32, %arg3: memref<8x512xbf16, #tpu.memory_space<vmem>>, %arg4: memref<512x256xbf16, #tpu.memory_space<vmem>>, %arg5: memref<1x256xf32, #tpu.memory_space<vmem>>, %arg6: memref<1x256xf32, #tpu.memory_space<vmem>>, %arg7: memref<8x256xbf16, #tpu.memory_space<vmem>>, %arg8: memref<8x256xf32, #tpu.memory_space<vmem>>) attributes {dimension_semantics = [#tpu.dimension_semantics<parallel>, #tpu.dimension_semantics<parallel>, #tpu.dimension_semantics<arbitrary>], iteration_bounds = array<i64: 1, 16, 4>, scalar_prefetch = 0 : i64, scratch_operands = 1 : i64, tpu.core_type = #tpu.core_type<tc>, window_params = [{transform_indices = @transform_0, window_bounds = array<i64: 8, 512>}, {transform_indices = @transform_1, window_bounds = array<i64: 512, 256>}, {transform_indices = @transform_2, window_bounds = array<i64: 1, 256>}, {transform_indices = @transform_3, window_bounds = array<i64: 1, 256>}, {transform_indices = @transform_4, window_bounds = array<i64: 8, 256>}]} {
    %c0_i32 = arith.constant 0 : i32
    %0 = arith.cmpi eq, %arg2, %c0_i32 : i32
    %1 = arith.extui %0 : i1 to i32
    %c0_i32_0 = arith.constant 0 : i32
    %2 = arith.cmpi ne, %1, %c0_i32_0 : i32
    scf.if %2 {
      %cst_9 = arith.constant 0.000000e+00 : f32
      %12 = vector.broadcast %cst_9 : f32 to vector<8x256xf32>
      %c0_10 = arith.constant 0 : index
      %c0_11 = arith.constant 0 : index
      %13 = vector.load %arg8[%c0_10, %c0_11] : memref<8x256xf32, #tpu.memory_space<vmem>>, vector<8x256xf32>
      tpu.vector_store %arg8[%c0_10, %c0_11], %12 {strides = array<i32>} : memref<8x256xf32, #tpu.memory_space<vmem>>, vector<8x256xf32>,
    } else {
    }
    %c0 = arith.constant 0 : index
    %c0_1 = arith.constant 0 : index
    %3 = vector.load %arg8[%c0, %c0_1] : memref<8x256xf32, #tpu.memory_space<vmem>>, vector<8x256xf32>
    %c0_2 = arith.constant 0 : index
    %c0_3 = arith.constant 0 : index
    %4 = vector.load %arg3[%c0_2, %c0_3] : memref<8x512xbf16, #tpu.memory_space<vmem>>, vector<8x512xbf16>
    %c0_4 = arith.constant 0 : index
    %c0_5 = arith.constant 0 : index
    %5 = vector.load %arg4[%c0_4, %c0_5] : memref<512x256xbf16, #tpu.memory_space<vmem>>, vector<512x256xbf16>
    %cst = arith.constant dense<0.000000e+00> : vector<8x256xf32>
    %6 = tpu.matmul %4, %5, %cst {dimension_numbers = #tpu.dot_dimension_numbers<[1], [0], [0], [1], [0, 0, 1, 1], [], []>} : vector<8x512xbf16>, vector<512x256xbf16>, vector<8x256xf32> -> vector<8x256xf32>
    %7 = arith.addf %3, %6 : vector<8x256xf32>
    %c0_6 = arith.constant 0 : index
    %c0_7 = arith.constant 0 : index
    %8 = vector.load %arg8[%c0_6, %c0_7] : memref<8x256xf32, #tpu.memory_space<vmem>>, vector<8x256xf32>
    tpu.vector_store %arg8[%c0_6, %c0_7], %7 {strides = array<i32>} : memref<8x256xf32, #tpu.memory_space<vmem>>, vector<8x256xf32>,
    %c3_i32 = arith.constant 3 : i32
    %9 = arith.cmpi eq, %arg2, %c3_i32 : i32
    %10 = arith.extui %9 : i1 to i32
    %c0_i32_8 = arith.constant 0 : i32
    %11 = arith.cmpi ne, %10, %c0_i32_8 : i32
    scf.if %11 {
      %c0_9 = arith.constant 0 : index
      %c0_10 = arith.constant 0 : index
      %12 = vector.load %arg8[%c0_9, %c0_10] : memref<8x256xf32, #tpu.memory_space<vmem>>, vector<8x256xf32>
      %c0_11 = arith.constant 0 : index
      %c0_12 = arith.constant 0 : index
      %13 = vector.load %arg5[%c0_11, %c0_12] : memref<1x256xf32, #tpu.memory_space<vmem>>, vector<1x256xf32>
      %14 = vector.broadcast %13 : vector<1x256xf32> to vector<8x256xf32>
      %15 = arith.addf %12, %14 : vector<8x256xf32>
      %16 = arith.mulf %15, %15 : vector<8x256xf32>
      %cst_13 = arith.constant dense<0.000000e+00> : vector<8xf32>
      %17 = vector.multi_reduction <add>, %16, %cst_13 [1] : vector<8x256xf32> to vector<8xf32>
      %18 = vector.shape_cast %17 : vector<8xf32> to vector<8x1xf32>
      %19 = math.sqrt %18 : vector<8x1xf32>
      %cst_14 = arith.constant 9.99999993E-9 : f32
      %20 = vector.broadcast %cst_14 : f32 to vector<8x1xf32>
      %21 = arith.addf %19, %20 : vector<8x1xf32>
      %22 = vector.broadcast %21 : vector<8x1xf32> to vector<8x256xf32>
      %23 = arith.divf %15, %22 : vector<8x256xf32>
      %c0_15 = arith.constant 0 : index
      %c0_16 = arith.constant 0 : index
      %24 = vector.load %arg6[%c0_15, %c0_16] : memref<1x256xf32, #tpu.memory_space<vmem>>, vector<1x256xf32>
      %25 = vector.broadcast %24 : vector<1x256xf32> to vector<8x256xf32>
      %26 = arith.mulf %23, %25 : vector<8x256xf32>
      %27 = arith.truncf %26 : vector<8x256xf32> to vector<8x256xbf16>
      %c0_17 = arith.constant 0 : index
      %c0_18 = arith.constant 0 : index
      %28 = vector.load %arg7[%c0_17, %c0_18] : memref<8x256xbf16, #tpu.memory_space<vmem>>, vector<8x256xbf16>
      tpu.vector_store %arg7[%c0_17, %c0_18], %27 {strides = array<i32>} : memref<8x256xbf16, #tpu.memory_space<vmem>>, vector<8x256xbf16>,
    } else {
    }
    return
  }
  func.func @transform_0(%arg0: i32, %arg1: i32, %arg2: i32) -> (i32, i32) {
    %c0_i32 = arith.constant 0 : i32
    return %arg0, %arg2 : i32, i32
  }
  func.func @transform_1(%arg0: i32, %arg1: i32, %arg2: i32) -> (i32, i32) {
    %c0_i32 = arith.constant 0 : i32
    return %arg2, %arg1 : i32, i32
  }
  func.func @transform_2(%arg0: i32, %arg1: i32, %arg2: i32) -> (i32, i32) {
    %c0_i32 = arith.constant 0 : i32
    %c0_i32_0 = arith.constant 0 : i32
    return %c0_i32, %arg1 : i32, i32
  }
  func.func @transform_3(%arg0: i32, %arg1: i32, %arg2: i32) -> (i32, i32) {
    %c0_i32 = arith.constant 0 : i32
    %c0_i32_0 = arith.constant 0 : i32
    return %c0_i32, %arg1 : i32, i32
  }
  func.func @transform_4(%arg0: i32, %arg1: i32, %arg2: i32) -> (i32, i32) {
    %c0_i32 = arith.constant 0 : i32
    return %arg0, %arg1 : i32, i32
  }
}

module attributes {stable_mosaic.version = 11 : i64} {
  func.func @_feat_conv_kernel(%arg0: i32, %arg1: i32, %arg2: i32, %arg3: memref<1x1x10x256xbf16, #tpu.memory_space<vmem>>, %arg4: memref<1x1x10x256xbf16, #tpu.memory_space<vmem>>, %arg5: memref<1x1x10x256xbf16, #tpu.memory_space<vmem>>, %arg6: memref<1x3x256x256xbf16, #tpu.memory_space<vmem>>, %arg7: memref<1x3x256x256xbf16, #tpu.memory_space<vmem>>, %arg8: memref<1x3x256x256xbf16, #tpu.memory_space<vmem>>, %arg9: memref<1x1x8x256xbf16, #tpu.memory_space<vmem>>, %arg10: memref<8x256xf32, #tpu.memory_space<vmem>>) attributes {dimension_semantics = [#tpu.dimension_semantics<parallel>, #tpu.dimension_semantics<parallel>, #tpu.dimension_semantics<arbitrary>], iteration_bounds = array<i64: 2, 8, 3>, scalar_prefetch = 0 : i64, scratch_operands = 1 : i64, tpu.core_type = #tpu.core_type<tc>, window_params = [{transform_indices = @transform_0, window_bounds = array<i64: 1, 1, 10, 256>}, {transform_indices = @transform_1, window_bounds = array<i64: 1, 1, 10, 256>}, {transform_indices = @transform_2, window_bounds = array<i64: 1, 1, 10, 256>}, {transform_indices = @transform_3, window_bounds = array<i64: 1, 3, 256, 256>}, {transform_indices = @transform_4, window_bounds = array<i64: 1, 3, 256, 256>}, {transform_indices = @transform_5, window_bounds = array<i64: 1, 3, 256, 256>}, {transform_indices = @transform_6, window_bounds = array<i64: 1, 1, 8, 256>}]} {
    %c0_i32 = arith.constant 0 : i32
    %0 = arith.cmpi eq, %arg2, %c0_i32 : i32
    %1 = arith.extui %0 : i1 to i32
    %c0_i32_0 = arith.constant 0 : i32
    %2 = arith.cmpi ne, %1, %c0_i32_0 : i32
    scf.if %2 {
      %cst_115 = arith.constant 0.000000e+00 : f32
      %78 = vector.broadcast %cst_115 : f32 to vector<8x256xf32>
      %c0_116 = arith.constant 0 : index
      %c0_117 = arith.constant 0 : index
      %79 = vector.load %arg10[%c0_116, %c0_117] : memref<8x256xf32, #tpu.memory_space<vmem>>, vector<8x256xf32>
      tpu.vector_store %arg10[%c0_116, %c0_117], %78 {strides = array<i32>} : memref<8x256xf32, #tpu.memory_space<vmem>>, vector<8x256xf32>,
    } else {
    }
    %c0 = arith.constant 0 : index
    %c0_1 = arith.constant 0 : index
    %3 = vector.load %arg10[%c0, %c0_1] : memref<8x256xf32, #tpu.memory_space<vmem>>, vector<8x256xf32>
    %c0_2 = arith.constant 0 : index
    %c0_3 = arith.constant 0 : index
    %c0_4 = arith.constant 0 : index
    %c0_5 = arith.constant 0 : index
    %4 = vector.load %arg3[%c0_2, %c0_3, %c0_4, %c0_5] : memref<1x1x10x256xbf16, #tpu.memory_space<vmem>>, vector<1x1x8x256xbf16>
    %5 = vector.shape_cast %4 : vector<1x1x8x256xbf16> to vector<8x256xbf16>
    %c0_6 = arith.constant 0 : index
    %c0_7 = arith.constant 0 : index
    %c0_8 = arith.constant 0 : index
    %c0_9 = arith.constant 0 : index
    %6 = vector.load %arg6[%c0_6, %c0_7, %c0_8, %c0_9] : memref<1x3x256x256xbf16, #tpu.memory_space<vmem>>, vector<1x1x256x256xbf16>
    %7 = vector.shape_cast %6 : vector<1x1x256x256xbf16> to vector<256x256xbf16>
    %cst = arith.constant dense<0.000000e+00> : vector<8x256xf32>
    %8 = tpu.matmul %5, %7, %cst {dimension_numbers = #tpu.dot_dimension_numbers<[1], [0], [0], [1], [0, 0, 1, 1], [], []>} : vector<8x256xbf16>, vector<256x256xbf16>, vector<8x256xf32> -> vector<8x256xf32>
    %9 = arith.addf %3, %8 : vector<8x256xf32>
    %c0_10 = arith.constant 0 : index
    %c0_11 = arith.constant 0 : index
    %10 = vector.load %arg10[%c0_10, %c0_11] : memref<8x256xf32, #tpu.memory_space<vmem>>, vector<8x256xf32>
    tpu.vector_store %arg10[%c0_10, %c0_11], %9 {strides = array<i32>} : memref<8x256xf32, #tpu.memory_space<vmem>>, vector<8x256xf32>,
    %c0_12 = arith.constant 0 : index
    %c0_13 = arith.constant 0 : index
    %11 = vector.load %arg10[%c0_12, %c0_13] : memref<8x256xf32, #tpu.memory_space<vmem>>, vector<8x256xf32>
    %c0_14 = arith.constant 0 : index
    %c0_15 = arith.constant 0 : index
    %c1 = arith.constant 1 : index
    %c0_16 = arith.constant 0 : index
    %12 = vector.load %arg3[%c0_14, %c0_15, %c1, %c0_16] : memref<1x1x10x256xbf16, #tpu.memory_space<vmem>>, vector<1x1x8x256xbf16>
    %13 = vector.shape_cast %12 : vector<1x1x8x256xbf16> to vector<8x256xbf16>
    %c0_17 = arith.constant 0 : index
    %c1_18 = arith.constant 1 : index
    %c0_19 = arith.constant 0 : index
    %c0_20 = arith.constant 0 : index
    %14 = vector.load %arg6[%c0_17, %c1_18, %c0_19, %c0_20] : memref<1x3x256x256xbf16, #tpu.memory_space<vmem>>, vector<1x1x256x256xbf16>
    %15 = vector.shape_cast %14 : vector<1x1x256x256xbf16> to vector<256x256xbf16>
    %cst_21 = arith.constant dense<0.000000e+00> : vector<8x256xf32>
    %16 = tpu.matmul %13, %15, %cst_21 {dimension_numbers = #tpu.dot_dimension_numbers<[1], [0], [0], [1], [0, 0, 1, 1], [], []>} : vector<8x256xbf16>, vector<256x256xbf16>, vector<8x256xf32> -> vector<8x256xf32>
    %17 = arith.addf %11, %16 : vector<8x256xf32>
    %c0_22 = arith.constant 0 : index
    %c0_23 = arith.constant 0 : index
    %18 = vector.load %arg10[%c0_22, %c0_23] : memref<8x256xf32, #tpu.memory_space<vmem>>, vector<8x256xf32>
    tpu.vector_store %arg10[%c0_22, %c0_23], %17 {strides = array<i32>} : memref<8x256xf32, #tpu.memory_space<vmem>>, vector<8x256xf32>,
    %c0_24 = arith.constant 0 : index
    %c0_25 = arith.constant 0 : index
    %19 = vector.load %arg10[%c0_24, %c0_25] : memref<8x256xf32, #tpu.memory_space<vmem>>, vector<8x256xf32>
    %c0_26 = arith.constant 0 : index
    %c0_27 = arith.constant 0 : index
    %c2 = arith.constant 2 : index
    %c0_28 = arith.constant 0 : index
    %20 = vector.load %arg3[%c0_26, %c0_27, %c2, %c0_28] : memref<1x1x10x256xbf16, #tpu.memory_space<vmem>>, vector<1x1x8x256xbf16>
    %21 = vector.shape_cast %20 : vector<1x1x8x256xbf16> to vector<8x256xbf16>
    %c0_29 = arith.constant 0 : index
    %c2_30 = arith.constant 2 : index
    %c0_31 = arith.constant 0 : index
    %c0_32 = arith.constant 0 : index
    %22 = vector.load %arg6[%c0_29, %c2_30, %c0_31, %c0_32] : memref<1x3x256x256xbf16, #tpu.memory_space<vmem>>, vector<1x1x256x256xbf16>
    %23 = vector.shape_cast %22 : vector<1x1x256x256xbf16> to vector<256x256xbf16>
    %cst_33 = arith.constant dense<0.000000e+00> : vector<8x256xf32>
    %24 = tpu.matmul %21, %23, %cst_33 {dimension_numbers = #tpu.dot_dimension_numbers<[1], [0], [0], [1], [0, 0, 1, 1], [], []>} : vector<8x256xbf16>, vector<256x256xbf16>, vector<8x256xf32> -> vector<8x256xf32>
    %25 = arith.addf %19, %24 : vector<8x256xf32>
    %c0_34 = arith.constant 0 : index
    %c0_35 = arith.constant 0 : index
    %26 = vector.load %arg10[%c0_34, %c0_35] : memref<8x256xf32, #tpu.memory_space<vmem>>, vector<8x256xf32>
    tpu.vector_store %arg10[%c0_34, %c0_35], %25 {strides = array<i32>} : memref<8x256xf32, #tpu.memory_space<vmem>>, vector<8x256xf32>,
    %c0_36 = arith.constant 0 : index
    %c0_37 = arith.constant 0 : index
    %27 = vector.load %arg10[%c0_36, %c0_37] : memref<8x256xf32, #tpu.memory_space<vmem>>, vector<8x256xf32>
    %c0_38 = arith.constant 0 : index
    %c0_39 = arith.constant 0 : index
    %c0_40 = arith.constant 0 : index
    %c0_41 = arith.constant 0 : index
    %28 = vector.load %arg4[%c0_38, %c0_39, %c0_40, %c0_41] : memref<1x1x10x256xbf16, #tpu.memory_space<vmem>>, vector<1x1x8x256xbf16>
    %29 = vector.shape_cast %28 : vector<1x1x8x256xbf16> to vector<8x256xbf16>
    %c0_42 = arith.constant 0 : index
    %c0_43 = arith.constant 0 : index
    %c0_44 = arith.constant 0 : index
    %c0_45 = arith.constant 0 : index
    %30 = vector.load %arg7[%c0_42, %c0_43, %c0_44, %c0_45] : memref<1x3x256x256xbf16, #tpu.memory_space<vmem>>, vector<1x1x256x256xbf16>
    %31 = vector.shape_cast %30 : vector<1x1x256x256xbf16> to vector<256x256xbf16>
    %cst_46 = arith.constant dense<0.000000e+00> : vector<8x256xf32>
    %32 = tpu.matmul %29, %31, %cst_46 {dimension_numbers = #tpu.dot_dimension_numbers<[1], [0], [0], [1], [0, 0, 1, 1], [], []>} : vector<8x256xbf16>, vector<256x256xbf16>, vector<8x256xf32> -> vector<8x256xf32>
    %33 = arith.addf %27, %32 : vector<8x256xf32>
    %c0_47 = arith.constant 0 : index
    %c0_48 = arith.constant 0 : index
    %34 = vector.load %arg10[%c0_47, %c0_48] : memref<8x256xf32, #tpu.memory_space<vmem>>, vector<8x256xf32>
    tpu.vector_store %arg10[%c0_47, %c0_48], %33 {strides = array<i32>} : memref<8x256xf32, #tpu.memory_space<vmem>>, vector<8x256xf32>,
    %c0_49 = arith.constant 0 : index
    %c0_50 = arith.constant 0 : index
    %35 = vector.load %arg10[%c0_49, %c0_50] : memref<8x256xf32, #tpu.memory_space<vmem>>, vector<8x256xf32>
    %c0_51 = arith.constant 0 : index
    %c0_52 = arith.constant 0 : index
    %c1_53 = arith.constant 1 : index
    %c0_54 = arith.constant 0 : index
    %36 = vector.load %arg4[%c0_51, %c0_52, %c1_53, %c0_54] : memref<1x1x10x256xbf16, #tpu.memory_space<vmem>>, vector<1x1x8x256xbf16>
    %37 = vector.shape_cast %36 : vector<1x1x8x256xbf16> to vector<8x256xbf16>
    %c0_55 = arith.constant 0 : index
    %c1_56 = arith.constant 1 : index
    %c0_57 = arith.constant 0 : index
    %c0_58 = arith.constant 0 : index
    %38 = vector.load %arg7[%c0_55, %c1_56, %c0_57, %c0_58] : memref<1x3x256x256xbf16, #tpu.memory_space<vmem>>, vector<1x1x256x256xbf16>
    %39 = vector.shape_cast %38 : vector<1x1x256x256xbf16> to vector<256x256xbf16>
    %cst_59 = arith.constant dense<0.000000e+00> : vector<8x256xf32>
    %40 = tpu.matmul %37, %39, %cst_59 {dimension_numbers = #tpu.dot_dimension_numbers<[1], [0], [0], [1], [0, 0, 1, 1], [], []>} : vector<8x256xbf16>, vector<256x256xbf16>, vector<8x256xf32> -> vector<8x256xf32>
    %41 = arith.addf %35, %40 : vector<8x256xf32>
    %c0_60 = arith.constant 0 : index
    %c0_61 = arith.constant 0 : index
    %42 = vector.load %arg10[%c0_60, %c0_61] : memref<8x256xf32, #tpu.memory_space<vmem>>, vector<8x256xf32>
    tpu.vector_store %arg10[%c0_60, %c0_61], %41 {strides = array<i32>} : memref<8x256xf32, #tpu.memory_space<vmem>>, vector<8x256xf32>,
    %c0_62 = arith.constant 0 : index
    %c0_63 = arith.constant 0 : index
    %43 = vector.load %arg10[%c0_62, %c0_63] : memref<8x256xf32, #tpu.memory_space<vmem>>, vector<8x256xf32>
    %c0_64 = arith.constant 0 : index
    %c0_65 = arith.constant 0 : index
    %c2_66 = arith.constant 2 : index
    %c0_67 = arith.constant 0 : index
    %44 = vector.load %arg4[%c0_64, %c0_65, %c2_66, %c0_67] : memref<1x1x10x256xbf16, #tpu.memory_space<vmem>>, vector<1x1x8x256xbf16>
    %45 = vector.shape_cast %44 : vector<1x1x8x256xbf16> to vector<8x256xbf16>
    %c0_68 = arith.constant 0 : index
    %c2_69 = arith.constant 2 : index
    %c0_70 = arith.constant 0 : index
    %c0_71 = arith.constant 0 : index
    %46 = vector.load %arg7[%c0_68, %c2_69, %c0_70, %c0_71] : memref<1x3x256x256xbf16, #tpu.memory_space<vmem>>, vector<1x1x256x256xbf16>
    %47 = vector.shape_cast %46 : vector<1x1x256x256xbf16> to vector<256x256xbf16>
    %cst_72 = arith.constant dense<0.000000e+00> : vector<8x256xf32>
    %48 = tpu.matmul %45, %47, %cst_72 {dimension_numbers = #tpu.dot_dimension_numbers<[1], [0], [0], [1], [0, 0, 1, 1], [], []>} : vector<8x256xbf16>, vector<256x256xbf16>, vector<8x256xf32> -> vector<8x256xf32>
    %49 = arith.addf %43, %48 : vector<8x256xf32>
    %c0_73 = arith.constant 0 : index
    %c0_74 = arith.constant 0 : index
    %50 = vector.load %arg10[%c0_73, %c0_74] : memref<8x256xf32, #tpu.memory_space<vmem>>, vector<8x256xf32>
    tpu.vector_store %arg10[%c0_73, %c0_74], %49 {strides = array<i32>} : memref<8x256xf32, #tpu.memory_space<vmem>>, vector<8x256xf32>,
    %c0_75 = arith.constant 0 : index
    %c0_76 = arith.constant 0 : index
    %51 = vector.load %arg10[%c0_75, %c0_76] : memref<8x256xf32, #tpu.memory_space<vmem>>, vector<8x256xf32>
    %c0_77 = arith.constant 0 : index
    %c0_78 = arith.constant 0 : index
    %c0_79 = arith.constant 0 : index
    %c0_80 = arith.constant 0 : index
    %52 = vector.load %arg5[%c0_77, %c0_78, %c0_79, %c0_80] : memref<1x1x10x256xbf16, #tpu.memory_space<vmem>>, vector<1x1x8x256xbf16>
    %53 = vector.shape_cast %52 : vector<1x1x8x256xbf16> to vector<8x256xbf16>
    %c0_81 = arith.constant 0 : index
    %c0_82 = arith.constant 0 : index
    %c0_83 = arith.constant 0 : index
    %c0_84 = arith.constant 0 : index
    %54 = vector.load %arg8[%c0_81, %c0_82, %c0_83, %c0_84] : memref<1x3x256x256xbf16, #tpu.memory_space<vmem>>, vector<1x1x256x256xbf16>
    %55 = vector.shape_cast %54 : vector<1x1x256x256xbf16> to vector<256x256xbf16>
    %cst_85 = arith.constant dense<0.000000e+00> : vector<8x256xf32>
    %56 = tpu.matmul %53, %55, %cst_85 {dimension_numbers = #tpu.dot_dimension_numbers<[1], [0], [0], [1], [0, 0, 1, 1], [], []>} : vector<8x256xbf16>, vector<256x256xbf16>, vector<8x256xf32> -> vector<8x256xf32>
    %57 = arith.addf %51, %56 : vector<8x256xf32>
    %c0_86 = arith.constant 0 : index
    %c0_87 = arith.constant 0 : index
    %58 = vector.load %arg10[%c0_86, %c0_87] : memref<8x256xf32, #tpu.memory_space<vmem>>, vector<8x256xf32>
    tpu.vector_store %arg10[%c0_86, %c0_87], %57 {strides = array<i32>} : memref<8x256xf32, #tpu.memory_space<vmem>>, vector<8x256xf32>,
    %c0_88 = arith.constant 0 : index
    %c0_89 = arith.constant 0 : index
    %59 = vector.load %arg10[%c0_88, %c0_89] : memref<8x256xf32, #tpu.memory_space<vmem>>, vector<8x256xf32>
    %c0_90 = arith.constant 0 : index
    %c0_91 = arith.constant 0 : index
    %c1_92 = arith.constant 1 : index
    %c0_93 = arith.constant 0 : index
    %60 = vector.load %arg5[%c0_90, %c0_91, %c1_92, %c0_93] : memref<1x1x10x256xbf16, #tpu.memory_space<vmem>>, vector<1x1x8x256xbf16>
    %61 = vector.shape_cast %60 : vector<1x1x8x256xbf16> to vector<8x256xbf16>
    %c0_94 = arith.constant 0 : index
    %c1_95 = arith.constant 1 : index
    %c0_96 = arith.constant 0 : index
    %c0_97 = arith.constant 0 : index
    %62 = vector.load %arg8[%c0_94, %c1_95, %c0_96, %c0_97] : memref<1x3x256x256xbf16, #tpu.memory_space<vmem>>, vector<1x1x256x256xbf16>
    %63 = vector.shape_cast %62 : vector<1x1x256x256xbf16> to vector<256x256xbf16>
    %cst_98 = arith.constant dense<0.000000e+00> : vector<8x256xf32>
    %64 = tpu.matmul %61, %63, %cst_98 {dimension_numbers = #tpu.dot_dimension_numbers<[1], [0], [0], [1], [0, 0, 1, 1], [], []>} : vector<8x256xbf16>, vector<256x256xbf16>, vector<8x256xf32> -> vector<8x256xf32>
    %65 = arith.addf %59, %64 : vector<8x256xf32>
    %c0_99 = arith.constant 0 : index
    %c0_100 = arith.constant 0 : index
    %66 = vector.load %arg10[%c0_99, %c0_100] : memref<8x256xf32, #tpu.memory_space<vmem>>, vector<8x256xf32>
    tpu.vector_store %arg10[%c0_99, %c0_100], %65 {strides = array<i32>} : memref<8x256xf32, #tpu.memory_space<vmem>>, vector<8x256xf32>,
    %c0_101 = arith.constant 0 : index
    %c0_102 = arith.constant 0 : index
    %67 = vector.load %arg10[%c0_101, %c0_102] : memref<8x256xf32, #tpu.memory_space<vmem>>, vector<8x256xf32>
    %c0_103 = arith.constant 0 : index
    %c0_104 = arith.constant 0 : index
    %c2_105 = arith.constant 2 : index
    %c0_106 = arith.constant 0 : index
    %68 = vector.load %arg5[%c0_103, %c0_104, %c2_105, %c0_106] : memref<1x1x10x256xbf16, #tpu.memory_space<vmem>>, vector<1x1x8x256xbf16>
    %69 = vector.shape_cast %68 : vector<1x1x8x256xbf16> to vector<8x256xbf16>
    %c0_107 = arith.constant 0 : index
    %c2_108 = arith.constant 2 : index
    %c0_109 = arith.constant 0 : index
    %c0_110 = arith.constant 0 : index
    %70 = vector.load %arg8[%c0_107, %c2_108, %c0_109, %c0_110] : memref<1x3x256x256xbf16, #tpu.memory_space<vmem>>, vector<1x1x256x256xbf16>
    %71 = vector.shape_cast %70 : vector<1x1x256x256xbf16> to vector<256x256xbf16>
    %cst_111 = arith.constant dense<0.000000e+00> : vector<8x256xf32>
    %72 = tpu.matmul %69, %71, %cst_111 {dimension_numbers = #tpu.dot_dimension_numbers<[1], [0], [0], [1], [0, 0, 1, 1], [], []>} : vector<8x256xbf16>, vector<256x256xbf16>, vector<8x256xf32> -> vector<8x256xf32>
    %73 = arith.addf %67, %72 : vector<8x256xf32>
    %c0_112 = arith.constant 0 : index
    %c0_113 = arith.constant 0 : index
    %74 = vector.load %arg10[%c0_112, %c0_113] : memref<8x256xf32, #tpu.memory_space<vmem>>, vector<8x256xf32>
    tpu.vector_store %arg10[%c0_112, %c0_113], %73 {strides = array<i32>} : memref<8x256xf32, #tpu.memory_space<vmem>>, vector<8x256xf32>,
    %c2_i32 = arith.constant 2 : i32
    %75 = arith.cmpi eq, %arg2, %c2_i32 : i32
    %76 = arith.extui %75 : i1 to i32
    %c0_i32_114 = arith.constant 0 : i32
    %77 = arith.cmpi ne, %76, %c0_i32_114 : i32
    scf.if %77 {
      %c0_115 = arith.constant 0 : index
      %c0_116 = arith.constant 0 : index
      %78 = vector.load %arg10[%c0_115, %c0_116] : memref<8x256xf32, #tpu.memory_space<vmem>>, vector<8x256xf32>
      %79 = arith.truncf %78 : vector<8x256xf32> to vector<8x256xbf16>
      %c0_117 = arith.constant 0 : index
      %c0_118 = arith.constant 0 : index
      %c0_119 = arith.constant 0 : index
      %c0_120 = arith.constant 0 : index
      %80 = vector.load %arg9[%c0_117, %c0_118, %c0_119, %c0_120] : memref<1x1x8x256xbf16, #tpu.memory_space<vmem>>, vector<1x1x8x256xbf16>
      %81 = vector.shape_cast %80 : vector<1x1x8x256xbf16> to vector<8x256xbf16>
      %82 = vector.shape_cast %79 : vector<8x256xbf16> to vector<1x1x8x256xbf16>
      tpu.vector_store %arg9[%c0_117, %c0_118, %c0_119, %c0_120], %82 {strides = array<i32>} : memref<1x1x8x256xbf16, #tpu.memory_space<vmem>>, vector<1x1x8x256xbf16>,
    } else {
    }
    return
  }
  func.func @transform_0(%arg0: i32, %arg1: i32, %arg2: i32) -> (i32, i32, i32, i32) {
    %0 = arith.addi %arg1, %arg2 : i32
    %c0_i32 = arith.constant 0 : i32
    %c0_i32_0 = arith.constant 0 : i32
    %c0_i32_1 = arith.constant 0 : i32
    return %arg0, %0, %c0_i32, %c0_i32_0 : i32, i32, i32, i32
  }
  func.func @transform_1(%arg0: i32, %arg1: i32, %arg2: i32) -> (i32, i32, i32, i32) {
    %0 = arith.addi %arg1, %arg2 : i32
    %c0_i32 = arith.constant 0 : i32
    %c0_i32_0 = arith.constant 0 : i32
    %c0_i32_1 = arith.constant 0 : i32
    return %arg0, %0, %c0_i32, %c0_i32_0 : i32, i32, i32, i32
  }
  func.func @transform_2(%arg0: i32, %arg1: i32, %arg2: i32) -> (i32, i32, i32, i32) {
    %0 = arith.addi %arg1, %arg2 : i32
    %c0_i32 = arith.constant 0 : i32
    %c0_i32_0 = arith.constant 0 : i32
    %c0_i32_1 = arith.constant 0 : i32
    return %arg0, %0, %c0_i32, %c0_i32_0 : i32, i32, i32, i32
  }
  func.func @transform_3(%arg0: i32, %arg1: i32, %arg2: i32) -> (i32, i32, i32, i32) {
    %c0_i32 = arith.constant 0 : i32
    %c0_i32_0 = arith.constant 0 : i32
    %c0_i32_1 = arith.constant 0 : i32
    %c0_i32_2 = arith.constant 0 : i32
    return %arg2, %c0_i32, %c0_i32_0, %c0_i32_1 : i32, i32, i32, i32
  }
  func.func @transform_4(%arg0: i32, %arg1: i32, %arg2: i32) -> (i32, i32, i32, i32) {
    %c0_i32 = arith.constant 0 : i32
    %c0_i32_0 = arith.constant 0 : i32
    %c0_i32_1 = arith.constant 0 : i32
    %c0_i32_2 = arith.constant 0 : i32
    return %arg2, %c0_i32, %c0_i32_0, %c0_i32_1 : i32, i32, i32, i32
  }
  func.func @transform_5(%arg0: i32, %arg1: i32, %arg2: i32) -> (i32, i32, i32, i32) {
    %c0_i32 = arith.constant 0 : i32
    %c0_i32_0 = arith.constant 0 : i32
    %c0_i32_1 = arith.constant 0 : i32
    %c0_i32_2 = arith.constant 0 : i32
    return %arg2, %c0_i32, %c0_i32_0, %c0_i32_1 : i32, i32, i32, i32
  }
  func.func @transform_6(%arg0: i32, %arg1: i32, %arg2: i32) -> (i32, i32, i32, i32) {
    %c0_i32 = arith.constant 0 : i32
    %c0_i32_0 = arith.constant 0 : i32
    %c0_i32_1 = arith.constant 0 : i32
    return %arg0, %arg1, %c0_i32, %c0_i32_0 : i32, i32, i32, i32
  }
}

module attributes {stable_mosaic.version = 11 : i64} {
  func.func @_bn_stats_kernel(%arg0: i32, %arg1: memref<128x256xbf16, #tpu.memory_space<vmem>>, %arg2: memref<2x256xf32, #tpu.memory_space<vmem>>) attributes {dimension_semantics = [#tpu.dimension_semantics<arbitrary>], iteration_bounds = array<i64: 1>, scalar_prefetch = 0 : i64, scratch_operands = 0 : i64, tpu.core_type = #tpu.core_type<tc>, window_params = [{transform_indices = @transform_0, window_bounds = array<i64: 128, 256>}, {pipeline_mode = #tpu.pipeline_mode<synchronous>, transform_indices = @transform_1, window_bounds = array<i64: 2, 256>}]} {
    %c0_i32 = arith.constant 0 : i32
    %0 = arith.cmpi eq, %arg0, %c0_i32 : i32
    %1 = arith.extui %0 : i1 to i32
    %c0_i32_0 = arith.constant 0 : i32
    %2 = arith.cmpi ne, %1, %c0_i32_0 : i32
    scf.if %2 {
      %cst_10 = arith.constant 0.000000e+00 : f32
      %16 = vector.broadcast %cst_10 : f32 to vector<2x256xf32>
      %c0_11 = arith.constant 0 : index
      %c0_12 = arith.constant 0 : index
      %17 = vector.load %arg2[%c0_11, %c0_12] : memref<2x256xf32, #tpu.memory_space<vmem>>, vector<2x256xf32>
      tpu.vector_store %arg2[%c0_11, %c0_12], %16 {strides = array<i32>} : memref<2x256xf32, #tpu.memory_space<vmem>>, vector<2x256xf32>,
    } else {
    }
    %c0 = arith.constant 0 : index
    %c0_1 = arith.constant 0 : index
    %3 = vector.load %arg1[%c0, %c0_1] : memref<128x256xbf16, #tpu.memory_space<vmem>>, vector<128x256xbf16>
    %4 = arith.extf %3 : vector<128x256xbf16> to vector<128x256xf32>
    %c0_2 = arith.constant 0 : index
    %c0_3 = arith.constant 0 : index
    %5 = vector.load %arg2[%c0_2, %c0_3] : memref<2x256xf32, #tpu.memory_space<vmem>>, vector<1x256xf32>
    %cst = arith.constant dense<0.000000e+00> : vector<256xf32>
    %6 = vector.multi_reduction <add>, %4, %cst [0] : vector<128x256xf32> to vector<256xf32>
    %7 = vector.shape_cast %6 : vector<256xf32> to vector<1x256xf32>
    %8 = arith.addf %5, %7 : vector<1x256xf32>
    %c0_4 = arith.constant 0 : index
    %c0_5 = arith.constant 0 : index
    %9 = vector.load %arg2[%c0_4, %c0_5] : memref<2x256xf32, #tpu.memory_space<vmem>>, vector<1x256xf32>
    tpu.vector_store %arg2[%c0_4, %c0_5], %8 {strides = array<i32>} : memref<2x256xf32, #tpu.memory_space<vmem>>, vector<1x256xf32>,
    %c1 = arith.constant 1 : index
    %c0_6 = arith.constant 0 : index
    %10 = vector.load %arg2[%c1, %c0_6] : memref<2x256xf32, #tpu.memory_space<vmem>>, vector<1x256xf32>
    %11 = arith.mulf %4, %4 : vector<128x256xf32>
    %cst_7 = arith.constant dense<0.000000e+00> : vector<256xf32>
    %12 = vector.multi_reduction <add>, %11, %cst_7 [0] : vector<128x256xf32> to vector<256xf32>
    %13 = vector.shape_cast %12 : vector<256xf32> to vector<1x256xf32>
    %14 = arith.addf %10, %13 : vector<1x256xf32>
    %c1_8 = arith.constant 1 : index
    %c0_9 = arith.constant 0 : index
    %15 = vector.load %arg2[%c1_8, %c0_9] : memref<2x256xf32, #tpu.memory_space<vmem>>, vector<1x256xf32>
    tpu.vector_store %arg2[%c1_8, %c0_9], %14 {strides = array<i32>} : memref<2x256xf32, #tpu.memory_space<vmem>>, vector<1x256xf32>,
    return
  }
  func.func @transform_0(%arg0: i32) -> (i32, i32) {
    %c0_i32 = arith.constant 0 : i32
    %c0_i32_0 = arith.constant 0 : i32
    return %arg0, %c0_i32 : i32, i32
  }
  func.func @transform_1(%arg0: i32) -> (i32, i32) {
    %c0_i32 = arith.constant 0 : i32
    %c0_i32_0 = arith.constant 0 : i32
    %c0_i32_1 = arith.constant 0 : i32
    return %c0_i32, %c0_i32_0 : i32, i32
  }
}

module attributes {stable_mosaic.version = 11 : i64} {
  func.func @_bn_heads_kernel(%arg0: i32, %arg1: memref<128x256xbf16, #tpu.memory_space<vmem>>, %arg2: memref<2x256xf32, #tpu.memory_space<vmem>>, %arg3: memref<1x256xf32, #tpu.memory_space<vmem>>, %arg4: memref<1x256xf32, #tpu.memory_space<vmem>>, %arg5: memref<256x8xbf16, #tpu.memory_space<vmem>>, %arg6: memref<1x8xf32, #tpu.memory_space<vmem>>, %arg7: memref<128x8xf32, #tpu.memory_space<vmem>>) attributes {dimension_semantics = [#tpu.dimension_semantics<parallel>], iteration_bounds = array<i64: 1>, scalar_prefetch = 0 : i64, scratch_operands = 0 : i64, tpu.core_type = #tpu.core_type<tc>, window_params = [{transform_indices = @transform_0, window_bounds = array<i64: 128, 256>}, {pipeline_mode = #tpu.pipeline_mode<synchronous>, transform_indices = @transform_1, window_bounds = array<i64: 2, 256>}, {pipeline_mode = #tpu.pipeline_mode<synchronous>, transform_indices = @transform_2, window_bounds = array<i64: 1, 256>}, {pipeline_mode = #tpu.pipeline_mode<synchronous>, transform_indices = @transform_3, window_bounds = array<i64: 1, 256>}, {pipeline_mode = #tpu.pipeline_mode<synchronous>, transform_indices = @transform_4, window_bounds = array<i64: 256, 8>}, {pipeline_mode = #tpu.pipeline_mode<synchronous>, transform_indices = @transform_5, window_bounds = array<i64: 1, 8>}, {transform_indices = @transform_6, window_bounds = array<i64: 128, 8>}]} {
    %c0 = arith.constant 0 : index
    %c0_0 = arith.constant 0 : index
    %0 = vector.load %arg1[%c0, %c0_0] : memref<128x256xbf16, #tpu.memory_space<vmem>>, vector<128x256xbf16>
    %1 = arith.extf %0 : vector<128x256xbf16> to vector<128x256xf32>
    %c0_1 = arith.constant 0 : index
    %c0_2 = arith.constant 0 : index
    %2 = vector.load %arg2[%c0_1, %c0_2] : memref<2x256xf32, #tpu.memory_space<vmem>>, vector<1x256xf32>
    %cst = arith.constant 7.812500e-03 : f32
    %3 = vector.broadcast %cst : f32 to vector<1x256xf32>
    %4 = arith.mulf %2, %3 : vector<1x256xf32>
    %c1 = arith.constant 1 : index
    %c0_3 = arith.constant 0 : index
    %5 = vector.load %arg2[%c1, %c0_3] : memref<2x256xf32, #tpu.memory_space<vmem>>, vector<1x256xf32>
    %cst_4 = arith.constant 7.812500e-03 : f32
    %6 = vector.broadcast %cst_4 : f32 to vector<1x256xf32>
    %7 = arith.mulf %5, %6 : vector<1x256xf32>
    %8 = arith.mulf %4, %4 : vector<1x256xf32>
    %9 = arith.subf %7, %8 : vector<1x256xf32>
    %cst_5 = arith.constant 0.000000e+00 : f32
    %10 = vector.broadcast %cst_5 : f32 to vector<1x256xf32>
    %11 = arith.maximumf %9, %10 : vector<1x256xf32>
    %12 = vector.broadcast %4 : vector<1x256xf32> to vector<128x256xf32>
    %13 = arith.subf %1, %12 : vector<128x256xf32>
    %cst_6 = arith.constant 9.99999974E-6 : f32
    %14 = vector.broadcast %cst_6 : f32 to vector<1x256xf32>
    %15 = arith.addf %11, %14 : vector<1x256xf32>
    %16 = math.rsqrt %15 : vector<1x256xf32>
    %17 = vector.broadcast %16 : vector<1x256xf32> to vector<128x256xf32>
    %18 = arith.mulf %13, %17 : vector<128x256xf32>
    %c0_7 = arith.constant 0 : index
    %c0_8 = arith.constant 0 : index
    %19 = vector.load %arg3[%c0_7, %c0_8] : memref<1x256xf32, #tpu.memory_space<vmem>>, vector<1x256xf32>
    %20 = vector.broadcast %19 : vector<1x256xf32> to vector<128x256xf32>
    %21 = arith.mulf %18, %20 : vector<128x256xf32>
    %c0_9 = arith.constant 0 : index
    %c0_10 = arith.constant 0 : index
    %22 = vector.load %arg4[%c0_9, %c0_10] : memref<1x256xf32, #tpu.memory_space<vmem>>, vector<1x256xf32>
    %23 = vector.broadcast %22 : vector<1x256xf32> to vector<128x256xf32>
    %24 = arith.addf %21, %23 : vector<128x256xf32>
    %cst_11 = arith.constant 0.000000e+00 : f32
    %25 = vector.broadcast %cst_11 : f32 to vector<128x256xf32>
    %26 = arith.maximumf %24, %25 : vector<128x256xf32>
    %27 = arith.truncf %26 : vector<128x256xf32> to vector<128x256xbf16>
    %c0_12 = arith.constant 0 : index
    %c0_13 = arith.constant 0 : index
    %28 = vector.load %arg5[%c0_12, %c0_13] : memref<256x8xbf16, #tpu.memory_space<vmem>>, vector<256x8xbf16>
    %cst_14 = arith.constant dense<0.000000e+00> : vector<128x8xf32>
    %29 = tpu.matmul %27, %28, %cst_14 {dimension_numbers = #tpu.dot_dimension_numbers<[1], [0], [0], [1], [0, 0, 1, 1], [], []>} : vector<128x256xbf16>, vector<256x8xbf16>, vector<128x8xf32> -> vector<128x8xf32>
    %c0_15 = arith.constant 0 : index
    %c0_16 = arith.constant 0 : index
    %30 = vector.load %arg6[%c0_15, %c0_16] : memref<1x8xf32, #tpu.memory_space<vmem>>, vector<1x8xf32>
    %31 = vector.broadcast %30 : vector<1x8xf32> to vector<128x8xf32>
    %32 = arith.addf %29, %31 : vector<128x8xf32>
    %c0_17 = arith.constant 0 : index
    %c0_18 = arith.constant 0 : index
    %33 = vector.load %arg7[%c0_17, %c0_18] : memref<128x8xf32, #tpu.memory_space<vmem>>, vector<128x8xf32>
    tpu.vector_store %arg7[%c0_17, %c0_18], %32 {strides = array<i32>} : memref<128x8xf32, #tpu.memory_space<vmem>>, vector<128x8xf32>,
    return
  }
  func.func @transform_0(%arg0: i32) -> (i32, i32) {
    %c0_i32 = arith.constant 0 : i32
    %c0_i32_0 = arith.constant 0 : i32
    return %arg0, %c0_i32 : i32, i32
  }
  func.func @transform_1(%arg0: i32) -> (i32, i32) {
    %c0_i32 = arith.constant 0 : i32
    %c0_i32_0 = arith.constant 0 : i32
    %c0_i32_1 = arith.constant 0 : i32
    return %c0_i32, %c0_i32_0 : i32, i32
  }
  func.func @transform_2(%arg0: i32) -> (i32, i32) {
    %c0_i32 = arith.constant 0 : i32
    %c0_i32_0 = arith.constant 0 : i32
    %c0_i32_1 = arith.constant 0 : i32
    return %c0_i32, %c0_i32_0 : i32, i32
  }
  func.func @transform_3(%arg0: i32) -> (i32, i32) {
    %c0_i32 = arith.constant 0 : i32
    %c0_i32_0 = arith.constant 0 : i32
    %c0_i32_1 = arith.constant 0 : i32
    return %c0_i32, %c0_i32_0 : i32, i32
  }
  func.func @transform_4(%arg0: i32) -> (i32, i32) {
    %c0_i32 = arith.constant 0 : i32
    %c0_i32_0 = arith.constant 0 : i32
    %c0_i32_1 = arith.constant 0 : i32
    return %c0_i32, %c0_i32_0 : i32, i32
  }
  func.func @transform_5(%arg0: i32) -> (i32, i32) {
    %c0_i32 = arith.constant 0 : i32
    %c0_i32_0 = arith.constant 0 : i32
    %c0_i32_1 = arith.constant 0 : i32
    return %c0_i32, %c0_i32_0 : i32, i32
  }
  func.func @transform_6(%arg0: i32) -> (i32, i32) {
    %c0_i32 = arith.constant 0 : i32
    %c0_i32_0 = arith.constant 0 : i32
    return %arg0, %c0_i32 : i32, i32
  }
}

</mosaic_0001>

<llo_original>
// kernel: dncnet_forward.12
$region0: #{dncnet_forward.12}
  #allocation0 [shape = 'u32[]', space=smem, size = 0x4, offset = 0x4, fixed_abs, tag = 'smem constant byte address 0x4 - core index']
  #allocation1 [shape = 'u32[144,128]{1,0:T(1,128)}', space=vmem, size = 0x12000, scoped, tag = 'internal scratch']
  #allocation2 [shape = 'f32[32,256]{1,0:T(8,128)}', space=vmem, size = 0x8000, scoped, tag = 'scratch operand']
  %s0 = inlined_call_operand.vmem [shape: bf16[32,2048], index: 0, kind: input, shape index: {}]
  %s1 = inlined_call_operand.vmem [shape: bf16[2048,256], index: 1, kind: input, shape index: {}]
  %s2 = inlined_call_operand.vmem [shape: f32[1,256], index: 2, kind: input, shape index: {}]
  %s3 = inlined_call_operand.vmem [shape: f32[1,256], index: 3, kind: input, shape index: {}]
  %s4 = inlined_call_operand.vmem [shape: bf16[32,256], index: 4, kind: output, shape index: {}]
  %s5 = sld [smem:[#allocation0]]
  $region80: #{dncnet_forward.12} parent=0
    _
  %s7 = ssub.s32 1, %s5
  %s8 = scalar_select 0, %s7, %s5
  $region1: #{dncnet_forward.12} parent=0
    #allocation3 [shape = 'u8[65536]{0}', space=vmem, size = 0x10000, scoped, tag = 'input window, operand 0']
    loop: start=0, step=1, limit=6
    $region2: #{dncnet_forward.12} parent=1 // loop_pre_header
      _
    $region3: #{dncnet_forward.12} parent=1 // loop_header
      %s10 = sphi 0, %s14
      %p11 = scmp.ge.s32.totalorder %s10, 6
      %s17 = sphi 0, %s36
      %s18 = sphi 0, %s32
      %s19 = sphi 0, %s28
      %s20 = sphi 0, %s17
      %s21 = sphi 0, %s18
      %s22 = sphi 0, %s19
      %s23 = sphi 0, %s20
      %s24 = sphi 0, %s21
      %s25 = sphi 0, %s22
      %s41 = sphi 0, %s43
      %s44 = sphi 0, %s41
      %s45 = sphi 0, %s44
      %s61 = sphi 0, %s45
      %s69 = sphi 0, %s71
      %s72 = sphi 0, %s69
      %s73 = sphi 0, %s72
      %s89 = sphi 0, %s73
      %s95 = sphi 0, %s97
      %s98 = sphi 0, %s95
      %s99 = sphi 0, %s98
      %s115 = sphi 0, %s99
      %s121 = sphi 0, %s123
      %s124 = sphi 0, %s121
      %s125 = sphi 0, %s124
      %s141 = sphi 0, %s125
      %s149 = sphi 0, %s151
      %s152 = sphi 0, %s149
      %s153 = sphi 0, %s152
      %s169 = sphi 0, %s153
    $region4: #{dncnet_forward.12} parent=1 // loop_header_branch
      %13 = sbr.rel (%p11) target = $region8
    $region5: #{dncnet_forward.12} parent=1 // loop_body
      %s15 = ssub.s32 %s10, 1
      %s16 = ssub.s32 %s10, 2
      %s26 = sadd.s32 1, %s19
      %p27 = scmp.ge.s32.totalorder %s26, 4
      %s28 = scalar_select %p27, 0, %s26
      %s29 = sadd.s32 1, %s18
      %s30 = scalar_select %p27, %s29, %s18
      %p31 = scmp.ge.s32.totalorder %s30, 1
      %s32 = scalar_select %p31, 0, %s30
      %s33 = sadd.s32 1, %s17
      %s34 = scalar_select %p31, %s33, %s17
      %p35 = scmp.ge.s32.totalorder %s34, 1
      %s36 = scalar_select %p35, 0, %s34
      %s37 = ssub.s32 %s17, %s36
      %s38 = ssub.s32 %s19, %s28
      %s39 = sor.u32 %s37, %s38
      %p40 = scmp.eq.s32.totalorder %s39, 0
      %s42 = sadd.s32 %s41, 1
      %s43 = scalar_select %p40, %s41, %s42
      %p46 = pneg %p40
      %p47 = scmp.eq.s32.totalorder %s10, 3
      %p48 = por %p46, %p47
      %p49 = scmp.ne.s32.totalorder %s41, %s44
      %p50 = scmp.eq.s32.totalorder %s10, 0
      %p51 = por %p49, %p50
      %p52 = scmp.ne.s32.totalorder %s41, %s44
      %p53 = scmp.eq.s32.totalorder %s15, 3
      %p54 = por %p52, %p53
      %p55 = scmp.ne.s32.totalorder %s44, %s45
      %p56 = scmp.eq.s32.totalorder %s15, 0
      %p57 = por %p55, %p56
      %p58 = scmp.ne.s32.totalorder %s44, %s45
      %p59 = scmp.eq.s32.totalorder %s16, 3
      %p60 = por %p58, %p59
      %p62 = scmp.ne.s32.totalorder %s45, %s61
      %p63 = scmp.eq.s32.totalorder %s16, 0
      %p64 = por %p62, %p63
      %s65 = ssub.s32 %s19, %s28
      %s66 = ssub.s32 %s18, %s32
      %s67 = sor.u32 %s65, %s66
      %p68 = scmp.eq.s32.totalorder %s67, 0
      %s70 = sadd.s32 %s69, 1
      %s71 = scalar_select %p68, %s69, %s70
      %p74 = pneg %p68
      %p75 = scmp.eq.s32.totalorder %s10, 3
      %p76 = por %p74, %p75
      %p77 = scmp.ne.s32.totalorder %s69, %s72
      %p78 = scmp.eq.s32.totalorder %s10, 0
      %p79 = por %p77, %p78
      %p80 = scmp.ne.s32.totalorder %s69, %s72
      %p81 = scmp.eq.s32.totalorder %s15, 3
      %p82 = por %p80, %p81
      %p83 = scmp.ne.s32.totalorder %s72, %s73
      %p84 = scmp.eq.s32.totalorder %s15, 0
      %p85 = por %p83, %p84
      %p86 = scmp.ne.s32.totalorder %s72, %s73
      %p87 = scmp.eq.s32.totalorder %s16, 3
      %p88 = por %p86, %p87
      %p90 = scmp.ne.s32.totalorder %s73, %s89
      %p91 = scmp.eq.s32.totalorder %s16, 0
      %p92 = por %p90, %p91
      %s93 = ssub.s32 %s18, %s32
      %p94 = scmp.eq.s32.totalorder %s93, 0
      %s96 = sadd.s32 %s95, 1
      %s97 = scalar_select %p94, %s95, %s96
      %p100 = pneg %p94
      %p101 = scmp.eq.s32.totalorder %s10, 3
      %p102 = por %p100, %p101
      %p103 = scmp.ne.s32.totalorder %s95, %s98
      %p104 = scmp.eq.s32.totalorder %s10, 0
      %p105 = por %p103, %p104
      %p106 = scmp.ne.s32.totalorder %s95, %s98
      %p107 = scmp.eq.s32.totalorder %s15, 3
      %p108 = por %p106, %p107
      %p109 = scmp.ne.s32.totalorder %s98, %s99
      %p110 = scmp.eq.s32.totalorder %s15, 0
      %p111 = por %p109, %p110
      %p112 = scmp.ne.s32.totalorder %s98, %s99
      %p113 = scmp.eq.s32.totalorder %s16, 3
      %p114 = por %p112, %p113
      %p116 = scmp.ne.s32.totalorder %s99, %s115
      %p117 = scmp.eq.s32.totalorder %s16, 0
      %p118 = por %p116, %p117
      %s119 = ssub.s32 %s18, %s32
      %p120 = scmp.eq.s32.totalorder %s119, 0
      %s122 = sadd.s32 %s121, 1
      %s123 = scalar_select %p120, %s121, %s122
      %p126 = pneg %p120
      %p127 = scmp.eq.s32.totalorder %s10, 3
      %p128 = por %p126, %p127
      %p129 = scmp.ne.s32.totalorder %s121, %s124
      %p130 = scmp.eq.s32.totalorder %s10, 0
      %p131 = por %p129, %p130
      %p132 = scmp.ne.s32.totalorder %s121, %s124
      %p133 = scmp.eq.s32.totalorder %s15, 3
      %p134 = por %p132, %p133
      %p135 = scmp.ne.s32.totalorder %s124, %s125
      %p136 = scmp.eq.s32.totalorder %s15, 0
      %p137 = por %p135, %p136
      %p138 = scmp.ne.s32.totalorder %s124, %s125
      %p139 = scmp.eq.s32.totalorder %s16, 3
      %p140 = por %p138, %p139
      %p142 = scmp.ne.s32.totalorder %s125, %s141
      %p143 = scmp.eq.s32.totalorder %s16, 0
      %p144 = por %p142, %p143
      %s145 = ssub.s32 %s17, %s36
      %s146 = ssub.s32 %s18, %s32
      %s147 = sor.u32 %s145, %s146
      %p148 = scmp.eq.s32.totalorder %s147, 0
      %s150 = sadd.s32 %s149, 1
      %s151 = scalar_select %p148, %s149, %s150
      %p154 = pneg %p148
      %p155 = scmp.eq.s32.totalorder %s10, 3
      %p156 = por %p154, %p155
      %p157 = scmp.ne.s32.totalorder %s149, %s152
      %p158 = scmp.eq.s32.totalorder %s10, 0
      %p159 = por %p157, %p158
      %p160 = scmp.ne.s32.totalorder %s149, %s152
      %p161 = scmp.eq.s32.totalorder %s15, 3
      %p162 = por %p160, %p161
      %p163 = scmp.ne.s32.totalorder %s152, %s153
      %p164 = scmp.eq.s32.totalorder %s15, 0
      %p165 = por %p163, %p164
      %p166 = scmp.ne.s32.totalorder %s152, %s153
      %p167 = scmp.eq.s32.totalorder %s16, 3
      %p168 = por %p166, %p167
      %p170 = scmp.ne.s32.totalorder %s153, %s169
      %p171 = scmp.eq.s32.totalorder %s16, 0
      %p172 = por %p170, %p171
      %p173 = scmp.le.s32.totalorder 1, %s10
      %p174 = scmp.lt.s32.totalorder %s10, 5
      %p175 = pnand %p173, %p174
      %p176 = pneg %p175
      // Predicated region
      $region9: #{dncnet_forward.12} parent=5 // pred_check
        _
      $region10: #{dncnet_forward.12} parent=5 // pred_check_branch
        %178 = sbr.rel (%p175) target = $region12
      $region11: #{dncnet_forward.12} parent=5 // pred_region
        %s179 = ssub.s32 %s10, 1
        // Predicated region
        $region13: #{dncnet_forward.12} parent=11 // pred_check
          %p180 = pneg %p111
        $region14: #{dncnet_forward.12} parent=11 // pred_check_branch
          %182 = sbr.rel (%p180) target = $region16
        $region15: #{dncnet_forward.12} parent=11 // pred_region
          %s183 = smul.u32 2, %s21
          %p184 = scmp.lt.s32.totalorder %s183, 1
          %s185 = scalar_select %p184, %s183, 1
          %s186 = scalar_lea.vmem %s2, %s185
          %s187 = smul.u32 2, %s21
        $region16: #{dncnet_forward.12} parent=11 // pred_fallthru
          _
        // Predicated region
        $region17: #{dncnet_forward.12} parent=11 // pred_check
          %p188 = pneg %p137
        $region18: #{dncnet_forward.12} parent=11 // pred_check_branch
          %190 = sbr.rel (%p188) target = $region20
        $region19: #{dncnet_forward.12} parent=11 // pred_region
          %s191 = smul.u32 2, %s21
          %p192 = scmp.lt.s32.totalorder %s191, 1
          %s193 = scalar_select %p192, %s191, 1
          %s194 = scalar_lea.vmem %s3, %s193
          %s195 = smul.u32 2, %s21
        $region20: #{dncnet_forward.12} parent=11 // pred_fallthru
          _
      $region12: #{dncnet_forward.12} parent=5 // pred_fallthru
        _
      %p196 = scmp.lt.s32.totalorder %s10, 4
      // Predicated region
      $region21: #{dncnet_forward.12} parent=5 // pred_check
        %p197 = pneg %p196
      $region22: #{dncnet_forward.12} parent=5 // pred_check_branch
        %199 = sbr.rel (%p197) target = $region24
      $region23: #{dncnet_forward.12} parent=5 // pred_region
        // Predicated region
        $region25: #{dncnet_forward.12} parent=23 // pred_check
          %p200 = pneg %p51
        $region26: #{dncnet_forward.12} parent=23 // pred_check_branch
          %202 = sbr.rel (%p200) target = $region28
        $region27: #{dncnet_forward.12} parent=23 // pred_region
          %s203 = sand.u32 %s41, 1
          %s204 = sand.u32 %s41, 1
          %s205 = smul.addr %s204, 64
          %s206 = scalar_lea.vmem [#allocation3], %s205
          %s207 = smul.u32 4, %s17
          %s208 = smul.u32 4, %s19
          %s209 = smul.addr %s207, 16
          %s210 = sadd.s32 %s208, %s209
          %s211 = smul.addr %s210, 4
          %s212 = scalar_lea.vmem %s0, %s211
          // Predicated region
          $region29: #{dncnet_forward.12} parent=27 // pred_check
            _
          $region30: #{dncnet_forward.12} parent=27 // pred_check_branch
            %214 = sbr.rel (0) target = $region32
          $region31: #{dncnet_forward.12} parent=27 // pred_region
            // Predicated region
            $region33: #{dncnet_forward.12} parent=31 // pred_check
              _
            $region34: #{dncnet_forward.12} parent=31 // pred_check_branch
              %216 = sbr.rel (0) target = $region36
            $region35: #{dncnet_forward.12} parent=31 // pred_region
              loop: start=0, step=1, limit=1
              $region37: #{dncnet_forward.12} parent=35 // loop_pre_header
                _
              $region38: #{dncnet_forward.12} parent=35 // loop_header
                %s218 = sphi 0, %s222
                %p219 = scmp.ge.s32.totalorder %s218, 1
                %s223 = sphi %s212, %s212
                %s224 = sphi %s206, %s206
              $region39: #{dncnet_forward.12} parent=35 // loop_header_branch
                %221 = sbr.rel (%p219) target = $region43
              $region40: #{dncnet_forward.12} parent=35 // loop_body
                %v225 = vld [vmem:[%s223] sm:$0xff]
                %226 = vst [vmem:[%s224] sm:$0xff] %v225
                %v227 = vld [vmem:[%s223 + $0x8] sm:$0xff]
                %228 = vst [vmem:[%s224 + $0x8] sm:$0xff] %v227
                %v229 = vld [vmem:[%s223 + $0x40] sm:$0xff]
                %230 = vst [vmem:[%s224 + $0x10] sm:$0xff] %v229
                %v231 = vld [vmem:[%s223 + $0x48] sm:$0xff]
                %232 = vst [vmem:[%s224 + $0x18] sm:$0xff] %v231
                %v233 = vld [vmem:[%s223 + $0x80] sm:$0xff]
                %234 = vst [vmem:[%s224 + $0x20] sm:$0xff] %v233
                %v235 = vld [vmem:[%s223 + $0x88] sm:$0xff]
                %236 = vst [vmem:[%s224 + $0x28] sm:$0xff] %v235
                %v237 = vld [vmem:[%s223 + $0xc0] sm:$0xff]
                %238 = vst [vmem:[%s224 + $0x30] sm:$0xff] %v237
                %v239 = vld [vmem:[%s223 + $0xc8] sm:$0xff]
                %240 = vst [vmem:[%s224 + $0x38] sm:$0xff] %v239
              $region41: #{dncnet_forward.12} parent=35 // loop_footer
                %s222 = sadd.s32 1, %s218
              $region42: #{dncnet_forward.12} parent=35 // loop_footer_branch
                %217 = sbr.rel target = $region38
              $region43: #{dncnet_forward.12} parent=35 // loop_exit
                _
            $region36: #{dncnet_forward.12} parent=31 // pred_fallthru
              _
            // Predicated region
            $region44: #{dncnet_forward.12} parent=31 // pred_check
              _
            $region45: #{dncnet_forward.12} parent=31 // pred_check_branch
              %242 = sbr.rel target = $region47
            $region46: #{dncnet_forward.12} parent=31 // pred_region
              _
            $region47: #{dncnet_forward.12} parent=31 // pred_fallthru
              _
          $region32: #{dncnet_forward.12} parent=27 // pred_fallthru
            _
          %243 = vnop
        $region28: #{dncnet_forward.12} parent=23 // pred_fallthru
          _
        // Predicated region
        $region48: #{dncnet_forward.12} parent=23 // pred_check
          %p244 = pneg %p79
        $region49: #{dncnet_forward.12} parent=23 // pred_check_branch
          %246 = sbr.rel (%p244) target = $region51
        $region50: #{dncnet_forward.12} parent=23 // pred_region
          %s247 = smul.u32 64, %s19
          %s248 = smul.u32 2, %s18
          %p249 = scmp.lt.s32.totalorder %s247, 255
          %s250 = scalar_select %p249, %s247, 255
          %p251 = scmp.lt.s32.totalorder %s248, 1
          %s252 = scalar_select %p251, %s248, 1
          %s253 = smul.addr %s250, 2
          %s254 = sadd.s32 %s252, %s253
          %s255 = smul.addr %s254, 4
          %s256 = scalar_lea.vmem %s1, %s255
          %s257 = smul.u32 64, %s19
          %s258 = smul.u32 2, %s18
        $region51: #{dncnet_forward.12} parent=23 // pred_fallthru
          _
      $region24: #{dncnet_forward.12} parent=5 // pred_fallthru
        _
      %p259 = scmp.le.s32.totalorder 1, %s10
      %p260 = scmp.lt.s32.totalorder %s10, 5
      %p261 = pnand %p259, %p260
      %p262 = pneg %p261
      // Predicated region
      $region52: #{dncnet_forward.12} parent=5 // pred_check
        _
      $region53: #{dncnet_forward.12} parent=5 // pred_check_branch
        %264 = sbr.rel (%p261) target = $region55
      $region54: #{dncnet_forward.12} parent=5 // pred_region
        %s265 = ssub.s32 %s10, 1
        %s266 = sand.u32 %s44, 1
        %s267 = sand.u32 %s44, 1
        %s268 = smul.addr %s267, 64
        %s269 = scalar_lea.vmem [#allocation3], %s268
        // Predicated region
        $region56: #{dncnet_forward.12} parent=54 // pred_check
          %p270 = pneg %p57
        $region57: #{dncnet_forward.12} parent=54 // pred_check_branch
          %272 = sbr.rel (%p270) target = $region59
        $region58: #{dncnet_forward.12} parent=54 // pred_region
          _
        $region59: #{dncnet_forward.12} parent=54 // pred_fallthru
          _
        %s273 = sand.u32 %s44, 1
        %s274 = sand.u32 %s44, 1
        %s275 = smul.addr %s274, 64
        %s276 = scalar_lea.vmem [#allocation3], %s275
        %p277 = pneg %p57
        %p278 = pneg %p54
        %s279 = smul.u32 64, %s22
        %s280 = smul.u32 2, %s21
        %p281 = scmp.lt.s32.totalorder %s279, 255
        %s282 = scalar_select %p281, %s279, 255
        %p283 = scmp.lt.s32.totalorder %s280, 1
        %s284 = scalar_select %p283, %s280, 1
        %s285 = smul.addr %s282, 2
        %s286 = sadd.s32 %s284, %s285
        %s287 = smul.addr %s286, 4
        %s288 = scalar_lea.vmem %s1, %s287
        %p289 = pneg %p85
        %p290 = pneg %p82
        %s291 = smul.u32 2, %s21
        %p292 = scmp.lt.s32.totalorder %s291, 1
        %s293 = scalar_select %p292, %s291, 1
        %s294 = scalar_lea.vmem %s2, %s293
        %p295 = pneg %p111
        %p296 = pneg %p108
        %s297 = smul.u32 2, %s21
        %p298 = scmp.lt.s32.totalorder %s297, 1
        %s299 = scalar_select %p298, %s297, 1
        %s300 = scalar_lea.vmem %s3, %s299
        %p301 = pneg %p137
        %p302 = pneg %p134
        %p303 = pneg %p165
        %p304 = pneg %p162
        %s305 = smul.u32 4, %s20
        %s306 = smul.u32 2, %s21
        %p307 = scmp.lt.s32.totalorder %s305, 3
        %s308 = scalar_select %p307, %s305, 3
        %p309 = scmp.lt.s32.totalorder %s306, 1
        %s310 = scalar_select %p309, %s306, 1
        %s311 = smul.addr %s308, 2
        %s312 = sadd.s32 %s310, %s311
        %s313 = smul.addr %s312, 4
        %s314 = scalar_lea.vmem %s4, %s313
        %s315 = smul.u32 4, %s20
        %s316 = smul.u32 4, %s22
        %s317 = smul.u32 64, %s22
        %s318 = smul.u32 2, %s21
        %p319 = scmp.lt.s32.totalorder %s317, 255
        %s320 = scalar_select %p319, %s317, 255
        %p321 = scmp.lt.s32.totalorder %s318, 1
        %s322 = scalar_select %p321, %s318, 1
        %s323 = smul.addr %s320, 2
        %s324 = sadd.s32 %s322, %s323
        %s325 = smul.addr %s324, 4
        %s326 = scalar_lea.vmem %s1, %s325
        %s327 = smul.u32 64, %s22
        %s328 = smul.u32 2, %s21
        %s329 = smul.u32 2, %s21
        %p330 = scmp.lt.s32.totalorder %s329, 1
        %s331 = scalar_select %p330, %s329, 1
        %s332 = scalar_lea.vmem %s2, %s331
        %s333 = smul.u32 2, %s21
        %s334 = smul.u32 2, %s21
        %p335 = scmp.lt.s32.totalorder %s334, 1
        %s336 = scalar_select %p335, %s334, 1
        %s337 = scalar_lea.vmem %s3, %s336
        %s338 = smul.u32 2, %s21
        %s339 = smul.u32 4, %s20
        %s340 = smul.u32 2, %s21
        %p341 = scmp.lt.s32.totalorder %s339, 3
        %s342 = scalar_select %p341, %s339, 3
        %p343 = scmp.lt.s32.totalorder %s340, 1
        %s344 = scalar_select %p343, %s340, 1
        %s345 = smul.addr %s342, 2
        %s346 = sadd.s32 %s344, %s345
        %s347 = smul.addr %s346, 4
        %s348 = scalar_lea.vmem %s4, %s347
        %s349 = smul.u32 4, %s20
        %s350 = smul.u32 2, %s21
        %p351 = scmp.eq.s32.totalorder %s22, 0
        // Predicated region
        $region60: #{dncnet_forward.12} parent=54 // pred_check
          %p352 = pneg %p351
        $region61: #{dncnet_forward.12} parent=54 // pred_check_branch
          %354 = sbr.rel (%p352) target = $region63
        $region62: #{dncnet_forward.12} parent=54 // pred_region
          %355 = vst [vmem:[#allocation2] sm:$0xff] 0.0
          %356 = vst [vmem:[#allocation2 + $0x8] sm:$0xff] 0.0
          %357 = vst [vmem:[#allocation2 + $0x10] sm:$0xff] 0.0
          %358 = vst [vmem:[#allocation2 + $0x18] sm:$0xff] 0.0
          %359 = vst [vmem:[#allocation2 + $0x20] sm:$0xff] 0.0
          %360 = vst [vmem:[#allocation2 + $0x28] sm:$0xff] 0.0
          %361 = vst [vmem:[#allocation2 + $0x30] sm:$0xff] 0.0
          %362 = vst [vmem:[#allocation2 + $0x38] sm:$0xff] 0.0
        $region63: #{dncnet_forward.12} parent=54 // pred_fallthru
          _
        %v363 = vld [vmem:[#allocation2] sm:$0xff]
        %v364 = vld [vmem:[#allocation2 + $0x8] sm:$0xff]
        %v365 = vld [vmem:[#allocation2 + $0x10] sm:$0xff]
        %v366 = vld [vmem:[#allocation2 + $0x18] sm:$0xff]
        %v367 = vld [vmem:[#allocation2 + $0x20] sm:$0xff]
        %v368 = vld [vmem:[#allocation2 + $0x28] sm:$0xff]
        %v369 = vld [vmem:[#allocation2 + $0x30] sm:$0xff]
        %v370 = vld [vmem:[#allocation2 + $0x38] sm:$0xff]
        %v371 = vld [vmem:[%s269] sm:$0xff]
        %v372 = vld [vmem:[%s269 + $0x8] sm:$0xff]
        %v373 = vld [vmem:[%s269 + $0x10] sm:$0xff]
        %v374 = vld [vmem:[%s269 + $0x18] sm:$0xff]
        %v375 = vld [vmem:[%s269 + $0x20] sm:$0xff]
        %v376 = vld [vmem:[%s269 + $0x28] sm:$0xff]
        %v377 = vld [vmem:[%s269 + $0x30] sm:$0xff]
        %v378 = vld [vmem:[%s269 + $0x38] sm:$0xff]
        %v379 = vld [vmem:[%s326] sm:$0xff]
        %v380 = vld [vmem:[%s326 + $0x8] sm:$0xff]
        %v381 = vld [vmem:[%s326 + $0x10] sm:$0xff]
        %v382 = vld [vmem:[%s326 + $0x18] sm:$0xff]
        %v383 = vld [vmem:[%s326 + $0x20] sm:$0xff]
        %v384 = vld [vmem:[%s326 + $0x28] sm:$0xff]
        %v385 = vld [vmem:[%s326 + $0x30] sm:$0xff]
        %v386 = vld [vmem:[%s326 + $0x38] sm:$0xff]
        %v387 = vld [vmem:[%s326 + $0x40] sm:$0xff]
        %v388 = vld [vmem:[%s326 + $0x48] sm:$0xff]
        %v389 = vld [vmem:[%s326 + $0x50] sm:$0xff]
        %v390 = vld [vmem:[%s326 + $0x58] sm:$0xff]
        %v391 = vld [vmem:[%s326 + $0x60] sm:$0xff]
        %v392 = vld [vmem:[%s326 + $0x68] sm:$0xff]
        %v393 = vld [vmem:[%s326 + $0x70] sm:$0xff]
        %v394 = vld [vmem:[%s326 + $0x78] sm:$0xff]
        %v395 = vld [vmem:[%s326 + $0x80] sm:$0xff]
        %v396 = vld [vmem:[%s326 + $0x88] sm:$0xff]
        %v397 = vld [vmem:[%s326 + $0x90] sm:$0xff]
        %v398 = vld [vmem:[%s326 + $0x98] sm:$0xff]
        %v399 = vld [vmem:[%s326 + $0xa0] sm:$0xff]
        %v400 = vld [vmem:[%s326 + $0xa8] sm:$0xff]
        %v401 = vld [vmem:[%s326 + $0xb0] sm:$0xff]
        %v402 = vld [vmem:[%s326 + $0xb8] sm:$0xff]
        %v403 = vld [vmem:[%s326 + $0xc0] sm:$0xff]
        %v404 = vld [vmem:[%s326 + $0xc8] sm:$0xff]
        %v405 = vld [vmem:[%s326 + $0xd0] sm:$0xff]
        %v406 = vld [vmem:[%s326 + $0xd8] sm:$0xff]
        %v407 = vld [vmem:[%s326 + $0xe0] sm:$0xff]
        %v408 = vld [vmem:[%s326 + $0xe8] sm:$0xff]
        %v409 = vld [vmem:[%s326 + $0xf0] sm:$0xff]
        %v410 = vld [vmem:[%s326 + $0xf8] sm:$0xff]
        %v411 = vld [vmem:[%s326 + $0x100] sm:$0xff]
        %v412 = vld [vmem:[%s326 + $0x108] sm:$0xff]
        %v413 = vld [vmem:[%s326 + $0x110] sm:$0xff]
        %v414 = vld [vmem:[%s326 + $0x118] sm:$0xff]
        %v415 = vld [vmem:[%s326 + $0x120] sm:$0xff]
        %v416 = vld [vmem:[%s326 + $0x128] sm:$0xff]
        %v417 = vld [vmem:[%s326 + $0x130] sm:$0xff]
        %v418 = vld [vmem:[%s326 + $0x138] sm:$0xff]
        %v419 = vld [vmem:[%s326 + $0x140] sm:$0xff]
        %v420 = vld [vmem:[%s326 + $0x148] sm:$0xff]
        %v421 = vld [vmem:[%s326 + $0x150] sm:$0xff]
        %v422 = vld [vmem:[%s326 + $0x158] sm:$0xff]
        %v423 = vld [vmem:[%s326 + $0x160] sm:$0xff]
        %v424 = vld [vmem:[%s326 + $0x168] sm:$0xff]
        %v425 = vld [vmem:[%s326 + $0x170] sm:$0xff]
        %v426 = vld [vmem:[%s326 + $0x178] sm:$0xff]
        %v427 = vld [vmem:[%s326 + $0x180] sm:$0xff]
        %v428 = vld [vmem:[%s326 + $0x188] sm:$0xff]
        %v429 = vld [vmem:[%s326 + $0x190] sm:$0xff]
        %v430 = vld [vmem:[%s326 + $0x198] sm:$0xff]
        %v431 = vld [vmem:[%s326 + $0x1a0] sm:$0xff]
        %v432 = vld [vmem:[%s326 + $0x1a8] sm:$0xff]
        %v433 = vld [vmem:[%s326 + $0x1b0] sm:$0xff]
        %v434 = vld [vmem:[%s326 + $0x1b8] sm:$0xff]
        %v435 = vld [vmem:[%s326 + $0x1c0] sm:$0xff]
        %v436 = vld [vmem:[%s326 + $0x1c8] sm:$0xff]
        %v437 = vld [vmem:[%s326 + $0x1d0] sm:$0xff]
        %v438 = vld [vmem:[%s326 + $0x1d8] sm:$0xff]
        %v439 = vld [vmem:[%s326 + $0x1e0] sm:$0xff]
        %v440 = vld [vmem:[%s326 + $0x1e8] sm:$0xff]
        %v441 = vld [vmem:[%s326 + $0x1f0] sm:$0xff]
        %v442 = vld [vmem:[%s326 + $0x1f8] sm:$0xff]
        %v451 = vunpack.c.l.b16 %v371
        %v452 = vunpack.c.h.b16 %v371
        %v453 = vunpack.c.l.b16 %v372
        %v454 = vunpack.c.h.b16 %v372
        %v455 = vunpack.c.l.b16 %v373
        %v456 = vunpack.c.h.b16 %v373
        %v457 = vunpack.c.l.b16 %v374
        %v458 = vunpack.c.h.b16 %v374
        %v459 = vunpack.c.l.b16 %v375
        %v460 = vunpack.c.h.b16 %v375
        %v461 = vunpack.c.l.b16 %v376
        %v462 = vunpack.c.h.b16 %v376
        %v463 = vunpack.c.l.b16 %v377
        %v464 = vunpack.c.h.b16 %v377
        %v465 = vunpack.c.l.b16 %v378
        %v466 = vunpack.c.h.b16 %v378
        %v467 = vpack.c.b16 %v455, %v451
        %v468 = vpack.c.b16 %v456, %v452
        %v469 = vpack.c.b16 %v457, %v453
        %v470 = vpack.c.b16 %v458, %v454
        %v471 = vpack.c.b16 %v463, %v459
        %v472 = vpack.c.b16 %v464, %v460
        %v473 = vpack.c.b16 %v465, %v461
        %v474 = vpack.c.b16 %v466, %v462
        %v547 = vunpack.c.l.b16 %v379
        %v548 = vunpack.c.h.b16 %v379
        %v549 = vunpack.c.l.b16 %v380
        %v550 = vunpack.c.h.b16 %v380
        %v551 = vunpack.c.l.b16 %v381
        %v552 = vunpack.c.h.b16 %v381
        %v553 = vunpack.c.l.b16 %v382
        %v554 = vunpack.c.h.b16 %v382
        %v555 = vunpack.c.l.b16 %v383
        %v556 = vunpack.c.h.b16 %v383
        %v557 = vunpack.c.l.b16 %v384
        %v558 = vunpack.c.h.b16 %v384
        %v559 = vunpack.c.l.b16 %v385
        %v560 = vunpack.c.h.b16 %v385
        %v561 = vunpack.c.l.b16 %v386
        %v562 = vunpack.c.h.b16 %v386
        %v563 = vunpack.c.l.b16 %v387
        %v564 = vunpack.c.h.b16 %v387
        %v565 = vunpack.c.l.b16 %v388
        %v566 = vunpack.c.h.b16 %v388
        %v567 = vunpack.c.l.b16 %v389
        %v568 = vunpack.c.h.b16 %v389
        %v569 = vunpack.c.l.b16 %v390
        %v570 = vunpack.c.h.b16 %v390
        %v571 = vunpack.c.l.b16 %v391
        %v572 = vunpack.c.h.b16 %v391
        %v573 = vunpack.c.l.b16 %v392
        %v574 = vunpack.c.h.b16 %v392
        %v575 = vunpack.c.l.b16 %v393
        %v576 = vunpack.c.h.b16 %v393
        %v577 = vunpack.c.l.b16 %v394
        %v578 = vunpack.c.h.b16 %v394
        %v579 = vunpack.c.l.b16 %v395
        %v580 = vunpack.c.h.b16 %v395
        %v581 = vunpack.c.l.b16 %v396
        %v582 = vunpack.c.h.b16 %v396
        %v583 = vunpack.c.l.b16 %v397
        %v584 = vunpack.c.h.b16 %v397
        %v585 = vunpack.c.l.b16 %v398
        %v586 = vunpack.c.h.b16 %v398
        %v587 = vunpack.c.l.b16 %v399
        %v588 = vunpack.c.h.b16 %v399
        %v589 = vunpack.c.l.b16 %v400
        %v590 = vunpack.c.h.b16 %v400
        %v591 = vunpack.c.l.b16 %v401
        %v592 = vunpack.c.h.b16 %v401
        %v593 = vunpack.c.l.b16 %v402
        %v594 = vunpack.c.h.b16 %v402
        %v595 = vunpack.c.l.b16 %v403
        %v596 = vunpack.c.h.b16 %v403
        %v597 = vunpack.c.l.b16 %v404
        %v598 = vunpack.c.h.b16 %v404
        %v599 = vunpack.c.l.b16 %v405
        %v600 = vunpack.c.h.b16 %v405
        %v601 = vunpack.c.l.b16 %v406
        %v602 = vunpack.c.h.b16 %v406
        %v603 = vunpack.c.l.b16 %v407
        %v604 = vunpack.c.h.b16 %v407
        %v605 = vunpack.c.l.b16 %v408
        %v606 = vunpack.c.h.b16 %v408
        %v607 = vunpack.c.l.b16 %v409
        %v608 = vunpack.c.h.b16 %v409
        %v609 = vunpack.c.l.b16 %v410
        %v610 = vunpack.c.h.b16 %v410
        %v611 = vunpack.c.l.b16 %v411
        %v612 = vunpack.c.h.b16 %v411
        %v613 = vunpack.c.l.b16 %v412
        %v614 = vunpack.c.h.b16 %v412
        %v615 = vunpack.c.l.b16 %v413
        %v616 = vunpack.c.h.b16 %v413
        %v617 = vunpack.c.l.b16 %v414
        %v618 = vunpack.c.h.b16 %v414
        %v619 = vunpack.c.l.b16 %v415
        %v620 = vunpack.c.h.b16 %v415
        %v621 = vunpack.c.l.b16 %v416
        %v622 = vunpack.c.h.b16 %v416
        %v623 = vunpack.c.l.b16 %v417
        %v624 = vunpack.c.h.b16 %v417
        %v625 = vunpack.c.l.b16 %v418
        %v626 = vunpack.c.h.b16 %v418
        %v627 = vunpack.c.l.b16 %v419
        %v628 = vunpack.c.h.b16 %v419
        %v629 = vunpack.c.l.b16 %v420
        %v630 = vunpack.c.h.b16 %v420
        %v631 = vunpack.c.l.b16 %v421
        %v632 = vunpack.c.h.b16 %v421
        %v633 = vunpack.c.l.b16 %v422
        %v634 = vunpack.c.h.b16 %v422
        %v635 = vunpack.c.l.b16 %v423
        %v636 = vunpack.c.h.b16 %v423
        %v637 = vunpack.c.l.b16 %v424
        %v638 = vunpack.c.h.b16 %v424
        %v639 = vunpack.c.l.b16 %v425
        %v640 = vunpack.c.h.b16 %v425
        %v641 = vunpack.c.l.b16 %v426
        %v642 = vunpack.c.h.b16 %v426
        %v643 = vunpack.c.l.b16 %v427
        %v644 = vunpack.c.h.b16 %v427
        %v645 = vunpack.c.l.b16 %v428
        %v646 = vunpack.c.h.b16 %v428
        %v647 = vunpack.c.l.b16 %v429
        %v648 = vunpack.c.h.b16 %v429
        %v649 = vunpack.c.l.b16 %v430
        %v650 = vunpack.c.h.b16 %v430
        %v651 = vunpack.c.l.b16 %v431
        %v652 = vunpack.c.h.b16 %v431
        %v653 = vunpack.c.l.b16 %v432
        %v654 = vunpack.c.h.b16 %v432
        %v655 = vunpack.c.l.b16 %v433
        %v656 = vunpack.c.h.b16 %v433
        %v657 = vunpack.c.l.b16 %v434
        %v658 = vunpack.c.h.b16 %v434
        %v659 = vunpack.c.l.b16 %v435
        %v660 = vunpack.c.h.b16 %v435
        %v661 = vunpack.c.l.b16 %v436
        %v662 = vunpack.c.h.b16 %v436
        %v663 = vunpack.c.l.b16 %v437
        %v664 = vunpack.c.h.b16 %v437
        %v665 = vunpack.c.l.b16 %v438
        %v666 = vunpack.c.h.b16 %v438
        %v667 = vunpack.c.l.b16 %v439
        %v668 = vunpack.c.h.b16 %v439
        %v669 = vunpack.c.l.b16 %v440
        %v670 = vunpack.c.h.b16 %v440
        %v671 = vunpack.c.l.b16 %v441
        %v672 = vunpack.c.h.b16 %v441
        %v673 = vunpack.c.l.b16 %v442
        %v674 = vunpack.c.h.b16 %v442
        %v675 = vpack.c.b16 %v549, %v547
        %v676 = vpack.c.b16 %v550, %v548
        %v677 = vpack.c.b16 %v553, %v551
        %v678 = vpack.c.b16 %v554, %v552
        %v679 = vpack.c.b16 %v557, %v555
        %v680 = vpack.c.b16 %v558, %v556
        %v681 = vpack.c.b16 %v561, %v559
        %v682 = vpack.c.b16 %v562, %v560
        %v683 = vpack.c.b16 %v565, %v563
        %v684 = vpack.c.b16 %v566, %v564
        %v685 = vpack.c.b16 %v569, %v567
        %v686 = vpack.c.b16 %v570, %v568
        %v687 = vpack.c.b16 %v573, %v571
        %v688 = vpack.c.b16 %v574, %v572
        %v689 = vpack.c.b16 %v577, %v575
        %v690 = vpack.c.b16 %v578, %v576
        %v691 = vpack.c.b16 %v581, %v579
        %v692 = vpack.c.b16 %v582, %v580
        %v693 = vpack.c.b16 %v585, %v583
        %v694 = vpack.c.b16 %v586, %v584
        %v695 = vpack.c.b16 %v589, %v587
        %v696 = vpack.c.b16 %v590, %v588
        %v697 = vpack.c.b16 %v593, %v591
        %v698 = vpack.c.b16 %v594, %v592
        %v699 = vpack.c.b16 %v597, %v595
        %v700 = vpack.c.b16 %v598, %v596
        %v701 = vpack.c.b16 %v601, %v599
        %v702 = vpack.c.b16 %v602, %v600
        %v703 = vpack.c.b16 %v605, %v603
        %v704 = vpack.c.b16 %v606, %v604
        %v705 = vpack.c.b16 %v609, %v607
        %v706 = vpack.c.b16 %v610, %v608
        %v707 = vpack.c.b16 %v613, %v611
        %v708 = vpack.c.b16 %v614, %v612
        %v709 = vpack.c.b16 %v617, %v615
        %v710 = vpack.c.b16 %v618, %v616
        %v711 = vpack.c.b16 %v621, %v619
        %v712 = vpack.c.b16 %v622, %v620
        %v713 = vpack.c.b16 %v625, %v623
        %v714 = vpack.c.b16 %v626, %v624
        %v715 = vpack.c.b16 %v629, %v627
        %v716 = vpack.c.b16 %v630, %v628
        %v717 = vpack.c.b16 %v633, %v631
        %v718 = vpack.c.b16 %v634, %v632
        %v719 = vpack.c.b16 %v637, %v635
        %v720 = vpack.c.b16 %v638, %v636
        %v721 = vpack.c.b16 %v641, %v639
        %v722 = vpack.c.b16 %v642, %v640
        %v723 = vpack.c.b16 %v645, %v643
        %v724 = vpack.c.b16 %v646, %v644
        %v725 = vpack.c.b16 %v649, %v647
        %v726 = vpack.c.b16 %v650, %v648
        %v727 = vpack.c.b16 %v653, %v651
        %v728 = vpack.c.b16 %v654, %v652
        %v729 = vpack.c.b16 %v657, %v655
        %v730 = vpack.c.b16 %v658, %v656
        %v731 = vpack.c.b16 %v661, %v659
        %v732 = vpack.c.b16 %v662, %v660
        %v733 = vpack.c.b16 %v665, %v663
        %v734 = vpack.c.b16 %v666, %v664
        %v735 = vpack.c.b16 %v669, %v667
        %v736 = vpack.c.b16 %v670, %v668
        %v737 = vpack.c.b16 %v673, %v671
        %v738 = vpack.c.b16 %v674, %v672
        %803 = vmatprep.subr.bf16.mxu0 %v676
        %804 = vmatpush1.bf16.msra.mxu0 %v675
        %805 = vmatprep.subr.bf16.mxu0 %v678
        %806 = vmatpush1.bf16.msra.mxu0 %v677
        %807 = vmatprep.subr.bf16.mxu0 %v680
        %808 = vmatpush1.bf16.msra.mxu0 %v679
        %809 = vmatprep.subr.bf16.mxu0 %v682
        %810 = vmatpush1.bf16.msra.mxu0 %v681
        %811 = vmatprep.subr.bf16.mxu0 %v684
        %812 = vmatpush1.bf16.msra.mxu0 %v683
        %813 = vmatprep.subr.bf16.mxu0 %v686
        %814 = vmatpush1.bf16.msra.mxu0 %v685
        %815 = vmatprep.subr.bf16.mxu0 %v688
        %816 = vmatpush1.bf16.msra.mxu0 %v687
        %817 = vmatprep.subr.bf16.mxu0 %v690
        %818 = vmatpush1.bf16.msra.mxu0 %v689
        %819 = vmatprep.subr.bf16.mxu0 %v692
        %820 = vmatpush1.bf16.msra.mxu0 %v691
        %821 = vmatprep.subr.bf16.mxu0 %v694
        %822 = vmatpush1.bf16.msra.mxu0 %v693
        %823 = vmatprep.subr.bf16.mxu0 %v696
        %824 = vmatpush1.bf16.msra.mxu0 %v695
        %825 = vmatprep.subr.bf16.mxu0 %v698
        %826 = vmatpush1.bf16.msra.mxu0 %v697
        %827 = vmatprep.subr.bf16.mxu0 %v700
        %828 = vmatpush1.bf16.msra.mxu0 %v699
        %829 = vmatprep.subr.bf16.mxu0 %v702
        %830 = vmatpush1.bf16.msra.mxu0 %v701
        %831 = vmatprep.subr.bf16.mxu0 %v704
        %832 = vmatpush1.bf16.msra.mxu0 %v703
        %833 = vmatprep.subr.bf16.mxu0 %v706
        %834 = vmatpush1.bf16.msra.mxu0 %v705
        %835 = vmatprep.mubr.bf16.mxu0 %v468
        %836 = vmatmul.mubr.bf16.gmra.mrb[0].mxu0 %v467
        %v837 = vpop.f32.mrb[0].mxu0
        %v838 = vadd.f32 0.0, %v837
        %v839 = vpop.f32.mrb[0].mxu0
        %v840 = vadd.f32 0.0, %v839
        %v841 = vpop.f32.mrb[0].mxu0
        %v842 = vadd.f32 0.0, %v841
        %v843 = vpop.f32.mrb[0].mxu0
        %v844 = vadd.f32 0.0, %v843
        %845 = vmatprep.mubr.bf16.mxu0 %v472
        %846 = vmatmul.mubr.bf16.gmra.mrb[0].mxu0 %v471
        %v847 = vpop.f32.mrb[0].mxu0
        %v848 = vadd.f32 0.0, %v847
        %v849 = vpop.f32.mrb[0].mxu0
        %v850 = vadd.f32 0.0, %v849
        %v851 = vpop.f32.mrb[0].mxu0
        %v852 = vadd.f32 0.0, %v851
        %v853 = vpop.f32.mrb[0].mxu0
        %v854 = vadd.f32 0.0, %v853
        %855 = vdwg.mxu0
        %856 = vmatprep.subr.bf16.mxu0 %v708
        %857 = vmatpush1.bf16.msra.mxu0 %v707
        %858 = vmatprep.subr.bf16.mxu0 %v710
        %859 = vmatpush1.bf16.msra.mxu0 %v709
        %860 = vmatprep.subr.bf16.mxu0 %v712
        %861 = vmatpush1.bf16.msra.mxu0 %v711
        %862 = vmatprep.subr.bf16.mxu0 %v714
        %863 = vmatpush1.bf16.msra.mxu0 %v713
        %864 = vmatprep.subr.bf16.mxu0 %v716
        %865 = vmatpush1.bf16.msra.mxu0 %v715
        %866 = vmatprep.subr.bf16.mxu0 %v718
        %867 = vmatpush1.bf16.msra.mxu0 %v717
        %868 = vmatprep.subr.bf16.mxu0 %v720
        %869 = vmatpush1.bf16.msra.mxu0 %v719
        %870 = vmatprep.subr.bf16.mxu0 %v722
        %871 = vmatpush1.bf16.msra.mxu0 %v721
        %872 = vmatprep.subr.bf16.mxu0 %v724
        %873 = vmatpush1.bf16.msra.mxu0 %v723
        %874 = vmatprep.subr.bf16.mxu0 %v726
        %875 = vmatpush1.bf16.msra.mxu0 %v725
        %876 = vmatprep.subr.bf16.mxu0 %v728
        %877 = vmatpush1.bf16.msra.mxu0 %v727
        %878 = vmatprep.subr.bf16.mxu0 %v730
        %879 = vmatpush1.bf16.msra.mxu0 %v729
        %880 = vmatprep.subr.bf16.mxu0 %v732
        %881 = vmatpush1.bf16.msra.mxu0 %v731
        %882 = vmatprep.subr.bf16.mxu0 %v734
        %883 = vmatpush1.bf16.msra.mxu0 %v733
        %884 = vmatprep.subr.bf16.mxu0 %v736
        %885 = vmatpush1.bf16.msra.mxu0 %v735
        %886 = vmatprep.subr.bf16.mxu0 %v738
        %887 = vmatpush1.bf16.msra.mxu0 %v737
        %888 = vmatprep.mubr.bf16.mxu0 %v470
        %889 = vmatmul.mubr.bf16.gmra.mrb[0].mxu0 %v469
        %v890 = vpop.f32.mrb[0].mxu0
        %v891 = vadd.f32 %v838, %v890
        %v892 = vpop.f32.mrb[0].mxu0
        %v893 = vadd.f32 %v840, %v892
        %v894 = vpop.f32.mrb[0].mxu0
        %v895 = vadd.f32 %v842, %v894
        %v896 = vpop.f32.mrb[0].mxu0
        %v897 = vadd.f32 %v844, %v896
        %898 = vmatprep.mubr.bf16.mxu0 %v474
        %899 = vmatmul.mubr.bf16.gmra.mrb[0].mxu0 %v473
        %v900 = vpop.f32.mrb[0].mxu0
        %v901 = vadd.f32 %v848, %v900
        %v902 = vpop.f32.mrb[0].mxu0
        %v903 = vadd.f32 %v850, %v902
        %v904 = vpop.f32.mrb[0].mxu0
        %v905 = vadd.f32 %v852, %v904
        %v906 = vpop.f32.mrb[0].mxu0
        %v907 = vadd.f32 %v854, %v906
        %908 = vdwg.mxu0
        %v909 = vadd.f32 %v363, %v891
        %v910 = vadd.f32 %v364, %v893
        %v911 = vadd.f32 %v365, %v895
        %v912 = vadd.f32 %v366, %v897
        %v913 = vadd.f32 %v367, %v901
        %v914 = vadd.f32 %v368, %v903
        %v915 = vadd.f32 %v369, %v905
        %v916 = vadd.f32 %v370, %v907
        %917 = vst [vmem:[#allocation2] sm:$0xff] %v909
        %918 = vst [vmem:[#allocation2 + $0x8] sm:$0xff] %v910
        %919 = vst [vmem:[#allocation2 + $0x10] sm:$0xff] %v911
        %920 = vst [vmem:[#allocation2 + $0x18] sm:$0xff] %v912
        %921 = vst [vmem:[#allocation2 + $0x20] sm:$0xff] %v913
        %922 = vst [vmem:[#allocation2 + $0x28] sm:$0xff] %v914
        %923 = vst [vmem:[#allocation2 + $0x30] sm:$0xff] %v915
        %924 = vst [vmem:[#allocation2 + $0x38] sm:$0xff] %v916
        %p925 = scmp.eq.s32.totalorder %s22, 3
        // Predicated region
        $region64: #{dncnet_forward.12} parent=54 // pred_check
          %p926 = pneg %p925
        $region65: #{dncnet_forward.12} parent=54 // pred_check_branch
          %928 = sbr.rel (%p926) target = $region67
        $region66: #{dncnet_forward.12} parent=54 // pred_region
          %v929 = vld [vmem:[#allocation2] sm:$0xff]
          %v930 = vld [vmem:[#allocation2 + $0x8] sm:$0xff]
          %v931 = vld [vmem:[#allocation2 + $0x10] sm:$0xff]
          %v932 = vld [vmem:[#allocation2 + $0x18] sm:$0xff]
          %v933 = vld [vmem:[#allocation2 + $0x20] sm:$0xff]
          %v934 = vld [vmem:[#allocation2 + $0x28] sm:$0xff]
          %v935 = vld [vmem:[#allocation2 + $0x30] sm:$0xff]
          %v936 = vld [vmem:[#allocation2 + $0x38] sm:$0xff]
          %v937 = vld [vmem:[%s332] sm:$0x3]
          %v939 = vlaneseq
          %v940 = vshrl.u32 %v939, 7
          %v941 = vsub.s32 0, %v940
          %v942 = vrot.slane %v937, %v941
          %v943 = vlaneseq
          %v944 = vshrl.u32 %v943, 7
          %v945 = vsub.s32 1, %v944
          %v946 = vrot.slane %v937, %v945
          %v949 = vadd.f32 %v929, %v942
          %v950 = vadd.f32 %v930, %v946
          %v951 = vadd.f32 %v931, %v942
          %v952 = vadd.f32 %v932, %v946
          %v953 = vadd.f32 %v933, %v942
          %v954 = vadd.f32 %v934, %v946
          %v955 = vadd.f32 %v935, %v942
          %v956 = vadd.f32 %v936, %v946
          %v957 = vmul.f32 %v949, %v949
          %v958 = vmul.f32 %v950, %v950
          %v959 = vmul.f32 %v951, %v951
          %v960 = vmul.f32 %v952, %v952
          %v961 = vmul.f32 %v953, %v953
          %v962 = vmul.f32 %v954, %v954
          %v963 = vmul.f32 %v955, %v955
          %v964 = vmul.f32 %v956, %v956
          %v965 = vadd.f32 %v957, %v958
          %966 = vadd.xlane.f32.xlu0 %v965
          %v967 = vpop.xlane.xlu0 %966
          %v968 = vadd.f32 %v959, %v960
          %969 = vadd.xlane.f32.xlu0 %v968
          %v970 = vpop.xlane.xlu0 %969
          %v971 = vadd.f32 %v961, %v962
          %972 = vadd.xlane.f32.xlu0 %v971
          %v973 = vpop.xlane.xlu0 %972
          %v974 = vadd.f32 %v963, %v964
          %975 = vadd.xlane.f32.xlu0 %v974
          %v976 = vpop.xlane.xlu0 %975
          %v977 = vrsqrt.pop %v967
          %v978 = vmul.f32 %v967, %v977
          %vm979 = vcmp.eq.f32.partialorder %v967, inf
          %v980 = vsel %vm979, %v967, %v978
          %vm981 = vcmp.eq.f32.partialorder %v967, 0.0
          %v982 = vand.u32 %v967, 2147483648
          %v983 = vsel %vm981, %v982, %v980
          %v984 = vrsqrt.pop %v970
          %v985 = vmul.f32 %v970, %v984
          %vm986 = vcmp.eq.f32.partialorder %v970, inf
          %v987 = vsel %vm986, %v970, %v985
          %vm988 = vcmp.eq.f32.partialorder %v970, 0.0
          %v989 = vand.u32 %v970, 2147483648
          %v990 = vsel %vm988, %v989, %v987
          %v991 = vrsqrt.pop %v973
          %v992 = vmul.f32 %v973, %v991
          %vm993 = vcmp.eq.f32.partialorder %v973, inf
          %v994 = vsel %vm993, %v973, %v992
          %vm995 = vcmp.eq.f32.partialorder %v973, 0.0
          %v996 = vand.u32 %v973, 2147483648
          %v997 = vsel %vm995, %v996, %v994
          %v998 = vrsqrt.pop %v976
          %v999 = vmul.f32 %v976, %v998
          %vm1000 = vcmp.eq.f32.partialorder %v976, inf
          %v1001 = vsel %vm1000, %v976, %v999
          %vm1002 = vcmp.eq.f32.partialorder %v976, 0.0
          %v1003 = vand.u32 %v976, 2147483648
          %v1004 = vsel %vm1002, %v1003, %v1001
          %v1005 = vadd.f32 %v983, 1e-08
          %v1006 = vadd.f32 %v990, 1e-08
          %v1007 = vadd.f32 %v997, 1e-08
          %v1008 = vadd.f32 %v1004, 1e-08
          %v1009 = vrcp.pop %v1005
          %v1010 = vmul.f32 %v949, %v1009
          %v1011 = vmul.f32 %v950, %v1009
          %v1012 = vrcp.pop %v1006
          %v1013 = vmul.f32 %v951, %v1012
          %v1014 = vmul.f32 %v952, %v1012
          %v1015 = vrcp.pop %v1007
          %v1016 = vmul.f32 %v953, %v1015
          %v1017 = vmul.f32 %v954, %v1015
          %v1018 = vrcp.pop %v1008
          %v1019 = vmul.f32 %v955, %v1018
          %v1020 = vmul.f32 %v956, %v1018
          %v1021 = vld [vmem:[%s337] sm:$0x3]
          %v1023 = vlaneseq
          %v1024 = vshrl.u32 %v1023, 7
          %v1025 = vsub.s32 0, %v1024
          %v1026 = vrot.slane %v1021, %v1025
          %v1027 = vlaneseq
          %v1028 = vshrl.u32 %v1027, 7
          %v1029 = vsub.s32 1, %v1028
          %v1030 = vrot.slane %v1021, %v1029
          %v1033 = vmul.f32 %v1010, %v1026
          %v1034 = vmul.f32 %v1011, %v1030
          %v1035 = vmul.f32 %v1013, %v1026
          %v1036 = vmul.f32 %v1014, %v1030
          %v1037 = vmul.f32 %v1016, %v1026
          %v1038 = vmul.f32 %v1017, %v1030
          %v1039 = vmul.f32 %v1019, %v1026
          %v1040 = vmul.f32 %v1020, %v1030
          %v1041 = vpack.c.bf16 %v1035, %v1033
          %v1042 = vpack.c.bf16 %v1036, %v1034
          %v1043 = vpack.c.bf16 %v1039, %v1037
          %v1044 = vpack.c.bf16 %v1040, %v1038
          %v1049 = vunpack.c.l.b16 %v1041
          %v1050 = vunpack.c.l.b16 %v1042
          %v1051 = vunpack.c.h.b16 %v1041
          %v1052 = vunpack.c.h.b16 %v1042
          %v1053 = vunpack.c.l.b16 %v1043
          %v1054 = vunpack.c.l.b16 %v1044
          %v1055 = vunpack.c.h.b16 %v1043
          %v1056 = vunpack.c.h.b16 %v1044
          %v1057 = vpack.c.b16 %v1050, %v1049
          %v1058 = vpack.c.b16 %v1052, %v1051
          %v1059 = vpack.c.b16 %v1054, %v1053
          %v1060 = vpack.c.b16 %v1056, %v1055
          %1065 = vst [vmem:[%s348] sm:$0xff] %v1057
          %1066 = vst [vmem:[%s348 + $0x8] sm:$0xff] %v1058
          %1067 = vst [vmem:[%s348 + $0x10] sm:$0xff] %v1059
          %1068 = vst [vmem:[%s348 + $0x18] sm:$0xff] %v1060
        $region67: #{dncnet_forward.12} parent=54 // pred_fallthru
          _
        %s1069 = smul.u32 4, %s20
        %s1070 = smul.u32 2, %s21
        %p1071 = scmp.lt.s32.totalorder %s1069, 3
        %s1072 = scalar_select %p1071, %s1069, 3
        %p1073 = scmp.lt.s32.totalorder %s1070, 1
        %s1074 = scalar_select %p1073, %s1070, 1
        %s1075 = smul.addr %s1072, 2
        %s1076 = sadd.s32 %s1074, %s1075
        %s1077 = smul.addr %s1076, 4
        %s1078 = scalar_lea.vmem %s4, %s1077
        // Predicated region
        $region68: #{dncnet_forward.12} parent=54 // pred_check
          %p1079 = pneg %p162
        $region69: #{dncnet_forward.12} parent=54 // pred_check_branch
          %1081 = sbr.rel (%p1079) target = $region71
        $region70: #{dncnet_forward.12} parent=54 // pred_region
          %s1082 = smul.u32 4, %s20
          %s1083 = smul.u32 2, %s21
        $region71: #{dncnet_forward.12} parent=54 // pred_fallthru
          _
        // Predicated region
        $region72: #{dncnet_forward.12} parent=54 // pred_check
          %p1084 = pneg %p162
        $region73: #{dncnet_forward.12} parent=54 // pred_check_branch
          %1086 = sbr.rel (%p1084) target = $region75
        $region74: #{dncnet_forward.12} parent=54 // pred_region
          %s1087 = smul.u32 4, %s20
          %s1088 = smul.u32 2, %s21
          %p1089 = scmp.lt.s32.totalorder %s1087, 3
          %s1090 = scalar_select %p1089, %s1087, 3
          %p1091 = scmp.lt.s32.totalorder %s1088, 1
          %s1092 = scalar_select %p1091, %s1088, 1
          %s1093 = smul.addr %s1090, 2
          %s1094 = sadd.s32 %s1092, %s1093
          %s1095 = smul.addr %s1094, 4
          %s1096 = scalar_lea.vmem %s4, %s1095
        $region75: #{dncnet_forward.12} parent=54 // pred_fallthru
          _
      $region55: #{dncnet_forward.12} parent=5 // pred_fallthru
        _
      %p1097 = scmp.le.s32.totalorder 2, %s10
      // Predicated region
      $region76: #{dncnet_forward.12} parent=5 // pred_check
        %p1098 = pneg %p1097
      $region77: #{dncnet_forward.12} parent=5 // pred_check_branch
        %1100 = sbr.rel (%p1098) target = $region79
      $region78: #{dncnet_forward.12} parent=5 // pred_region
        %s1101 = ssub.s32 %s10, 2
      $region79: #{dncnet_forward.12} parent=5 // pred_fallthru
        _
    $region6: #{dncnet_forward.12} parent=1 // loop_footer
      %s14 = sadd.s32 1, %s10
    $region7: #{dncnet_forward.12} parent=1 // loop_footer_branch
      %9 = sbr.rel target = $region3
    $region8: #{dncnet_forward.12} parent=1 // loop_exit
      _

// kernel: dncnet_forward.13
$region0: #{dncnet_forward.13}
  #allocation0 [shape = 'u32[]', space=smem, size = 0x4, offset = 0x4, fixed_abs, tag = 'smem constant byte address 0x4 - core index']
  #allocation1 [shape = 'u32[144,128]{1,0:T(1,128)}', space=vmem, size = 0x12000, scoped, tag = 'internal scratch']
  #allocation2 [shape = 'f32[8,256]{1,0:T(8,128)}', space=vmem, size = 0x2000, scoped, tag = 'scratch operand']
  %s0 = inlined_call_operand.vmem [shape: bf16[8,1024], index: 0, kind: input, shape index: {}]
  %s1 = inlined_call_operand.vmem [shape: bf16[1024,4096], index: 1, kind: input, shape index: {}]
  %s2 = inlined_call_operand.vmem [shape: f32[1,4096], index: 2, kind: input, shape index: {}]
  %s3 = inlined_call_operand.vmem [shape: f32[1,4096], index: 3, kind: input, shape index: {}]
  %s4 = inlined_call_operand.vmem [shape: bf16[8,4096], index: 4, kind: output, shape index: {}]
  %s5 = sld [smem:[#allocation0]]
  $region95: #{dncnet_forward.13} parent=0
    _
  %s7 = ssub.s32 1, %s5
  %s8 = scalar_select 0, %s7, %s5
  $region1: #{dncnet_forward.13} parent=0
    #allocation3 [shape = 'u8[524288]{0}', space=vmem, size = 0x80000, scoped, tag = 'input window, operand 1']
    loop: start=0, step=1, limit=34
    $region2: #{dncnet_forward.13} parent=1 // loop_pre_header
      _
    $region3: #{dncnet_forward.13} parent=1 // loop_header
      %s10 = sphi 0, %s14
      %p11 = scmp.ge.s32.totalorder %s10, 34
      %s17 = sphi 0, %s36
      %s18 = sphi 0, %s32
      %s19 = sphi 0, %s28
      %s20 = sphi 0, %s17
      %s21 = sphi 0, %s18
      %s22 = sphi 0, %s19
      %s23 = sphi 0, %s20
      %s24 = sphi 0, %s21
      %s25 = sphi 0, %s22
      %s41 = sphi 0, %s43
      %s44 = sphi 0, %s41
      %s45 = sphi 0, %s44
      %s61 = sphi 0, %s45
      %s69 = sphi 0, %s71
      %s72 = sphi 0, %s69
      %s73 = sphi 0, %s72
      %s89 = sphi 0, %s73
      %s95 = sphi 0, %s97
      %s98 = sphi 0, %s95
      %s99 = sphi 0, %s98
      %s115 = sphi 0, %s99
      %s121 = sphi 0, %s123
      %s124 = sphi 0, %s121
      %s125 = sphi 0, %s124
      %s141 = sphi 0, %s125
      %s149 = sphi 0, %s151
      %s152 = sphi 0, %s149
      %s153 = sphi 0, %s152
      %s169 = sphi 0, %s153
    $region4: #{dncnet_forward.13} parent=1 // loop_header_branch
      %13 = sbr.rel (%p11) target = $region8
    $region5: #{dncnet_forward.13} parent=1 // loop_body
      %s15 = ssub.s32 %s10, 1
      %s16 = ssub.s32 %s10, 2
      %s26 = sadd.s32 1, %s19
      %p27 = scmp.ge.s32.totalorder %s26, 2
      %s28 = scalar_select %p27, 0, %s26
      %s29 = sadd.s32 1, %s18
      %s30 = scalar_select %p27, %s29, %s18
      %p31 = scmp.ge.s32.totalorder %s30, 16
      %s32 = scalar_select %p31, 0, %s30
      %s33 = sadd.s32 1, %s17
      %s34 = scalar_select %p31, %s33, %s17
      %p35 = scmp.ge.s32.totalorder %s34, 1
      %s36 = scalar_select %p35, 0, %s34
      %s37 = ssub.s32 %s17, %s36
      %s38 = ssub.s32 %s19, %s28
      %s39 = sor.u32 %s37, %s38
      %p40 = scmp.eq.s32.totalorder %s39, 0
      %s42 = sadd.s32 %s41, 1
      %s43 = scalar_select %p40, %s41, %s42
      %p46 = pneg %p40
      %p47 = scmp.eq.s32.totalorder %s10, 31
      %p48 = por %p46, %p47
      %p49 = scmp.ne.s32.totalorder %s41, %s44
      %p50 = scmp.eq.s32.totalorder %s10, 0
      %p51 = por %p49, %p50
      %p52 = scmp.ne.s32.totalorder %s41, %s44
      %p53 = scmp.eq.s32.totalorder %s15, 31
      %p54 = por %p52, %p53
      %p55 = scmp.ne.s32.totalorder %s44, %s45
      %p56 = scmp.eq.s32.totalorder %s15, 0
      %p57 = por %p55, %p56
      %p58 = scmp.ne.s32.totalorder %s44, %s45
      %p59 = scmp.eq.s32.totalorder %s16, 31
      %p60 = por %p58, %p59
      %p62 = scmp.ne.s32.totalorder %s45, %s61
      %p63 = scmp.eq.s32.totalorder %s16, 0
      %p64 = por %p62, %p63
      %s65 = ssub.s32 %s19, %s28
      %s66 = ssub.s32 %s18, %s32
      %s67 = sor.u32 %s65, %s66
      %p68 = scmp.eq.s32.totalorder %s67, 0
      %s70 = sadd.s32 %s69, 1
      %s71 = scalar_select %p68, %s69, %s70
      %p74 = pneg %p68
      %p75 = scmp.eq.s32.totalorder %s10, 31
      %p76 = por %p74, %p75
      %p77 = scmp.ne.s32.totalorder %s69, %s72
      %p78 = scmp.eq.s32.totalorder %s10, 0
      %p79 = por %p77, %p78
      %p80 = scmp.ne.s32.totalorder %s69, %s72
      %p81 = scmp.eq.s32.totalorder %s15, 31
      %p82 = por %p80, %p81
      %p83 = scmp.ne.s32.totalorder %s72, %s73
      %p84 = scmp.eq.s32.totalorder %s15, 0
      %p85 = por %p83, %p84
      %p86 = scmp.ne.s32.totalorder %s72, %s73
      %p87 = scmp.eq.s32.totalorder %s16, 31
      %p88 = por %p86, %p87
      %p90 = scmp.ne.s32.totalorder %s73, %s89
      %p91 = scmp.eq.s32.totalorder %s16, 0
      %p92 = por %p90, %p91
      %s93 = ssub.s32 %s18, %s32
      %p94 = scmp.eq.s32.totalorder %s93, 0
      %s96 = sadd.s32 %s95, 1
      %s97 = scalar_select %p94, %s95, %s96
      %p100 = pneg %p94
      %p101 = scmp.eq.s32.totalorder %s10, 31
      %p102 = por %p100, %p101
      %p103 = scmp.ne.s32.totalorder %s95, %s98
      %p104 = scmp.eq.s32.totalorder %s10, 0
      %p105 = por %p103, %p104
      %p106 = scmp.ne.s32.totalorder %s95, %s98
      %p107 = scmp.eq.s32.totalorder %s15, 31
      %p108 = por %p106, %p107
      %p109 = scmp.ne.s32.totalorder %s98, %s99
      %p110 = scmp.eq.s32.totalorder %s15, 0
      %p111 = por %p109, %p110
      %p112 = scmp.ne.s32.totalorder %s98, %s99
      %p113 = scmp.eq.s32.totalorder %s16, 31
      %p114 = por %p112, %p113
      %p116 = scmp.ne.s32.totalorder %s99, %s115
      %p117 = scmp.eq.s32.totalorder %s16, 0
      %p118 = por %p116, %p117
      %s119 = ssub.s32 %s18, %s32
      %p120 = scmp.eq.s32.totalorder %s119, 0
      %s122 = sadd.s32 %s121, 1
      %s123 = scalar_select %p120, %s121, %s122
      %p126 = pneg %p120
      %p127 = scmp.eq.s32.totalorder %s10, 31
      %p128 = por %p126, %p127
      %p129 = scmp.ne.s32.totalorder %s121, %s124
      %p130 = scmp.eq.s32.totalorder %s10, 0
      %p131 = por %p129, %p130
      %p132 = scmp.ne.s32.totalorder %s121, %s124
      %p133 = scmp.eq.s32.totalorder %s15, 31
      %p134 = por %p132, %p133
      %p135 = scmp.ne.s32.totalorder %s124, %s125
      %p136 = scmp.eq.s32.totalorder %s15, 0
      %p137 = por %p135, %p136
      %p138 = scmp.ne.s32.totalorder %s124, %s125
      %p139 = scmp.eq.s32.totalorder %s16, 31
      %p140 = por %p138, %p139
      %p142 = scmp.ne.s32.totalorder %s125, %s141
      %p143 = scmp.eq.s32.totalorder %s16, 0
      %p144 = por %p142, %p143
      %s145 = ssub.s32 %s17, %s36
      %s146 = ssub.s32 %s18, %s32
      %s147 = sor.u32 %s145, %s146
      %p148 = scmp.eq.s32.totalorder %s147, 0
      %s150 = sadd.s32 %s149, 1
      %s151 = scalar_select %p148, %s149, %s150
      %p154 = pneg %p148
      %p155 = scmp.eq.s32.totalorder %s10, 31
      %p156 = por %p154, %p155
      %p157 = scmp.ne.s32.totalorder %s149, %s152
      %p158 = scmp.eq.s32.totalorder %s10, 0
      %p159 = por %p157, %p158
      %p160 = scmp.ne.s32.totalorder %s149, %s152
      %p161 = scmp.eq.s32.totalorder %s15, 31
      %p162 = por %p160, %p161
      %p163 = scmp.ne.s32.totalorder %s152, %s153
      %p164 = scmp.eq.s32.totalorder %s15, 0
      %p165 = por %p163, %p164
      %p166 = scmp.ne.s32.totalorder %s152, %s153
      %p167 = scmp.eq.s32.totalorder %s16, 31
      %p168 = por %p166, %p167
      %p170 = scmp.ne.s32.totalorder %s153, %s169
      %p171 = scmp.eq.s32.totalorder %s16, 0
      %p172 = por %p170, %p171
      %p173 = scmp.le.s32.totalorder 1, %s10
      %p174 = scmp.lt.s32.totalorder %s10, 33
      %p175 = pnand %p173, %p174
      %p176 = pneg %p175
      // Predicated region
      $region9: #{dncnet_forward.13} parent=5 // pred_check
        _
      $region10: #{dncnet_forward.13} parent=5 // pred_check_branch
        %178 = sbr.rel (%p175) target = $region12
      $region11: #{dncnet_forward.13} parent=5 // pred_region
        %s179 = ssub.s32 %s10, 1
      $region12: #{dncnet_forward.13} parent=5 // pred_fallthru
        _
      %p180 = scmp.lt.s32.totalorder %s10, 32
      // Predicated region
      $region13: #{dncnet_forward.13} parent=5 // pred_check
        %p181 = pneg %p180
      $region14: #{dncnet_forward.13} parent=5 // pred_check_branch
        %183 = sbr.rel (%p181) target = $region16
      $region15: #{dncnet_forward.13} parent=5 // pred_region
        // Predicated region
        $region17: #{dncnet_forward.13} parent=15 // pred_check
          %p184 = pneg %p51
        $region18: #{dncnet_forward.13} parent=15 // pred_check_branch
          %186 = sbr.rel (%p184) target = $region20
        $region19: #{dncnet_forward.13} parent=15 // pred_region
          %s187 = smul.u32 4, %s19
          %p188 = scmp.lt.s32.totalorder %s17, 0
          %s189 = scalar_select %p188, %s17, 0
          %p190 = scmp.lt.s32.totalorder %s187, 7
          %s191 = scalar_select %p190, %s187, 7
          %s192 = smul.addr %s189, 8
          %s193 = sadd.s32 %s191, %s192
          %s194 = smul.addr %s193, 4
          %s195 = scalar_lea.vmem %s0, %s194
          %s196 = smul.u32 4, %s19
        $region20: #{dncnet_forward.13} parent=15 // pred_fallthru
          _
        // Predicated region
        $region21: #{dncnet_forward.13} parent=15 // pred_check
          %p197 = pneg %p79
        $region22: #{dncnet_forward.13} parent=15 // pred_check_branch
          %199 = sbr.rel (%p197) target = $region24
        $region23: #{dncnet_forward.13} parent=15 // pred_region
          %s200 = sand.u32 %s69, 1
          %s201 = sand.u32 %s69, 1
          %s202 = smul.addr %s201, 512
          %s203 = scalar_lea.vmem [#allocation3], %s202
          %s204 = smul.u32 64, %s19
          %s205 = smul.u32 2, %s18
          %s206 = smul.addr %s204, 32
          %s207 = sadd.s32 %s205, %s206
          %s208 = smul.addr %s207, 4
          %s209 = scalar_lea.vmem %s1, %s208
          // Predicated region
          $region25: #{dncnet_forward.13} parent=23 // pred_check
            _
          $region26: #{dncnet_forward.13} parent=23 // pred_check_branch
            %211 = sbr.rel (0) target = $region28
          $region27: #{dncnet_forward.13} parent=23 // pred_region
            // Predicated region
            $region29: #{dncnet_forward.13} parent=27 // pred_check
              _
            $region30: #{dncnet_forward.13} parent=27 // pred_check_branch
              %213 = sbr.rel (0) target = $region32
            $region31: #{dncnet_forward.13} parent=27 // pred_region
              // Predicated region
              $region44: #{dncnet_forward.13} parent=31 // pred_check
                _
              $region45: #{dncnet_forward.13} parent=31 // pred_check_branch
                %354 = sbr.rel (0) target = $region47
              $region46: #{dncnet_forward.13} parent=31 // pred_region
                loop: start=0, step=1, limit=1
                $region48: #{dncnet_forward.13} parent=46 // loop_pre_header
                  _
                $region49: #{dncnet_forward.13} parent=46 // loop_header
                  %s356 = sphi 0, %s360
                  %p357 = scmp.ge.s32.totalorder %s356, 1
                  %s361 = sphi %s209, %s209
                  %s362 = sphi %s203, %s203
                $region50: #{dncnet_forward.13} parent=46 // loop_header_branch
                  %359 = sbr.rel (%p357) target = $region54
                $region51: #{dncnet_forward.13} parent=46 // loop_body
                  %v363 = vld [vmem:[%s361] sm:$0xff]
                  %364 = vst [vmem:[%s362] sm:$0xff] %v363
                  %v365 = vld [vmem:[%s361 + $0x80] sm:$0xff]
                  %366 = vst [vmem:[%s362 + $0x8] sm:$0xff] %v365
                  %v367 = vld [vmem:[%s361 + $0x100] sm:$0xff]
                  %368 = vst [vmem:[%s362 + $0x10] sm:$0xff] %v367
                  %v369 = vld [vmem:[%s361 + $0x180] sm:$0xff]
                  %370 = vst [vmem:[%s362 + $0x18] sm:$0xff] %v369
                  %v371 = vld [vmem:[%s361 + $0x200] sm:$0xff]
                  %372 = vst [vmem:[%s362 + $0x20] sm:$0xff] %v371
                  %v373 = vld [vmem:[%s361 + $0x280] sm:$0xff]
                  %374 = vst [vmem:[%s362 + $0x28] sm:$0xff] %v373
                  %v375 = vld [vmem:[%s361 + $0x300] sm:$0xff]
                  %376 = vst [vmem:[%s362 + $0x30] sm:$0xff] %v375
                  %v377 = vld [vmem:[%s361 + $0x380] sm:$0xff]
                  %378 = vst [vmem:[%s362 + $0x38] sm:$0xff] %v377
                  %v379 = vld [vmem:[%s361 + $0x400] sm:$0xff]
                  %380 = vst [vmem:[%s362 + $0x40] sm:$0xff] %v379
                  %v381 = vld [vmem:[%s361 + $0x480] sm:$0xff]
                  %382 = vst [vmem:[%s362 + $0x48] sm:$0xff] %v381
                  %v383 = vld [vmem:[%s361 + $0x500] sm:$0xff]
                  %384 = vst [vmem:[%s362 + $0x50] sm:$0xff] %v383
                  %v385 = vld [vmem:[%s361 + $0x580] sm:$0xff]
                  %386 = vst [vmem:[%s362 + $0x58] sm:$0xff] %v385
                  %v387 = vld [vmem:[%s361 + $0x600] sm:$0xff]
                  %388 = vst [vmem:[%s362 + $0x60] sm:$0xff] %v387
                  %v389 = vld [vmem:[%s361 + $0x680] sm:$0xff]
                  %390 = vst [vmem:[%s362 + $0x68] sm:$0xff] %v389
                  %v391 = vld [vmem:[%s361 + $0x700] sm:$0xff]
                  %392 = vst [vmem:[%s362 + $0x70] sm:$0xff] %v391
                  %v393 = vld [vmem:[%s361 + $0x780] sm:$0xff]
                  %394 = vst [vmem:[%s362 + $0x78] sm:$0xff] %v393
                  %v395 = vld [vmem:[%s361 + $0x800] sm:$0xff]
                  %396 = vst [vmem:[%s362 + $0x80] sm:$0xff] %v395
                  %v397 = vld [vmem:[%s361 + $0x880] sm:$0xff]
                  %398 = vst [vmem:[%s362 + $0x88] sm:$0xff] %v397
                  %v399 = vld [vmem:[%s361 + $0x900] sm:$0xff]
                  %400 = vst [vmem:[%s362 + $0x90] sm:$0xff] %v399
                  %v401 = vld [vmem:[%s361 + $0x980] sm:$0xff]
                  %402 = vst [vmem:[%s362 + $0x98] sm:$0xff] %v401
                  %v403 = vld [vmem:[%s361 + $0xa00] sm:$0xff]
                  %404 = vst [vmem:[%s362 + $0xa0] sm:$0xff] %v403
                  %v405 = vld [vmem:[%s361 + $0xa80] sm:$0xff]
                  %406 = vst [vmem:[%s362 + $0xa8] sm:$0xff] %v405
                  %v407 = vld [vmem:[%s361 + $0xb00] sm:$0xff]
                  %408 = vst [vmem:[%s362 + $0xb0] sm:$0xff] %v407
                  %v409 = vld [vmem:[%s361 + $0xb80] sm:$0xff]
                  %410 = vst [vmem:[%s362 + $0xb8] sm:$0xff] %v409
                  %v411 = vld [vmem:[%s361 + $0xc00] sm:$0xff]
                  %412 = vst [vmem:[%s362 + $0xc0] sm:$0xff] %v411
                  %v413 = vld [vmem:[%s361 + $0xc80] sm:$0xff]
                  %414 = vst [vmem:[%s362 + $0xc8] sm:$0xff] %v413
                  %v415 = vld [vmem:[%s361 + $0xd00] sm:$0xff]
                  %416 = vst [vmem:[%s362 + $0xd0] sm:$0xff] %v415
                  %v417 = vld [vmem:[%s361 + $0xd80] sm:$0xff]
                  %418 = vst [vmem:[%s362 + $0xd8] sm:$0xff] %v417
                  %v419 = vld [vmem:[%s361 + $0xe00] sm:$0xff]
                  %420 = vst [vmem:[%s362 + $0xe0] sm:$0xff] %v419
                  %v421 = vld [vmem:[%s361 + $0xe80] sm:$0xff]
                  %422 = vst [vmem:[%s362 + $0xe8] sm:$0xff] %v421
                  %v423 = vld [vmem:[%s361 + $0xf00] sm:$0xff]
                  %424 = vst [vmem:[%s362 + $0xf0] sm:$0xff] %v423
                  %v425 = vld [vmem:[%s361 + $0xf80] sm:$0xff]
                  %426 = vst [vmem:[%s362 + $0xf8] sm:$0xff] %v425
                  %v427 = vld [vmem:[%s361 + $0x1000] sm:$0xff]
                  %428 = vst [vmem:[%s362 + $0x100] sm:$0xff] %v427
                  %v429 = vld [vmem:[%s361 + $0x1080] sm:$0xff]
                  %430 = vst [vmem:[%s362 + $0x108] sm:$0xff] %v429
                  %v431 = vld [vmem:[%s361 + $0x1100] sm:$0xff]
                  %432 = vst [vmem:[%s362 + $0x110] sm:$0xff] %v431
                  %v433 = vld [vmem:[%s361 + $0x1180] sm:$0xff]
                  %434 = vst [vmem:[%s362 + $0x118] sm:$0xff] %v433
                  %v435 = vld [vmem:[%s361 + $0x1200] sm:$0xff]
                  %436 = vst [vmem:[%s362 + $0x120] sm:$0xff] %v435
                  %v437 = vld [vmem:[%s361 + $0x1280] sm:$0xff]
                  %438 = vst [vmem:[%s362 + $0x128] sm:$0xff] %v437
                  %v439 = vld [vmem:[%s361 + $0x1300] sm:$0xff]
                  %440 = vst [vmem:[%s362 + $0x130] sm:$0xff] %v439
                  %v441 = vld [vmem:[%s361 + $0x1380] sm:$0xff]
                  %442 = vst [vmem:[%s362 + $0x138] sm:$0xff] %v441
                  %v443 = vld [vmem:[%s361 + $0x1400] sm:$0xff]
                  %444 = vst [vmem:[%s362 + $0x140] sm:$0xff] %v443
                  %v445 = vld [vmem:[%s361 + $0x1480] sm:$0xff]
                  %446 = vst [vmem:[%s362 + $0x148] sm:$0xff] %v445
                  %v447 = vld [vmem:[%s361 + $0x1500] sm:$0xff]
                  %448 = vst [vmem:[%s362 + $0x150] sm:$0xff] %v447
                  %v449 = vld [vmem:[%s361 + $0x1580] sm:$0xff]
                  %450 = vst [vmem:[%s362 + $0x158] sm:$0xff] %v449
                  %v451 = vld [vmem:[%s361 + $0x1600] sm:$0xff]
                  %452 = vst [vmem:[%s362 + $0x160] sm:$0xff] %v451
                  %v453 = vld [vmem:[%s361 + $0x1680] sm:$0xff]
                  %454 = vst [vmem:[%s362 + $0x168] sm:$0xff] %v453
                  %v455 = vld [vmem:[%s361 + $0x1700] sm:$0xff]
                  %456 = vst [vmem:[%s362 + $0x170] sm:$0xff] %v455
                  %v457 = vld [vmem:[%s361 + $0x1780] sm:$0xff]
                  %458 = vst [vmem:[%s362 + $0x178] sm:$0xff] %v457
                  %v459 = vld [vmem:[%s361 + $0x1800] sm:$0xff]
                  %460 = vst [vmem:[%s362 + $0x180] sm:$0xff] %v459
                  %v461 = vld [vmem:[%s361 + $0x1880] sm:$0xff]
                  %462 = vst [vmem:[%s362 + $0x188] sm:$0xff] %v461
                  %v463 = vld [vmem:[%s361 + $0x1900] sm:$0xff]
                  %464 = vst [vmem:[%s362 + $0x190] sm:$0xff] %v463
                  %v465 = vld [vmem:[%s361 + $0x1980] sm:$0xff]
                  %466 = vst [vmem:[%s362 + $0x198] sm:$0xff] %v465
                  %v467 = vld [vmem:[%s361 + $0x1a00] sm:$0xff]
                  %468 = vst [vmem:[%s362 + $0x1a0] sm:$0xff] %v467
                  %v469 = vld [vmem:[%s361 + $0x1a80] sm:$0xff]
                  %470 = vst [vmem:[%s362 + $0x1a8] sm:$0xff] %v469
                  %v471 = vld [vmem:[%s361 + $0x1b00] sm:$0xff]
                  %472 = vst [vmem:[%s362 + $0x1b0] sm:$0xff] %v471
                  %v473 = vld [vmem:[%s361 + $0x1b80] sm:$0xff]
                  %474 = vst [vmem:[%s362 + $0x1b8] sm:$0xff] %v473
                  %v475 = vld [vmem:[%s361 + $0x1c00] sm:$0xff]
                  %476 = vst [vmem:[%s362 + $0x1c0] sm:$0xff] %v475
                  %v477 = vld [vmem:[%s361 + $0x1c80] sm:$0xff]
                  %478 = vst [vmem:[%s362 + $0x1c8] sm:$0xff] %v477
                  %v479 = vld [vmem:[%s361 + $0x1d00] sm:$0xff]
                  %480 = vst [vmem:[%s362 + $0x1d0] sm:$0xff] %v479
                  %v481 = vld [vmem:[%s361 + $0x1d80] sm:$0xff]
                  %482 = vst [vmem:[%s362 + $0x1d8] sm:$0xff] %v481
                  %v483 = vld [vmem:[%s361 + $0x1e00] sm:$0xff]
                  %484 = vst [vmem:[%s362 + $0x1e0] sm:$0xff] %v483
                  %v485 = vld [vmem:[%s361 + $0x1e80] sm:$0xff]
                  %486 = vst [vmem:[%s362 + $0x1e8] sm:$0xff] %v485
                  %v487 = vld [vmem:[%s361 + $0x1f00] sm:$0xff]
                  %488 = vst [vmem:[%s362 + $0x1f0] sm:$0xff] %v487
                  %v489 = vld [vmem:[%s361 + $0x1f80] sm:$0xff]
                  %490 = vst [vmem:[%s362 + $0x1f8] sm:$0xff] %v489
                $region52: #{dncnet_forward.13} parent=46 // loop_footer
                  %s360 = sadd.s32 1, %s356
                $region53: #{dncnet_forward.13} parent=46 // loop_footer_branch
                  %355 = sbr.rel target = $region49
                $region54: #{dncnet_forward.13} parent=46 // loop_exit
                  _
              $region47: #{dncnet_forward.13} parent=31 // pred_fallthru
                _
              // Predicated region
              $region55: #{dncnet_forward.13} parent=31 // pred_check
                _
              $region56: #{dncnet_forward.13} parent=31 // pred_check_branch
                %492 = sbr.rel target = $region58
              $region57: #{dncnet_forward.13} parent=31 // pred_region
                _
              $region58: #{dncnet_forward.13} parent=31 // pred_fallthru
                _
            $region32: #{dncnet_forward.13} parent=27 // pred_fallthru
              _
            // Predicated region
            $region33: #{dncnet_forward.13} parent=27 // pred_check
              _
            $region34: #{dncnet_forward.13} parent=27 // pred_check_branch
              %215 = sbr.rel target = $region36
            $region35: #{dncnet_forward.13} parent=27 // pred_region
              loop: start=0, step=1, limit=1
              $region37: #{dncnet_forward.13} parent=35 // loop_pre_header
                _
              $region38: #{dncnet_forward.13} parent=35 // loop_header
                %s218 = sphi 0, %s222
                %p219 = scmp.ge.s32.totalorder %s218, 1
                %s223 = sphi %s209, %s209
                %s224 = sphi %s203, %s203
              $region39: #{dncnet_forward.13} parent=35 // loop_header_branch
                %221 = sbr.rel (%p219) target = $region43
              $region40: #{dncnet_forward.13} parent=35 // loop_body
                %v225 = vld [vmem:[%s223] sm:$0xff]
                %226 = vst [vmem:[%s224] sm:$0xff] %v225
                %v227 = vld [vmem:[%s223 + $0x80] sm:$0xff]
                %228 = vst [vmem:[%s224 + $0x8] sm:$0xff] %v227
                %v229 = vld [vmem:[%s223 + $0x100] sm:$0xff]
                %230 = vst [vmem:[%s224 + $0x10] sm:$0xff] %v229
                %v231 = vld [vmem:[%s223 + $0x180] sm:$0xff]
                %232 = vst [vmem:[%s224 + $0x18] sm:$0xff] %v231
                %v233 = vld [vmem:[%s223 + $0x200] sm:$0xff]
                %234 = vst [vmem:[%s224 + $0x20] sm:$0xff] %v233
                %v235 = vld [vmem:[%s223 + $0x280] sm:$0xff]
                %236 = vst [vmem:[%s224 + $0x28] sm:$0xff] %v235
                %v237 = vld [vmem:[%s223 + $0x300] sm:$0xff]
                %238 = vst [vmem:[%s224 + $0x30] sm:$0xff] %v237
                %v239 = vld [vmem:[%s223 + $0x380] sm:$0xff]
                %240 = vst [vmem:[%s224 + $0x38] sm:$0xff] %v239
                %v241 = vld [vmem:[%s223 + $0x400] sm:$0xff]
                %242 = vst [vmem:[%s224 + $0x40] sm:$0xff] %v241
                %v243 = vld [vmem:[%s223 + $0x480] sm:$0xff]
                %244 = vst [vmem:[%s224 + $0x48] sm:$0xff] %v243
                %v245 = vld [vmem:[%s223 + $0x500] sm:$0xff]
                %246 = vst [vmem:[%s224 + $0x50] sm:$0xff] %v245
                %v247 = vld [vmem:[%s223 + $0x580] sm:$0xff]
                %248 = vst [vmem:[%s224 + $0x58] sm:$0xff] %v247
                %v249 = vld [vmem:[%s223 + $0x600] sm:$0xff]
                %250 = vst [vmem:[%s224 + $0x60] sm:$0xff] %v249
                %v251 = vld [vmem:[%s223 + $0x680] sm:$0xff]
                %252 = vst [vmem:[%s224 + $0x68] sm:$0xff] %v251
                %v253 = vld [vmem:[%s223 + $0x700] sm:$0xff]
                %254 = vst [vmem:[%s224 + $0x70] sm:$0xff] %v253
                %v255 = vld [vmem:[%s223 + $0x780] sm:$0xff]
                %256 = vst [vmem:[%s224 + $0x78] sm:$0xff] %v255
                %v257 = vld [vmem:[%s223 + $0x800] sm:$0xff]
                %258 = vst [vmem:[%s224 + $0x80] sm:$0xff] %v257
                %v259 = vld [vmem:[%s223 + $0x880] sm:$0xff]
                %260 = vst [vmem:[%s224 + $0x88] sm:$0xff] %v259
                %v261 = vld [vmem:[%s223 + $0x900] sm:$0xff]
                %262 = vst [vmem:[%s224 + $0x90] sm:$0xff] %v261
                %v263 = vld [vmem:[%s223 + $0x980] sm:$0xff]
                %264 = vst [vmem:[%s224 + $0x98] sm:$0xff] %v263
                %v265 = vld [vmem:[%s223 + $0xa00] sm:$0xff]
                %266 = vst [vmem:[%s224 + $0xa0] sm:$0xff] %v265
                %v267 = vld [vmem:[%s223 + $0xa80] sm:$0xff]
                %268 = vst [vmem:[%s224 + $0xa8] sm:$0xff] %v267
                %v269 = vld [vmem:[%s223 + $0xb00] sm:$0xff]
                %270 = vst [vmem:[%s224 + $0xb0] sm:$0xff] %v269
                %v271 = vld [vmem:[%s223 + $0xb80] sm:$0xff]
                %272 = vst [vmem:[%s224 + $0xb8] sm:$0xff] %v271
                %v273 = vld [vmem:[%s223 + $0xc00] sm:$0xff]
                %274 = vst [vmem:[%s224 + $0xc0] sm:$0xff] %v273
                %v275 = vld [vmem:[%s223 + $0xc80] sm:$0xff]
                %276 = vst [vmem:[%s224 + $0xc8] sm:$0xff] %v275
                %v277 = vld [vmem:[%s223 + $0xd00] sm:$0xff]
                %278 = vst [vmem:[%s224 + $0xd0] sm:$0xff] %v277
                %v279 = vld [vmem:[%s223 + $0xd80] sm:$0xff]
                %280 = vst [vmem:[%s224 + $0xd8] sm:$0xff] %v279
                %v281 = vld [vmem:[%s223 + $0xe00] sm:$0xff]
                %282 = vst [vmem:[%s224 + $0xe0] sm:$0xff] %v281
                %v283 = vld [vmem:[%s223 + $0xe80] sm:$0xff]
                %284 = vst [vmem:[%s224 + $0xe8] sm:$0xff] %v283
                %v285 = vld [vmem:[%s223 + $0xf00] sm:$0xff]
                %286 = vst [vmem:[%s224 + $0xf0] sm:$0xff] %v285
                %v287 = vld [vmem:[%s223 + $0xf80] sm:$0xff]
                %288 = vst [vmem:[%s224 + $0xf8] sm:$0xff] %v287
                %v289 = vld [vmem:[%s223 + $0x1000] sm:$0xff]
                %290 = vst [vmem:[%s224 + $0x100] sm:$0xff] %v289
                %v291 = vld [vmem:[%s223 + $0x1080] sm:$0xff]
                %292 = vst [vmem:[%s224 + $0x108] sm:$0xff] %v291
                %v293 = vld [vmem:[%s223 + $0x1100] sm:$0xff]
                %294 = vst [vmem:[%s224 + $0x110] sm:$0xff] %v293
                %v295 = vld [vmem:[%s223 + $0x1180] sm:$0xff]
                %296 = vst [vmem:[%s224 + $0x118] sm:$0xff] %v295
                %v297 = vld [vmem:[%s223 + $0x1200] sm:$0xff]
                %298 = vst [vmem:[%s224 + $0x120] sm:$0xff] %v297
                %v299 = vld [vmem:[%s223 + $0x1280] sm:$0xff]
                %300 = vst [vmem:[%s224 + $0x128] sm:$0xff] %v299
                %v301 = vld [vmem:[%s223 + $0x1300] sm:$0xff]
                %302 = vst [vmem:[%s224 + $0x130] sm:$0xff] %v301
                %v303 = vld [vmem:[%s223 + $0x1380] sm:$0xff]
                %304 = vst [vmem:[%s224 + $0x138] sm:$0xff] %v303
                %v305 = vld [vmem:[%s223 + $0x1400] sm:$0xff]
                %306 = vst [vmem:[%s224 + $0x140] sm:$0xff] %v305
                %v307 = vld [vmem:[%s223 + $0x1480] sm:$0xff]
                %308 = vst [vmem:[%s224 + $0x148] sm:$0xff] %v307
                %v309 = vld [vmem:[%s223 + $0x1500] sm:$0xff]
                %310 = vst [vmem:[%s224 + $0x150] sm:$0xff] %v309
                %v311 = vld [vmem:[%s223 + $0x1580] sm:$0xff]
                %312 = vst [vmem:[%s224 + $0x158] sm:$0xff] %v311
                %v313 = vld [vmem:[%s223 + $0x1600] sm:$0xff]
                %314 = vst [vmem:[%s224 + $0x160] sm:$0xff] %v313
                %v315 = vld [vmem:[%s223 + $0x1680] sm:$0xff]
                %316 = vst [vmem:[%s224 + $0x168] sm:$0xff] %v315
                %v317 = vld [vmem:[%s223 + $0x1700] sm:$0xff]
                %318 = vst [vmem:[%s224 + $0x170] sm:$0xff] %v317
                %v319 = vld [vmem:[%s223 + $0x1780] sm:$0xff]
                %320 = vst [vmem:[%s224 + $0x178] sm:$0xff] %v319
                %v321 = vld [vmem:[%s223 + $0x1800] sm:$0xff]
                %322 = vst [vmem:[%s224 + $0x180] sm:$0xff] %v321
                %v323 = vld [vmem:[%s223 + $0x1880] sm:$0xff]
                %324 = vst [vmem:[%s224 + $0x188] sm:$0xff] %v323
                %v325 = vld [vmem:[%s223 + $0x1900] sm:$0xff]
                %326 = vst [vmem:[%s224 + $0x190] sm:$0xff] %v325
                %v327 = vld [vmem:[%s223 + $0x1980] sm:$0xff]
                %328 = vst [vmem:[%s224 + $0x198] sm:$0xff] %v327
                %v329 = vld [vmem:[%s223 + $0x1a00] sm:$0xff]
                %330 = vst [vmem:[%s224 + $0x1a0] sm:$0xff] %v329
                %v331 = vld [vmem:[%s223 + $0x1a80] sm:$0xff]
                %332 = vst [vmem:[%s224 + $0x1a8] sm:$0xff] %v331
                %v333 = vld [vmem:[%s223 + $0x1b00] sm:$0xff]
                %334 = vst [vmem:[%s224 + $0x1b0] sm:$0xff] %v333
                %v335 = vld [vmem:[%s223 + $0x1b80] sm:$0xff]
                %336 = vst [vmem:[%s224 + $0x1b8] sm:$0xff] %v335
                %v337 = vld [vmem:[%s223 + $0x1c00] sm:$0xff]
                %338 = vst [vmem:[%s224 + $0x1c0] sm:$0xff] %v337
                %v339 = vld [vmem:[%s223 + $0x1c80] sm:$0xff]
                %340 = vst [vmem:[%s224 + $0x1c8] sm:$0xff] %v339
                %v341 = vld [vmem:[%s223 + $0x1d00] sm:$0xff]
                %342 = vst [vmem:[%s224 + $0x1d0] sm:$0xff] %v341
                %v343 = vld [vmem:[%s223 + $0x1d80] sm:$0xff]
                %344 = vst [vmem:[%s224 + $0x1d8] sm:$0xff] %v343
                %v345 = vld [vmem:[%s223 + $0x1e00] sm:$0xff]
                %346 = vst [vmem:[%s224 + $0x1e0] sm:$0xff] %v345
                %v347 = vld [vmem:[%s223 + $0x1e80] sm:$0xff]
                %348 = vst [vmem:[%s224 + $0x1e8] sm:$0xff] %v347
                %v349 = vld [vmem:[%s223 + $0x1f00] sm:$0xff]
                %350 = vst [vmem:[%s224 + $0x1f0] sm:$0xff] %v349
                %v351 = vld [vmem:[%s223 + $0x1f80] sm:$0xff]
                %352 = vst [vmem:[%s224 + $0x1f8] sm:$0xff] %v351
              $region41: #{dncnet_forward.13} parent=35 // loop_footer
                %s222 = sadd.s32 1, %s218
              $region42: #{dncnet_forward.13} parent=35 // loop_footer_branch
                %217 = sbr.rel target = $region38
              $region43: #{dncnet_forward.13} parent=35 // loop_exit
                _
            $region36: #{dncnet_forward.13} parent=27 // pred_fallthru
              _
          $region28: #{dncnet_forward.13} parent=23 // pred_fallthru
            _
          %493 = vnop
        $region24: #{dncnet_forward.13} parent=15 // pred_fallthru
          _
        // Predicated region
        $region59: #{dncnet_forward.13} parent=15 // pred_check
          %p494 = pneg %p105
        $region60: #{dncnet_forward.13} parent=15 // pred_check_branch
          %496 = sbr.rel (%p494) target = $region62
        $region61: #{dncnet_forward.13} parent=15 // pred_region
          %s497 = smul.u32 2, %s18
          %p498 = scmp.lt.s32.totalorder %s497, 31
          %s499 = scalar_select %p498, %s497, 31
          %s500 = scalar_lea.vmem %s2, %s499
          %s501 = smul.u32 2, %s18
        $region62: #{dncnet_forward.13} parent=15 // pred_fallthru
          _
        // Predicated region
        $region63: #{dncnet_forward.13} parent=15 // pred_check
          %p502 = pneg %p131
        $region64: #{dncnet_forward.13} parent=15 // pred_check_branch
          %504 = sbr.rel (%p502) target = $region66
        $region65: #{dncnet_forward.13} parent=15 // pred_region
          %s505 = smul.u32 2, %s18
          %p506 = scmp.lt.s32.totalorder %s505, 31
          %s507 = scalar_select %p506, %s505, 31
          %s508 = scalar_lea.vmem %s3, %s507
          %s509 = smul.u32 2, %s18
        $region66: #{dncnet_forward.13} parent=15 // pred_fallthru
          _
      $region16: #{dncnet_forward.13} parent=5 // pred_fallthru
        _
      %p510 = scmp.le.s32.totalorder 1, %s10
      %p511 = scmp.lt.s32.totalorder %s10, 33
      %p512 = pnand %p510, %p511
      %p513 = pneg %p512
      // Predicated region
      $region67: #{dncnet_forward.13} parent=5 // pred_check
        _
      $region68: #{dncnet_forward.13} parent=5 // pred_check_branch
        %515 = sbr.rel (%p512) target = $region70
      $region69: #{dncnet_forward.13} parent=5 // pred_region
        %s516 = ssub.s32 %s10, 1
        %s517 = sand.u32 %s72, 1
        %s518 = sand.u32 %s72, 1
        %s519 = smul.addr %s518, 512
        %s520 = scalar_lea.vmem [#allocation3], %s519
        // Predicated region
        $region71: #{dncnet_forward.13} parent=69 // pred_check
          %p521 = pneg %p85
        $region72: #{dncnet_forward.13} parent=69 // pred_check_branch
          %523 = sbr.rel (%p521) target = $region74
        $region73: #{dncnet_forward.13} parent=69 // pred_region
          _
        $region74: #{dncnet_forward.13} parent=69 // pred_fallthru
          _
        %s524 = smul.u32 4, %s22
        %p525 = scmp.lt.s32.totalorder %s20, 0
        %s526 = scalar_select %p525, %s20, 0
        %p527 = scmp.lt.s32.totalorder %s524, 7
        %s528 = scalar_select %p527, %s524, 7
        %s529 = smul.addr %s526, 8
        %s530 = sadd.s32 %s528, %s529
        %s531 = smul.addr %s530, 4
        %s532 = scalar_lea.vmem %s0, %s531
        %p533 = pneg %p57
        %p534 = pneg %p54
        %s535 = sand.u32 %s72, 1
        %s536 = sand.u32 %s72, 1
        %s537 = smul.addr %s536, 512
        %s538 = scalar_lea.vmem [#allocation3], %s537
        %p539 = pneg %p85
        %p540 = pneg %p82
        %s541 = smul.u32 2, %s21
        %p542 = scmp.lt.s32.totalorder %s541, 31
        %s543 = scalar_select %p542, %s541, 31
        %s544 = scalar_lea.vmem %s2, %s543
        %p545 = pneg %p111
        %p546 = pneg %p108
        %s547 = smul.u32 2, %s21
        %p548 = scmp.lt.s32.totalorder %s547, 31
        %s549 = scalar_select %p548, %s547, 31
        %s550 = scalar_lea.vmem %s3, %s549
        %p551 = pneg %p137
        %p552 = pneg %p134
        %p553 = pneg %p165
        %p554 = pneg %p162
        %s555 = smul.u32 2, %s21
        %p556 = scmp.lt.s32.totalorder %s20, 0
        %s557 = scalar_select %p556, %s20, 0
        %p558 = scmp.lt.s32.totalorder %s555, 31
        %s559 = scalar_select %p558, %s555, 31
        %s560 = smul.addr %s557, 32
        %s561 = sadd.s32 %s559, %s560
        %s562 = smul.addr %s561, 4
        %s563 = scalar_lea.vmem %s4, %s562
        %s564 = smul.u32 4, %s22
        %p565 = scmp.lt.s32.totalorder %s20, 0
        %s566 = scalar_select %p565, %s20, 0
        %p567 = scmp.lt.s32.totalorder %s564, 7
        %s568 = scalar_select %p567, %s564, 7
        %s569 = smul.addr %s566, 8
        %s570 = sadd.s32 %s568, %s569
        %s571 = smul.addr %s570, 4
        %s572 = scalar_lea.vmem %s0, %s571
        %s573 = smul.u32 4, %s22
        %s574 = smul.u32 64, %s22
        %s575 = smul.u32 2, %s21
        %s576 = smul.u32 2, %s21
        %p577 = scmp.lt.s32.totalorder %s576, 31
        %s578 = scalar_select %p577, %s576, 31
        %s579 = scalar_lea.vmem %s2, %s578
        %s580 = smul.u32 2, %s21
        %s581 = smul.u32 2, %s21
        %p582 = scmp.lt.s32.totalorder %s581, 31
        %s583 = scalar_select %p582, %s581, 31
        %s584 = scalar_lea.vmem %s3, %s583
        %s585 = smul.u32 2, %s21
        %s586 = smul.u32 2, %s21
        %p587 = scmp.lt.s32.totalorder %s20, 0
        %s588 = scalar_select %p587, %s20, 0
        %p589 = scmp.lt.s32.totalorder %s586, 31
        %s590 = scalar_select %p589, %s586, 31
        %s591 = smul.addr %s588, 32
        %s592 = sadd.s32 %s590, %s591
        %s593 = smul.addr %s592, 4
        %s594 = scalar_lea.vmem %s4, %s593
        %s595 = smul.u32 2, %s21
        %p596 = scmp.eq.s32.totalorder %s22, 0
        // Predicated region
        $region75: #{dncnet_forward.13} parent=69 // pred_check
          %p597 = pneg %p596
        $region76: #{dncnet_forward.13} parent=69 // pred_check_branch
          %599 = sbr.rel (%p597) target = $region78
        $region77: #{dncnet_forward.13} parent=69 // pred_region
          %600 = vst [vmem:[#allocation2] sm:$0xff] 0.0
          %601 = vst [vmem:[#allocation2 + $0x8] sm:$0xff] 0.0
        $region78: #{dncnet_forward.13} parent=69 // pred_fallthru
          _
        %v602 = vld [vmem:[#allocation2] sm:$0xff]
        %v603 = vld [vmem:[#allocation2 + $0x8] sm:$0xff]
        %v604 = vld [vmem:[%s572] sm:$0xff]
        %v605 = vld [vmem:[%s572 + $0x8] sm:$0xff]
        %v606 = vld [vmem:[%s520] sm:$0xff]
        %v607 = vld [vmem:[%s520 + $0x8] sm:$0xff]
        %v608 = vld [vmem:[%s520 + $0x10] sm:$0xff]
        %v609 = vld [vmem:[%s520 + $0x18] sm:$0xff]
        %v610 = vld [vmem:[%s520 + $0x20] sm:$0xff]
        %v611 = vld [vmem:[%s520 + $0x28] sm:$0xff]
        %v612 = vld [vmem:[%s520 + $0x30] sm:$0xff]
        %v613 = vld [vmem:[%s520 + $0x38] sm:$0xff]
        %v614 = vld [vmem:[%s520 + $0x40] sm:$0xff]
        %v615 = vld [vmem:[%s520 + $0x48] sm:$0xff]
        %v616 = vld [vmem:[%s520 + $0x50] sm:$0xff]
        %v617 = vld [vmem:[%s520 + $0x58] sm:$0xff]
        %v618 = vld [vmem:[%s520 + $0x60] sm:$0xff]
        %v619 = vld [vmem:[%s520 + $0x68] sm:$0xff]
        %v620 = vld [vmem:[%s520 + $0x70] sm:$0xff]
        %v621 = vld [vmem:[%s520 + $0x78] sm:$0xff]
        %v622 = vld [vmem:[%s520 + $0x80] sm:$0xff]
        %v623 = vld [vmem:[%s520 + $0x88] sm:$0xff]
        %v624 = vld [vmem:[%s520 + $0x90] sm:$0xff]
        %v625 = vld [vmem:[%s520 + $0x98] sm:$0xff]
        %v626 = vld [vmem:[%s520 + $0xa0] sm:$0xff]
        %v627 = vld [vmem:[%s520 + $0xa8] sm:$0xff]
        %v628 = vld [vmem:[%s520 + $0xb0] sm:$0xff]
        %v629 = vld [vmem:[%s520 + $0xb8] sm:$0xff]
        %v630 = vld [vmem:[%s520 + $0xc0] sm:$0xff]
        %v631 = vld [vmem:[%s520 + $0xc8] sm:$0xff]
        %v632 = vld [vmem:[%s520 + $0xd0] sm:$0xff]
        %v633 = vld [vmem:[%s520 + $0xd8] sm:$0xff]
        %v634 = vld [vmem:[%s520 + $0xe0] sm:$0xff]
        %v635 = vld [vmem:[%s520 + $0xe8] sm:$0xff]
        %v636 = vld [vmem:[%s520 + $0xf0] sm:$0xff]
        %v637 = vld [vmem:[%s520 + $0xf8] sm:$0xff]
        %v638 = vld [vmem:[%s520 + $0x100] sm:$0xff]
        %v639 = vld [vmem:[%s520 + $0x108] sm:$0xff]
        %v640 = vld [vmem:[%s520 + $0x110] sm:$0xff]
        %v641 = vld [vmem:[%s520 + $0x118] sm:$0xff]
        %v642 = vld [vmem:[%s520 + $0x120] sm:$0xff]
        %v643 = vld [vmem:[%s520 + $0x128] sm:$0xff]
        %v644 = vld [vmem:[%s520 + $0x130] sm:$0xff]
        %v645 = vld [vmem:[%s520 + $0x138] sm:$0xff]
        %v646 = vld [vmem:[%s520 + $0x140] sm:$0xff]
        %v647 = vld [vmem:[%s520 + $0x148] sm:$0xff]
        %v648 = vld [vmem:[%s520 + $0x150] sm:$0xff]
        %v649 = vld [vmem:[%s520 + $0x158] sm:$0xff]
        %v650 = vld [vmem:[%s520 + $0x160] sm:$0xff]
        %v651 = vld [vmem:[%s520 + $0x168] sm:$0xff]
        %v652 = vld [vmem:[%s520 + $0x170] sm:$0xff]
        %v653 = vld [vmem:[%s520 + $0x178] sm:$0xff]
        %v654 = vld [vmem:[%s520 + $0x180] sm:$0xff]
        %v655 = vld [vmem:[%s520 + $0x188] sm:$0xff]
        %v656 = vld [vmem:[%s520 + $0x190] sm:$0xff]
        %v657 = vld [vmem:[%s520 + $0x198] sm:$0xff]
        %v658 = vld [vmem:[%s520 + $0x1a0] sm:$0xff]
        %v659 = vld [vmem:[%s520 + $0x1a8] sm:$0xff]
        %v660 = vld [vmem:[%s520 + $0x1b0] sm:$0xff]
        %v661 = vld [vmem:[%s520 + $0x1b8] sm:$0xff]
        %v662 = vld [vmem:[%s520 + $0x1c0] sm:$0xff]
        %v663 = vld [vmem:[%s520 + $0x1c8] sm:$0xff]
        %v664 = vld [vmem:[%s520 + $0x1d0] sm:$0xff]
        %v665 = vld [vmem:[%s520 + $0x1d8] sm:$0xff]
        %v666 = vld [vmem:[%s520 + $0x1e0] sm:$0xff]
        %v667 = vld [vmem:[%s520 + $0x1e8] sm:$0xff]
        %v668 = vld [vmem:[%s520 + $0x1f0] sm:$0xff]
        %v669 = vld [vmem:[%s520 + $0x1f8] sm:$0xff]
        %v672 = vunpack.c.l.b16 %v604
        %v673 = vunpack.c.h.b16 %v604
        %v674 = vunpack.c.l.b16 %v605
        %v675 = vunpack.c.h.b16 %v605
        %v676 = vpack.c.b16 %v672, %v672
        %v677 = vpack.c.b16 %v673, %v673
        %v678 = vpack.c.b16 %v674, %v674
        %v679 = vpack.c.b16 %v675, %v675
        %v748 = vunpack.c.l.b16 %v606
        %v749 = vunpack.c.h.b16 %v606
        %v750 = vunpack.c.l.b16 %v607
        %v751 = vunpack.c.h.b16 %v607
        %v752 = vunpack.c.l.b16 %v608
        %v753 = vunpack.c.h.b16 %v608
        %v754 = vunpack.c.l.b16 %v609
        %v755 = vunpack.c.h.b16 %v609
        %v756 = vunpack.c.l.b16 %v610
        %v757 = vunpack.c.h.b16 %v610
        %v758 = vunpack.c.l.b16 %v611
        %v759 = vunpack.c.h.b16 %v611
        %v760 = vunpack.c.l.b16 %v612
        %v761 = vunpack.c.h.b16 %v612
        %v762 = vunpack.c.l.b16 %v613
        %v763 = vunpack.c.h.b16 %v613
        %v764 = vunpack.c.l.b16 %v614
        %v765 = vunpack.c.h.b16 %v614
        %v766 = vunpack.c.l.b16 %v615
        %v767 = vunpack.c.h.b16 %v615
        %v768 = vunpack.c.l.b16 %v616
        %v769 = vunpack.c.h.b16 %v616
        %v770 = vunpack.c.l.b16 %v617
        %v771 = vunpack.c.h.b16 %v617
        %v772 = vunpack.c.l.b16 %v618
        %v773 = vunpack.c.h.b16 %v618
        %v774 = vunpack.c.l.b16 %v619
        %v775 = vunpack.c.h.b16 %v619
        %v776 = vunpack.c.l.b16 %v620
        %v777 = vunpack.c.h.b16 %v620
        %v778 = vunpack.c.l.b16 %v621
        %v779 = vunpack.c.h.b16 %v621
        %v780 = vunpack.c.l.b16 %v622
        %v781 = vunpack.c.h.b16 %v622
        %v782 = vunpack.c.l.b16 %v623
        %v783 = vunpack.c.h.b16 %v623
        %v784 = vunpack.c.l.b16 %v624
        %v785 = vunpack.c.h.b16 %v624
        %v786 = vunpack.c.l.b16 %v625
        %v787 = vunpack.c.h.b16 %v625
        %v788 = vunpack.c.l.b16 %v626
        %v789 = vunpack.c.h.b16 %v626
        %v790 = vunpack.c.l.b16 %v627
        %v791 = vunpack.c.h.b16 %v627
        %v792 = vunpack.c.l.b16 %v628
        %v793 = vunpack.c.h.b16 %v628
        %v794 = vunpack.c.l.b16 %v629
        %v795 = vunpack.c.h.b16 %v629
        %v796 = vunpack.c.l.b16 %v630
        %v797 = vunpack.c.h.b16 %v630
        %v798 = vunpack.c.l.b16 %v631
        %v799 = vunpack.c.h.b16 %v631
        %v800 = vunpack.c.l.b16 %v632
        %v801 = vunpack.c.h.b16 %v632
        %v802 = vunpack.c.l.b16 %v633
        %v803 = vunpack.c.h.b16 %v633
        %v804 = vunpack.c.l.b16 %v634
        %v805 = vunpack.c.h.b16 %v634
        %v806 = vunpack.c.l.b16 %v635
        %v807 = vunpack.c.h.b16 %v635
        %v808 = vunpack.c.l.b16 %v636
        %v809 = vunpack.c.h.b16 %v636
        %v810 = vunpack.c.l.b16 %v637
        %v811 = vunpack.c.h.b16 %v637
        %v812 = vunpack.c.l.b16 %v638
        %v813 = vunpack.c.h.b16 %v638
        %v814 = vunpack.c.l.b16 %v639
        %v815 = vunpack.c.h.b16 %v639
        %v816 = vunpack.c.l.b16 %v640
        %v817 = vunpack.c.h.b16 %v640
        %v818 = vunpack.c.l.b16 %v641
        %v819 = vunpack.c.h.b16 %v641
        %v820 = vunpack.c.l.b16 %v642
        %v821 = vunpack.c.h.b16 %v642
        %v822 = vunpack.c.l.b16 %v643
        %v823 = vunpack.c.h.b16 %v643
        %v824 = vunpack.c.l.b16 %v644
        %v825 = vunpack.c.h.b16 %v644
        %v826 = vunpack.c.l.b16 %v645
        %v827 = vunpack.c.h.b16 %v645
        %v828 = vunpack.c.l.b16 %v646
        %v829 = vunpack.c.h.b16 %v646
        %v830 = vunpack.c.l.b16 %v647
        %v831 = vunpack.c.h.b16 %v647
        %v832 = vunpack.c.l.b16 %v648
        %v833 = vunpack.c.h.b16 %v648
        %v834 = vunpack.c.l.b16 %v649
        %v835 = vunpack.c.h.b16 %v649
        %v836 = vunpack.c.l.b16 %v650
        %v837 = vunpack.c.h.b16 %v650
        %v838 = vunpack.c.l.b16 %v651
        %v839 = vunpack.c.h.b16 %v651
        %v840 = vunpack.c.l.b16 %v652
        %v841 = vunpack.c.h.b16 %v652
        %v842 = vunpack.c.l.b16 %v653
        %v843 = vunpack.c.h.b16 %v653
        %v844 = vunpack.c.l.b16 %v654
        %v845 = vunpack.c.h.b16 %v654
        %v846 = vunpack.c.l.b16 %v655
        %v847 = vunpack.c.h.b16 %v655
        %v848 = vunpack.c.l.b16 %v656
        %v849 = vunpack.c.h.b16 %v656
        %v850 = vunpack.c.l.b16 %v657
        %v851 = vunpack.c.h.b16 %v657
        %v852 = vunpack.c.l.b16 %v658
        %v853 = vunpack.c.h.b16 %v658
        %v854 = vunpack.c.l.b16 %v659
        %v855 = vunpack.c.h.b16 %v659
        %v856 = vunpack.c.l.b16 %v660
        %v857 = vunpack.c.h.b16 %v660
        %v858 = vunpack.c.l.b16 %v661
        %v859 = vunpack.c.h.b16 %v661
        %v860 = vunpack.c.l.b16 %v662
        %v861 = vunpack.c.h.b16 %v662
        %v862 = vunpack.c.l.b16 %v663
        %v863 = vunpack.c.h.b16 %v663
        %v864 = vunpack.c.l.b16 %v664
        %v865 = vunpack.c.h.b16 %v664
        %v866 = vunpack.c.l.b16 %v665
        %v867 = vunpack.c.h.b16 %v665
        %v868 = vunpack.c.l.b16 %v666
        %v869 = vunpack.c.h.b16 %v666
        %v870 = vunpack.c.l.b16 %v667
        %v871 = vunpack.c.h.b16 %v667
        %v872 = vunpack.c.l.b16 %v668
        %v873 = vunpack.c.h.b16 %v668
        %v874 = vunpack.c.l.b16 %v669
        %v875 = vunpack.c.h.b16 %v669
        %v876 = vpack.c.b16 %v750, %v748
        %v877 = vpack.c.b16 %v751, %v749
        %v878 = vpack.c.b16 %v754, %v752
        %v879 = vpack.c.b16 %v755, %v753
        %v880 = vpack.c.b16 %v758, %v756
        %v881 = vpack.c.b16 %v759, %v757
        %v882 = vpack.c.b16 %v762, %v760
        %v883 = vpack.c.b16 %v763, %v761
        %v884 = vpack.c.b16 %v766, %v764
        %v885 = vpack.c.b16 %v767, %v765
        %v886 = vpack.c.b16 %v770, %v768
        %v887 = vpack.c.b16 %v771, %v769
        %v888 = vpack.c.b16 %v774, %v772
        %v889 = vpack.c.b16 %v775, %v773
        %v890 = vpack.c.b16 %v778, %v776
        %v891 = vpack.c.b16 %v779, %v777
        %v892 = vpack.c.b16 %v782, %v780
        %v893 = vpack.c.b16 %v783, %v781
        %v894 = vpack.c.b16 %v786, %v784
        %v895 = vpack.c.b16 %v787, %v785
        %v896 = vpack.c.b16 %v790, %v788
        %v897 = vpack.c.b16 %v791, %v789
        %v898 = vpack.c.b16 %v794, %v792
        %v899 = vpack.c.b16 %v795, %v793
        %v900 = vpack.c.b16 %v798, %v796
        %v901 = vpack.c.b16 %v799, %v797
        %v902 = vpack.c.b16 %v802, %v800
        %v903 = vpack.c.b16 %v803, %v801
        %v904 = vpack.c.b16 %v806, %v804
        %v905 = vpack.c.b16 %v807, %v805
        %v906 = vpack.c.b16 %v810, %v808
        %v907 = vpack.c.b16 %v811, %v809
        %v908 = vpack.c.b16 %v814, %v812
        %v909 = vpack.c.b16 %v815, %v813
        %v910 = vpack.c.b16 %v818, %v816
        %v911 = vpack.c.b16 %v819, %v817
        %v912 = vpack.c.b16 %v822, %v820
        %v913 = vpack.c.b16 %v823, %v821
        %v914 = vpack.c.b16 %v826, %v824
        %v915 = vpack.c.b16 %v827, %v825
        %v916 = vpack.c.b16 %v830, %v828
        %v917 = vpack.c.b16 %v831, %v829
        %v918 = vpack.c.b16 %v834, %v832
        %v919 = vpack.c.b16 %v835, %v833
        %v920 = vpack.c.b16 %v838, %v836
        %v921 = vpack.c.b16 %v839, %v837
        %v922 = vpack.c.b16 %v842, %v840
        %v923 = vpack.c.b16 %v843, %v841
        %v924 = vpack.c.b16 %v846, %v844
        %v925 = vpack.c.b16 %v847, %v845
        %v926 = vpack.c.b16 %v850, %v848
        %v927 = vpack.c.b16 %v851, %v849
        %v928 = vpack.c.b16 %v854, %v852
        %v929 = vpack.c.b16 %v855, %v853
        %v930 = vpack.c.b16 %v858, %v856
        %v931 = vpack.c.b16 %v859, %v857
        %v932 = vpack.c.b16 %v862, %v860
        %v933 = vpack.c.b16 %v863, %v861
        %v934 = vpack.c.b16 %v866, %v864
        %v935 = vpack.c.b16 %v867, %v865
        %v936 = vpack.c.b16 %v870, %v868
        %v937 = vpack.c.b16 %v871, %v869
        %v938 = vpack.c.b16 %v874, %v872
        %v939 = vpack.c.b16 %v875, %v873
        %1004 = vmatprep.subr.bf16.mxu0 %v877
        %1005 = vmatpush1.bf16.msra.mxu0 %v876
        %1006 = vmatprep.subr.bf16.mxu0 %v879
        %1007 = vmatpush1.bf16.msra.mxu0 %v878
        %1008 = vmatprep.subr.bf16.mxu0 %v881
        %1009 = vmatpush1.bf16.msra.mxu0 %v880
        %1010 = vmatprep.subr.bf16.mxu0 %v883
        %1011 = vmatpush1.bf16.msra.mxu0 %v882
        %1012 = vmatprep.subr.bf16.mxu0 %v885
        %1013 = vmatpush1.bf16.msra.mxu0 %v884
        %1014 = vmatprep.subr.bf16.mxu0 %v887
        %1015 = vmatpush1.bf16.msra.mxu0 %v886
        %1016 = vmatprep.subr.bf16.mxu0 %v889
        %1017 = vmatpush1.bf16.msra.mxu0 %v888
        %1018 = vmatprep.subr.bf16.mxu0 %v891
        %1019 = vmatpush1.bf16.msra.mxu0 %v890
        %1020 = vmatprep.subr.bf16.mxu0 %v893
        %1021 = vmatpush1.bf16.msra.mxu0 %v892
        %1022 = vmatprep.subr.bf16.mxu0 %v895
        %1023 = vmatpush1.bf16.msra.mxu0 %v894
        %1024 = vmatprep.subr.bf16.mxu0 %v897
        %1025 = vmatpush1.bf16.msra.mxu0 %v896
        %1026 = vmatprep.subr.bf16.mxu0 %v899
        %1027 = vmatpush1.bf16.msra.mxu0 %v898
        %1028 = vmatprep.subr.bf16.mxu0 %v901
        %1029 = vmatpush1.bf16.msra.mxu0 %v900
        %1030 = vmatprep.subr.bf16.mxu0 %v903
        %1031 = vmatpush1.bf16.msra.mxu0 %v902
        %1032 = vmatprep.subr.bf16.mxu0 %v905
        %1033 = vmatpush1.bf16.msra.mxu0 %v904
        %1034 = vmatprep.subr.bf16.mxu0 %v907
        %1035 = vmatpush1.bf16.msra.mxu0 %v906
        %1036 = vmatprep.mubr.bf16.mxu0 %v677
        %1037 = vmatmul.mubr.bf16.gmra.mrb[0].mxu0 %v676
        %v1038 = vpop.f32.mrb[0].mxu0
        %v1039 = vadd.f32 0.0, %v1038
        %v1040 = vpop.f32.mrb[0].mxu0
        %v1041 = vadd.f32 0.0, %v1040
        %v1042 = vpop.f32.mrb[0].mxu0
        %v1043 = vpop.f32.mrb[0].mxu0
        %1044 = vdwg.mxu0
        %1045 = vmatprep.subr.bf16.mxu0 %v909
        %1046 = vmatpush1.bf16.msra.mxu0 %v908
        %1047 = vmatprep.subr.bf16.mxu0 %v911
        %1048 = vmatpush1.bf16.msra.mxu0 %v910
        %1049 = vmatprep.subr.bf16.mxu0 %v913
        %1050 = vmatpush1.bf16.msra.mxu0 %v912
        %1051 = vmatprep.subr.bf16.mxu0 %v915
        %1052 = vmatpush1.bf16.msra.mxu0 %v914
        %1053 = vmatprep.subr.bf16.mxu0 %v917
        %1054 = vmatpush1.bf16.msra.mxu0 %v916
        %1055 = vmatprep.subr.bf16.mxu0 %v919
        %1056 = vmatpush1.bf16.msra.mxu0 %v918
        %1057 = vmatprep.subr.bf16.mxu0 %v921
        %1058 = vmatpush1.bf16.msra.mxu0 %v920
        %1059 = vmatprep.subr.bf16.mxu0 %v923
        %1060 = vmatpush1.bf16.msra.mxu0 %v922
        %1061 = vmatprep.subr.bf16.mxu0 %v925
        %1062 = vmatpush1.bf16.msra.mxu0 %v924
        %1063 = vmatprep.subr.bf16.mxu0 %v927
        %1064 = vmatpush1.bf16.msra.mxu0 %v926
        %1065 = vmatprep.subr.bf16.mxu0 %v929
        %1066 = vmatpush1.bf16.msra.mxu0 %v928
        %1067 = vmatprep.subr.bf16.mxu0 %v931
        %1068 = vmatpush1.bf16.msra.mxu0 %v930
        %1069 = vmatprep.subr.bf16.mxu0 %v933
        %1070 = vmatpush1.bf16.msra.mxu0 %v932
        %1071 = vmatprep.subr.bf16.mxu0 %v935
        %1072 = vmatpush1.bf16.msra.mxu0 %v934
        %1073 = vmatprep.subr.bf16.mxu0 %v937
        %1074 = vmatpush1.bf16.msra.mxu0 %v936
        %1075 = vmatprep.subr.bf16.mxu0 %v939
        %1076 = vmatpush1.bf16.msra.mxu0 %v938
        %1077 = vmatprep.mubr.bf16.mxu0 %v679
        %1078 = vmatmul.mubr.bf16.gmra.mrb[0].mxu0 %v678
        %v1079 = vpop.f32.mrb[0].mxu0
        %v1080 = vadd.f32 %v1039, %v1079
        %v1081 = vpop.f32.mrb[0].mxu0
        %v1082 = vadd.f32 %v1041, %v1081
        %v1083 = vpop.f32.mrb[0].mxu0
        %v1084 = vpop.f32.mrb[0].mxu0
        %1085 = vdwg.mxu0
        %v1086 = vadd.f32 %v602, %v1080
        %v1087 = vadd.f32 %v603, %v1082
        %1088 = vst [vmem:[#allocation2] sm:$0xff] %v1086
        %1089 = vst [vmem:[#allocation2 + $0x8] sm:$0xff] %v1087
        %p1090 = scmp.eq.s32.totalorder %s22, 1
        // Predicated region
        $region79: #{dncnet_forward.13} parent=69 // pred_check
          %p1091 = pneg %p1090
        $region80: #{dncnet_forward.13} parent=69 // pred_check_branch
          %1093 = sbr.rel (%p1091) target = $region82
        $region81: #{dncnet_forward.13} parent=69 // pred_region
          %v1094 = vld [vmem:[#allocation2] sm:$0xff]
          %v1095 = vld [vmem:[#allocation2 + $0x8] sm:$0xff]
          %v1096 = vld [vmem:[%s579] sm:$0x3]
          %v1098 = vlaneseq
          %v1099 = vshrl.u32 %v1098, 7
          %v1100 = vsub.s32 0, %v1099
          %v1101 = vrot.slane %v1096, %v1100
          %v1102 = vlaneseq
          %v1103 = vshrl.u32 %v1102, 7
          %v1104 = vsub.s32 1, %v1103
          %v1105 = vrot.slane %v1096, %v1104
          %v1108 = vadd.f32 %v1094, %v1101
          %v1109 = vadd.f32 %v1095, %v1105
          %v1110 = vmul.f32 %v1108, %v1108
          %v1111 = vmul.f32 %v1109, %v1109
          %v1112 = vadd.f32 %v1110, %v1111
          %1113 = vadd.xlane.f32.xlu0 %v1112
          %v1114 = vpop.xlane.xlu0 %1113
          %v1115 = vrsqrt.pop %v1114
          %v1116 = vmul.f32 %v1114, %v1115
          %vm1117 = vcmp.eq.f32.partialorder %v1114, inf
          %v1118 = vsel %vm1117, %v1114, %v1116
          %vm1119 = vcmp.eq.f32.partialorder %v1114, 0.0
          %v1120 = vand.u32 %v1114, 2147483648
          %v1121 = vsel %vm1119, %v1120, %v1118
          %v1122 = vadd.f32 %v1121, 1e-08
          %v1123 = vrcp.pop %v1122
          %v1124 = vmul.f32 %v1108, %v1123
          %v1125 = vmul.f32 %v1109, %v1123
          %v1126 = vld [vmem:[%s584] sm:$0x3]
          %v1128 = vlaneseq
          %v1129 = vshrl.u32 %v1128, 7
          %v1130 = vsub.s32 0, %v1129
          %v1131 = vrot.slane %v1126, %v1130
          %v1132 = vlaneseq
          %v1133 = vshrl.u32 %v1132, 7
          %v1134 = vsub.s32 1, %v1133
          %v1135 = vrot.slane %v1126, %v1134
          %v1138 = vmul.f32 %v1124, %v1131
          %v1139 = vmul.f32 %v1125, %v1135
          %v1140 = vpack.c.bf16 %v1138, %v1138
          %v1141 = vpack.c.bf16 %v1139, %v1139
          %v1144 = vunpack.c.l.b16 %v1140
          %v1145 = vunpack.c.l.b16 %v1141
          %v1146 = vpack.c.b16 %v1145, %v1144
          %1148 = vst [vmem:[%s594] sm:$0xff] %v1146
        $region82: #{dncnet_forward.13} parent=69 // pred_fallthru
          _
        %s1149 = smul.u32 2, %s21
        %p1150 = scmp.lt.s32.totalorder %s20, 0
        %s1151 = scalar_select %p1150, %s20, 0
        %p1152 = scmp.lt.s32.totalorder %s1149, 31
        %s1153 = scalar_select %p1152, %s1149, 31
        %s1154 = smul.addr %s1151, 32
        %s1155 = sadd.s32 %s1153, %s1154
        %s1156 = smul.addr %s1155, 4
        %s1157 = scalar_lea.vmem %s4, %s1156
        // Predicated region
        $region83: #{dncnet_forward.13} parent=69 // pred_check
          %p1158 = pneg %p162
        $region84: #{dncnet_forward.13} parent=69 // pred_check_branch
          %1160 = sbr.rel (%p1158) target = $region86
        $region85: #{dncnet_forward.13} parent=69 // pred_region
          %s1161 = smul.u32 2, %s21
        $region86: #{dncnet_forward.13} parent=69 // pred_fallthru
          _
      $region70: #{dncnet_forward.13} parent=5 // pred_fallthru
        _
      %p1162 = scmp.le.s32.totalorder 2, %s10
      // Predicated region
      $region87: #{dncnet_forward.13} parent=5 // pred_check
        %p1163 = pneg %p1162
      $region88: #{dncnet_forward.13} parent=5 // pred_check_branch
        %1165 = sbr.rel (%p1163) target = $region90
      $region89: #{dncnet_forward.13} parent=5 // pred_region
        %s1166 = ssub.s32 %s10, 2
        // Predicated region
        $region91: #{dncnet_forward.13} parent=89 // pred_check
          %p1167 = pneg %p168
        $region92: #{dncnet_forward.13} parent=89 // pred_check_branch
          %1169 = sbr.rel (%p1167) target = $region94
        $region93: #{dncnet_forward.13} parent=89 // pred_region
          %s1170 = smul.u32 2, %s24
          %p1171 = scmp.lt.s32.totalorder %s23, 0
          %s1172 = scalar_select %p1171, %s23, 0
          %p1173 = scmp.lt.s32.totalorder %s1170, 31
          %s1174 = scalar_select %p1173, %s1170, 31
          %s1175 = smul.addr %s1172, 32
          %s1176 = sadd.s32 %s1174, %s1175
          %s1177 = smul.addr %s1176, 4
          %s1178 = scalar_lea.vmem %s4, %s1177
        $region94: #{dncnet_forward.13} parent=89 // pred_fallthru
          _
      $region90: #{dncnet_forward.13} parent=5 // pred_fallthru
        _
    $region6: #{dncnet_forward.13} parent=1 // loop_footer
      %s14 = sadd.s32 1, %s10
    $region7: #{dncnet_forward.13} parent=1 // loop_footer_branch
      %9 = sbr.rel target = $region3
    $region8: #{dncnet_forward.13} parent=1 // loop_exit
      _

// kernel: dncnet_forward.14
$region0: #{dncnet_forward.14}
  #allocation0 [shape = 'u32[]', space=smem, size = 0x4, offset = 0x4, fixed_abs, tag = 'smem constant byte address 0x4 - core index']
  #allocation1 [shape = 'u32[144,128]{1,0:T(1,128)}', space=vmem, size = 0x12000, scoped, tag = 'internal scratch']
  #allocation2 [shape = 'f32[8,256]{1,0:T(8,128)}', space=vmem, size = 0x2000, scoped, tag = 'scratch operand']
  %s0 = inlined_call_operand.hbm [shape: bf16[8,2048], index: 0, kind: input, shape index: {}]
  %s1 = inlined_call_operand.vmem [shape: bf16[2048,4096], index: 1, kind: input, shape index: {}]
  %s2 = inlined_call_operand.vmem [shape: f32[1,4096], index: 2, kind: input, shape index: {}]
  %s3 = inlined_call_operand.vmem [shape: f32[1,4096], index: 3, kind: input, shape index: {}]
  %s4 = inlined_call_operand.vmem [shape: bf16[8,4096], index: 4, kind: output, shape index: {}]
  %s5 = sld [smem:[#allocation0]]
  $region99: #{dncnet_forward.14} parent=0
    _
  %s7 = ssub.s32 1, %s5
  %s8 = scalar_select 0, %s7, %s5
  $region1: #{dncnet_forward.14} parent=0
    #allocation3 [shape = 'u8[16384]{0}', space=vmem, size = 0x4000, scoped, tag = 'input window, operand 0']
    #allocation4 [shape = 's32[2]{0}', space=sflag, size = 0x8, scoped, tag = 'scoped memory for dncnet_forward.14']
    #allocation5 [shape = 'u8[524288]{0}', space=vmem, size = 0x80000, scoped, tag = 'input window, operand 1']
    %9 = vsyncpa [#allocation4], 0
    %s10 = scalar_lea.sflag [#allocation4], 1
    %11 = vsyncpa %s10, 0
    loop: start=0, step=1, limit=66
    $region2: #{dncnet_forward.14} parent=1 // loop_pre_header
      _
    $region3: #{dncnet_forward.14} parent=1 // loop_header
      %s13 = sphi 0, %s17
      %p14 = scmp.ge.s32.totalorder %s13, 66
      %s20 = sphi 0, %s39
      %s21 = sphi 0, %s35
      %s22 = sphi 0, %s31
      %s23 = sphi 0, %s20
      %s24 = sphi 0, %s21
      %s25 = sphi 0, %s22
      %s26 = sphi 0, %s23
      %s27 = sphi 0, %s24
      %s28 = sphi 0, %s25
      %s44 = sphi 0, %s46
      %s47 = sphi 0, %s44
      %s48 = sphi 0, %s47
      %s64 = sphi 0, %s48
      %s72 = sphi 0, %s74
      %s75 = sphi 0, %s72
      %s76 = sphi 0, %s75
      %s92 = sphi 0, %s76
      %s98 = sphi 0, %s100
      %s101 = sphi 0, %s98
      %s102 = sphi 0, %s101
      %s118 = sphi 0, %s102
      %s124 = sphi 0, %s126
      %s127 = sphi 0, %s124
      %s128 = sphi 0, %s127
      %s144 = sphi 0, %s128
      %s152 = sphi 0, %s154
      %s155 = sphi 0, %s152
      %s156 = sphi 0, %s155
      %s172 = sphi 0, %s156
    $region4: #{dncnet_forward.14} parent=1 // loop_header_branch
      %16 = sbr.rel (%p14) target = $region8
    $region5: #{dncnet_forward.14} parent=1 // loop_body
      %s18 = ssub.s32 %s13, 1
      %s19 = ssub.s32 %s13, 2
      %s29 = sadd.s32 1, %s22
      %p30 = scmp.ge.s32.totalorder %s29, 4
      %s31 = scalar_select %p30, 0, %s29
      %s32 = sadd.s32 1, %s21
      %s33 = scalar_select %p30, %s32, %s21
      %p34 = scmp.ge.s32.totalorder %s33, 16
      %s35 = scalar_select %p34, 0, %s33
      %s36 = sadd.s32 1, %s20
      %s37 = scalar_select %p34, %s36, %s20
      %p38 = scmp.ge.s32.totalorder %s37, 1
      %s39 = scalar_select %p38, 0, %s37
      %s40 = ssub.s32 %s20, %s39
      %s41 = ssub.s32 %s22, %s31
      %s42 = sor.u32 %s40, %s41
      %p43 = scmp.eq.s32.totalorder %s42, 0
      %s45 = sadd.s32 %s44, 1
      %s46 = scalar_select %p43, %s44, %s45
      %p49 = pneg %p43
      %p50 = scmp.eq.s32.totalorder %s13, 63
      %p51 = por %p49, %p50
      %p52 = scmp.ne.s32.totalorder %s44, %s47
      %p53 = scmp.eq.s32.totalorder %s13, 0
      %p54 = por %p52, %p53
      %p55 = scmp.ne.s32.totalorder %s44, %s47
      %p56 = scmp.eq.s32.totalorder %s18, 63
      %p57 = por %p55, %p56
      %p58 = scmp.ne.s32.totalorder %s47, %s48
      %p59 = scmp.eq.s32.totalorder %s18, 0
      %p60 = por %p58, %p59
      %p61 = scmp.ne.s32.totalorder %s47, %s48
      %p62 = scmp.eq.s32.totalorder %s19, 63
      %p63 = por %p61, %p62
      %p65 = scmp.ne.s32.totalorder %s48, %s64
      %p66 = scmp.eq.s32.totalorder %s19, 0
      %p67 = por %p65, %p66
      %s68 = ssub.s32 %s22, %s31
      %s69 = ssub.s32 %s21, %s35
      %s70 = sor.u32 %s68, %s69
      %p71 = scmp.eq.s32.totalorder %s70, 0
      %s73 = sadd.s32 %s72, 1
      %s74 = scalar_select %p71, %s72, %s73
      %p77 = pneg %p71
      %p78 = scmp.eq.s32.totalorder %s13, 63
      %p79 = por %p77, %p78
      %p80 = scmp.ne.s32.totalorder %s72, %s75
      %p81 = scmp.eq.s32.totalorder %s13, 0
      %p82 = por %p80, %p81
      %p83 = scmp.ne.s32.totalorder %s72, %s75
      %p84 = scmp.eq.s32.totalorder %s18, 63
      %p85 = por %p83, %p84
      %p86 = scmp.ne.s32.totalorder %s75, %s76
      %p87 = scmp.eq.s32.totalorder %s18, 0
      %p88 = por %p86, %p87
      %p89 = scmp.ne.s32.totalorder %s75, %s76
      %p90 = scmp.eq.s32.totalorder %s19, 63
      %p91 = por %p89, %p90
      %p93 = scmp.ne.s32.totalorder %s76, %s92
      %p94 = scmp.eq.s32.totalorder %s19, 0
      %p95 = por %p93, %p94
      %s96 = ssub.s32 %s21, %s35
      %p97 = scmp.eq.s32.totalorder %s96, 0
      %s99 = sadd.s32 %s98, 1
      %s100 = scalar_select %p97, %s98, %s99
      %p103 = pneg %p97
      %p104 = scmp.eq.s32.totalorder %s13, 63
      %p105 = por %p103, %p104
      %p106 = scmp.ne.s32.totalorder %s98, %s101
      %p107 = scmp.eq.s32.totalorder %s13, 0
      %p108 = por %p106, %p107
      %p109 = scmp.ne.s32.totalorder %s98, %s101
      %p110 = scmp.eq.s32.totalorder %s18, 63
      %p111 = por %p109, %p110
      %p112 = scmp.ne.s32.totalorder %s101, %s102
      %p113 = scmp.eq.s32.totalorder %s18, 0
      %p114 = por %p112, %p113
      %p115 = scmp.ne.s32.totalorder %s101, %s102
      %p116 = scmp.eq.s32.totalorder %s19, 63
      %p117 = por %p115, %p116
      %p119 = scmp.ne.s32.totalorder %s102, %s118
      %p120 = scmp.eq.s32.totalorder %s19, 0
      %p121 = por %p119, %p120
      %s122 = ssub.s32 %s21, %s35
      %p123 = scmp.eq.s32.totalorder %s122, 0
      %s125 = sadd.s32 %s124, 1
      %s126 = scalar_select %p123, %s124, %s125
      %p129 = pneg %p123
      %p130 = scmp.eq.s32.totalorder %s13, 63
      %p131 = por %p129, %p130
      %p132 = scmp.ne.s32.totalorder %s124, %s127
      %p133 = scmp.eq.s32.totalorder %s13, 0
      %p134 = por %p132, %p133
      %p135 = scmp.ne.s32.totalorder %s124, %s127
      %p136 = scmp.eq.s32.totalorder %s18, 63
      %p137 = por %p135, %p136
      %p138 = scmp.ne.s32.totalorder %s127, %s128
      %p139 = scmp.eq.s32.totalorder %s18, 0
      %p140 = por %p138, %p139
      %p141 = scmp.ne.s32.totalorder %s127, %s128
      %p142 = scmp.eq.s32.totalorder %s19, 63
      %p143 = por %p141, %p142
      %p145 = scmp.ne.s32.totalorder %s128, %s144
      %p146 = scmp.eq.s32.totalorder %s19, 0
      %p147 = por %p145, %p146
      %s148 = ssub.s32 %s20, %s39
      %s149 = ssub.s32 %s21, %s35
      %s150 = sor.u32 %s148, %s149
      %p151 = scmp.eq.s32.totalorder %s150, 0
      %s153 = sadd.s32 %s152, 1
      %s154 = scalar_select %p151, %s152, %s153
      %p157 = pneg %p151
      %p158 = scmp.eq.s32.totalorder %s13, 63
      %p159 = por %p157, %p158
      %p160 = scmp.ne.s32.totalorder %s152, %s155
      %p161 = scmp.eq.s32.totalorder %s13, 0
      %p162 = por %p160, %p161
      %p163 = scmp.ne.s32.totalorder %s152, %s155
      %p164 = scmp.eq.s32.totalorder %s18, 63
      %p165 = por %p163, %p164
      %p166 = scmp.ne.s32.totalorder %s155, %s156
      %p167 = scmp.eq.s32.totalorder %s18, 0
      %p168 = por %p166, %p167
      %p169 = scmp.ne.s32.totalorder %s155, %s156
      %p170 = scmp.eq.s32.totalorder %s19, 63
      %p171 = por %p169, %p170
      %p173 = scmp.ne.s32.totalorder %s156, %s172
      %p174 = scmp.eq.s32.totalorder %s19, 0
      %p175 = por %p173, %p174
      %p176 = scmp.le.s32.totalorder 1, %s13
      %p177 = scmp.lt.s32.totalorder %s13, 65
      %p178 = pnand %p176, %p177
      %p179 = pneg %p178
      // Predicated region
      $region9: #{dncnet_forward.14} parent=5 // pred_check
        _
      $region10: #{dncnet_forward.14} parent=5 // pred_check_branch
        %181 = sbr.rel (%p178) target = $region12
      $region11: #{dncnet_forward.14} parent=5 // pred_region
        %s182 = ssub.s32 %s13, 1
      $region12: #{dncnet_forward.14} parent=5 // pred_fallthru
        _
      %p183 = scmp.lt.s32.totalorder %s13, 64
      // Predicated region
      $region13: #{dncnet_forward.14} parent=5 // pred_check
        %p184 = pneg %p183
      $region14: #{dncnet_forward.14} parent=5 // pred_check_branch
        %186 = sbr.rel (%p184) target = $region16
      $region15: #{dncnet_forward.14} parent=5 // pred_region
        // Predicated region
        $region17: #{dncnet_forward.14} parent=15 // pred_check
          %p187 = pneg %p54
        $region18: #{dncnet_forward.14} parent=15 // pred_check_branch
          %189 = sbr.rel (%p187) target = $region20
        $region19: #{dncnet_forward.14} parent=15 // pred_region
          %s190 = sand.u32 %s44, 1
          %s191 = scalar_lea.sflag [#allocation4], %s190
          %s192 = sand.u32 %s44, 1
          %s193 = smul.addr %s192, 16
          %s194 = scalar_lea.vmem [#allocation3], %s193
          %s195 = smul.u32 4, %s22
          %s197 = ssub.s32 256, 256
          %198 = vsyncadd %s191, %s197
          %s199 = smul.addr %s20, 16
          %s200 = sadd.s32 %s195, %s199
          %s201 = smul.addr %s200, 64
          %s202 = scalar_lea.hbm %s0, %s201
          %s204 = sshll.u32 %s194, 4
          %s205 = int_to_ptr.vmem [resolvable:$true] %s204
          %207 = dma.hbm_to_vmem [thread:$0]  %s202, 256, %s205, %s191
        $region20: #{dncnet_forward.14} parent=15 // pred_fallthru
          _
        // Predicated region
        $region21: #{dncnet_forward.14} parent=15 // pred_check
          %p208 = pneg %p82
        $region22: #{dncnet_forward.14} parent=15 // pred_check_branch
          %210 = sbr.rel (%p208) target = $region24
        $region23: #{dncnet_forward.14} parent=15 // pred_region
          %s211 = sand.u32 %s72, 1
          %s212 = sand.u32 %s72, 1
          %s213 = smul.addr %s212, 512
          %s214 = scalar_lea.vmem [#allocation5], %s213
          %s215 = smul.u32 64, %s22
          %s216 = smul.u32 2, %s21
          %s217 = smul.addr %s215, 32
          %s218 = sadd.s32 %s216, %s217
          %s219 = smul.addr %s218, 4
          %s220 = scalar_lea.vmem %s1, %s219
          // Predicated region
          $region25: #{dncnet_forward.14} parent=23 // pred_check
            _
          $region26: #{dncnet_forward.14} parent=23 // pred_check_branch
            %222 = sbr.rel (0) target = $region28
          $region27: #{dncnet_forward.14} parent=23 // pred_region
            // Predicated region
            $region29: #{dncnet_forward.14} parent=27 // pred_check
              _
            $region30: #{dncnet_forward.14} parent=27 // pred_check_branch
              %224 = sbr.rel (0) target = $region32
            $region31: #{dncnet_forward.14} parent=27 // pred_region
              // Predicated region
              $region44: #{dncnet_forward.14} parent=31 // pred_check
                _
              $region45: #{dncnet_forward.14} parent=31 // pred_check_branch
                %365 = sbr.rel (0) target = $region47
              $region46: #{dncnet_forward.14} parent=31 // pred_region
                loop: start=0, step=1, limit=1
                $region48: #{dncnet_forward.14} parent=46 // loop_pre_header
                  _
                $region49: #{dncnet_forward.14} parent=46 // loop_header
                  %s367 = sphi 0, %s371
                  %p368 = scmp.ge.s32.totalorder %s367, 1
                  %s372 = sphi %s220, %s220
                  %s373 = sphi %s214, %s214
                $region50: #{dncnet_forward.14} parent=46 // loop_header_branch
                  %370 = sbr.rel (%p368) target = $region54
                $region51: #{dncnet_forward.14} parent=46 // loop_body
                  %v374 = vld [vmem:[%s372] sm:$0xff]
                  %375 = vst [vmem:[%s373] sm:$0xff] %v374
                  %v376 = vld [vmem:[%s372 + $0x80] sm:$0xff]
                  %377 = vst [vmem:[%s373 + $0x8] sm:$0xff] %v376
                  %v378 = vld [vmem:[%s372 + $0x100] sm:$0xff]
                  %379 = vst [vmem:[%s373 + $0x10] sm:$0xff] %v378
                  %v380 = vld [vmem:[%s372 + $0x180] sm:$0xff]
                  %381 = vst [vmem:[%s373 + $0x18] sm:$0xff] %v380
                  %v382 = vld [vmem:[%s372 + $0x200] sm:$0xff]
                  %383 = vst [vmem:[%s373 + $0x20] sm:$0xff] %v382
                  %v384 = vld [vmem:[%s372 + $0x280] sm:$0xff]
                  %385 = vst [vmem:[%s373 + $0x28] sm:$0xff] %v384
                  %v386 = vld [vmem:[%s372 + $0x300] sm:$0xff]
                  %387 = vst [vmem:[%s373 + $0x30] sm:$0xff] %v386
                  %v388 = vld [vmem:[%s372 + $0x380] sm:$0xff]
                  %389 = vst [vmem:[%s373 + $0x38] sm:$0xff] %v388
                  %v390 = vld [vmem:[%s372 + $0x400] sm:$0xff]
                  %391 = vst [vmem:[%s373 + $0x40] sm:$0xff] %v390
                  %v392 = vld [vmem:[%s372 + $0x480] sm:$0xff]
                  %393 = vst [vmem:[%s373 + $0x48] sm:$0xff] %v392
                  %v394 = vld [vmem:[%s372 + $0x500] sm:$0xff]
                  %395 = vst [vmem:[%s373 + $0x50] sm:$0xff] %v394
                  %v396 = vld [vmem:[%s372 + $0x580] sm:$0xff]
                  %397 = vst [vmem:[%s373 + $0x58] sm:$0xff] %v396
                  %v398 = vld [vmem:[%s372 + $0x600] sm:$0xff]
                  %399 = vst [vmem:[%s373 + $0x60] sm:$0xff] %v398
                  %v400 = vld [vmem:[%s372 + $0x680] sm:$0xff]
                  %401 = vst [vmem:[%s373 + $0x68] sm:$0xff] %v400
                  %v402 = vld [vmem:[%s372 + $0x700] sm:$0xff]
                  %403 = vst [vmem:[%s373 + $0x70] sm:$0xff] %v402
                  %v404 = vld [vmem:[%s372 + $0x780] sm:$0xff]
                  %405 = vst [vmem:[%s373 + $0x78] sm:$0xff] %v404
                  %v406 = vld [vmem:[%s372 + $0x800] sm:$0xff]
                  %407 = vst [vmem:[%s373 + $0x80] sm:$0xff] %v406
                  %v408 = vld [vmem:[%s372 + $0x880] sm:$0xff]
                  %409 = vst [vmem:[%s373 + $0x88] sm:$0xff] %v408
                  %v410 = vld [vmem:[%s372 + $0x900] sm:$0xff]
                  %411 = vst [vmem:[%s373 + $0x90] sm:$0xff] %v410
                  %v412 = vld [vmem:[%s372 + $0x980] sm:$0xff]
                  %413 = vst [vmem:[%s373 + $0x98] sm:$0xff] %v412
                  %v414 = vld [vmem:[%s372 + $0xa00] sm:$0xff]
                  %415 = vst [vmem:[%s373 + $0xa0] sm:$0xff] %v414
                  %v416 = vld [vmem:[%s372 + $0xa80] sm:$0xff]
                  %417 = vst [vmem:[%s373 + $0xa8] sm:$0xff] %v416
                  %v418 = vld [vmem:[%s372 + $0xb00] sm:$0xff]
                  %419 = vst [vmem:[%s373 + $0xb0] sm:$0xff] %v418
                  %v420 = vld [vmem:[%s372 + $0xb80] sm:$0xff]
                  %421 = vst [vmem:[%s373 + $0xb8] sm:$0xff] %v420
                  %v422 = vld [vmem:[%s372 + $0xc00] sm:$0xff]
                  %423 = vst [vmem:[%s373 + $0xc0] sm:$0xff] %v422
                  %v424 = vld [vmem:[%s372 + $0xc80] sm:$0xff]
                  %425 = vst [vmem:[%s373 + $0xc8] sm:$0xff] %v424
                  %v426 = vld [vmem:[%s372 + $0xd00] sm:$0xff]
                  %427 = vst [vmem:[%s373 + $0xd0] sm:$0xff] %v426
                  %v428 = vld [vmem:[%s372 + $0xd80] sm:$0xff]
                  %429 = vst [vmem:[%s373 + $0xd8] sm:$0xff] %v428
                  %v430 = vld [vmem:[%s372 + $0xe00] sm:$0xff]
                  %431 = vst [vmem:[%s373 + $0xe0] sm:$0xff] %v430
                  %v432 = vld [vmem:[%s372 + $0xe80] sm:$0xff]
                  %433 = vst [vmem:[%s373 + $0xe8] sm:$0xff] %v432
                  %v434 = vld [vmem:[%s372 + $0xf00] sm:$0xff]
                  %435 = vst [vmem:[%s373 + $0xf0] sm:$0xff] %v434
                  %v436 = vld [vmem:[%s372 + $0xf80] sm:$0xff]
                  %437 = vst [vmem:[%s373 + $0xf8] sm:$0xff] %v436
                  %v438 = vld [vmem:[%s372 + $0x1000] sm:$0xff]
                  %439 = vst [vmem:[%s373 + $0x100] sm:$0xff] %v438
                  %v440 = vld [vmem:[%s372 + $0x1080] sm:$0xff]
                  %441 = vst [vmem:[%s373 + $0x108] sm:$0xff] %v440
                  %v442 = vld [vmem:[%s372 + $0x1100] sm:$0xff]
                  %443 = vst [vmem:[%s373 + $0x110] sm:$0xff] %v442
                  %v444 = vld [vmem:[%s372 + $0x1180] sm:$0xff]
                  %445 = vst [vmem:[%s373 + $0x118] sm:$0xff] %v444
                  %v446 = vld [vmem:[%s372 + $0x1200] sm:$0xff]
                  %447 = vst [vmem:[%s373 + $0x120] sm:$0xff] %v446
                  %v448 = vld [vmem:[%s372 + $0x1280] sm:$0xff]
                  %449 = vst [vmem:[%s373 + $0x128] sm:$0xff] %v448
                  %v450 = vld [vmem:[%s372 + $0x1300] sm:$0xff]
                  %451 = vst [vmem:[%s373 + $0x130] sm:$0xff] %v450
                  %v452 = vld [vmem:[%s372 + $0x1380] sm:$0xff]
                  %453 = vst [vmem:[%s373 + $0x138] sm:$0xff] %v452
                  %v454 = vld [vmem:[%s372 + $0x1400] sm:$0xff]
                  %455 = vst [vmem:[%s373 + $0x140] sm:$0xff] %v454
                  %v456 = vld [vmem:[%s372 + $0x1480] sm:$0xff]
                  %457 = vst [vmem:[%s373 + $0x148] sm:$0xff] %v456
                  %v458 = vld [vmem:[%s372 + $0x1500] sm:$0xff]
                  %459 = vst [vmem:[%s373 + $0x150] sm:$0xff] %v458
                  %v460 = vld [vmem:[%s372 + $0x1580] sm:$0xff]
                  %461 = vst [vmem:[%s373 + $0x158] sm:$0xff] %v460
                  %v462 = vld [vmem:[%s372 + $0x1600] sm:$0xff]
                  %463 = vst [vmem:[%s373 + $0x160] sm:$0xff] %v462
                  %v464 = vld [vmem:[%s372 + $0x1680] sm:$0xff]
                  %465 = vst [vmem:[%s373 + $0x168] sm:$0xff] %v464
                  %v466 = vld [vmem:[%s372 + $0x1700] sm:$0xff]
                  %467 = vst [vmem:[%s373 + $0x170] sm:$0xff] %v466
                  %v468 = vld [vmem:[%s372 + $0x1780] sm:$0xff]
                  %469 = vst [vmem:[%s373 + $0x178] sm:$0xff] %v468
                  %v470 = vld [vmem:[%s372 + $0x1800] sm:$0xff]
                  %471 = vst [vmem:[%s373 + $0x180] sm:$0xff] %v470
                  %v472 = vld [vmem:[%s372 + $0x1880] sm:$0xff]
                  %473 = vst [vmem:[%s373 + $0x188] sm:$0xff] %v472
                  %v474 = vld [vmem:[%s372 + $0x1900] sm:$0xff]
                  %475 = vst [vmem:[%s373 + $0x190] sm:$0xff] %v474
                  %v476 = vld [vmem:[%s372 + $0x1980] sm:$0xff]
                  %477 = vst [vmem:[%s373 + $0x198] sm:$0xff] %v476
                  %v478 = vld [vmem:[%s372 + $0x1a00] sm:$0xff]
                  %479 = vst [vmem:[%s373 + $0x1a0] sm:$0xff] %v478
                  %v480 = vld [vmem:[%s372 + $0x1a80] sm:$0xff]
                  %481 = vst [vmem:[%s373 + $0x1a8] sm:$0xff] %v480
                  %v482 = vld [vmem:[%s372 + $0x1b00] sm:$0xff]
                  %483 = vst [vmem:[%s373 + $0x1b0] sm:$0xff] %v482
                  %v484 = vld [vmem:[%s372 + $0x1b80] sm:$0xff]
                  %485 = vst [vmem:[%s373 + $0x1b8] sm:$0xff] %v484
                  %v486 = vld [vmem:[%s372 + $0x1c00] sm:$0xff]
                  %487 = vst [vmem:[%s373 + $0x1c0] sm:$0xff] %v486
                  %v488 = vld [vmem:[%s372 + $0x1c80] sm:$0xff]
                  %489 = vst [vmem:[%s373 + $0x1c8] sm:$0xff] %v488
                  %v490 = vld [vmem:[%s372 + $0x1d00] sm:$0xff]
                  %491 = vst [vmem:[%s373 + $0x1d0] sm:$0xff] %v490
                  %v492 = vld [vmem:[%s372 + $0x1d80] sm:$0xff]
                  %493 = vst [vmem:[%s373 + $0x1d8] sm:$0xff] %v492
                  %v494 = vld [vmem:[%s372 + $0x1e00] sm:$0xff]
                  %495 = vst [vmem:[%s373 + $0x1e0] sm:$0xff] %v494
                  %v496 = vld [vmem:[%s372 + $0x1e80] sm:$0xff]
                  %497 = vst [vmem:[%s373 + $0x1e8] sm:$0xff] %v496
                  %v498 = vld [vmem:[%s372 + $0x1f00] sm:$0xff]
                  %499 = vst [vmem:[%s373 + $0x1f0] sm:$0xff] %v498
                  %v500 = vld [vmem:[%s372 + $0x1f80] sm:$0xff]
                  %501 = vst [vmem:[%s373 + $0x1f8] sm:$0xff] %v500
                $region52: #{dncnet_forward.14} parent=46 // loop_footer
                  %s371 = sadd.s32 1, %s367
                $region53: #{dncnet_forward.14} parent=46 // loop_footer_branch
                  %366 = sbr.rel target = $region49
                $region54: #{dncnet_forward.14} parent=46 // loop_exit
                  _
              $region47: #{dncnet_forward.14} parent=31 // pred_fallthru
                _
              // Predicated region
              $region55: #{dncnet_forward.14} parent=31 // pred_check
                _
              $region56: #{dncnet_forward.14} parent=31 // pred_check_branch
                %503 = sbr.rel target = $region58
              $region57: #{dncnet_forward.14} parent=31 // pred_region
                _
              $region58: #{dncnet_forward.14} parent=31 // pred_fallthru
                _
            $region32: #{dncnet_forward.14} parent=27 // pred_fallthru
              _
            // Predicated region
            $region33: #{dncnet_forward.14} parent=27 // pred_check
              _
            $region34: #{dncnet_forward.14} parent=27 // pred_check_branch
              %226 = sbr.rel target = $region36
            $region35: #{dncnet_forward.14} parent=27 // pred_region
              loop: start=0, step=1, limit=1
              $region37: #{dncnet_forward.14} parent=35 // loop_pre_header
                _
              $region38: #{dncnet_forward.14} parent=35 // loop_header
                %s229 = sphi 0, %s233
                %p230 = scmp.ge.s32.totalorder %s229, 1
                %s234 = sphi %s220, %s220
                %s235 = sphi %s214, %s214
              $region39: #{dncnet_forward.14} parent=35 // loop_header_branch
                %232 = sbr.rel (%p230) target = $region43
              $region40: #{dncnet_forward.14} parent=35 // loop_body
                %v236 = vld [vmem:[%s234] sm:$0xff]
                %237 = vst [vmem:[%s235] sm:$0xff] %v236
                %v238 = vld [vmem:[%s234 + $0x80] sm:$0xff]
                %239 = vst [vmem:[%s235 + $0x8] sm:$0xff] %v238
                %v240 = vld [vmem:[%s234 + $0x100] sm:$0xff]
                %241 = vst [vmem:[%s235 + $0x10] sm:$0xff] %v240
                %v242 = vld [vmem:[%s234 + $0x180] sm:$0xff]
                %243 = vst [vmem:[%s235 + $0x18] sm:$0xff] %v242
                %v244 = vld [vmem:[%s234 + $0x200] sm:$0xff]
                %245 = vst [vmem:[%s235 + $0x20] sm:$0xff] %v244
                %v246 = vld [vmem:[%s234 + $0x280] sm:$0xff]
                %247 = vst [vmem:[%s235 + $0x28] sm:$0xff] %v246
                %v248 = vld [vmem:[%s234 + $0x300] sm:$0xff]
                %249 = vst [vmem:[%s235 + $0x30] sm:$0xff] %v248
                %v250 = vld [vmem:[%s234 + $0x380] sm:$0xff]
                %251 = vst [vmem:[%s235 + $0x38] sm:$0xff] %v250
                %v252 = vld [vmem:[%s234 + $0x400] sm:$0xff]
                %253 = vst [vmem:[%s235 + $0x40] sm:$0xff] %v252
                %v254 = vld [vmem:[%s234 + $0x480] sm:$0xff]
                %255 = vst [vmem:[%s235 + $0x48] sm:$0xff] %v254
                %v256 = vld [vmem:[%s234 + $0x500] sm:$0xff]
                %257 = vst [vmem:[%s235 + $0x50] sm:$0xff] %v256
                %v258 = vld [vmem:[%s234 + $0x580] sm:$0xff]
                %259 = vst [vmem:[%s235 + $0x58] sm:$0xff] %v258
                %v260 = vld [vmem:[%s234 + $0x600] sm:$0xff]
                %261 = vst [vmem:[%s235 + $0x60] sm:$0xff] %v260
                %v262 = vld [vmem:[%s234 + $0x680] sm:$0xff]
                %263 = vst [vmem:[%s235 + $0x68] sm:$0xff] %v262
                %v264 = vld [vmem:[%s234 + $0x700] sm:$0xff]
                %265 = vst [vmem:[%s235 + $0x70] sm:$0xff] %v264
                %v266 = vld [vmem:[%s234 + $0x780] sm:$0xff]
                %267 = vst [vmem:[%s235 + $0x78] sm:$0xff] %v266
                %v268 = vld [vmem:[%s234 + $0x800] sm:$0xff]
                %269 = vst [vmem:[%s235 + $0x80] sm:$0xff] %v268
                %v270 = vld [vmem:[%s234 + $0x880] sm:$0xff]
                %271 = vst [vmem:[%s235 + $0x88] sm:$0xff] %v270
                %v272 = vld [vmem:[%s234 + $0x900] sm:$0xff]
                %273 = vst [vmem:[%s235 + $0x90] sm:$0xff] %v272
                %v274 = vld [vmem:[%s234 + $0x980] sm:$0xff]
                %275 = vst [vmem:[%s235 + $0x98] sm:$0xff] %v274
                %v276 = vld [vmem:[%s234 + $0xa00] sm:$0xff]
                %277 = vst [vmem:[%s235 + $0xa0] sm:$0xff] %v276
                %v278 = vld [vmem:[%s234 + $0xa80] sm:$0xff]
                %279 = vst [vmem:[%s235 + $0xa8] sm:$0xff] %v278
                %v280 = vld [vmem:[%s234 + $0xb00] sm:$0xff]
                %281 = vst [vmem:[%s235 + $0xb0] sm:$0xff] %v280
                %v282 = vld [vmem:[%s234 + $0xb80] sm:$0xff]
                %283 = vst [vmem:[%s235 + $0xb8] sm:$0xff] %v282
                %v284 = vld [vmem:[%s234 + $0xc00] sm:$0xff]
                %285 = vst [vmem:[%s235 + $0xc0] sm:$0xff] %v284
                %v286 = vld [vmem:[%s234 + $0xc80] sm:$0xff]
                %287 = vst [vmem:[%s235 + $0xc8] sm:$0xff] %v286
                %v288 = vld [vmem:[%s234 + $0xd00] sm:$0xff]
                %289 = vst [vmem:[%s235 + $0xd0] sm:$0xff] %v288
                %v290 = vld [vmem:[%s234 + $0xd80] sm:$0xff]
                %291 = vst [vmem:[%s235 + $0xd8] sm:$0xff] %v290
                %v292 = vld [vmem:[%s234 + $0xe00] sm:$0xff]
                %293 = vst [vmem:[%s235 + $0xe0] sm:$0xff] %v292
                %v294 = vld [vmem:[%s234 + $0xe80] sm:$0xff]
                %295 = vst [vmem:[%s235 + $0xe8] sm:$0xff] %v294
                %v296 = vld [vmem:[%s234 + $0xf00] sm:$0xff]
                %297 = vst [vmem:[%s235 + $0xf0] sm:$0xff] %v296
                %v298 = vld [vmem:[%s234 + $0xf80] sm:$0xff]
                %299 = vst [vmem:[%s235 + $0xf8] sm:$0xff] %v298
                %v300 = vld [vmem:[%s234 + $0x1000] sm:$0xff]
                %301 = vst [vmem:[%s235 + $0x100] sm:$0xff] %v300
                %v302 = vld [vmem:[%s234 + $0x1080] sm:$0xff]
                %303 = vst [vmem:[%s235 + $0x108] sm:$0xff] %v302
                %v304 = vld [vmem:[%s234 + $0x1100] sm:$0xff]
                %305 = vst [vmem:[%s235 + $0x110] sm:$0xff] %v304
                %v306 = vld [vmem:[%s234 + $0x1180] sm:$0xff]
                %307 = vst [vmem:[%s235 + $0x118] sm:$0xff] %v306
                %v308 = vld [vmem:[%s234 + $0x1200] sm:$0xff]
                %309 = vst [vmem:[%s235 + $0x120] sm:$0xff] %v308
                %v310 = vld [vmem:[%s234 + $0x1280] sm:$0xff]
                %311 = vst [vmem:[%s235 + $0x128] sm:$0xff] %v310
                %v312 = vld [vmem:[%s234 + $0x1300] sm:$0xff]
                %313 = vst [vmem:[%s235 + $0x130] sm:$0xff] %v312
                %v314 = vld [vmem:[%s234 + $0x1380] sm:$0xff]
                %315 = vst [vmem:[%s235 + $0x138] sm:$0xff] %v314
                %v316 = vld [vmem:[%s234 + $0x1400] sm:$0xff]
                %317 = vst [vmem:[%s235 + $0x140] sm:$0xff] %v316
                %v318 = vld [vmem:[%s234 + $0x1480] sm:$0xff]
                %319 = vst [vmem:[%s235 + $0x148] sm:$0xff] %v318
                %v320 = vld [vmem:[%s234 + $0x1500] sm:$0xff]
                %321 = vst [vmem:[%s235 + $0x150] sm:$0xff] %v320
                %v322 = vld [vmem:[%s234 + $0x1580] sm:$0xff]
                %323 = vst [vmem:[%s235 + $0x158] sm:$0xff] %v322
                %v324 = vld [vmem:[%s234 + $0x1600] sm:$0xff]
                %325 = vst [vmem:[%s235 + $0x160] sm:$0xff] %v324
                %v326 = vld [vmem:[%s234 + $0x1680] sm:$0xff]
                %327 = vst [vmem:[%s235 + $0x168] sm:$0xff] %v326
                %v328 = vld [vmem:[%s234 + $0x1700] sm:$0xff]
                %329 = vst [vmem:[%s235 + $0x170] sm:$0xff] %v328
                %v330 = vld [vmem:[%s234 + $0x1780] sm:$0xff]
                %331 = vst [vmem:[%s235 + $0x178] sm:$0xff] %v330
                %v332 = vld [vmem:[%s234 + $0x1800] sm:$0xff]
                %333 = vst [vmem:[%s235 + $0x180] sm:$0xff] %v332
                %v334 = vld [vmem:[%s234 + $0x1880] sm:$0xff]
                %335 = vst [vmem:[%s235 + $0x188] sm:$0xff] %v334
                %v336 = vld [vmem:[%s234 + $0x1900] sm:$0xff]
                %337 = vst [vmem:[%s235 + $0x190] sm:$0xff] %v336
                %v338 = vld [vmem:[%s234 + $0x1980] sm:$0xff]
                %339 = vst [vmem:[%s235 + $0x198] sm:$0xff] %v338
                %v340 = vld [vmem:[%s234 + $0x1a00] sm:$0xff]
                %341 = vst [vmem:[%s235 + $0x1a0] sm:$0xff] %v340
                %v342 = vld [vmem:[%s234 + $0x1a80] sm:$0xff]
                %343 = vst [vmem:[%s235 + $0x1a8] sm:$0xff] %v342
                %v344 = vld [vmem:[%s234 + $0x1b00] sm:$0xff]
                %345 = vst [vmem:[%s235 + $0x1b0] sm:$0xff] %v344
                %v346 = vld [vmem:[%s234 + $0x1b80] sm:$0xff]
                %347 = vst [vmem:[%s235 + $0x1b8] sm:$0xff] %v346
                %v348 = vld [vmem:[%s234 + $0x1c00] sm:$0xff]
                %349 = vst [vmem:[%s235 + $0x1c0] sm:$0xff] %v348
                %v350 = vld [vmem:[%s234 + $0x1c80] sm:$0xff]
                %351 = vst [vmem:[%s235 + $0x1c8] sm:$0xff] %v350
                %v352 = vld [vmem:[%s234 + $0x1d00] sm:$0xff]
                %353 = vst [vmem:[%s235 + $0x1d0] sm:$0xff] %v352
                %v354 = vld [vmem:[%s234 + $0x1d80] sm:$0xff]
                %355 = vst [vmem:[%s235 + $0x1d8] sm:$0xff] %v354
                %v356 = vld [vmem:[%s234 + $0x1e00] sm:$0xff]
                %357 = vst [vmem:[%s235 + $0x1e0] sm:$0xff] %v356
                %v358 = vld [vmem:[%s234 + $0x1e80] sm:$0xff]
                %359 = vst [vmem:[%s235 + $0x1e8] sm:$0xff] %v358
                %v360 = vld [vmem:[%s234 + $0x1f00] sm:$0xff]
                %361 = vst [vmem:[%s235 + $0x1f0] sm:$0xff] %v360
                %v362 = vld [vmem:[%s234 + $0x1f80] sm:$0xff]
                %363 = vst [vmem:[%s235 + $0x1f8] sm:$0xff] %v362
              $region41: #{dncnet_forward.14} parent=35 // loop_footer
                %s233 = sadd.s32 1, %s229
              $region42: #{dncnet_forward.14} parent=35 // loop_footer_branch
                %228 = sbr.rel target = $region38
              $region43: #{dncnet_forward.14} parent=35 // loop_exit
                _
            $region36: #{dncnet_forward.14} parent=27 // pred_fallthru
              _
          $region28: #{dncnet_forward.14} parent=23 // pred_fallthru
            _
          %504 = vnop
        $region24: #{dncnet_forward.14} parent=15 // pred_fallthru
          _
        // Predicated region
        $region59: #{dncnet_forward.14} parent=15 // pred_check
          %p505 = pneg %p108
        $region60: #{dncnet_forward.14} parent=15 // pred_check_branch
          %507 = sbr.rel (%p505) target = $region62
        $region61: #{dncnet_forward.14} parent=15 // pred_region
          %s508 = smul.u32 2, %s21
          %p509 = scmp.lt.s32.totalorder %s508, 31
          %s510 = scalar_select %p509, %s508, 31
          %s511 = scalar_lea.vmem %s2, %s510
          %s512 = smul.u32 2, %s21
        $region62: #{dncnet_forward.14} parent=15 // pred_fallthru
          _
        // Predicated region
        $region63: #{dncnet_forward.14} parent=15 // pred_check
          %p513 = pneg %p134
        $region64: #{dncnet_forward.14} parent=15 // pred_check_branch
          %515 = sbr.rel (%p513) target = $region66
        $region65: #{dncnet_forward.14} parent=15 // pred_region
          %s516 = smul.u32 2, %s21
          %p517 = scmp.lt.s32.totalorder %s516, 31
          %s518 = scalar_select %p517, %s516, 31
          %s519 = scalar_lea.vmem %s3, %s518
          %s520 = smul.u32 2, %s21
        $region66: #{dncnet_forward.14} parent=15 // pred_fallthru
          _
      $region16: #{dncnet_forward.14} parent=5 // pred_fallthru
        _
      %p521 = scmp.le.s32.totalorder 1, %s13
      %p522 = scmp.lt.s32.totalorder %s13, 65
      %p523 = pnand %p521, %p522
      %p524 = pneg %p523
      // Predicated region
      $region67: #{dncnet_forward.14} parent=5 // pred_check
        _
      $region68: #{dncnet_forward.14} parent=5 // pred_check_branch
        %526 = sbr.rel (%p523) target = $region70
      $region69: #{dncnet_forward.14} parent=5 // pred_region
        %s527 = ssub.s32 %s13, 1
        %s528 = sand.u32 %s47, 1
        %s529 = scalar_lea.sflag [#allocation4], %s528
        %s530 = sand.u32 %s47, 1
        %s531 = smul.addr %s530, 16
        %s532 = scalar_lea.vmem [#allocation3], %s531
        // Predicated region
        $region71: #{dncnet_forward.14} parent=69 // pred_check
          %p533 = pneg %p60
        $region72: #{dncnet_forward.14} parent=69 // pred_check_branch
          %535 = sbr.rel (%p533) target = $region74
        $region73: #{dncnet_forward.14} parent=69 // pred_region
          %536 = dma.done %s529, 256
        $region74: #{dncnet_forward.14} parent=69 // pred_fallthru
          _
        %s537 = sand.u32 %s75, 1
        %s538 = sand.u32 %s75, 1
        %s539 = smul.addr %s538, 512
        %s540 = scalar_lea.vmem [#allocation5], %s539
        // Predicated region
        $region75: #{dncnet_forward.14} parent=69 // pred_check
          %p541 = pneg %p88
        $region76: #{dncnet_forward.14} parent=69 // pred_check_branch
          %543 = sbr.rel (%p541) target = $region78
        $region77: #{dncnet_forward.14} parent=69 // pred_region
          _
        $region78: #{dncnet_forward.14} parent=69 // pred_fallthru
          _
        %s544 = sand.u32 %s47, 1
        %s545 = scalar_lea.sflag [#allocation4], %s544
        %s546 = sand.u32 %s47, 1
        %s547 = smul.addr %s546, 16
        %s548 = scalar_lea.vmem [#allocation3], %s547
        %p549 = pneg %p60
        %p550 = pneg %p57
        %s551 = sand.u32 %s75, 1
        %s552 = sand.u32 %s75, 1
        %s553 = smul.addr %s552, 512
        %s554 = scalar_lea.vmem [#allocation5], %s553
        %p555 = pneg %p88
        %p556 = pneg %p85
        %s557 = smul.u32 2, %s24
        %p558 = scmp.lt.s32.totalorder %s557, 31
        %s559 = scalar_select %p558, %s557, 31
        %s560 = scalar_lea.vmem %s2, %s559
        %p561 = pneg %p114
        %p562 = pneg %p111
        %s563 = smul.u32 2, %s24
        %p564 = scmp.lt.s32.totalorder %s563, 31
        %s565 = scalar_select %p564, %s563, 31
        %s566 = scalar_lea.vmem %s3, %s565
        %p567 = pneg %p140
        %p568 = pneg %p137
        %p569 = pneg %p168
        %p570 = pneg %p165
        %s571 = smul.u32 2, %s24
        %p572 = scmp.lt.s32.totalorder %s23, 0
        %s573 = scalar_select %p572, %s23, 0
        %p574 = scmp.lt.s32.totalorder %s571, 31
        %s575 = scalar_select %p574, %s571, 31
        %s576 = smul.addr %s573, 32
        %s577 = sadd.s32 %s575, %s576
        %s578 = smul.addr %s577, 4
        %s579 = scalar_lea.vmem %s4, %s578
        %s580 = smul.u32 4, %s25
        %s581 = smul.u32 64, %s25
        %s582 = smul.u32 2, %s24
        %s583 = smul.u32 2, %s24
        %p584 = scmp.lt.s32.totalorder %s583, 31
        %s585 = scalar_select %p584, %s583, 31
        %s586 = scalar_lea.vmem %s2, %s585
        %s587 = smul.u32 2, %s24
        %s588 = smul.u32 2, %s24
        %p589 = scmp.lt.s32.totalorder %s588, 31
        %s590 = scalar_select %p589, %s588, 31
        %s591 = scalar_lea.vmem %s3, %s590
        %s592 = smul.u32 2, %s24
        %s593 = smul.u32 2, %s24
        %p594 = scmp.lt.s32.totalorder %s23, 0
        %s595 = scalar_select %p594, %s23, 0
        %p596 = scmp.lt.s32.totalorder %s593, 31
        %s597 = scalar_select %p596, %s593, 31
        %s598 = smul.addr %s595, 32
        %s599 = sadd.s32 %s597, %s598
        %s600 = smul.addr %s599, 4
        %s601 = scalar_lea.vmem %s4, %s600
        %s602 = smul.u32 2, %s24
        %p603 = scmp.eq.s32.totalorder %s25, 0
        // Predicated region
        $region79: #{dncnet_forward.14} parent=69 // pred_check
          %p604 = pneg %p603
        $region80: #{dncnet_forward.14} parent=69 // pred_check_branch
          %606 = sbr.rel (%p604) target = $region82
        $region81: #{dncnet_forward.14} parent=69 // pred_region
          %607 = vst [vmem:[#allocation2] sm:$0xff] 0.0
          %608 = vst [vmem:[#allocation2 + $0x8] sm:$0xff] 0.0
        $region82: #{dncnet_forward.14} parent=69 // pred_fallthru
          _
        %v609 = vld [vmem:[#allocation2] sm:$0xff]
        %v610 = vld [vmem:[#allocation2 + $0x8] sm:$0xff]
        %v611 = vld [vmem:[%s532] sm:$0xff]
        %v612 = vld [vmem:[%s532 + $0x8] sm:$0xff]
        %v613 = vld [vmem:[%s540] sm:$0xff]
        %v614 = vld [vmem:[%s540 + $0x8] sm:$0xff]
        %v615 = vld [vmem:[%s540 + $0x10] sm:$0xff]
        %v616 = vld [vmem:[%s540 + $0x18] sm:$0xff]
        %v617 = vld [vmem:[%s540 + $0x20] sm:$0xff]
        %v618 = vld [vmem:[%s540 + $0x28] sm:$0xff]
        %v619 = vld [vmem:[%s540 + $0x30] sm:$0xff]
        %v620 = vld [vmem:[%s540 + $0x38] sm:$0xff]
        %v621 = vld [vmem:[%s540 + $0x40] sm:$0xff]
        %v622 = vld [vmem:[%s540 + $0x48] sm:$0xff]
        %v623 = vld [vmem:[%s540 + $0x50] sm:$0xff]
        %v624 = vld [vmem:[%s540 + $0x58] sm:$0xff]
        %v625 = vld [vmem:[%s540 + $0x60] sm:$0xff]
        %v626 = vld [vmem:[%s540 + $0x68] sm:$0xff]
        %v627 = vld [vmem:[%s540 + $0x70] sm:$0xff]
        %v628 = vld [vmem:[%s540 + $0x78] sm:$0xff]
        %v629 = vld [vmem:[%s540 + $0x80] sm:$0xff]
        %v630 = vld [vmem:[%s540 + $0x88] sm:$0xff]
        %v631 = vld [vmem:[%s540 + $0x90] sm:$0xff]
        %v632 = vld [vmem:[%s540 + $0x98] sm:$0xff]
        %v633 = vld [vmem:[%s540 + $0xa0] sm:$0xff]
        %v634 = vld [vmem:[%s540 + $0xa8] sm:$0xff]
        %v635 = vld [vmem:[%s540 + $0xb0] sm:$0xff]
        %v636 = vld [vmem:[%s540 + $0xb8] sm:$0xff]
        %v637 = vld [vmem:[%s540 + $0xc0] sm:$0xff]
        %v638 = vld [vmem:[%s540 + $0xc8] sm:$0xff]
        %v639 = vld [vmem:[%s540 + $0xd0] sm:$0xff]
        %v640 = vld [vmem:[%s540 + $0xd8] sm:$0xff]
        %v641 = vld [vmem:[%s540 + $0xe0] sm:$0xff]
        %v642 = vld [vmem:[%s540 + $0xe8] sm:$0xff]
        %v643 = vld [vmem:[%s540 + $0xf0] sm:$0xff]
        %v644 = vld [vmem:[%s540 + $0xf8] sm:$0xff]
        %v645 = vld [vmem:[%s540 + $0x100] sm:$0xff]
        %v646 = vld [vmem:[%s540 + $0x108] sm:$0xff]
        %v647 = vld [vmem:[%s540 + $0x110] sm:$0xff]
        %v648 = vld [vmem:[%s540 + $0x118] sm:$0xff]
        %v649 = vld [vmem:[%s540 + $0x120] sm:$0xff]
        %v650 = vld [vmem:[%s540 + $0x128] sm:$0xff]
        %v651 = vld [vmem:[%s540 + $0x130] sm:$0xff]
        %v652 = vld [vmem:[%s540 + $0x138] sm:$0xff]
        %v653 = vld [vmem:[%s540 + $0x140] sm:$0xff]
        %v654 = vld [vmem:[%s540 + $0x148] sm:$0xff]
        %v655 = vld [vmem:[%s540 + $0x150] sm:$0xff]
        %v656 = vld [vmem:[%s540 + $0x158] sm:$0xff]
        %v657 = vld [vmem:[%s540 + $0x160] sm:$0xff]
        %v658 = vld [vmem:[%s540 + $0x168] sm:$0xff]
        %v659 = vld [vmem:[%s540 + $0x170] sm:$0xff]
        %v660 = vld [vmem:[%s540 + $0x178] sm:$0xff]
        %v661 = vld [vmem:[%s540 + $0x180] sm:$0xff]
        %v662 = vld [vmem:[%s540 + $0x188] sm:$0xff]
        %v663 = vld [vmem:[%s540 + $0x190] sm:$0xff]
        %v664 = vld [vmem:[%s540 + $0x198] sm:$0xff]
        %v665 = vld [vmem:[%s540 + $0x1a0] sm:$0xff]
        %v666 = vld [vmem:[%s540 + $0x1a8] sm:$0xff]
        %v667 = vld [vmem:[%s540 + $0x1b0] sm:$0xff]
        %v668 = vld [vmem:[%s540 + $0x1b8] sm:$0xff]
        %v669 = vld [vmem:[%s540 + $0x1c0] sm:$0xff]
        %v670 = vld [vmem:[%s540 + $0x1c8] sm:$0xff]
        %v671 = vld [vmem:[%s540 + $0x1d0] sm:$0xff]
        %v672 = vld [vmem:[%s540 + $0x1d8] sm:$0xff]
        %v673 = vld [vmem:[%s540 + $0x1e0] sm:$0xff]
        %v674 = vld [vmem:[%s540 + $0x1e8] sm:$0xff]
        %v675 = vld [vmem:[%s540 + $0x1f0] sm:$0xff]
        %v676 = vld [vmem:[%s540 + $0x1f8] sm:$0xff]
        %v679 = vunpack.c.l.b16 %v611
        %v680 = vunpack.c.h.b16 %v611
        %v681 = vunpack.c.l.b16 %v612
        %v682 = vunpack.c.h.b16 %v612
        %v683 = vpack.c.b16 %v679, %v679
        %v684 = vpack.c.b16 %v680, %v680
        %v685 = vpack.c.b16 %v681, %v681
        %v686 = vpack.c.b16 %v682, %v682
        %v755 = vunpack.c.l.b16 %v613
        %v756 = vunpack.c.h.b16 %v613
        %v757 = vunpack.c.l.b16 %v614
        %v758 = vunpack.c.h.b16 %v614
        %v759 = vunpack.c.l.b16 %v615
        %v760 = vunpack.c.h.b16 %v615
        %v761 = vunpack.c.l.b16 %v616
        %v762 = vunpack.c.h.b16 %v616
        %v763 = vunpack.c.l.b16 %v617
        %v764 = vunpack.c.h.b16 %v617
        %v765 = vunpack.c.l.b16 %v618
        %v766 = vunpack.c.h.b16 %v618
        %v767 = vunpack.c.l.b16 %v619
        %v768 = vunpack.c.h.b16 %v619
        %v769 = vunpack.c.l.b16 %v620
        %v770 = vunpack.c.h.b16 %v620
        %v771 = vunpack.c.l.b16 %v621
        %v772 = vunpack.c.h.b16 %v621
        %v773 = vunpack.c.l.b16 %v622
        %v774 = vunpack.c.h.b16 %v622
        %v775 = vunpack.c.l.b16 %v623
        %v776 = vunpack.c.h.b16 %v623
        %v777 = vunpack.c.l.b16 %v624
        %v778 = vunpack.c.h.b16 %v624
        %v779 = vunpack.c.l.b16 %v625
        %v780 = vunpack.c.h.b16 %v625
        %v781 = vunpack.c.l.b16 %v626
        %v782 = vunpack.c.h.b16 %v626
        %v783 = vunpack.c.l.b16 %v627
        %v784 = vunpack.c.h.b16 %v627
        %v785 = vunpack.c.l.b16 %v628
        %v786 = vunpack.c.h.b16 %v628
        %v787 = vunpack.c.l.b16 %v629
        %v788 = vunpack.c.h.b16 %v629
        %v789 = vunpack.c.l.b16 %v630
        %v790 = vunpack.c.h.b16 %v630
        %v791 = vunpack.c.l.b16 %v631
        %v792 = vunpack.c.h.b16 %v631
        %v793 = vunpack.c.l.b16 %v632
        %v794 = vunpack.c.h.b16 %v632
        %v795 = vunpack.c.l.b16 %v633
        %v796 = vunpack.c.h.b16 %v633
        %v797 = vunpack.c.l.b16 %v634
        %v798 = vunpack.c.h.b16 %v634
        %v799 = vunpack.c.l.b16 %v635
        %v800 = vunpack.c.h.b16 %v635
        %v801 = vunpack.c.l.b16 %v636
        %v802 = vunpack.c.h.b16 %v636
        %v803 = vunpack.c.l.b16 %v637
        %v804 = vunpack.c.h.b16 %v637
        %v805 = vunpack.c.l.b16 %v638
        %v806 = vunpack.c.h.b16 %v638
        %v807 = vunpack.c.l.b16 %v639
        %v808 = vunpack.c.h.b16 %v639
        %v809 = vunpack.c.l.b16 %v640
        %v810 = vunpack.c.h.b16 %v640
        %v811 = vunpack.c.l.b16 %v641
        %v812 = vunpack.c.h.b16 %v641
        %v813 = vunpack.c.l.b16 %v642
        %v814 = vunpack.c.h.b16 %v642
        %v815 = vunpack.c.l.b16 %v643
        %v816 = vunpack.c.h.b16 %v643
        %v817 = vunpack.c.l.b16 %v644
        %v818 = vunpack.c.h.b16 %v644
        %v819 = vunpack.c.l.b16 %v645
        %v820 = vunpack.c.h.b16 %v645
        %v821 = vunpack.c.l.b16 %v646
        %v822 = vunpack.c.h.b16 %v646
        %v823 = vunpack.c.l.b16 %v647
        %v824 = vunpack.c.h.b16 %v647
        %v825 = vunpack.c.l.b16 %v648
        %v826 = vunpack.c.h.b16 %v648
        %v827 = vunpack.c.l.b16 %v649
        %v828 = vunpack.c.h.b16 %v649
        %v829 = vunpack.c.l.b16 %v650
        %v830 = vunpack.c.h.b16 %v650
        %v831 = vunpack.c.l.b16 %v651
        %v832 = vunpack.c.h.b16 %v651
        %v833 = vunpack.c.l.b16 %v652
        %v834 = vunpack.c.h.b16 %v652
        %v835 = vunpack.c.l.b16 %v653
        %v836 = vunpack.c.h.b16 %v653
        %v837 = vunpack.c.l.b16 %v654
        %v838 = vunpack.c.h.b16 %v654
        %v839 = vunpack.c.l.b16 %v655
        %v840 = vunpack.c.h.b16 %v655
        %v841 = vunpack.c.l.b16 %v656
        %v842 = vunpack.c.h.b16 %v656
        %v843 = vunpack.c.l.b16 %v657
        %v844 = vunpack.c.h.b16 %v657
        %v845 = vunpack.c.l.b16 %v658
        %v846 = vunpack.c.h.b16 %v658
        %v847 = vunpack.c.l.b16 %v659
        %v848 = vunpack.c.h.b16 %v659
        %v849 = vunpack.c.l.b16 %v660
        %v850 = vunpack.c.h.b16 %v660
        %v851 = vunpack.c.l.b16 %v661
        %v852 = vunpack.c.h.b16 %v661
        %v853 = vunpack.c.l.b16 %v662
        %v854 = vunpack.c.h.b16 %v662
        %v855 = vunpack.c.l.b16 %v663
        %v856 = vunpack.c.h.b16 %v663
        %v857 = vunpack.c.l.b16 %v664
        %v858 = vunpack.c.h.b16 %v664
        %v859 = vunpack.c.l.b16 %v665
        %v860 = vunpack.c.h.b16 %v665
        %v861 = vunpack.c.l.b16 %v666
        %v862 = vunpack.c.h.b16 %v666
        %v863 = vunpack.c.l.b16 %v667
        %v864 = vunpack.c.h.b16 %v667
        %v865 = vunpack.c.l.b16 %v668
        %v866 = vunpack.c.h.b16 %v668
        %v867 = vunpack.c.l.b16 %v669
        %v868 = vunpack.c.h.b16 %v669
        %v869 = vunpack.c.l.b16 %v670
        %v870 = vunpack.c.h.b16 %v670
        %v871 = vunpack.c.l.b16 %v671
        %v872 = vunpack.c.h.b16 %v671
        %v873 = vunpack.c.l.b16 %v672
        %v874 = vunpack.c.h.b16 %v672
        %v875 = vunpack.c.l.b16 %v673
        %v876 = vunpack.c.h.b16 %v673
        %v877 = vunpack.c.l.b16 %v674
        %v878 = vunpack.c.h.b16 %v674
        %v879 = vunpack.c.l.b16 %v675
        %v880 = vunpack.c.h.b16 %v675
        %v881 = vunpack.c.l.b16 %v676
        %v882 = vunpack.c.h.b16 %v676
        %v883 = vpack.c.b16 %v757, %v755
        %v884 = vpack.c.b16 %v758, %v756
        %v885 = vpack.c.b16 %v761, %v759
        %v886 = vpack.c.b16 %v762, %v760
        %v887 = vpack.c.b16 %v765, %v763
        %v888 = vpack.c.b16 %v766, %v764
        %v889 = vpack.c.b16 %v769, %v767
        %v890 = vpack.c.b16 %v770, %v768
        %v891 = vpack.c.b16 %v773, %v771
        %v892 = vpack.c.b16 %v774, %v772
        %v893 = vpack.c.b16 %v777, %v775
        %v894 = vpack.c.b16 %v778, %v776
        %v895 = vpack.c.b16 %v781, %v779
        %v896 = vpack.c.b16 %v782, %v780
        %v897 = vpack.c.b16 %v785, %v783
        %v898 = vpack.c.b16 %v786, %v784
        %v899 = vpack.c.b16 %v789, %v787
        %v900 = vpack.c.b16 %v790, %v788
        %v901 = vpack.c.b16 %v793, %v791
        %v902 = vpack.c.b16 %v794, %v792
        %v903 = vpack.c.b16 %v797, %v795
        %v904 = vpack.c.b16 %v798, %v796
        %v905 = vpack.c.b16 %v801, %v799
        %v906 = vpack.c.b16 %v802, %v800
        %v907 = vpack.c.b16 %v805, %v803
        %v908 = vpack.c.b16 %v806, %v804
        %v909 = vpack.c.b16 %v809, %v807
        %v910 = vpack.c.b16 %v810, %v808
        %v911 = vpack.c.b16 %v813, %v811
        %v912 = vpack.c.b16 %v814, %v812
        %v913 = vpack.c.b16 %v817, %v815
        %v914 = vpack.c.b16 %v818, %v816
        %v915 = vpack.c.b16 %v821, %v819
        %v916 = vpack.c.b16 %v822, %v820
        %v917 = vpack.c.b16 %v825, %v823
        %v918 = vpack.c.b16 %v826, %v824
        %v919 = vpack.c.b16 %v829, %v827
        %v920 = vpack.c.b16 %v830, %v828
        %v921 = vpack.c.b16 %v833, %v831
        %v922 = vpack.c.b16 %v834, %v832
        %v923 = vpack.c.b16 %v837, %v835
        %v924 = vpack.c.b16 %v838, %v836
        %v925 = vpack.c.b16 %v841, %v839
        %v926 = vpack.c.b16 %v842, %v840
        %v927 = vpack.c.b16 %v845, %v843
        %v928 = vpack.c.b16 %v846, %v844
        %v929 = vpack.c.b16 %v849, %v847
        %v930 = vpack.c.b16 %v850, %v848
        %v931 = vpack.c.b16 %v853, %v851
        %v932 = vpack.c.b16 %v854, %v852
        %v933 = vpack.c.b16 %v857, %v855
        %v934 = vpack.c.b16 %v858, %v856
        %v935 = vpack.c.b16 %v861, %v859
        %v936 = vpack.c.b16 %v862, %v860
        %v937 = vpack.c.b16 %v865, %v863
        %v938 = vpack.c.b16 %v866, %v864
        %v939 = vpack.c.b16 %v869, %v867
        %v940 = vpack.c.b16 %v870, %v868
        %v941 = vpack.c.b16 %v873, %v871
        %v942 = vpack.c.b16 %v874, %v872
        %v943 = vpack.c.b16 %v877, %v875
        %v944 = vpack.c.b16 %v878, %v876
        %v945 = vpack.c.b16 %v881, %v879
        %v946 = vpack.c.b16 %v882, %v880
        %1011 = vmatprep.subr.bf16.mxu0 %v884
        %1012 = vmatpush1.bf16.msra.mxu0 %v883
        %1013 = vmatprep.subr.bf16.mxu0 %v886
        %1014 = vmatpush1.bf16.msra.mxu0 %v885
        %1015 = vmatprep.subr.bf16.mxu0 %v888
        %1016 = vmatpush1.bf16.msra.mxu0 %v887
        %1017 = vmatprep.subr.bf16.mxu0 %v890
        %1018 = vmatpush1.bf16.msra.mxu0 %v889
        %1019 = vmatprep.subr.bf16.mxu0 %v892
        %1020 = vmatpush1.bf16.msra.mxu0 %v891
        %1021 = vmatprep.subr.bf16.mxu0 %v894
        %1022 = vmatpush1.bf16.msra.mxu0 %v893
        %1023 = vmatprep.subr.bf16.mxu0 %v896
        %1024 = vmatpush1.bf16.msra.mxu0 %v895
        %1025 = vmatprep.subr.bf16.mxu0 %v898
        %1026 = vmatpush1.bf16.msra.mxu0 %v897
        %1027 = vmatprep.subr.bf16.mxu0 %v900
        %1028 = vmatpush1.bf16.msra.mxu0 %v899
        %1029 = vmatprep.subr.bf16.mxu0 %v902
        %1030 = vmatpush1.bf16.msra.mxu0 %v901
        %1031 = vmatprep.subr.bf16.mxu0 %v904
        %1032 = vmatpush1.bf16.msra.mxu0 %v903
        %1033 = vmatprep.subr.bf16.mxu0 %v906
        %1034 = vmatpush1.bf16.msra.mxu0 %v905
        %1035 = vmatprep.subr.bf16.mxu0 %v908
        %1036 = vmatpush1.bf16.msra.mxu0 %v907
        %1037 = vmatprep.subr.bf16.mxu0 %v910
        %1038 = vmatpush1.bf16.msra.mxu0 %v909
        %1039 = vmatprep.subr.bf16.mxu0 %v912
        %1040 = vmatpush1.bf16.msra.mxu0 %v911
        %1041 = vmatprep.subr.bf16.mxu0 %v914
        %1042 = vmatpush1.bf16.msra.mxu0 %v913
        %1043 = vmatprep.mubr.bf16.mxu0 %v684
        %1044 = vmatmul.mubr.bf16.gmra.mrb[0].mxu0 %v683
        %v1045 = vpop.f32.mrb[0].mxu0
        %v1046 = vadd.f32 0.0, %v1045
        %v1047 = vpop.f32.mrb[0].mxu0
        %v1048 = vadd.f32 0.0, %v1047
        %v1049 = vpop.f32.mrb[0].mxu0
        %v1050 = vpop.f32.mrb[0].mxu0
        %1051 = vdwg.mxu0
        %1052 = vmatprep.subr.bf16.mxu0 %v916
        %1053 = vmatpush1.bf16.msra.mxu0 %v915
        %1054 = vmatprep.subr.bf16.mxu0 %v918
        %1055 = vmatpush1.bf16.msra.mxu0 %v917
        %1056 = vmatprep.subr.bf16.mxu0 %v920
        %1057 = vmatpush1.bf16.msra.mxu0 %v919
        %1058 = vmatprep.subr.bf16.mxu0 %v922
        %1059 = vmatpush1.bf16.msra.mxu0 %v921
        %1060 = vmatprep.subr.bf16.mxu0 %v924
        %1061 = vmatpush1.bf16.msra.mxu0 %v923
        %1062 = vmatprep.subr.bf16.mxu0 %v926
        %1063 = vmatpush1.bf16.msra.mxu0 %v925
        %1064 = vmatprep.subr.bf16.mxu0 %v928
        %1065 = vmatpush1.bf16.msra.mxu0 %v927
        %1066 = vmatprep.subr.bf16.mxu0 %v930
        %1067 = vmatpush1.bf16.msra.mxu0 %v929
        %1068 = vmatprep.subr.bf16.mxu0 %v932
        %1069 = vmatpush1.bf16.msra.mxu0 %v931
        %1070 = vmatprep.subr.bf16.mxu0 %v934
        %1071 = vmatpush1.bf16.msra.mxu0 %v933
        %1072 = vmatprep.subr.bf16.mxu0 %v936
        %1073 = vmatpush1.bf16.msra.mxu0 %v935
        %1074 = vmatprep.subr.bf16.mxu0 %v938
        %1075 = vmatpush1.bf16.msra.mxu0 %v937
        %1076 = vmatprep.subr.bf16.mxu0 %v940
        %1077 = vmatpush1.bf16.msra.mxu0 %v939
        %1078 = vmatprep.subr.bf16.mxu0 %v942
        %1079 = vmatpush1.bf16.msra.mxu0 %v941
        %1080 = vmatprep.subr.bf16.mxu0 %v944
        %1081 = vmatpush1.bf16.msra.mxu0 %v943
        %1082 = vmatprep.subr.bf16.mxu0 %v946
        %1083 = vmatpush1.bf16.msra.mxu0 %v945
        %1084 = vmatprep.mubr.bf16.mxu0 %v686
        %1085 = vmatmul.mubr.bf16.gmra.mrb[0].mxu0 %v685
        %v1086 = vpop.f32.mrb[0].mxu0
        %v1087 = vadd.f32 %v1046, %v1086
        %v1088 = vpop.f32.mrb[0].mxu0
        %v1089 = vadd.f32 %v1048, %v1088
        %v1090 = vpop.f32.mrb[0].mxu0
        %v1091 = vpop.f32.mrb[0].mxu0
        %1092 = vdwg.mxu0
        %v1093 = vadd.f32 %v609, %v1087
        %v1094 = vadd.f32 %v610, %v1089
        %1095 = vst [vmem:[#allocation2] sm:$0xff] %v1093
        %1096 = vst [vmem:[#allocation2 + $0x8] sm:$0xff] %v1094
        %p1097 = scmp.eq.s32.totalorder %s25, 3
        // Predicated region
        $region83: #{dncnet_forward.14} parent=69 // pred_check
          %p1098 = pneg %p1097
        $region84: #{dncnet_forward.14} parent=69 // pred_check_branch
          %1100 = sbr.rel (%p1098) target = $region86
        $region85: #{dncnet_forward.14} parent=69 // pred_region
          %v1101 = vld [vmem:[#allocation2] sm:$0xff]
          %v1102 = vld [vmem:[#allocation2 + $0x8] sm:$0xff]
          %v1103 = vld [vmem:[%s586] sm:$0x3]
          %v1105 = vlaneseq
          %v1106 = vshrl.u32 %v1105, 7
          %v1107 = vsub.s32 0, %v1106
          %v1108 = vrot.slane %v1103, %v1107
          %v1109 = vlaneseq
          %v1110 = vshrl.u32 %v1109, 7
          %v1111 = vsub.s32 1, %v1110
          %v1112 = vrot.slane %v1103, %v1111
          %v1115 = vadd.f32 %v1101, %v1108
          %v1116 = vadd.f32 %v1102, %v1112
          %v1117 = vmul.f32 %v1115, %v1115
          %v1118 = vmul.f32 %v1116, %v1116
          %v1119 = vadd.f32 %v1117, %v1118
          %1120 = vadd.xlane.f32.xlu0 %v1119
          %v1121 = vpop.xlane.xlu0 %1120
          %v1122 = vrsqrt.pop %v1121
          %v1123 = vmul.f32 %v1121, %v1122
          %vm1124 = vcmp.eq.f32.partialorder %v1121, inf
          %v1125 = vsel %vm1124, %v1121, %v1123
          %vm1126 = vcmp.eq.f32.partialorder %v1121, 0.0
          %v1127 = vand.u32 %v1121, 2147483648
          %v1128 = vsel %vm1126, %v1127, %v1125
          %v1129 = vadd.f32 %v1128, 1e-08
          %v1130 = vrcp.pop %v1129
          %v1131 = vmul.f32 %v1115, %v1130
          %v1132 = vmul.f32 %v1116, %v1130
          %v1133 = vld [vmem:[%s591] sm:$0x3]
          %v1135 = vlaneseq
          %v1136 = vshrl.u32 %v1135, 7
          %v1137 = vsub.s32 0, %v1136
          %v1138 = vrot.slane %v1133, %v1137
          %v1139 = vlaneseq
          %v1140 = vshrl.u32 %v1139, 7
          %v1141 = vsub.s32 1, %v1140
          %v1142 = vrot.slane %v1133, %v1141
          %v1145 = vmul.f32 %v1131, %v1138
          %v1146 = vmul.f32 %v1132, %v1142
          %v1147 = vpack.c.bf16 %v1145, %v1145
          %v1148 = vpack.c.bf16 %v1146, %v1146
          %v1151 = vunpack.c.l.b16 %v1147
          %v1152 = vunpack.c.l.b16 %v1148
          %v1153 = vpack.c.b16 %v1152, %v1151
          %1155 = vst [vmem:[%s601] sm:$0xff] %v1153
        $region86: #{dncnet_forward.14} parent=69 // pred_fallthru
          _
        %s1156 = smul.u32 2, %s24
        %p1157 = scmp.lt.s32.totalorder %s23, 0
        %s1158 = scalar_select %p1157, %s23, 0
        %p1159 = scmp.lt.s32.totalorder %s1156, 31
        %s1160 = scalar_select %p1159, %s1156, 31
        %s1161 = smul.addr %s1158, 32
        %s1162 = sadd.s32 %s1160, %s1161
        %s1163 = smul.addr %s1162, 4
        %s1164 = scalar_lea.vmem %s4, %s1163
        // Predicated region
        $region87: #{dncnet_forward.14} parent=69 // pred_check
          %p1165 = pneg %p165
        $region88: #{dncnet_forward.14} parent=69 // pred_check_branch
          %1167 = sbr.rel (%p1165) target = $region90
        $region89: #{dncnet_forward.14} parent=69 // pred_region
          %s1168 = smul.u32 2, %s24
        $region90: #{dncnet_forward.14} parent=69 // pred_fallthru
          _
      $region70: #{dncnet_forward.14} parent=5 // pred_fallthru
        _
      %p1169 = scmp.le.s32.totalorder 2, %s13
      // Predicated region
      $region91: #{dncnet_forward.14} parent=5 // pred_check
        %p1170 = pneg %p1169
      $region92: #{dncnet_forward.14} parent=5 // pred_check_branch
        %1172 = sbr.rel (%p1170) target = $region94
      $region93: #{dncnet_forward.14} parent=5 // pred_region
        %s1173 = ssub.s32 %s13, 2
        // Predicated region
        $region95: #{dncnet_forward.14} parent=93 // pred_check
          %p1174 = pneg %p171
        $region96: #{dncnet_forward.14} parent=93 // pred_check_branch
          %1176 = sbr.rel (%p1174) target = $region98
        $region97: #{dncnet_forward.14} parent=93 // pred_region
          %s1177 = smul.u32 2, %s27
          %p1178 = scmp.lt.s32.totalorder %s26, 0
          %s1179 = scalar_select %p1178, %s26, 0
          %p1180 = scmp.lt.s32.totalorder %s1177, 31
          %s1181 = scalar_select %p1180, %s1177, 31
          %s1182 = smul.addr %s1179, 32
          %s1183 = sadd.s32 %s1181, %s1182
          %s1184 = smul.addr %s1183, 4
          %s1185 = scalar_lea.vmem %s4, %s1184
        $region98: #{dncnet_forward.14} parent=93 // pred_fallthru
          _
      $region94: #{dncnet_forward.14} parent=5 // pred_fallthru
        _
    $region6: #{dncnet_forward.14} parent=1 // loop_footer
      %s17 = sadd.s32 1, %s13
    $region7: #{dncnet_forward.14} parent=1 // loop_footer_branch
      %12 = sbr.rel target = $region3
    $region8: #{dncnet_forward.14} parent=1 // loop_exit
      _
    %1186 = vsyncpa [#allocation4], 1
    %s1187 = scalar_lea.sflag [#allocation4], 1
    %1188 = vsyncpa %s1187, 1

// kernel: dncnet_forward.16
$region0: #{dncnet_forward.16}
  #allocation0 [shape = 'u32[]', space=smem, size = 0x4, offset = 0x4, fixed_abs, tag = 'smem constant byte address 0x4 - core index']
  #allocation1 [shape = 'u32[144,128]{1,0:T(1,128)}', space=vmem, size = 0x12000, scoped, tag = 'internal scratch']
  %s0 = inlined_call_operand.vmem [shape: bf16[128,256], index: 0, kind: input, shape index: {}]
  %s1 = inlined_call_operand.vmem [shape: f32[2,256], index: 1, kind: output, shape index: {}]
  %s2 = sld [smem:[#allocation0]]
  $region18: #{dncnet_forward.16} parent=0
    _
  %s4 = ssub.s32 1, %s2
  %s5 = scalar_select 0, %s4, %s2
  // Predicated region
  $region2: #{dncnet_forward.16} parent=0 // pred_check
    _
  $region3: #{dncnet_forward.16} parent=0 // pred_check_branch
    %7 = sbr.rel (0) target = $region5
  $region4: #{dncnet_forward.16} parent=0 // pred_region
    _
  $region5: #{dncnet_forward.16} parent=0 // pred_fallthru
    _
  %p8 = scmp.eq.s32.totalorder 0, 0
  // Predicated region
  $region6: #{dncnet_forward.16} parent=0 // pred_check
    %p9 = pneg %p8
  $region7: #{dncnet_forward.16} parent=0 // pred_check_branch
    %11 = sbr.rel (%p9) target = $region9
  $region8: #{dncnet_forward.16} parent=0 // pred_region
    %12 = vst [vmem:[%s1] sm:$0xf] 0.0
  $region9: #{dncnet_forward.16} parent=0 // pred_fallthru
    _
  %v13 = vld [vmem:[%s0] sm:$0xff]
  %v14 = vld [vmem:[%s0 + $0x8] sm:$0xff]
  %v15 = vld [vmem:[%s0 + $0x10] sm:$0xff]
  %v16 = vld [vmem:[%s0 + $0x18] sm:$0xff]
  %v17 = vld [vmem:[%s0 + $0x20] sm:$0xff]
  %v18 = vld [vmem:[%s0 + $0x28] sm:$0xff]
  %v19 = vld [vmem:[%s0 + $0x30] sm:$0xff]
  %v20 = vld [vmem:[%s0 + $0x38] sm:$0xff]
  %v21 = vld [vmem:[%s0 + $0x40] sm:$0xff]
  %v22 = vld [vmem:[%s0 + $0x48] sm:$0xff]
  %v23 = vld [vmem:[%s0 + $0x50] sm:$0xff]
  %v24 = vld [vmem:[%s0 + $0x58] sm:$0xff]
  %v25 = vld [vmem:[%s0 + $0x60] sm:$0xff]
  %v26 = vld [vmem:[%s0 + $0x68] sm:$0xff]
  %v27 = vld [vmem:[%s0 + $0x70] sm:$0xff]
  %v28 = vld [vmem:[%s0 + $0x78] sm:$0xff]
  %v29 = vunpack.c.l.bf16 %v13
  %v30 = vunpack.c.h.bf16 %v13
  %v31 = vunpack.c.l.bf16 %v14
  %v32 = vunpack.c.h.bf16 %v14
  %v33 = vunpack.c.l.bf16 %v15
  %v34 = vunpack.c.h.bf16 %v15
  %v35 = vunpack.c.l.bf16 %v16
  %v36 = vunpack.c.h.bf16 %v16
  %v37 = vunpack.c.l.bf16 %v17
  %v38 = vunpack.c.h.bf16 %v17
  %v39 = vunpack.c.l.bf16 %v18
  %v40 = vunpack.c.h.bf16 %v18
  %v41 = vunpack.c.l.bf16 %v19
  %v42 = vunpack.c.h.bf16 %v19
  %v43 = vunpack.c.l.bf16 %v20
  %v44 = vunpack.c.h.bf16 %v20
  %v45 = vunpack.c.l.bf16 %v21
  %v46 = vunpack.c.h.bf16 %v21
  %v47 = vunpack.c.l.bf16 %v22
  %v48 = vunpack.c.h.bf16 %v22
  %v49 = vunpack.c.l.bf16 %v23
  %v50 = vunpack.c.h.bf16 %v23
  %v51 = vunpack.c.l.bf16 %v24
  %v52 = vunpack.c.h.bf16 %v24
  %v53 = vunpack.c.l.bf16 %v25
  %v54 = vunpack.c.h.bf16 %v25
  %v55 = vunpack.c.l.bf16 %v26
  %v56 = vunpack.c.h.bf16 %v26
  %v57 = vunpack.c.l.bf16 %v27
  %v58 = vunpack.c.h.bf16 %v27
  %v59 = vunpack.c.l.bf16 %v28
  %v60 = vunpack.c.h.bf16 %v28
  %v61 = vld [vmem:[%s1] ss:$2 sm:$0x3]
  %v62 = vadd.f32 %v29, %v31
  %v63 = vadd.f32 %v62, %v33
  %v64 = vadd.f32 %v63, %v35
  %v65 = vadd.f32 %v64, %v37
  %v66 = vadd.f32 %v65, %v39
  %v67 = vadd.f32 %v66, %v41
  %v68 = vadd.f32 %v67, %v43
  %v69 = vadd.f32 %v68, %v45
  %v70 = vadd.f32 %v69, %v47
  %v71 = vadd.f32 %v70, %v49
  %v72 = vadd.f32 %v71, %v51
  %v73 = vadd.f32 %v72, %v53
  %v74 = vadd.f32 %v73, %v55
  %v75 = vadd.f32 %v74, %v57
  %v76 = vadd.f32 %v75, %v59
  %v77 = vrot.slane %v76, 4
  %v78 = vadd.f32 %v76, %v77
  %v79 = vrot.slane %v78, 2
  %v80 = vadd.f32 %v78, %v79
  %v81 = vrot.slane %v80, 1
  %v82 = vadd.f32 %v80, %v81
  %v83 = vadd.f32 %v30, %v32
  %v84 = vadd.f32 %v83, %v34
  %v85 = vadd.f32 %v84, %v36
  %v86 = vadd.f32 %v85, %v38
  %v87 = vadd.f32 %v86, %v40
  %v88 = vadd.f32 %v87, %v42
  %v89 = vadd.f32 %v88, %v44
  %v90 = vadd.f32 %v89, %v46
  %v91 = vadd.f32 %v90, %v48
  %v92 = vadd.f32 %v91, %v50
  %v93 = vadd.f32 %v92, %v52
  %v94 = vadd.f32 %v93, %v54
  %v95 = vadd.f32 %v94, %v56
  %v96 = vadd.f32 %v95, %v58
  %v97 = vadd.f32 %v96, %v60
  %v98 = vrot.slane %v97, 4
  %v99 = vadd.f32 %v97, %v98
  %v100 = vrot.slane %v99, 2
  %v101 = vadd.f32 %v99, %v100
  %v102 = vrot.slane %v101, 1
  %v103 = vadd.f32 %v101, %v102
  %v106 = vcombine.low %v82, %v103
  %v108 = vunpack.c.l.s4 1966171168
  %v109 = vunpack.c.0.s8 %v108
  %v110 = vlaneseq
  %v111 = vshrl.u32 %v110, 7
  %v112 = vsub.s32 %v109, %v111
  %v113 = vrot.slane %v106, %v112
  %v115 = vunpack.c.l.s4 1966171168
  %v116 = vunpack.c.0.s8 %v115
  %v117 = vlaneseq
  %v118 = vshrl.u32 %v117, 7
  %v119 = vsub.s32 %v116, %v118
  %v120 = vrot.slane %v113, %v119
  %v122 = vadd.f32 %v61, %v120
  %v123 = vlaneseq
  %vm124 = vcmp.ge.s32.totalorder %v123, 0
  %vm125 = vcmp.lt.s32.totalorder %v123, 256
  %vm126 = vmand %vm124, %vm125
  %127 = vst.msk [vmem:[%s1] ss:$2 sm:$0x3] %vm126, %v122
  %s128 = scalar_lea.vmem %s1, 1
  %v129 = vld [vmem:[%s128] ss:$2 sm:$0x3]
  %v130 = vmul.f32 %v29, %v29
  %v131 = vmul.f32 %v30, %v30
  %v132 = vmul.f32 %v31, %v31
  %v133 = vmul.f32 %v32, %v32
  %v134 = vmul.f32 %v33, %v33
  %v135 = vmul.f32 %v34, %v34
  %v136 = vmul.f32 %v35, %v35
  %v137 = vmul.f32 %v36, %v36
  %v138 = vmul.f32 %v37, %v37
  %v139 = vmul.f32 %v38, %v38
  %v140 = vmul.f32 %v39, %v39
  %v141 = vmul.f32 %v40, %v40
  %v142 = vmul.f32 %v41, %v41
  %v143 = vmul.f32 %v42, %v42
  %v144 = vmul.f32 %v43, %v43
  %v145 = vmul.f32 %v44, %v44
  %v146 = vmul.f32 %v45, %v45
  %v147 = vmul.f32 %v46, %v46
  %v148 = vmul.f32 %v47, %v47
  %v149 = vmul.f32 %v48, %v48
  %v150 = vmul.f32 %v49, %v49
  %v151 = vmul.f32 %v50, %v50
  %v152 = vmul.f32 %v51, %v51
  %v153 = vmul.f32 %v52, %v52
  %v154 = vmul.f32 %v53, %v53
  %v155 = vmul.f32 %v54, %v54
  %v156 = vmul.f32 %v55, %v55
  %v157 = vmul.f32 %v56, %v56
  %v158 = vmul.f32 %v57, %v57
  %v159 = vmul.f32 %v58, %v58
  %v160 = vmul.f32 %v59, %v59
  %v161 = vmul.f32 %v60, %v60
  %v162 = vadd.f32 %v130, %v132
  %v163 = vadd.f32 %v162, %v134
  %v164 = vadd.f32 %v163, %v136
  %v165 = vadd.f32 %v164, %v138
  %v166 = vadd.f32 %v165, %v140
  %v167 = vadd.f32 %v166, %v142
  %v168 = vadd.f32 %v167, %v144
  %v169 = vadd.f32 %v168, %v146
  %v170 = vadd.f32 %v169, %v148
  %v171 = vadd.f32 %v170, %v150
  %v172 = vadd.f32 %v171, %v152
  %v173 = vadd.f32 %v172, %v154
  %v174 = vadd.f32 %v173, %v156
  %v175 = vadd.f32 %v174, %v158
  %v176 = vadd.f32 %v175, %v160
  %v177 = vrot.slane %v176, 4
  %v178 = vadd.f32 %v176, %v177
  %v179 = vrot.slane %v178, 2
  %v180 = vadd.f32 %v178, %v179
  %v181 = vrot.slane %v180, 1
  %v182 = vadd.f32 %v180, %v181
  %v183 = vadd.f32 %v131, %v133
  %v184 = vadd.f32 %v183, %v135
  %v185 = vadd.f32 %v184, %v137
  %v186 = vadd.f32 %v185, %v139
  %v187 = vadd.f32 %v186, %v141
  %v188 = vadd.f32 %v187, %v143
  %v189 = vadd.f32 %v188, %v145
  %v190 = vadd.f32 %v189, %v147
  %v191 = vadd.f32 %v190, %v149
  %v192 = vadd.f32 %v191, %v151
  %v193 = vadd.f32 %v192, %v153
  %v194 = vadd.f32 %v193, %v155
  %v195 = vadd.f32 %v194, %v157
  %v196 = vadd.f32 %v195, %v159
  %v197 = vadd.f32 %v196, %v161
  %v198 = vrot.slane %v197, 4
  %v199 = vadd.f32 %v197, %v198
  %v200 = vrot.slane %v199, 2
  %v201 = vadd.f32 %v199, %v200
  %v202 = vrot.slane %v201, 1
  %v203 = vadd.f32 %v201, %v202
  %v206 = vcombine.low %v182, %v203
  %v208 = vunpack.c.l.s4 1966171168
  %v209 = vunpack.c.0.s8 %v208
  %v210 = vlaneseq
  %v211 = vshrl.u32 %v210, 7
  %v212 = vsub.s32 %v209, %v211
  %v213 = vrot.slane %v206, %v212
  %v215 = vunpack.c.l.s4 1966171168
  %v216 = vunpack.c.0.s8 %v215
  %v217 = vlaneseq
  %v218 = vshrl.u32 %v217, 7
  %v219 = vsub.s32 %v216, %v218
  %v220 = vrot.slane %v213, %v219
  %v222 = vadd.f32 %v129, %v220
  %223 = vst.msk [vmem:[%s128] ss:$2 sm:$0x3] %vm126, %v222
  // Predicated region
  $region10: #{dncnet_forward.16} parent=0 // pred_check
    _
  $region11: #{dncnet_forward.16} parent=0 // pred_check_branch
    %225 = sbr.rel (0) target = $region13
  $region12: #{dncnet_forward.16} parent=0 // pred_region
    _
  $region13: #{dncnet_forward.16} parent=0 // pred_fallthru
    _
  // Predicated region
  $region14: #{dncnet_forward.16} parent=0 // pred_check
    _
  $region15: #{dncnet_forward.16} parent=0 // pred_check_branch
    %227 = sbr.rel (0) target = $region17
  $region16: #{dncnet_forward.16} parent=0 // pred_region
    _
  $region17: #{dncnet_forward.16} parent=0 // pred_fallthru
    _

// kernel: dncnet_forward.17
$region0: #{dncnet_forward.17}
  #allocation0 [shape = 'u32[]', space=smem, size = 0x4, offset = 0x4, fixed_abs, tag = 'smem constant byte address 0x4 - core index']
  #allocation1 [shape = 'u32[144,128]{1,0:T(1,128)}', space=vmem, size = 0x12000, scoped, tag = 'internal scratch']
  %s0 = inlined_call_operand.vmem [shape: bf16[128,256], index: 0, kind: input, shape index: {}]
  %s1 = inlined_call_operand.vmem [shape: f32[2,256], index: 1, kind: input, shape index: {}]
  %s2 = inlined_call_operand.vmem [shape: f32[1,256], index: 2, kind: input, shape index: {}]
  %s3 = inlined_call_operand.vmem [shape: f32[1,256], index: 3, kind: input, shape index: {}]
  %s4 = inlined_call_operand.vmem [shape: bf16[256,8], index: 4, kind: input, shape index: {}]
  %s5 = inlined_call_operand.vmem [shape: f32[1,8], index: 5, kind: input, shape index: {}]
  %s6 = inlined_call_operand.vmem [shape: f32[128,8], index: 6, kind: output, shape index: {}]
  %s7 = sld [smem:[#allocation0]]
  $region34: #{dncnet_forward.17} parent=0
    _
  %s9 = ssub.s32 1, %s7
  %s10 = scalar_select 0, %s9, %s7
  // Predicated region
  $region2: #{dncnet_forward.17} parent=0 // pred_check
    _
  $region3: #{dncnet_forward.17} parent=0 // pred_check_branch
    %12 = sbr.rel (0) target = $region5
  $region4: #{dncnet_forward.17} parent=0 // pred_region
    _
  $region5: #{dncnet_forward.17} parent=0 // pred_fallthru
    _
  // Predicated region
  $region6: #{dncnet_forward.17} parent=0 // pred_check
    _
  $region7: #{dncnet_forward.17} parent=0 // pred_check_branch
    %14 = sbr.rel (0) target = $region9
  $region8: #{dncnet_forward.17} parent=0 // pred_region
    _
  $region9: #{dncnet_forward.17} parent=0 // pred_fallthru
    _
  // Predicated region
  $region10: #{dncnet_forward.17} parent=0 // pred_check
    _
  $region11: #{dncnet_forward.17} parent=0 // pred_check_branch
    %16 = sbr.rel (0) target = $region13
  $region12: #{dncnet_forward.17} parent=0 // pred_region
    _
  $region13: #{dncnet_forward.17} parent=0 // pred_fallthru
    _
  // Predicated region
  $region14: #{dncnet_forward.17} parent=0 // pred_check
    _
  $region15: #{dncnet_forward.17} parent=0 // pred_check_branch
    %18 = sbr.rel (0) target = $region17
  $region16: #{dncnet_forward.17} parent=0 // pred_region
    _
  $region17: #{dncnet_forward.17} parent=0 // pred_fallthru
    _
  // Predicated region
  $region18: #{dncnet_forward.17} parent=0 // pred_check
    _
  $region19: #{dncnet_forward.17} parent=0 // pred_check_branch
    %20 = sbr.rel (0) target = $region21
  $region20: #{dncnet_forward.17} parent=0 // pred_region
    _
  $region21: #{dncnet_forward.17} parent=0 // pred_fallthru
    _
  // Predicated region
  $region22: #{dncnet_forward.17} parent=0 // pred_check
    _
  $region23: #{dncnet_forward.17} parent=0 // pred_check_branch
    %22 = sbr.rel (0) target = $region25
  $region24: #{dncnet_forward.17} parent=0 // pred_region
    _
  $region25: #{dncnet_forward.17} parent=0 // pred_fallthru
    _
  %v24 = vld [vmem:[%s0] sm:$0xff]
  %v25 = vld [vmem:[%s0 + $0x8] sm:$0xff]
  %v26 = vld [vmem:[%s0 + $0x10] sm:$0xff]
  %v27 = vld [vmem:[%s0 + $0x18] sm:$0xff]
  %v28 = vld [vmem:[%s0 + $0x20] sm:$0xff]
  %v29 = vld [vmem:[%s0 + $0x28] sm:$0xff]
  %v30 = vld [vmem:[%s0 + $0x30] sm:$0xff]
  %v31 = vld [vmem:[%s0 + $0x38] sm:$0xff]
  %v32 = vld [vmem:[%s0 + $0x40] sm:$0xff]
  %v33 = vld [vmem:[%s0 + $0x48] sm:$0xff]
  %v34 = vld [vmem:[%s0 + $0x50] sm:$0xff]
  %v35 = vld [vmem:[%s0 + $0x58] sm:$0xff]
  %v36 = vld [vmem:[%s0 + $0x60] sm:$0xff]
  %v37 = vld [vmem:[%s0 + $0x68] sm:$0xff]
  %v38 = vld [vmem:[%s0 + $0x70] sm:$0xff]
  %v39 = vld [vmem:[%s0 + $0x78] sm:$0xff]
  %v40 = vunpack.c.l.bf16 %v24
  %v41 = vunpack.c.h.bf16 %v24
  %v42 = vunpack.c.l.bf16 %v25
  %v43 = vunpack.c.h.bf16 %v25
  %v44 = vunpack.c.l.bf16 %v26
  %v45 = vunpack.c.h.bf16 %v26
  %v46 = vunpack.c.l.bf16 %v27
  %v47 = vunpack.c.h.bf16 %v27
  %v48 = vunpack.c.l.bf16 %v28
  %v49 = vunpack.c.h.bf16 %v28
  %v50 = vunpack.c.l.bf16 %v29
  %v51 = vunpack.c.h.bf16 %v29
  %v52 = vunpack.c.l.bf16 %v30
  %v53 = vunpack.c.h.bf16 %v30
  %v54 = vunpack.c.l.bf16 %v31
  %v55 = vunpack.c.h.bf16 %v31
  %v56 = vunpack.c.l.bf16 %v32
  %v57 = vunpack.c.h.bf16 %v32
  %v58 = vunpack.c.l.bf16 %v33
  %v59 = vunpack.c.h.bf16 %v33
  %v60 = vunpack.c.l.bf16 %v34
  %v61 = vunpack.c.h.bf16 %v34
  %v62 = vunpack.c.l.bf16 %v35
  %v63 = vunpack.c.h.bf16 %v35
  %v64 = vunpack.c.l.bf16 %v36
  %v65 = vunpack.c.h.bf16 %v36
  %v66 = vunpack.c.l.bf16 %v37
  %v67 = vunpack.c.h.bf16 %v37
  %v68 = vunpack.c.l.bf16 %v38
  %v69 = vunpack.c.h.bf16 %v38
  %v70 = vunpack.c.l.bf16 %v39
  %v71 = vunpack.c.h.bf16 %v39
  %v72 = vld [vmem:[%s1] ss:$2 sm:$0x3]
  %v73 = vmul.f32 %v72, 0.0078125
  %s74 = scalar_lea.vmem %s1, 1
  %v75 = vld [vmem:[%s74] ss:$2 sm:$0x3]
  %v76 = vmul.f32 %v75, 0.0078125
  %v77 = vmul.f32 %v73, %v73
  %v78 = vsub.f32 %v76, %v77
  %v79 = vmax.f32 %v78, 0.0
  %v81 = vlaneseq
  %v82 = vshrl.u32 %v81, 7
  %v83 = vsub.s32 0, %v82
  %v84 = vrot.slane %v73, %v83
  %v85 = vlaneseq
  %v86 = vshrl.u32 %v85, 7
  %v87 = vsub.s32 1, %v86
  %v88 = vrot.slane %v73, %v87
  %v91 = vsub.f32 %v40, %v84
  %v92 = vsub.f32 %v41, %v88
  %v93 = vsub.f32 %v42, %v84
  %v94 = vsub.f32 %v43, %v88
  %v95 = vsub.f32 %v44, %v84
  %v96 = vsub.f32 %v45, %v88
  %v97 = vsub.f32 %v46, %v84
  %v98 = vsub.f32 %v47, %v88
  %v99 = vsub.f32 %v48, %v84
  %v100 = vsub.f32 %v49, %v88
  %v101 = vsub.f32 %v50, %v84
  %v102 = vsub.f32 %v51, %v88
  %v103 = vsub.f32 %v52, %v84
  %v104 = vsub.f32 %v53, %v88
  %v105 = vsub.f32 %v54, %v84
  %v106 = vsub.f32 %v55, %v88
  %v107 = vsub.f32 %v56, %v84
  %v108 = vsub.f32 %v57, %v88
  %v109 = vsub.f32 %v58, %v84
  %v110 = vsub.f32 %v59, %v88
  %v111 = vsub.f32 %v60, %v84
  %v112 = vsub.f32 %v61, %v88
  %v113 = vsub.f32 %v62, %v84
  %v114 = vsub.f32 %v63, %v88
  %v115 = vsub.f32 %v64, %v84
  %v116 = vsub.f32 %v65, %v88
  %v117 = vsub.f32 %v66, %v84
  %v118 = vsub.f32 %v67, %v88
  %v119 = vsub.f32 %v68, %v84
  %v120 = vsub.f32 %v69, %v88
  %v121 = vsub.f32 %v70, %v84
  %v122 = vsub.f32 %v71, %v88
  %v123 = vadd.f32 %v79, 1e-05
  %v124 = vrsqrt.pop %v123
  %v126 = vlaneseq
  %v127 = vshrl.u32 %v126, 7
  %v128 = vsub.s32 0, %v127
  %v129 = vrot.slane %v124, %v128
  %v130 = vlaneseq
  %v131 = vshrl.u32 %v130, 7
  %v132 = vsub.s32 1, %v131
  %v133 = vrot.slane %v124, %v132
  %v136 = vmul.f32 %v91, %v129
  %v137 = vmul.f32 %v92, %v133
  %v138 = vmul.f32 %v93, %v129
  %v139 = vmul.f32 %v94, %v133
  %v140 = vmul.f32 %v95, %v129
  %v141 = vmul.f32 %v96, %v133
  %v142 = vmul.f32 %v97, %v129
  %v143 = vmul.f32 %v98, %v133
  %v144 = vmul.f32 %v99, %v129
  %v145 = vmul.f32 %v100, %v133
  %v146 = vmul.f32 %v101, %v129
  %v147 = vmul.f32 %v102, %v133
  %v148 = vmul.f32 %v103, %v129
  %v149 = vmul.f32 %v104, %v133
  %v150 = vmul.f32 %v105, %v129
  %v151 = vmul.f32 %v106, %v133
  %v152 = vmul.f32 %v107, %v129
  %v153 = vmul.f32 %v108, %v133
  %v154 = vmul.f32 %v109, %v129
  %v155 = vmul.f32 %v110, %v133
  %v156 = vmul.f32 %v111, %v129
  %v157 = vmul.f32 %v112, %v133
  %v158 = vmul.f32 %v113, %v129
  %v159 = vmul.f32 %v114, %v133
  %v160 = vmul.f32 %v115, %v129
  %v161 = vmul.f32 %v116, %v133
  %v162 = vmul.f32 %v117, %v129
  %v163 = vmul.f32 %v118, %v133
  %v164 = vmul.f32 %v119, %v129
  %v165 = vmul.f32 %v120, %v133
  %v166 = vmul.f32 %v121, %v129
  %v167 = vmul.f32 %v122, %v133
  %v168 = vld [vmem:[%s2] sm:$0x3]
  %v170 = vlaneseq
  %v171 = vshrl.u32 %v170, 7
  %v172 = vsub.s32 0, %v171
  %v173 = vrot.slane %v168, %v172
  %v174 = vlaneseq
  %v175 = vshrl.u32 %v174, 7
  %v176 = vsub.s32 1, %v175
  %v177 = vrot.slane %v168, %v176
  %v180 = vmul.f32 %v136, %v173
  %v181 = vmul.f32 %v137, %v177
  %v182 = vmul.f32 %v138, %v173
  %v183 = vmul.f32 %v139, %v177
  %v184 = vmul.f32 %v140, %v173
  %v185 = vmul.f32 %v141, %v177
  %v186 = vmul.f32 %v142, %v173
  %v187 = vmul.f32 %v143, %v177
  %v188 = vmul.f32 %v144, %v173
  %v189 = vmul.f32 %v145, %v177
  %v190 = vmul.f32 %v146, %v173
  %v191 = vmul.f32 %v147, %v177
  %v192 = vmul.f32 %v148, %v173
  %v193 = vmul.f32 %v149, %v177
  %v194 = vmul.f32 %v150, %v173
  %v195 = vmul.f32 %v151, %v177
  %v196 = vmul.f32 %v152, %v173
  %v197 = vmul.f32 %v153, %v177
  %v198 = vmul.f32 %v154, %v173
  %v199 = vmul.f32 %v155, %v177
  %v200 = vmul.f32 %v156, %v173
  %v201 = vmul.f32 %v157, %v177
  %v202 = vmul.f32 %v158, %v173
  %v203 = vmul.f32 %v159, %v177
  %v204 = vmul.f32 %v160, %v173
  %v205 = vmul.f32 %v161, %v177
  %v206 = vmul.f32 %v162, %v173
  %v207 = vmul.f32 %v163, %v177
  %v208 = vmul.f32 %v164, %v173
  %v209 = vmul.f32 %v165, %v177
  %v210 = vmul.f32 %v166, %v173
  %v211 = vmul.f32 %v167, %v177
  %v212 = vld [vmem:[%s3] sm:$0x3]
  %v214 = vlaneseq
  %v215 = vshrl.u32 %v214, 7
  %v216 = vsub.s32 0, %v215
  %v217 = vrot.slane %v212, %v216
  %v218 = vlaneseq
  %v219 = vshrl.u32 %v218, 7
  %v220 = vsub.s32 1, %v219
  %v221 = vrot.slane %v212, %v220
  %v224 = vadd.f32 %v180, %v217
  %v225 = vadd.f32 %v181, %v221
  %v226 = vadd.f32 %v182, %v217
  %v227 = vadd.f32 %v183, %v221
  %v228 = vadd.f32 %v184, %v217
  %v229 = vadd.f32 %v185, %v221
  %v230 = vadd.f32 %v186, %v217
  %v231 = vadd.f32 %v187, %v221
  %v232 = vadd.f32 %v188, %v217
  %v233 = vadd.f32 %v189, %v221
  %v234 = vadd.f32 %v190, %v217
  %v235 = vadd.f32 %v191, %v221
  %v236 = vadd.f32 %v192, %v217
  %v237 = vadd.f32 %v193, %v221
  %v238 = vadd.f32 %v194, %v217
  %v239 = vadd.f32 %v195, %v221
  %v240 = vadd.f32 %v196, %v217
  %v241 = vadd.f32 %v197, %v221
  %v242 = vadd.f32 %v198, %v217
  %v243 = vadd.f32 %v199, %v221
  %v244 = vadd.f32 %v200, %v217
  %v245 = vadd.f32 %v201, %v221
  %v246 = vadd.f32 %v202, %v217
  %v247 = vadd.f32 %v203, %v221
  %v248 = vadd.f32 %v204, %v217
  %v249 = vadd.f32 %v205, %v221
  %v250 = vadd.f32 %v206, %v217
  %v251 = vadd.f32 %v207, %v221
  %v252 = vadd.f32 %v208, %v217
  %v253 = vadd.f32 %v209, %v221
  %v254 = vadd.f32 %v210, %v217
  %v255 = vadd.f32 %v211, %v221
  %v256 = vmax.f32 %v224, 0.0
  %v257 = vmax.f32 %v225, 0.0
  %v258 = vmax.f32 %v226, 0.0
  %v259 = vmax.f32 %v227, 0.0
  %v260 = vmax.f32 %v228, 0.0
  %v261 = vmax.f32 %v229, 0.0
  %v262 = vmax.f32 %v230, 0.0
  %v263 = vmax.f32 %v231, 0.0
  %v264 = vmax.f32 %v232, 0.0
  %v265 = vmax.f32 %v233, 0.0
  %v266 = vmax.f32 %v234, 0.0
  %v267 = vmax.f32 %v235, 0.0
  %v268 = vmax.f32 %v236, 0.0
  %v269 = vmax.f32 %v237, 0.0
  %v270 = vmax.f32 %v238, 0.0
  %v271 = vmax.f32 %v239, 0.0
  %v272 = vmax.f32 %v240, 0.0
  %v273 = vmax.f32 %v241, 0.0
  %v274 = vmax.f32 %v242, 0.0
  %v275 = vmax.f32 %v243, 0.0
  %v276 = vmax.f32 %v244, 0.0
  %v277 = vmax.f32 %v245, 0.0
  %v278 = vmax.f32 %v246, 0.0
  %v279 = vmax.f32 %v247, 0.0
  %v280 = vmax.f32 %v248, 0.0
  %v281 = vmax.f32 %v249, 0.0
  %v282 = vmax.f32 %v250, 0.0
  %v283 = vmax.f32 %v251, 0.0
  %v284 = vmax.f32 %v252, 0.0
  %v285 = vmax.f32 %v253, 0.0
  %v286 = vmax.f32 %v254, 0.0
  %v287 = vmax.f32 %v255, 0.0
  %v288 = vpack.c.bf16 %v258, %v256
  %v289 = vpack.c.bf16 %v259, %v257
  %v290 = vpack.c.bf16 %v262, %v260
  %v291 = vpack.c.bf16 %v263, %v261
  %v292 = vpack.c.bf16 %v266, %v264
  %v293 = vpack.c.bf16 %v267, %v265
  %v294 = vpack.c.bf16 %v270, %v268
  %v295 = vpack.c.bf16 %v271, %v269
  %v296 = vpack.c.bf16 %v274, %v272
  %v297 = vpack.c.bf16 %v275, %v273
  %v298 = vpack.c.bf16 %v278, %v276
  %v299 = vpack.c.bf16 %v279, %v277
  %v300 = vpack.c.bf16 %v282, %v280
  %v301 = vpack.c.bf16 %v283, %v281
  %v302 = vpack.c.bf16 %v286, %v284
  %v303 = vpack.c.bf16 %v287, %v285
  %v304 = vld [vmem:[%s4] sm:$0xf]
  %v305 = vld [vmem:[%s4 + $0x4] sm:$0xf]
  %v306 = vld [vmem:[%s4 + $0x8] sm:$0xf]
  %v307 = vld [vmem:[%s4 + $0xc] sm:$0xf]
  %v308 = vld [vmem:[%s4 + $0x10] sm:$0xf]
  %v309 = vld [vmem:[%s4 + $0x14] sm:$0xf]
  %v310 = vld [vmem:[%s4 + $0x18] sm:$0xf]
  %v311 = vld [vmem:[%s4 + $0x1c] sm:$0xf]
  %v312 = vld [vmem:[%s4 + $0x20] sm:$0xf]
  %v313 = vld [vmem:[%s4 + $0x24] sm:$0xf]
  %v314 = vld [vmem:[%s4 + $0x28] sm:$0xf]
  %v315 = vld [vmem:[%s4 + $0x2c] sm:$0xf]
  %v316 = vld [vmem:[%s4 + $0x30] sm:$0xf]
  %v317 = vld [vmem:[%s4 + $0x34] sm:$0xf]
  %v318 = vld [vmem:[%s4 + $0x38] sm:$0xf]
  %v319 = vld [vmem:[%s4 + $0x3c] sm:$0xf]
  %v320 = vld [vmem:[%s4 + $0x40] sm:$0xf]
  %v321 = vld [vmem:[%s4 + $0x44] sm:$0xf]
  %v322 = vld [vmem:[%s4 + $0x48] sm:$0xf]
  %v323 = vld [vmem:[%s4 + $0x4c] sm:$0xf]
  %v324 = vld [vmem:[%s4 + $0x50] sm:$0xf]
  %v325 = vld [vmem:[%s4 + $0x54] sm:$0xf]
  %v326 = vld [vmem:[%s4 + $0x58] sm:$0xf]
  %v327 = vld [vmem:[%s4 + $0x5c] sm:$0xf]
  %v328 = vld [vmem:[%s4 + $0x60] sm:$0xf]
  %v329 = vld [vmem:[%s4 + $0x64] sm:$0xf]
  %v330 = vld [vmem:[%s4 + $0x68] sm:$0xf]
  %v331 = vld [vmem:[%s4 + $0x6c] sm:$0xf]
  %v332 = vld [vmem:[%s4 + $0x70] sm:$0xf]
  %v333 = vld [vmem:[%s4 + $0x74] sm:$0xf]
  %v334 = vld [vmem:[%s4 + $0x78] sm:$0xf]
  %v335 = vld [vmem:[%s4 + $0x7c] sm:$0xf]
  %v336 = vld [vmem:[%s5] sm:$0x1]
  %v338 = vlaneseq
  %v339 = vshrl.u32 %v338, 7
  %v340 = vsub.s32 0, %v339
  %v341 = vrot.slane %v336, %v340
  %v375 = vunpack.c.l.b16 %v304
  %v376 = vunpack.c.l.b16 %v305
  %v377 = vunpack.c.l.b16 %v306
  %v378 = vunpack.c.l.b16 %v307
  %v379 = vunpack.c.l.b16 %v308
  %v380 = vunpack.c.l.b16 %v309
  %v381 = vunpack.c.l.b16 %v310
  %v382 = vunpack.c.l.b16 %v311
  %v383 = vunpack.c.l.b16 %v312
  %v384 = vunpack.c.l.b16 %v313
  %v385 = vunpack.c.l.b16 %v314
  %v386 = vunpack.c.l.b16 %v315
  %v387 = vunpack.c.l.b16 %v316
  %v388 = vunpack.c.l.b16 %v317
  %v389 = vunpack.c.l.b16 %v318
  %v390 = vunpack.c.l.b16 %v319
  %v391 = vunpack.c.l.b16 %v320
  %v392 = vunpack.c.l.b16 %v321
  %v393 = vunpack.c.l.b16 %v322
  %v394 = vunpack.c.l.b16 %v323
  %v395 = vunpack.c.l.b16 %v324
  %v396 = vunpack.c.l.b16 %v325
  %v397 = vunpack.c.l.b16 %v326
  %v398 = vunpack.c.l.b16 %v327
  %v399 = vunpack.c.l.b16 %v328
  %v400 = vunpack.c.l.b16 %v329
  %v401 = vunpack.c.l.b16 %v330
  %v402 = vunpack.c.l.b16 %v331
  %v403 = vunpack.c.l.b16 %v332
  %v404 = vunpack.c.l.b16 %v333
  %v405 = vunpack.c.l.b16 %v334
  %v406 = vunpack.c.l.b16 %v335
  %v407 = vpack.c.b16 %v376, %v375
  %v408 = vpack.c.b16 %v378, %v377
  %v409 = vpack.c.b16 %v380, %v379
  %v410 = vpack.c.b16 %v382, %v381
  %v411 = vpack.c.b16 %v384, %v383
  %v412 = vpack.c.b16 %v386, %v385
  %v413 = vpack.c.b16 %v388, %v387
  %v414 = vpack.c.b16 %v390, %v389
  %v415 = vpack.c.b16 %v392, %v391
  %v416 = vpack.c.b16 %v394, %v393
  %v417 = vpack.c.b16 %v396, %v395
  %v418 = vpack.c.b16 %v398, %v397
  %v419 = vpack.c.b16 %v400, %v399
  %v420 = vpack.c.b16 %v402, %v401
  %v421 = vpack.c.b16 %v404, %v403
  %v422 = vpack.c.b16 %v406, %v405
  %439 = vmatprep.subr.bf16.mxu0 0
  %440 = vmatpush1.bf16.msra.mxu0 %v407
  %441 = vmatprep.subr.bf16.mxu0 0
  %442 = vmatpush1.bf16.msra.mxu0 %v408
  %443 = vmatprep.subr.bf16.mxu0 0
  %444 = vmatpush1.bf16.msra.mxu0 %v409
  %445 = vmatprep.subr.bf16.mxu0 0
  %446 = vmatpush1.bf16.msra.mxu0 %v410
  %447 = vmatprep.subr.bf16.mxu0 0
  %448 = vmatpush1.bf16.msra.mxu0 %v411
  %449 = vmatprep.subr.bf16.mxu0 0
  %450 = vmatpush1.bf16.msra.mxu0 %v412
  %451 = vmatprep.subr.bf16.mxu0 0
  %452 = vmatpush1.bf16.msra.mxu0 %v413
  %453 = vmatprep.subr.bf16.mxu0 0
  %454 = vmatpush1.bf16.msra.mxu0 %v414
  %455 = vmatprep.subr.bf16.mxu0 0
  %456 = vmatpush1.bf16.msra.mxu0 %v415
  %457 = vmatprep.subr.bf16.mxu0 0
  %458 = vmatpush1.bf16.msra.mxu0 %v416
  %459 = vmatprep.subr.bf16.mxu0 0
  %460 = vmatpush1.bf16.msra.mxu0 %v417
  %461 = vmatprep.subr.bf16.mxu0 0
  %462 = vmatpush1.bf16.msra.mxu0 %v418
  %463 = vmatprep.subr.bf16.mxu0 0
  %464 = vmatpush1.bf16.msra.mxu0 %v419
  %465 = vmatprep.subr.bf16.mxu0 0
  %466 = vmatpush1.bf16.msra.mxu0 %v420
  %467 = vmatprep.subr.bf16.mxu0 0
  %468 = vmatpush1.bf16.msra.mxu0 %v421
  %469 = vmatprep.subr.bf16.mxu0 0
  %470 = vmatpush1.bf16.msra.mxu0 %v422
  %471 = vmatprep.mubr.bf16.mxu0 %v289
  %472 = vmatmul.mubr.bf16.gmra.mrb[0].mxu0 %v288
  %v473 = vpop.f32.mrb[0].mxu0
  %v474 = vadd.f32 %v341, %v473
  %v475 = vpop.f32.mrb[0].mxu0
  %v476 = vpop.f32.mrb[0].mxu0
  %v477 = vadd.f32 %v341, %v476
  %v478 = vpop.f32.mrb[0].mxu0
  %479 = vmatprep.mubr.bf16.mxu0 %v291
  %480 = vmatmul.mubr.bf16.gmra.mrb[0].mxu0 %v290
  %v481 = vpop.f32.mrb[0].mxu0
  %v482 = vadd.f32 %v341, %v481
  %v483 = vpop.f32.mrb[0].mxu0
  %v484 = vpop.f32.mrb[0].mxu0
  %v485 = vadd.f32 %v341, %v484
  %v486 = vpop.f32.mrb[0].mxu0
  %487 = vmatprep.mubr.bf16.mxu0 %v293
  %488 = vmatmul.mubr.bf16.gmra.mrb[0].mxu0 %v292
  %v489 = vpop.f32.mrb[0].mxu0
  %v490 = vadd.f32 %v341, %v489
  %v491 = vpop.f32.mrb[0].mxu0
  %v492 = vpop.f32.mrb[0].mxu0
  %v493 = vadd.f32 %v341, %v492
  %v494 = vpop.f32.mrb[0].mxu0
  %495 = vmatprep.mubr.bf16.mxu0 %v295
  %496 = vmatmul.mubr.bf16.gmra.mrb[0].mxu0 %v294
  %v497 = vpop.f32.mrb[0].mxu0
  %v498 = vadd.f32 %v341, %v497
  %v499 = vpop.f32.mrb[0].mxu0
  %v500 = vpop.f32.mrb[0].mxu0
  %v501 = vadd.f32 %v341, %v500
  %v502 = vpop.f32.mrb[0].mxu0
  %503 = vmatprep.mubr.bf16.mxu0 %v297
  %504 = vmatmul.mubr.bf16.gmra.mrb[0].mxu0 %v296
  %v505 = vpop.f32.mrb[0].mxu0
  %v506 = vadd.f32 %v341, %v505
  %v507 = vpop.f32.mrb[0].mxu0
  %v508 = vpop.f32.mrb[0].mxu0
  %v509 = vadd.f32 %v341, %v508
  %v510 = vpop.f32.mrb[0].mxu0
  %511 = vmatprep.mubr.bf16.mxu0 %v299
  %512 = vmatmul.mubr.bf16.gmra.mrb[0].mxu0 %v298
  %v513 = vpop.f32.mrb[0].mxu0
  %v514 = vadd.f32 %v341, %v513
  %v515 = vpop.f32.mrb[0].mxu0
  %v516 = vpop.f32.mrb[0].mxu0
  %v517 = vadd.f32 %v341, %v516
  %v518 = vpop.f32.mrb[0].mxu0
  %519 = vmatprep.mubr.bf16.mxu0 %v301
  %520 = vmatmul.mubr.bf16.gmra.mrb[0].mxu0 %v300
  %v521 = vpop.f32.mrb[0].mxu0
  %v522 = vadd.f32 %v341, %v521
  %v523 = vpop.f32.mrb[0].mxu0
  %v524 = vpop.f32.mrb[0].mxu0
  %v525 = vadd.f32 %v341, %v524
  %v526 = vpop.f32.mrb[0].mxu0
  %527 = vmatprep.mubr.bf16.mxu0 %v303
  %528 = vmatmul.mubr.bf16.gmra.mrb[0].mxu0 %v302
  %v529 = vpop.f32.mrb[0].mxu0
  %v530 = vadd.f32 %v341, %v529
  %v531 = vpop.f32.mrb[0].mxu0
  %v532 = vpop.f32.mrb[0].mxu0
  %v533 = vadd.f32 %v341, %v532
  %v534 = vpop.f32.mrb[0].mxu0
  %535 = vdwg.mxu0
  %vm536 = vcmask 64512
  %537 = vst.msk [vmem:[%s6] sm:$0xff] %vm536, %v474
  %538 = vst.msk [vmem:[%s6 + $0x8] sm:$0xff] %vm536, %v477
  %539 = vst.msk [vmem:[%s6 + $0x10] sm:$0xff] %vm536, %v482
  %540 = vst.msk [vmem:[%s6 + $0x18] sm:$0xff] %vm536, %v485
  %541 = vst.msk [vmem:[%s6 + $0x20] sm:$0xff] %vm536, %v490
  %542 = vst.msk [vmem:[%s6 + $0x28] sm:$0xff] %vm536, %v493
  %543 = vst.msk [vmem:[%s6 + $0x30] sm:$0xff] %vm536, %v498
  %544 = vst.msk [vmem:[%s6 + $0x38] sm:$0xff] %vm536, %v501
  %545 = vst.msk [vmem:[%s6 + $0x40] sm:$0xff] %vm536, %v506
  %546 = vst.msk [vmem:[%s6 + $0x48] sm:$0xff] %vm536, %v509
  %547 = vst.msk [vmem:[%s6 + $0x50] sm:$0xff] %vm536, %v514
  %548 = vst.msk [vmem:[%s6 + $0x58] sm:$0xff] %vm536, %v517
  %549 = vst.msk [vmem:[%s6 + $0x60] sm:$0xff] %vm536, %v522
  %550 = vst.msk [vmem:[%s6 + $0x68] sm:$0xff] %vm536, %v525
  %551 = vst.msk [vmem:[%s6 + $0x70] sm:$0xff] %vm536, %v530
  %552 = vst.msk [vmem:[%s6 + $0x78] sm:$0xff] %vm536, %v533
  // Predicated region
  $region26: #{dncnet_forward.17} parent=0 // pred_check
    _
  $region27: #{dncnet_forward.17} parent=0 // pred_check_branch
    %554 = sbr.rel (0) target = $region29
  $region28: #{dncnet_forward.17} parent=0 // pred_region
    _
  $region29: #{dncnet_forward.17} parent=0 // pred_fallthru
    _
  // Predicated region
  $region30: #{dncnet_forward.17} parent=0 // pred_check
    _
  $region31: #{dncnet_forward.17} parent=0 // pred_check_branch
    %556 = sbr.rel (0) target = $region33
  $region32: #{dncnet_forward.17} parent=0 // pred_region
    _
  $region33: #{dncnet_forward.17} parent=0 // pred_fallthru
    _

// kernel: dncnet_forward.15
$region0: #{dncnet_forward.15}
  #allocation0 [shape = 'u32[]', space=smem, size = 0x4, offset = 0x4, fixed_abs, tag = 'smem constant byte address 0x4 - core index']
  #allocation1 [shape = 'u32[144,128]{1,0:T(1,128)}', space=vmem, size = 0x12000, scoped, tag = 'internal scratch']
  #allocation2 [shape = 'f32[8,256]{1,0:T(8,128)}', space=vmem, size = 0x2000, scoped, tag = 'scratch operand']
  %s0 = inlined_call_operand.vmem [shape: bf16[2,10,10,256], index: 0, kind: input, shape index: {}]
  %s1 = inlined_call_operand.vmem [shape: bf16[2,10,10,256], index: 1, kind: input, shape index: {}]
  %s2 = inlined_call_operand.vmem [shape: bf16[2,10,10,256], index: 2, kind: input, shape index: {}]
  %s3 = inlined_call_operand.vmem [shape: bf16[3,3,256,256], index: 3, kind: input, shape index: {}]
  %s4 = inlined_call_operand.vmem [shape: bf16[3,3,256,256], index: 4, kind: input, shape index: {}]
  %s5 = inlined_call_operand.vmem [shape: bf16[3,3,256,256], index: 5, kind: input, shape index: {}]
  %s6 = inlined_call_operand.vmem [shape: bf16[2,8,8,256], index: 6, kind: output, shape index: {}]
  %s7 = sld [smem:[#allocation0]]
  $region65: #{dncnet_forward.15} parent=0
    _
  %s9 = ssub.s32 1, %s7
  %s10 = scalar_select 0, %s9, %s7
  loop: start=0, step=1, limit=50
  $region2: #{dncnet_forward.15} parent=0 // loop_pre_header
    _
  $region3: #{dncnet_forward.15} parent=0 // loop_header
    %s12 = sphi 0, %s16
    %p13 = scmp.ge.s32.totalorder %s12, 50
    %s19 = sphi 0, %s38
    %s20 = sphi 0, %s34
    %s21 = sphi 0, %s30
    %s22 = sphi 0, %s19
    %s23 = sphi 0, %s20
    %s24 = sphi 0, %s21
    %s25 = sphi 0, %s22
    %s26 = sphi 0, %s23
    %s27 = sphi 0, %s24
    %s45 = sphi 0, %s47
    %s48 = sphi 0, %s45
    %s49 = sphi 0, %s48
    %s65 = sphi 0, %s49
    %s75 = sphi 0, %s77
    %s78 = sphi 0, %s75
    %s79 = sphi 0, %s78
    %s95 = sphi 0, %s79
    %s105 = sphi 0, %s107
    %s108 = sphi 0, %s105
    %s109 = sphi 0, %s108
    %s125 = sphi 0, %s109
    %s131 = sphi 0, %s133
    %s134 = sphi 0, %s131
    %s135 = sphi 0, %s134
    %s151 = sphi 0, %s135
    %s157 = sphi 0, %s159
    %s160 = sphi 0, %s157
    %s161 = sphi 0, %s160
    %s177 = sphi 0, %s161
    %s183 = sphi 0, %s185
    %s186 = sphi 0, %s183
    %s187 = sphi 0, %s186
    %s203 = sphi 0, %s187
    %s211 = sphi 0, %s213
    %s214 = sphi 0, %s211
    %s215 = sphi 0, %s214
    %s231 = sphi 0, %s215
  $region4: #{dncnet_forward.15} parent=0 // loop_header_branch
    %15 = sbr.rel (%p13) target = $region8
  $region5: #{dncnet_forward.15} parent=0 // loop_body
    %s17 = ssub.s32 %s12, 1
    %s18 = ssub.s32 %s12, 2
    %s28 = sadd.s32 1, %s21
    %p29 = scmp.ge.s32.totalorder %s28, 3
    %s30 = scalar_select %p29, 0, %s28
    %s31 = sadd.s32 1, %s20
    %s32 = scalar_select %p29, %s31, %s20
    %p33 = scmp.ge.s32.totalorder %s32, 8
    %s34 = scalar_select %p33, 0, %s32
    %s35 = sadd.s32 1, %s19
    %s36 = scalar_select %p33, %s35, %s19
    %p37 = scmp.ge.s32.totalorder %s36, 2
    %s38 = scalar_select %p37, 0, %s36
    %s39 = sadd.s32 %s20, %s21
    %s40 = sadd.s32 %s34, %s30
    %s41 = ssub.s32 %s19, %s38
    %s42 = ssub.s32 %s39, %s40
    %s43 = sor.u32 %s41, %s42
    %p44 = scmp.eq.s32.totalorder %s43, 0
    %s46 = sadd.s32 %s45, 1
    %s47 = scalar_select %p44, %s45, %s46
    %p50 = pneg %p44
    %p51 = scmp.eq.s32.totalorder %s12, 47
    %p52 = por %p50, %p51
    %p53 = scmp.ne.s32.totalorder %s45, %s48
    %p54 = scmp.eq.s32.totalorder %s12, 0
    %p55 = por %p53, %p54
    %p56 = scmp.ne.s32.totalorder %s45, %s48
    %p57 = scmp.eq.s32.totalorder %s17, 47
    %p58 = por %p56, %p57
    %p59 = scmp.ne.s32.totalorder %s48, %s49
    %p60 = scmp.eq.s32.totalorder %s17, 0
    %p61 = por %p59, %p60
    %p62 = scmp.ne.s32.totalorder %s48, %s49
    %p63 = scmp.eq.s32.totalorder %s18, 47
    %p64 = por %p62, %p63
    %p66 = scmp.ne.s32.totalorder %s49, %s65
    %p67 = scmp.eq.s32.totalorder %s18, 0
    %p68 = por %p66, %p67
    %s69 = sadd.s32 %s20, %s21
    %s70 = sadd.s32 %s34, %s30
    %s71 = ssub.s32 %s19, %s38
    %s72 = ssub.s32 %s69, %s70
    %s73 = sor.u32 %s71, %s72
    %p74 = scmp.eq.s32.totalorder %s73, 0
    %s76 = sadd.s32 %s75, 1
    %s77 = scalar_select %p74, %s75, %s76
    %p80 = pneg %p74
    %p81 = scmp.eq.s32.totalorder %s12, 47
    %p82 = por %p80, %p81
    %p83 = scmp.ne.s32.totalorder %s75, %s78
    %p84 = scmp.eq.s32.totalorder %s12, 0
    %p85 = por %p83, %p84
    %p86 = scmp.ne.s32.totalorder %s75, %s78
    %p87 = scmp.eq.s32.totalorder %s17, 47
    %p88 = por %p86, %p87
    %p89 = scmp.ne.s32.totalorder %s78, %s79
    %p90 = scmp.eq.s32.totalorder %s17, 0
    %p91 = por %p89, %p90
    %p92 = scmp.ne.s32.totalorder %s78, %s79
    %p93 = scmp.eq.s32.totalorder %s18, 47
    %p94 = por %p92, %p93
    %p96 = scmp.ne.s32.totalorder %s79, %s95
    %p97 = scmp.eq.s32.totalorder %s18, 0
    %p98 = por %p96, %p97
    %s99 = sadd.s32 %s20, %s21
    %s100 = sadd.s32 %s34, %s30
    %s101 = ssub.s32 %s19, %s38
    %s102 = ssub.s32 %s99, %s100
    %s103 = sor.u32 %s101, %s102
    %p104 = scmp.eq.s32.totalorder %s103, 0
    %s106 = sadd.s32 %s105, 1
    %s107 = scalar_select %p104, %s105, %s106
    %p110 = pneg %p104
    %p111 = scmp.eq.s32.totalorder %s12, 47
    %p112 = por %p110, %p111
    %p113 = scmp.ne.s32.totalorder %s105, %s108
    %p114 = scmp.eq.s32.totalorder %s12, 0
    %p115 = por %p113, %p114
    %p116 = scmp.ne.s32.totalorder %s105, %s108
    %p117 = scmp.eq.s32.totalorder %s17, 47
    %p118 = por %p116, %p117
    %p119 = scmp.ne.s32.totalorder %s108, %s109
    %p120 = scmp.eq.s32.totalorder %s17, 0
    %p121 = por %p119, %p120
    %p122 = scmp.ne.s32.totalorder %s108, %s109
    %p123 = scmp.eq.s32.totalorder %s18, 47
    %p124 = por %p122, %p123
    %p126 = scmp.ne.s32.totalorder %s109, %s125
    %p127 = scmp.eq.s32.totalorder %s18, 0
    %p128 = por %p126, %p127
    %s129 = ssub.s32 %s21, %s30
    %p130 = scmp.eq.s32.totalorder %s129, 0
    %s132 = sadd.s32 %s131, 1
    %s133 = scalar_select %p130, %s131, %s132
    %p136 = pneg %p130
    %p137 = scmp.eq.s32.totalorder %s12, 47
    %p138 = por %p136, %p137
    %p139 = scmp.ne.s32.totalorder %s131, %s134
    %p140 = scmp.eq.s32.totalorder %s12, 0
    %p141 = por %p139, %p140
    %p142 = scmp.ne.s32.totalorder %s131, %s134
    %p143 = scmp.eq.s32.totalorder %s17, 47
    %p144 = por %p142, %p143
    %p145 = scmp.ne.s32.totalorder %s134, %s135
    %p146 = scmp.eq.s32.totalorder %s17, 0
    %p147 = por %p145, %p146
    %p148 = scmp.ne.s32.totalorder %s134, %s135
    %p149 = scmp.eq.s32.totalorder %s18, 47
    %p150 = por %p148, %p149
    %p152 = scmp.ne.s32.totalorder %s135, %s151
    %p153 = scmp.eq.s32.totalorder %s18, 0
    %p154 = por %p152, %p153
    %s155 = ssub.s32 %s21, %s30
    %p156 = scmp.eq.s32.totalorder %s155, 0
    %s158 = sadd.s32 %s157, 1
    %s159 = scalar_select %p156, %s157, %s158
    %p162 = pneg %p156
    %p163 = scmp.eq.s32.totalorder %s12, 47
    %p164 = por %p162, %p163
    %p165 = scmp.ne.s32.totalorder %s157, %s160
    %p166 = scmp.eq.s32.totalorder %s12, 0
    %p167 = por %p165, %p166
    %p168 = scmp.ne.s32.totalorder %s157, %s160
    %p169 = scmp.eq.s32.totalorder %s17, 47
    %p170 = por %p168, %p169
    %p171 = scmp.ne.s32.totalorder %s160, %s161
    %p172 = scmp.eq.s32.totalorder %s17, 0
    %p173 = por %p171, %p172
    %p174 = scmp.ne.s32.totalorder %s160, %s161
    %p175 = scmp.eq.s32.totalorder %s18, 47
    %p176 = por %p174, %p175
    %p178 = scmp.ne.s32.totalorder %s161, %s177
    %p179 = scmp.eq.s32.totalorder %s18, 0
    %p180 = por %p178, %p179
    %s181 = ssub.s32 %s21, %s30
    %p182 = scmp.eq.s32.totalorder %s181, 0
    %s184 = sadd.s32 %s183, 1
    %s185 = scalar_select %p182, %s183, %s184
    %p188 = pneg %p182
    %p189 = scmp.eq.s32.totalorder %s12, 47
    %p190 = por %p188, %p189
    %p191 = scmp.ne.s32.totalorder %s183, %s186
    %p192 = scmp.eq.s32.totalorder %s12, 0
    %p193 = por %p191, %p192
    %p194 = scmp.ne.s32.totalorder %s183, %s186
    %p195 = scmp.eq.s32.totalorder %s17, 47
    %p196 = por %p194, %p195
    %p197 = scmp.ne.s32.totalorder %s186, %s187
    %p198 = scmp.eq.s32.totalorder %s17, 0
    %p199 = por %p197, %p198
    %p200 = scmp.ne.s32.totalorder %s186, %s187
    %p201 = scmp.eq.s32.totalorder %s18, 47
    %p202 = por %p200, %p201
    %p204 = scmp.ne.s32.totalorder %s187, %s203
    %p205 = scmp.eq.s32.totalorder %s18, 0
    %p206 = por %p204, %p205
    %s207 = ssub.s32 %s19, %s38
    %s208 = ssub.s32 %s20, %s34
    %s209 = sor.u32 %s207, %s208
    %p210 = scmp.eq.s32.totalorder %s209, 0
    %s212 = sadd.s32 %s211, 1
    %s213 = scalar_select %p210, %s211, %s212
    %p216 = pneg %p210
    %p217 = scmp.eq.s32.totalorder %s12, 47
    %p218 = por %p216, %p217
    %p219 = scmp.ne.s32.totalorder %s211, %s214
    %p220 = scmp.eq.s32.totalorder %s12, 0
    %p221 = por %p219, %p220
    %p222 = scmp.ne.s32.totalorder %s211, %s214
    %p223 = scmp.eq.s32.totalorder %s17, 47
    %p224 = por %p222, %p223
    %p225 = scmp.ne.s32.totalorder %s214, %s215
    %p226 = scmp.eq.s32.totalorder %s17, 0
    %p227 = por %p225, %p226
    %p228 = scmp.ne.s32.totalorder %s214, %s215
    %p229 = scmp.eq.s32.totalorder %s18, 47
    %p230 = por %p228, %p229
    %p232 = scmp.ne.s32.totalorder %s215, %s231
    %p233 = scmp.eq.s32.totalorder %s18, 0
    %p234 = por %p232, %p233
    %p235 = scmp.le.s32.totalorder 1, %s12
    %p236 = scmp.lt.s32.totalorder %s12, 49
    %p237 = pnand %p235, %p236
    %p238 = pneg %p237
    // Predicated region
    $region9: #{dncnet_forward.15} parent=5 // pred_check
      _
    $region10: #{dncnet_forward.15} parent=5 // pred_check_branch
      %240 = sbr.rel (%p237) target = $region12
    $region11: #{dncnet_forward.15} parent=5 // pred_region
      %s241 = ssub.s32 %s12, 1
    $region12: #{dncnet_forward.15} parent=5 // pred_fallthru
      _
    %p242 = scmp.lt.s32.totalorder %s12, 48
    // Predicated region
    $region13: #{dncnet_forward.15} parent=5 // pred_check
      %p243 = pneg %p242
    $region14: #{dncnet_forward.15} parent=5 // pred_check_branch
      %245 = sbr.rel (%p243) target = $region16
    $region15: #{dncnet_forward.15} parent=5 // pred_region
      // Predicated region
      $region17: #{dncnet_forward.15} parent=15 // pred_check
        %p246 = pneg %p55
      $region18: #{dncnet_forward.15} parent=15 // pred_check_branch
        %248 = sbr.rel (%p246) target = $region20
      $region19: #{dncnet_forward.15} parent=15 // pred_region
        %s249 = sadd.s32 %s20, %s21
        %p250 = scmp.lt.s32.totalorder %s19, 1
        %s251 = scalar_select %p250, %s19, 1
        %p252 = scmp.lt.s32.totalorder %s249, 9
        %s253 = scalar_select %p252, %s249, 9
        %s254 = smul.addr %s253, 4
        %s255 = smul.addr %s251, 40
        %s256 = sadd.s32 %s254, %s255
        %s257 = smul.addr %s256, 4
        %s258 = scalar_lea.vmem %s0, %s257
        %s259 = sadd.s32 %s20, %s21
      $region20: #{dncnet_forward.15} parent=15 // pred_fallthru
        _
      // Predicated region
      $region21: #{dncnet_forward.15} parent=15 // pred_check
        %p260 = pneg %p85
      $region22: #{dncnet_forward.15} parent=15 // pred_check_branch
        %262 = sbr.rel (%p260) target = $region24
      $region23: #{dncnet_forward.15} parent=15 // pred_region
        %s263 = sadd.s32 %s20, %s21
        %p264 = scmp.lt.s32.totalorder %s19, 1
        %s265 = scalar_select %p264, %s19, 1
        %p266 = scmp.lt.s32.totalorder %s263, 9
        %s267 = scalar_select %p266, %s263, 9
        %s268 = smul.addr %s267, 4
        %s269 = smul.addr %s265, 40
        %s270 = sadd.s32 %s268, %s269
        %s271 = smul.addr %s270, 4
        %s272 = scalar_lea.vmem %s1, %s271
        %s273 = sadd.s32 %s20, %s21
      $region24: #{dncnet_forward.15} parent=15 // pred_fallthru
        _
      // Predicated region
      $region25: #{dncnet_forward.15} parent=15 // pred_check
        %p274 = pneg %p115
      $region26: #{dncnet_forward.15} parent=15 // pred_check_branch
        %276 = sbr.rel (%p274) target = $region28
      $region27: #{dncnet_forward.15} parent=15 // pred_region
        %s277 = sadd.s32 %s20, %s21
        %p278 = scmp.lt.s32.totalorder %s19, 1
        %s279 = scalar_select %p278, %s19, 1
        %p280 = scmp.lt.s32.totalorder %s277, 9
        %s281 = scalar_select %p280, %s277, 9
        %s282 = smul.addr %s281, 4
        %s283 = smul.addr %s279, 40
        %s284 = sadd.s32 %s282, %s283
        %s285 = smul.addr %s284, 4
        %s286 = scalar_lea.vmem %s2, %s285
        %s287 = sadd.s32 %s20, %s21
      $region28: #{dncnet_forward.15} parent=15 // pred_fallthru
        _
      // Predicated region
      $region29: #{dncnet_forward.15} parent=15 // pred_check
        %p288 = pneg %p141
      $region30: #{dncnet_forward.15} parent=15 // pred_check_branch
        %290 = sbr.rel (%p288) target = $region32
      $region31: #{dncnet_forward.15} parent=15 // pred_region
        %p291 = scmp.lt.s32.totalorder %s21, 2
        %s292 = scalar_select %p291, %s21, 2
        %s293 = smul.addr %s292, 192
        %s294 = smul.addr %s293, 4
        %s295 = scalar_lea.vmem %s3, %s294
      $region32: #{dncnet_forward.15} parent=15 // pred_fallthru
        _
      // Predicated region
      $region33: #{dncnet_forward.15} parent=15 // pred_check
        %p296 = pneg %p167
      $region34: #{dncnet_forward.15} parent=15 // pred_check_branch
        %298 = sbr.rel (%p296) target = $region36
      $region35: #{dncnet_forward.15} parent=15 // pred_region
        %p299 = scmp.lt.s32.totalorder %s21, 2
        %s300 = scalar_select %p299, %s21, 2
        %s301 = smul.addr %s300, 192
        %s302 = smul.addr %s301, 4
        %s303 = scalar_lea.vmem %s4, %s302
      $region36: #{dncnet_forward.15} parent=15 // pred_fallthru
        _
      // Predicated region
      $region37: #{dncnet_forward.15} parent=15 // pred_check
        %p304 = pneg %p193
      $region38: #{dncnet_forward.15} parent=15 // pred_check_branch
        %306 = sbr.rel (%p304) target = $region40
      $region39: #{dncnet_forward.15} parent=15 // pred_region
        %p307 = scmp.lt.s32.totalorder %s21, 2
        %s308 = scalar_select %p307, %s21, 2
        %s309 = smul.addr %s308, 192
        %s310 = smul.addr %s309, 4
        %s311 = scalar_lea.vmem %s5, %s310
      $region40: #{dncnet_forward.15} parent=15 // pred_fallthru
        _
    $region16: #{dncnet_forward.15} parent=5 // pred_fallthru
      _
    %p312 = scmp.le.s32.totalorder 1, %s12
    %p313 = scmp.lt.s32.totalorder %s12, 49
    %p314 = pnand %p312, %p313
    %p315 = pneg %p314
    // Predicated region
    $region41: #{dncnet_forward.15} parent=5 // pred_check
      _
    $region42: #{dncnet_forward.15} parent=5 // pred_check_branch
      %317 = sbr.rel (%p314) target = $region44
    $region43: #{dncnet_forward.15} parent=5 // pred_region
      %s318 = ssub.s32 %s12, 1
      %s319 = sadd.s32 %s23, %s24
      %p320 = scmp.lt.s32.totalorder %s22, 1
      %s321 = scalar_select %p320, %s22, 1
      %p322 = scmp.lt.s32.totalorder %s319, 9
      %s323 = scalar_select %p322, %s319, 9
      %s324 = smul.addr %s323, 4
      %s325 = smul.addr %s321, 40
      %s326 = sadd.s32 %s324, %s325
      %s327 = smul.addr %s326, 4
      %s328 = scalar_lea.vmem %s0, %s327
      %p329 = pneg %p61
      %p330 = pneg %p58
      %s331 = sadd.s32 %s23, %s24
      %p332 = scmp.lt.s32.totalorder %s22, 1
      %s333 = scalar_select %p332, %s22, 1
      %p334 = scmp.lt.s32.totalorder %s331, 9
      %s335 = scalar_select %p334, %s331, 9
      %s336 = smul.addr %s335, 4
      %s337 = smul.addr %s333, 40
      %s338 = sadd.s32 %s336, %s337
      %s339 = smul.addr %s338, 4
      %s340 = scalar_lea.vmem %s1, %s339
      %p341 = pneg %p91
      %p342 = pneg %p88
      %s343 = sadd.s32 %s23, %s24
      %p344 = scmp.lt.s32.totalorder %s22, 1
      %s345 = scalar_select %p344, %s22, 1
      %p346 = scmp.lt.s32.totalorder %s343, 9
      %s347 = scalar_select %p346, %s343, 9
      %s348 = smul.addr %s347, 4
      %s349 = smul.addr %s345, 40
      %s350 = sadd.s32 %s348, %s349
      %s351 = smul.addr %s350, 4
      %s352 = scalar_lea.vmem %s2, %s351
      %p353 = pneg %p121
      %p354 = pneg %p118
      %p355 = scmp.lt.s32.totalorder %s24, 2
      %s356 = scalar_select %p355, %s24, 2
      %s357 = smul.addr %s356, 192
      %s358 = smul.addr %s357, 4
      %s359 = scalar_lea.vmem %s3, %s358
      %p360 = pneg %p147
      %p361 = pneg %p144
      %p362 = scmp.lt.s32.totalorder %s24, 2
      %s363 = scalar_select %p362, %s24, 2
      %s364 = smul.addr %s363, 192
      %s365 = smul.addr %s364, 4
      %s366 = scalar_lea.vmem %s4, %s365
      %p367 = pneg %p173
      %p368 = pneg %p170
      %p369 = scmp.lt.s32.totalorder %s24, 2
      %s370 = scalar_select %p369, %s24, 2
      %s371 = smul.addr %s370, 192
      %s372 = smul.addr %s371, 4
      %s373 = scalar_lea.vmem %s5, %s372
      %p374 = pneg %p199
      %p375 = pneg %p196
      %p376 = pneg %p227
      %p377 = pneg %p224
      %p378 = scmp.lt.s32.totalorder %s22, 1
      %s379 = scalar_select %p378, %s22, 1
      %p380 = scmp.lt.s32.totalorder %s23, 7
      %s381 = scalar_select %p380, %s23, 7
      %s382 = smul.addr %s381, 2
      %s383 = smul.addr %s379, 16
      %s384 = sadd.s32 %s382, %s383
      %s385 = smul.addr %s384, 4
      %s386 = scalar_lea.vmem %s6, %s385
      %s387 = sadd.s32 %s23, %s24
      %p388 = scmp.lt.s32.totalorder %s22, 1
      %s389 = scalar_select %p388, %s22, 1
      %p390 = scmp.lt.s32.totalorder %s387, 9
      %s391 = scalar_select %p390, %s387, 9
      %s392 = smul.addr %s391, 4
      %s393 = smul.addr %s389, 40
      %s394 = sadd.s32 %s392, %s393
      %s395 = smul.addr %s394, 4
      %s396 = scalar_lea.vmem %s0, %s395
      %s397 = sadd.s32 %s23, %s24
      %s398 = sadd.s32 %s23, %s24
      %p399 = scmp.lt.s32.totalorder %s22, 1
      %s400 = scalar_select %p399, %s22, 1
      %p401 = scmp.lt.s32.totalorder %s398, 9
      %s402 = scalar_select %p401, %s398, 9
      %s403 = smul.addr %s402, 4
      %s404 = smul.addr %s400, 40
      %s405 = sadd.s32 %s403, %s404
      %s406 = smul.addr %s405, 4
      %s407 = scalar_lea.vmem %s1, %s406
      %s408 = sadd.s32 %s23, %s24
      %s409 = sadd.s32 %s23, %s24
      %p410 = scmp.lt.s32.totalorder %s22, 1
      %s411 = scalar_select %p410, %s22, 1
      %p412 = scmp.lt.s32.totalorder %s409, 9
      %s413 = scalar_select %p412, %s409, 9
      %s414 = smul.addr %s413, 4
      %s415 = smul.addr %s411, 40
      %s416 = sadd.s32 %s414, %s415
      %s417 = smul.addr %s416, 4
      %s418 = scalar_lea.vmem %s2, %s417
      %s419 = sadd.s32 %s23, %s24
      %p420 = scmp.lt.s32.totalorder %s24, 2
      %s421 = scalar_select %p420, %s24, 2
      %s422 = smul.addr %s421, 192
      %s423 = smul.addr %s422, 4
      %s424 = scalar_lea.vmem %s3, %s423
      %p425 = scmp.lt.s32.totalorder %s24, 2
      %s426 = scalar_select %p425, %s24, 2
      %s427 = smul.addr %s426, 192
      %s428 = smul.addr %s427, 4
      %s429 = scalar_lea.vmem %s4, %s428
      %p430 = scmp.lt.s32.totalorder %s24, 2
      %s431 = scalar_select %p430, %s24, 2
      %s432 = smul.addr %s431, 192
      %s433 = smul.addr %s432, 4
      %s434 = scalar_lea.vmem %s5, %s433
      %p435 = scmp.lt.s32.totalorder %s22, 1
      %s436 = scalar_select %p435, %s22, 1
      %p437 = scmp.lt.s32.totalorder %s23, 7
      %s438 = scalar_select %p437, %s23, 7
      %s439 = smul.addr %s438, 2
      %s440 = smul.addr %s436, 16
      %s441 = sadd.s32 %s439, %s440
      %s442 = smul.addr %s441, 4
      %s443 = scalar_lea.vmem %s6, %s442
      %p444 = scmp.eq.s32.totalorder %s24, 0
      // Predicated region
      $region45: #{dncnet_forward.15} parent=43 // pred_check
        %p445 = pneg %p444
      $region46: #{dncnet_forward.15} parent=43 // pred_check_branch
        %447 = sbr.rel (%p445) target = $region48
      $region47: #{dncnet_forward.15} parent=43 // pred_region
        %448 = vst [vmem:[#allocation2] sm:$0xff] 0.0
        %449 = vst [vmem:[#allocation2 + $0x8] sm:$0xff] 0.0
      $region48: #{dncnet_forward.15} parent=43 // pred_fallthru
        _
      %v450 = vld [vmem:[#allocation2] sm:$0xff]
      %v451 = vld [vmem:[#allocation2 + $0x8] sm:$0xff]
      %v452 = vld [vmem:[%s396] sm:$0xff]
      %v453 = vld [vmem:[%s424] sm:$0xff]
      %v454 = vld [vmem:[%s424 + $0x8] sm:$0xff]
      %v455 = vld [vmem:[%s424 + $0x10] sm:$0xff]
      %v456 = vld [vmem:[%s424 + $0x18] sm:$0xff]
      %v457 = vld [vmem:[%s424 + $0x20] sm:$0xff]
      %v458 = vld [vmem:[%s424 + $0x28] sm:$0xff]
      %v459 = vld [vmem:[%s424 + $0x30] sm:$0xff]
      %v460 = vld [vmem:[%s424 + $0x38] sm:$0xff]
      %v461 = vld [vmem:[%s424 + $0x40] sm:$0xff]
      %v462 = vld [vmem:[%s424 + $0x48] sm:$0xff]
      %v463 = vld [vmem:[%s424 + $0x50] sm:$0xff]
      %v464 = vld [vmem:[%s424 + $0x58] sm:$0xff]
      %v465 = vld [vmem:[%s424 + $0x60] sm:$0xff]
      %v466 = vld [vmem:[%s424 + $0x68] sm:$0xff]
      %v467 = vld [vmem:[%s424 + $0x70] sm:$0xff]
      %v468 = vld [vmem:[%s424 + $0x78] sm:$0xff]
      %v469 = vld [vmem:[%s424 + $0x80] sm:$0xff]
      %v470 = vld [vmem:[%s424 + $0x88] sm:$0xff]
      %v471 = vld [vmem:[%s424 + $0x90] sm:$0xff]
      %v472 = vld [vmem:[%s424 + $0x98] sm:$0xff]
      %v473 = vld [vmem:[%s424 + $0xa0] sm:$0xff]
      %v474 = vld [vmem:[%s424 + $0xa8] sm:$0xff]
      %v475 = vld [vmem:[%s424 + $0xb0] sm:$0xff]
      %v476 = vld [vmem:[%s424 + $0xb8] sm:$0xff]
      %v477 = vld [vmem:[%s424 + $0xc0] sm:$0xff]
      %v478 = vld [vmem:[%s424 + $0xc8] sm:$0xff]
      %v479 = vld [vmem:[%s424 + $0xd0] sm:$0xff]
      %v480 = vld [vmem:[%s424 + $0xd8] sm:$0xff]
      %v481 = vld [vmem:[%s424 + $0xe0] sm:$0xff]
      %v482 = vld [vmem:[%s424 + $0xe8] sm:$0xff]
      %v483 = vld [vmem:[%s424 + $0xf0] sm:$0xff]
      %v484 = vld [vmem:[%s424 + $0xf8] sm:$0xff]
      %v486 = vunpack.c.l.b16 %v452
      %v487 = vunpack.c.h.b16 %v452
      %v488 = vpack.c.b16 %v486, %v486
      %v489 = vpack.c.b16 %v487, %v487
      %v524 = vunpack.c.l.b16 %v453
      %v525 = vunpack.c.h.b16 %v453
      %v526 = vunpack.c.l.b16 %v454
      %v527 = vunpack.c.h.b16 %v454
      %v528 = vunpack.c.l.b16 %v455
      %v529 = vunpack.c.h.b16 %v455
      %v530 = vunpack.c.l.b16 %v456
      %v531 = vunpack.c.h.b16 %v456
      %v532 = vunpack.c.l.b16 %v457
      %v533 = vunpack.c.h.b16 %v457
      %v534 = vunpack.c.l.b16 %v458
      %v535 = vunpack.c.h.b16 %v458
      %v536 = vunpack.c.l.b16 %v459
      %v537 = vunpack.c.h.b16 %v459
      %v538 = vunpack.c.l.b16 %v460
      %v539 = vunpack.c.h.b16 %v460
      %v540 = vunpack.c.l.b16 %v461
      %v541 = vunpack.c.h.b16 %v461
      %v542 = vunpack.c.l.b16 %v462
      %v543 = vunpack.c.h.b16 %v462
      %v544 = vunpack.c.l.b16 %v463
      %v545 = vunpack.c.h.b16 %v463
      %v546 = vunpack.c.l.b16 %v464
      %v547 = vunpack.c.h.b16 %v464
      %v548 = vunpack.c.l.b16 %v465
      %v549 = vunpack.c.h.b16 %v465
      %v550 = vunpack.c.l.b16 %v466
      %v551 = vunpack.c.h.b16 %v466
      %v552 = vunpack.c.l.b16 %v467
      %v553 = vunpack.c.h.b16 %v467
      %v554 = vunpack.c.l.b16 %v468
      %v555 = vunpack.c.h.b16 %v468
      %v556 = vunpack.c.l.b16 %v469
      %v557 = vunpack.c.h.b16 %v469
      %v558 = vunpack.c.l.b16 %v470
      %v559 = vunpack.c.h.b16 %v470
      %v560 = vunpack.c.l.b16 %v471
      %v561 = vunpack.c.h.b16 %v471
      %v562 = vunpack.c.l.b16 %v472
      %v563 = vunpack.c.h.b16 %v472
      %v564 = vunpack.c.l.b16 %v473
      %v565 = vunpack.c.h.b16 %v473
      %v566 = vunpack.c.l.b16 %v474
      %v567 = vunpack.c.h.b16 %v474
      %v568 = vunpack.c.l.b16 %v475
      %v569 = vunpack.c.h.b16 %v475
      %v570 = vunpack.c.l.b16 %v476
      %v571 = vunpack.c.h.b16 %v476
      %v572 = vunpack.c.l.b16 %v477
      %v573 = vunpack.c.h.b16 %v477
      %v574 = vunpack.c.l.b16 %v478
      %v575 = vunpack.c.h.b16 %v478
      %v576 = vunpack.c.l.b16 %v479
      %v577 = vunpack.c.h.b16 %v479
      %v578 = vunpack.c.l.b16 %v480
      %v579 = vunpack.c.h.b16 %v480
      %v580 = vunpack.c.l.b16 %v481
      %v581 = vunpack.c.h.b16 %v481
      %v582 = vunpack.c.l.b16 %v482
      %v583 = vunpack.c.h.b16 %v482
      %v584 = vunpack.c.l.b16 %v483
      %v585 = vunpack.c.h.b16 %v483
      %v586 = vunpack.c.l.b16 %v484
      %v587 = vunpack.c.h.b16 %v484
      %v588 = vpack.c.b16 %v526, %v524
      %v589 = vpack.c.b16 %v527, %v525
      %v590 = vpack.c.b16 %v530, %v528
      %v591 = vpack.c.b16 %v531, %v529
      %v592 = vpack.c.b16 %v534, %v532
      %v593 = vpack.c.b16 %v535, %v533
      %v594 = vpack.c.b16 %v538, %v536
      %v595 = vpack.c.b16 %v539, %v537
      %v596 = vpack.c.b16 %v542, %v540
      %v597 = vpack.c.b16 %v543, %v541
      %v598 = vpack.c.b16 %v546, %v544
      %v599 = vpack.c.b16 %v547, %v545
      %v600 = vpack.c.b16 %v550, %v548
      %v601 = vpack.c.b16 %v551, %v549
      %v602 = vpack.c.b16 %v554, %v552
      %v603 = vpack.c.b16 %v555, %v553
      %v604 = vpack.c.b16 %v558, %v556
      %v605 = vpack.c.b16 %v559, %v557
      %v606 = vpack.c.b16 %v562, %v560
      %v607 = vpack.c.b16 %v563, %v561
      %v608 = vpack.c.b16 %v566, %v564
      %v609 = vpack.c.b16 %v567, %v565
      %v610 = vpack.c.b16 %v570, %v568
      %v611 = vpack.c.b16 %v571, %v569
      %v612 = vpack.c.b16 %v574, %v572
      %v613 = vpack.c.b16 %v575, %v573
      %v614 = vpack.c.b16 %v578, %v576
      %v615 = vpack.c.b16 %v579, %v577
      %v616 = vpack.c.b16 %v582, %v580
      %v617 = vpack.c.b16 %v583, %v581
      %v618 = vpack.c.b16 %v586, %v584
      %v619 = vpack.c.b16 %v587, %v585
      %652 = vmatprep.subr.bf16.mxu0 %v589
      %653 = vmatpush1.bf16.msra.mxu0 %v588
      %654 = vmatprep.subr.bf16.mxu0 %v591
      %655 = vmatpush1.bf16.msra.mxu0 %v590
      %656 = vmatprep.subr.bf16.mxu0 %v593
      %657 = vmatpush1.bf16.msra.mxu0 %v592
      %658 = vmatprep.subr.bf16.mxu0 %v595
      %659 = vmatpush1.bf16.msra.mxu0 %v594
      %660 = vmatprep.subr.bf16.mxu0 %v597
      %661 = vmatpush1.bf16.msra.mxu0 %v596
      %662 = vmatprep.subr.bf16.mxu0 %v599
      %663 = vmatpush1.bf16.msra.mxu0 %v598
      %664 = vmatprep.subr.bf16.mxu0 %v601
      %665 = vmatpush1.bf16.msra.mxu0 %v600
      %666 = vmatprep.subr.bf16.mxu0 %v603
      %667 = vmatpush1.bf16.msra.mxu0 %v602
      %668 = vmatprep.subr.bf16.mxu0 %v605
      %669 = vmatpush1.bf16.msra.mxu0 %v604
      %670 = vmatprep.subr.bf16.mxu0 %v607
      %671 = vmatpush1.bf16.msra.mxu0 %v606
      %672 = vmatprep.subr.bf16.mxu0 %v609
      %673 = vmatpush1.bf16.msra.mxu0 %v608
      %674 = vmatprep.subr.bf16.mxu0 %v611
      %675 = vmatpush1.bf16.msra.mxu0 %v610
      %676 = vmatprep.subr.bf16.mxu0 %v613
      %677 = vmatpush1.bf16.msra.mxu0 %v612
      %678 = vmatprep.subr.bf16.mxu0 %v615
      %679 = vmatpush1.bf16.msra.mxu0 %v614
      %680 = vmatprep.subr.bf16.mxu0 %v617
      %681 = vmatpush1.bf16.msra.mxu0 %v616
      %682 = vmatprep.subr.bf16.mxu0 %v619
      %683 = vmatpush1.bf16.msra.mxu0 %v618
      %684 = vmatprep.mubr.bf16.mxu0 %v489
      %685 = vmatmul.mubr.bf16.gmra.mrb[0].mxu0 %v488
      %v686 = vpop.f32.mrb[0].mxu0
      %v687 = vadd.f32 0.0, %v686
      %v688 = vpop.f32.mrb[0].mxu0
      %v689 = vadd.f32 0.0, %v688
      %v690 = vpop.f32.mrb[0].mxu0
      %v691 = vpop.f32.mrb[0].mxu0
      %692 = vdwg.mxu0
      %v693 = vadd.f32 %v450, %v687
      %v694 = vadd.f32 %v451, %v689
      %695 = vst [vmem:[#allocation2] sm:$0xff] %v693
      %696 = vst [vmem:[#allocation2 + $0x8] sm:$0xff] %v694
      %v697 = vld [vmem:[#allocation2] sm:$0xff]
      %v698 = vld [vmem:[#allocation2 + $0x8] sm:$0xff]
      %v699 = vld [vmem:[%s396] sm:$0xff]
      %v700 = vld [vmem:[%s396 + $0x8] sm:$0x11]
      %s701 = scalar_lea.vmem %s424, 256
      %v702 = vld [vmem:[%s701] sm:$0xff]
      %v703 = vld [vmem:[%s701 + $0x8] sm:$0xff]
      %v704 = vld [vmem:[%s701 + $0x10] sm:$0xff]
      %v705 = vld [vmem:[%s701 + $0x18] sm:$0xff]
      %v706 = vld [vmem:[%s701 + $0x20] sm:$0xff]
      %v707 = vld [vmem:[%s701 + $0x28] sm:$0xff]
      %v708 = vld [vmem:[%s701 + $0x30] sm:$0xff]
      %v709 = vld [vmem:[%s701 + $0x38] sm:$0xff]
      %v710 = vld [vmem:[%s701 + $0x40] sm:$0xff]
      %v711 = vld [vmem:[%s701 + $0x48] sm:$0xff]
      %v712 = vld [vmem:[%s701 + $0x50] sm:$0xff]
      %v713 = vld [vmem:[%s701 + $0x58] sm:$0xff]
      %v714 = vld [vmem:[%s701 + $0x60] sm:$0xff]
      %v715 = vld [vmem:[%s701 + $0x68] sm:$0xff]
      %v716 = vld [vmem:[%s701 + $0x70] sm:$0xff]
      %v717 = vld [vmem:[%s701 + $0x78] sm:$0xff]
      %v718 = vld [vmem:[%s701 + $0x80] sm:$0xff]
      %v719 = vld [vmem:[%s701 + $0x88] sm:$0xff]
      %v720 = vld [vmem:[%s701 + $0x90] sm:$0xff]
      %v721 = vld [vmem:[%s701 + $0x98] sm:$0xff]
      %v722 = vld [vmem:[%s701 + $0xa0] sm:$0xff]
      %v723 = vld [vmem:[%s701 + $0xa8] sm:$0xff]
      %v724 = vld [vmem:[%s701 + $0xb0] sm:$0xff]
      %v725 = vld [vmem:[%s701 + $0xb8] sm:$0xff]
      %v726 = vld [vmem:[%s701 + $0xc0] sm:$0xff]
      %v727 = vld [vmem:[%s701 + $0xc8] sm:$0xff]
      %v728 = vld [vmem:[%s701 + $0xd0] sm:$0xff]
      %v729 = vld [vmem:[%s701 + $0xd8] sm:$0xff]
      %v730 = vld [vmem:[%s701 + $0xe0] sm:$0xff]
      %v731 = vld [vmem:[%s701 + $0xe8] sm:$0xff]
      %v732 = vld [vmem:[%s701 + $0xf0] sm:$0xff]
      %v733 = vld [vmem:[%s701 + $0xf8] sm:$0xff]
      %v736 = vunpack.c.l.b16 %v699
      %v737 = vunpack.c.h.b16 %v699
      %v738 = vunpack.c.l.b16 %v700
      %v739 = vunpack.c.h.b16 %v700
      %v740 = vpack.c.b16 %v738, %v736
      %v741 = vpack.c.b16 %v739, %v737
      %v743 = vshrl.u32 %v740, 16
      %v745 = vshll.u32 %v740, 16
      %v747 = vrot.slane %v745, 1
      %v748 = vor.u32 %v743, %v747
      %v750 = vshrl.u32 %v741, 16
      %v752 = vshll.u32 %v741, 16
      %v754 = vrot.slane %v752, 1
      %v755 = vor.u32 %v750, %v754
      %v790 = vunpack.c.l.b16 %v702
      %v791 = vunpack.c.h.b16 %v702
      %v792 = vunpack.c.l.b16 %v703
      %v793 = vunpack.c.h.b16 %v703
      %v794 = vunpack.c.l.b16 %v704
      %v795 = vunpack.c.h.b16 %v704
      %v796 = vunpack.c.l.b16 %v705
      %v797 = vunpack.c.h.b16 %v705
      %v798 = vunpack.c.l.b16 %v706
      %v799 = vunpack.c.h.b16 %v706
      %v800 = vunpack.c.l.b16 %v707
      %v801 = vunpack.c.h.b16 %v707
      %v802 = vunpack.c.l.b16 %v708
      %v803 = vunpack.c.h.b16 %v708
      %v804 = vunpack.c.l.b16 %v709
      %v805 = vunpack.c.h.b16 %v709
      %v806 = vunpack.c.l.b16 %v710
      %v807 = vunpack.c.h.b16 %v710
      %v808 = vunpack.c.l.b16 %v711
      %v809 = vunpack.c.h.b16 %v711
      %v810 = vunpack.c.l.b16 %v712
      %v811 = vunpack.c.h.b16 %v712
      %v812 = vunpack.c.l.b16 %v713
      %v813 = vunpack.c.h.b16 %v713
      %v814 = vunpack.c.l.b16 %v714
      %v815 = vunpack.c.h.b16 %v714
      %v816 = vunpack.c.l.b16 %v715
      %v817 = vunpack.c.h.b16 %v715
      %v818 = vunpack.c.l.b16 %v716
      %v819 = vunpack.c.h.b16 %v716
      %v820 = vunpack.c.l.b16 %v717
      %v821 = vunpack.c.h.b16 %v717
      %v822 = vunpack.c.l.b16 %v718
      %v823 = vunpack.c.h.b16 %v718
      %v824 = vunpack.c.l.b16 %v719
      %v825 = vunpack.c.h.b16 %v719
      %v826 = vunpack.c.l.b16 %v720
      %v827 = vunpack.c.h.b16 %v720
      %v828 = vunpack.c.l.b16 %v721
      %v829 = vunpack.c.h.b16 %v721
      %v830 = vunpack.c.l.b16 %v722
      %v831 = vunpack.c.h.b16 %v722
      %v832 = vunpack.c.l.b16 %v723
      %v833 = vunpack.c.h.b16 %v723
      %v834 = vunpack.c.l.b16 %v724
      %v835 = vunpack.c.h.b16 %v724
      %v836 = vunpack.c.l.b16 %v725
      %v837 = vunpack.c.h.b16 %v725
      %v838 = vunpack.c.l.b16 %v726
      %v839 = vunpack.c.h.b16 %v726
      %v840 = vunpack.c.l.b16 %v727
      %v841 = vunpack.c.h.b16 %v727
      %v842 = vunpack.c.l.b16 %v728
      %v843 = vunpack.c.h.b16 %v728
      %v844 = vunpack.c.l.b16 %v729
      %v845 = vunpack.c.h.b16 %v729
      %v846 = vunpack.c.l.b16 %v730
      %v847 = vunpack.c.h.b16 %v730
      %v848 = vunpack.c.l.b16 %v731
      %v849 = vunpack.c.h.b16 %v731
      %v850 = vunpack.c.l.b16 %v732
      %v851 = vunpack.c.h.b16 %v732
      %v852 = vunpack.c.l.b16 %v733
      %v853 = vunpack.c.h.b16 %v733
      %v854 = vpack.c.b16 %v792, %v790
      %v855 = vpack.c.b16 %v793, %v791
      %v856 = vpack.c.b16 %v796, %v794
      %v857 = vpack.c.b16 %v797, %v795
      %v858 = vpack.c.b16 %v800, %v798
      %v859 = vpack.c.b16 %v801, %v799
      %v860 = vpack.c.b16 %v804, %v802
      %v861 = vpack.c.b16 %v805, %v803
      %v862 = vpack.c.b16 %v808, %v806
      %v863 = vpack.c.b16 %v809, %v807
      %v864 = vpack.c.b16 %v812, %v810
      %v865 = vpack.c.b16 %v813, %v811
      %v866 = vpack.c.b16 %v816, %v814
      %v867 = vpack.c.b16 %v817, %v815
      %v868 = vpack.c.b16 %v820, %v818
      %v869 = vpack.c.b16 %v821, %v819
      %v870 = vpack.c.b16 %v824, %v822
      %v871 = vpack.c.b16 %v825, %v823
      %v872 = vpack.c.b16 %v828, %v826
      %v873 = vpack.c.b16 %v829, %v827
      %v874 = vpack.c.b16 %v832, %v830
      %v875 = vpack.c.b16 %v833, %v831
      %v876 = vpack.c.b16 %v836, %v834
      %v877 = vpack.c.b16 %v837, %v835
      %v878 = vpack.c.b16 %v840, %v838
      %v879 = vpack.c.b16 %v841, %v839
      %v880 = vpack.c.b16 %v844, %v842
      %v881 = vpack.c.b16 %v845, %v843
      %v882 = vpack.c.b16 %v848, %v846
      %v883 = vpack.c.b16 %v849, %v847
      %v884 = vpack.c.b16 %v852, %v850
      %v885 = vpack.c.b16 %v853, %v851
      %918 = vmatprep.subr.bf16.mxu0 %v855
      %919 = vmatpush1.bf16.msra.mxu0 %v854
      %920 = vmatprep.subr.bf16.mxu0 %v857
      %921 = vmatpush1.bf16.msra.mxu0 %v856
      %922 = vmatprep.subr.bf16.mxu0 %v859
      %923 = vmatpush1.bf16.msra.mxu0 %v858
      %924 = vmatprep.subr.bf16.mxu0 %v861
      %925 = vmatpush1.bf16.msra.mxu0 %v860
      %926 = vmatprep.subr.bf16.mxu0 %v863
      %927 = vmatpush1.bf16.msra.mxu0 %v862
      %928 = vmatprep.subr.bf16.mxu0 %v865
      %929 = vmatpush1.bf16.msra.mxu0 %v864
      %930 = vmatprep.subr.bf16.mxu0 %v867
      %931 = vmatpush1.bf16.msra.mxu0 %v866
      %932 = vmatprep.subr.bf16.mxu0 %v869
      %933 = vmatpush1.bf16.msra.mxu0 %v868
      %934 = vmatprep.subr.bf16.mxu0 %v871
      %935 = vmatpush1.bf16.msra.mxu0 %v870
      %936 = vmatprep.subr.bf16.mxu0 %v873
      %937 = vmatpush1.bf16.msra.mxu0 %v872
      %938 = vmatprep.subr.bf16.mxu0 %v875
      %939 = vmatpush1.bf16.msra.mxu0 %v874
      %940 = vmatprep.subr.bf16.mxu0 %v877
      %941 = vmatpush1.bf16.msra.mxu0 %v876
      %942 = vmatprep.subr.bf16.mxu0 %v879
      %943 = vmatpush1.bf16.msra.mxu0 %v878
      %944 = vmatprep.subr.bf16.mxu0 %v881
      %945 = vmatpush1.bf16.msra.mxu0 %v880
      %946 = vmatprep.subr.bf16.mxu0 %v883
      %947 = vmatpush1.bf16.msra.mxu0 %v882
      %948 = vmatprep.subr.bf16.mxu0 %v885
      %949 = vmatpush1.bf16.msra.mxu0 %v884
      %950 = vmatprep.mubr.bf16.mxu0 %v755
      %951 = vmatmul.mubr.bf16.gmra.mrb[0].mxu0 %v748
      %v952 = vpop.f32.mrb[0].mxu0
      %v953 = vadd.f32 0.0, %v952
      %v954 = vpop.f32.mrb[0].mxu0
      %v955 = vadd.f32 0.0, %v954
      %v956 = vpop.f32.mrb[0].mxu0
      %v957 = vpop.f32.mrb[0].mxu0
      %958 = vdwg.mxu0
      %v959 = vadd.f32 %v697, %v953
      %v960 = vadd.f32 %v698, %v955
      %961 = vst [vmem:[#allocation2] sm:$0xff] %v959
      %962 = vst [vmem:[#allocation2 + $0x8] sm:$0xff] %v960
      %v963 = vld [vmem:[#allocation2] sm:$0xff]
      %v964 = vld [vmem:[#allocation2 + $0x8] sm:$0xff]
      %v965 = vld [vmem:[%s396] sm:$0xee]
      %v966 = vld [vmem:[%s396 + $0x8] sm:$0x11]
      %s967 = scalar_lea.vmem %s424, 512
      %v968 = vld [vmem:[%s967] sm:$0xff]
      %v969 = vld [vmem:[%s967 + $0x8] sm:$0xff]
      %v970 = vld [vmem:[%s967 + $0x10] sm:$0xff]
      %v971 = vld [vmem:[%s967 + $0x18] sm:$0xff]
      %v972 = vld [vmem:[%s967 + $0x20] sm:$0xff]
      %v973 = vld [vmem:[%s967 + $0x28] sm:$0xff]
      %v974 = vld [vmem:[%s967 + $0x30] sm:$0xff]
      %v975 = vld [vmem:[%s967 + $0x38] sm:$0xff]
      %v976 = vld [vmem:[%s967 + $0x40] sm:$0xff]
      %v977 = vld [vmem:[%s967 + $0x48] sm:$0xff]
      %v978 = vld [vmem:[%s967 + $0x50] sm:$0xff]
      %v979 = vld [vmem:[%s967 + $0x58] sm:$0xff]
      %v980 = vld [vmem:[%s967 + $0x60] sm:$0xff]
      %v981 = vld [vmem:[%s967 + $0x68] sm:$0xff]
      %v982 = vld [vmem:[%s967 + $0x70] sm:$0xff]
      %v983 = vld [vmem:[%s967 + $0x78] sm:$0xff]
      %v984 = vld [vmem:[%s967 + $0x80] sm:$0xff]
      %v985 = vld [vmem:[%s967 + $0x88] sm:$0xff]
      %v986 = vld [vmem:[%s967 + $0x90] sm:$0xff]
      %v987 = vld [vmem:[%s967 + $0x98] sm:$0xff]
      %v988 = vld [vmem:[%s967 + $0xa0] sm:$0xff]
      %v989 = vld [vmem:[%s967 + $0xa8] sm:$0xff]
      %v990 = vld [vmem:[%s967 + $0xb0] sm:$0xff]
      %v991 = vld [vmem:[%s967 + $0xb8] sm:$0xff]
      %v992 = vld [vmem:[%s967 + $0xc0] sm:$0xff]
      %v993 = vld [vmem:[%s967 + $0xc8] sm:$0xff]
      %v994 = vld [vmem:[%s967 + $0xd0] sm:$0xff]
      %v995 = vld [vmem:[%s967 + $0xd8] sm:$0xff]
      %v996 = vld [vmem:[%s967 + $0xe0] sm:$0xff]
      %v997 = vld [vmem:[%s967 + $0xe8] sm:$0xff]
      %v998 = vld [vmem:[%s967 + $0xf0] sm:$0xff]
      %v999 = vld [vmem:[%s967 + $0xf8] sm:$0xff]
      %v1002 = vunpack.c.l.b16 %v965
      %v1003 = vunpack.c.h.b16 %v965
      %v1004 = vunpack.c.l.b16 %v966
      %v1005 = vunpack.c.h.b16 %v966
      %v1006 = vpack.c.b16 %v1004, %v1002
      %v1007 = vpack.c.b16 %v1005, %v1003
      %v1008 = vrot.slane %v1006, 1
      %v1009 = vrot.slane %v1007, 1
      %v1044 = vunpack.c.l.b16 %v968
      %v1045 = vunpack.c.h.b16 %v968
      %v1046 = vunpack.c.l.b16 %v969
      %v1047 = vunpack.c.h.b16 %v969
      %v1048 = vunpack.c.l.b16 %v970
      %v1049 = vunpack.c.h.b16 %v970
      %v1050 = vunpack.c.l.b16 %v971
      %v1051 = vunpack.c.h.b16 %v971
      %v1052 = vunpack.c.l.b16 %v972
      %v1053 = vunpack.c.h.b16 %v972
      %v1054 = vunpack.c.l.b16 %v973
      %v1055 = vunpack.c.h.b16 %v973
      %v1056 = vunpack.c.l.b16 %v974
      %v1057 = vunpack.c.h.b16 %v974
      %v1058 = vunpack.c.l.b16 %v975
      %v1059 = vunpack.c.h.b16 %v975
      %v1060 = vunpack.c.l.b16 %v976
      %v1061 = vunpack.c.h.b16 %v976
      %v1062 = vunpack.c.l.b16 %v977
      %v1063 = vunpack.c.h.b16 %v977
      %v1064 = vunpack.c.l.b16 %v978
      %v1065 = vunpack.c.h.b16 %v978
      %v1066 = vunpack.c.l.b16 %v979
      %v1067 = vunpack.c.h.b16 %v979
      %v1068 = vunpack.c.l.b16 %v980
      %v1069 = vunpack.c.h.b16 %v980
      %v1070 = vunpack.c.l.b16 %v981
      %v1071 = vunpack.c.h.b16 %v981
      %v1072 = vunpack.c.l.b16 %v982
      %v1073 = vunpack.c.h.b16 %v982
      %v1074 = vunpack.c.l.b16 %v983
      %v1075 = vunpack.c.h.b16 %v983
      %v1076 = vunpack.c.l.b16 %v984
      %v1077 = vunpack.c.h.b16 %v984
      %v1078 = vunpack.c.l.b16 %v985
      %v1079 = vunpack.c.h.b16 %v985
      %v1080 = vunpack.c.l.b16 %v986
      %v1081 = vunpack.c.h.b16 %v986
      %v1082 = vunpack.c.l.b16 %v987
      %v1083 = vunpack.c.h.b16 %v987
      %v1084 = vunpack.c.l.b16 %v988
      %v1085 = vunpack.c.h.b16 %v988
      %v1086 = vunpack.c.l.b16 %v989
      %v1087 = vunpack.c.h.b16 %v989
      %v1088 = vunpack.c.l.b16 %v990
      %v1089 = vunpack.c.h.b16 %v990
      %v1090 = vunpack.c.l.b16 %v991
      %v1091 = vunpack.c.h.b16 %v991
      %v1092 = vunpack.c.l.b16 %v992
      %v1093 = vunpack.c.h.b16 %v992
      %v1094 = vunpack.c.l.b16 %v993
      %v1095 = vunpack.c.h.b16 %v993
      %v1096 = vunpack.c.l.b16 %v994
      %v1097 = vunpack.c.h.b16 %v994
      %v1098 = vunpack.c.l.b16 %v995
      %v1099 = vunpack.c.h.b16 %v995
      %v1100 = vunpack.c.l.b16 %v996
      %v1101 = vunpack.c.h.b16 %v996
      %v1102 = vunpack.c.l.b16 %v997
      %v1103 = vunpack.c.h.b16 %v997
      %v1104 = vunpack.c.l.b16 %v998
      %v1105 = vunpack.c.h.b16 %v998
      %v1106 = vunpack.c.l.b16 %v999
      %v1107 = vunpack.c.h.b16 %v999
      %v1108 = vpack.c.b16 %v1046, %v1044
      %v1109 = vpack.c.b16 %v1047, %v1045
      %v1110 = vpack.c.b16 %v1050, %v1048
      %v1111 = vpack.c.b16 %v1051, %v1049
      %v1112 = vpack.c.b16 %v1054, %v1052
      %v1113 = vpack.c.b16 %v1055, %v1053
      %v1114 = vpack.c.b16 %v1058, %v1056
      %v1115 = vpack.c.b16 %v1059, %v1057
      %v1116 = vpack.c.b16 %v1062, %v1060
      %v1117 = vpack.c.b16 %v1063, %v1061
      %v1118 = vpack.c.b16 %v1066, %v1064
      %v1119 = vpack.c.b16 %v1067, %v1065
      %v1120 = vpack.c.b16 %v1070, %v1068
      %v1121 = vpack.c.b16 %v1071, %v1069
      %v1122 = vpack.c.b16 %v1074, %v1072
      %v1123 = vpack.c.b16 %v1075, %v1073
      %v1124 = vpack.c.b16 %v1078, %v1076
      %v1125 = vpack.c.b16 %v1079, %v1077
      %v1126 = vpack.c.b16 %v1082, %v1080
      %v1127 = vpack.c.b16 %v1083, %v1081
      %v1128 = vpack.c.b16 %v1086, %v1084
      %v1129 = vpack.c.b16 %v1087, %v1085
      %v1130 = vpack.c.b16 %v1090, %v1088
      %v1131 = vpack.c.b16 %v1091, %v1089
      %v1132 = vpack.c.b16 %v1094, %v1092
      %v1133 = vpack.c.b16 %v1095, %v1093
      %v1134 = vpack.c.b16 %v1098, %v1096
      %v1135 = vpack.c.b16 %v1099, %v1097
      %v1136 = vpack.c.b16 %v1102, %v1100
      %v1137 = vpack.c.b16 %v1103, %v1101
      %v1138 = vpack.c.b16 %v1106, %v1104
      %v1139 = vpack.c.b16 %v1107, %v1105
      %1172 = vmatprep.subr.bf16.mxu0 %v1109
      %1173 = vmatpush1.bf16.msra.mxu0 %v1108
      %1174 = vmatprep.subr.bf16.mxu0 %v1111
      %1175 = vmatpush1.bf16.msra.mxu0 %v1110
      %1176 = vmatprep.subr.bf16.mxu0 %v1113
      %1177 = vmatpush1.bf16.msra.mxu0 %v1112
      %1178 = vmatprep.subr.bf16.mxu0 %v1115
      %1179 = vmatpush1.bf16.msra.mxu0 %v1114
      %1180 = vmatprep.subr.bf16.mxu0 %v1117
      %1181 = vmatpush1.bf16.msra.mxu0 %v1116
      %1182 = vmatprep.subr.bf16.mxu0 %v1119
      %1183 = vmatpush1.bf16.msra.mxu0 %v1118
      %1184 = vmatprep.subr.bf16.mxu0 %v1121
      %1185 = vmatpush1.bf16.msra.mxu0 %v1120
      %1186 = vmatprep.subr.bf16.mxu0 %v1123
      %1187 = vmatpush1.bf16.msra.mxu0 %v1122
      %1188 = vmatprep.subr.bf16.mxu0 %v1125
      %1189 = vmatpush1.bf16.msra.mxu0 %v1124
      %1190 = vmatprep.subr.bf16.mxu0 %v1127
      %1191 = vmatpush1.bf16.msra.mxu0 %v1126
      %1192 = vmatprep.subr.bf16.mxu0 %v1129
      %1193 = vmatpush1.bf16.msra.mxu0 %v1128
      %1194 = vmatprep.subr.bf16.mxu0 %v1131
      %1195 = vmatpush1.bf16.msra.mxu0 %v1130
      %1196 = vmatprep.subr.bf16.mxu0 %v1133
      %1197 = vmatpush1.bf16.msra.mxu0 %v1132
      %1198 = vmatprep.subr.bf16.mxu0 %v1135
      %1199 = vmatpush1.bf16.msra.mxu0 %v1134
      %1200 = vmatprep.subr.bf16.mxu0 %v1137
      %1201 = vmatpush1.bf16.msra.mxu0 %v1136
      %1202 = vmatprep.subr.bf16.mxu0 %v1139
      %1203 = vmatpush1.bf16.msra.mxu0 %v1138
      %1204 = vmatprep.mubr.bf16.mxu0 %v1009
      %1205 = vmatmul.mubr.bf16.gmra.mrb[0].mxu0 %v1008
      %v1206 = vpop.f32.mrb[0].mxu0
      %v1207 = vadd.f32 0.0, %v1206
      %v1208 = vpop.f32.mrb[0].mxu0
      %v1209 = vadd.f32 0.0, %v1208
      %v1210 = vpop.f32.mrb[0].mxu0
      %v1211 = vpop.f32.mrb[0].mxu0
      %1212 = vdwg.mxu0
      %v1213 = vadd.f32 %v963, %v1207
      %v1214 = vadd.f32 %v964, %v1209
      %1215 = vst [vmem:[#allocation2] sm:$0xff] %v1213
      %1216 = vst [vmem:[#allocation2 + $0x8] sm:$0xff] %v1214
      %v1217 = vld [vmem:[#allocation2] sm:$0xff]
      %v1218 = vld [vmem:[#allocation2 + $0x8] sm:$0xff]
      %v1219 = vld [vmem:[%s407] sm:$0xff]
      %v1220 = vld [vmem:[%s429] sm:$0xff]
      %v1221 = vld [vmem:[%s429 + $0x8] sm:$0xff]
      %v1222 = vld [vmem:[%s429 + $0x10] sm:$0xff]
      %v1223 = vld [vmem:[%s429 + $0x18] sm:$0xff]
      %v1224 = vld [vmem:[%s429 + $0x20] sm:$0xff]
      %v1225 = vld [vmem:[%s429 + $0x28] sm:$0xff]
      %v1226 = vld [vmem:[%s429 + $0x30] sm:$0xff]
      %v1227 = vld [vmem:[%s429 + $0x38] sm:$0xff]
      %v1228 = vld [vmem:[%s429 + $0x40] sm:$0xff]
      %v1229 = vld [vmem:[%s429 + $0x48] sm:$0xff]
      %v1230 = vld [vmem:[%s429 + $0x50] sm:$0xff]
      %v1231 = vld [vmem:[%s429 + $0x58] sm:$0xff]
      %v1232 = vld [vmem:[%s429 + $0x60] sm:$0xff]
      %v1233 = vld [vmem:[%s429 + $0x68] sm:$0xff]
      %v1234 = vld [vmem:[%s429 + $0x70] sm:$0xff]
      %v1235 = vld [vmem:[%s429 + $0x78] sm:$0xff]
      %v1236 = vld [vmem:[%s429 + $0x80] sm:$0xff]
      %v1237 = vld [vmem:[%s429 + $0x88] sm:$0xff]
      %v1238 = vld [vmem:[%s429 + $0x90] sm:$0xff]
      %v1239 = vld [vmem:[%s429 + $0x98] sm:$0xff]
      %v1240 = vld [vmem:[%s429 + $0xa0] sm:$0xff]
      %v1241 = vld [vmem:[%s429 + $0xa8] sm:$0xff]
      %v1242 = vld [vmem:[%s429 + $0xb0] sm:$0xff]
      %v1243 = vld [vmem:[%s429 + $0xb8] sm:$0xff]
      %v1244 = vld [vmem:[%s429 + $0xc0] sm:$0xff]
      %v1245 = vld [vmem:[%s429 + $0xc8] sm:$0xff]
      %v1246 = vld [vmem:[%s429 + $0xd0] sm:$0xff]
      %v1247 = vld [vmem:[%s429 + $0xd8] sm:$0xff]
      %v1248 = vld [vmem:[%s429 + $0xe0] sm:$0xff]
      %v1249 = vld [vmem:[%s429 + $0xe8] sm:$0xff]
      %v1250 = vld [vmem:[%s429 + $0xf0] sm:$0xff]
      %v1251 = vld [vmem:[%s429 + $0xf8] sm:$0xff]
      %v1253 = vunpack.c.l.b16 %v1219
      %v1254 = vunpack.c.h.b16 %v1219
      %v1255 = vpack.c.b16 %v1253, %v1253
      %v1256 = vpack.c.b16 %v1254, %v1254
      %v1291 = vunpack.c.l.b16 %v1220
      %v1292 = vunpack.c.h.b16 %v1220
      %v1293 = vunpack.c.l.b16 %v1221
      %v1294 = vunpack.c.h.b16 %v1221
      %v1295 = vunpack.c.l.b16 %v1222
      %v1296 = vunpack.c.h.b16 %v1222
      %v1297 = vunpack.c.l.b16 %v1223
      %v1298 = vunpack.c.h.b16 %v1223
      %v1299 = vunpack.c.l.b16 %v1224
      %v1300 = vunpack.c.h.b16 %v1224
      %v1301 = vunpack.c.l.b16 %v1225
      %v1302 = vunpack.c.h.b16 %v1225
      %v1303 = vunpack.c.l.b16 %v1226
      %v1304 = vunpack.c.h.b16 %v1226
      %v1305 = vunpack.c.l.b16 %v1227
      %v1306 = vunpack.c.h.b16 %v1227
      %v1307 = vunpack.c.l.b16 %v1228
      %v1308 = vunpack.c.h.b16 %v1228
      %v1309 = vunpack.c.l.b16 %v1229
      %v1310 = vunpack.c.h.b16 %v1229
      %v1311 = vunpack.c.l.b16 %v1230
      %v1312 = vunpack.c.h.b16 %v1230
      %v1313 = vunpack.c.l.b16 %v1231
      %v1314 = vunpack.c.h.b16 %v1231
      %v1315 = vunpack.c.l.b16 %v1232
      %v1316 = vunpack.c.h.b16 %v1232
      %v1317 = vunpack.c.l.b16 %v1233
      %v1318 = vunpack.c.h.b16 %v1233
      %v1319 = vunpack.c.l.b16 %v1234
      %v1320 = vunpack.c.h.b16 %v1234
      %v1321 = vunpack.c.l.b16 %v1235
      %v1322 = vunpack.c.h.b16 %v1235
      %v1323 = vunpack.c.l.b16 %v1236
      %v1324 = vunpack.c.h.b16 %v1236
      %v1325 = vunpack.c.l.b16 %v1237
      %v1326 = vunpack.c.h.b16 %v1237
      %v1327 = vunpack.c.l.b16 %v1238
      %v1328 = vunpack.c.h.b16 %v1238
      %v1329 = vunpack.c.l.b16 %v1239
      %v1330 = vunpack.c.h.b16 %v1239
      %v1331 = vunpack.c.l.b16 %v1240
      %v1332 = vunpack.c.h.b16 %v1240
      %v1333 = vunpack.c.l.b16 %v1241
      %v1334 = vunpack.c.h.b16 %v1241
      %v1335 = vunpack.c.l.b16 %v1242
      %v1336 = vunpack.c.h.b16 %v1242
      %v1337 = vunpack.c.l.b16 %v1243
      %v1338 = vunpack.c.h.b16 %v1243
      %v1339 = vunpack.c.l.b16 %v1244
      %v1340 = vunpack.c.h.b16 %v1244
      %v1341 = vunpack.c.l.b16 %v1245
      %v1342 = vunpack.c.h.b16 %v1245
      %v1343 = vunpack.c.l.b16 %v1246
      %v1344 = vunpack.c.h.b16 %v1246
      %v1345 = vunpack.c.l.b16 %v1247
      %v1346 = vunpack.c.h.b16 %v1247
      %v1347 = vunpack.c.l.b16 %v1248
      %v1348 = vunpack.c.h.b16 %v1248
      %v1349 = vunpack.c.l.b16 %v1249
      %v1350 = vunpack.c.h.b16 %v1249
      %v1351 = vunpack.c.l.b16 %v1250
      %v1352 = vunpack.c.h.b16 %v1250
      %v1353 = vunpack.c.l.b16 %v1251
      %v1354 = vunpack.c.h.b16 %v1251
      %v1355 = vpack.c.b16 %v1293, %v1291
      %v1356 = vpack.c.b16 %v1294, %v1292
      %v1357 = vpack.c.b16 %v1297, %v1295
      %v1358 = vpack.c.b16 %v1298, %v1296
      %v1359 = vpack.c.b16 %v1301, %v1299
      %v1360 = vpack.c.b16 %v1302, %v1300
      %v1361 = vpack.c.b16 %v1305, %v1303
      %v1362 = vpack.c.b16 %v1306, %v1304
      %v1363 = vpack.c.b16 %v1309, %v1307
      %v1364 = vpack.c.b16 %v1310, %v1308
      %v1365 = vpack.c.b16 %v1313, %v1311
      %v1366 = vpack.c.b16 %v1314, %v1312
      %v1367 = vpack.c.b16 %v1317, %v1315
      %v1368 = vpack.c.b16 %v1318, %v1316
      %v1369 = vpack.c.b16 %v1321, %v1319
      %v1370 = vpack.c.b16 %v1322, %v1320
      %v1371 = vpack.c.b16 %v1325, %v1323
      %v1372 = vpack.c.b16 %v1326, %v1324
      %v1373 = vpack.c.b16 %v1329, %v1327
      %v1374 = vpack.c.b16 %v1330, %v1328
      %v1375 = vpack.c.b16 %v1333, %v1331
      %v1376 = vpack.c.b16 %v1334, %v1332
      %v1377 = vpack.c.b16 %v1337, %v1335
      %v1378 = vpack.c.b16 %v1338, %v1336
      %v1379 = vpack.c.b16 %v1341, %v1339
      %v1380 = vpack.c.b16 %v1342, %v1340
      %v1381 = vpack.c.b16 %v1345, %v1343
      %v1382 = vpack.c.b16 %v1346, %v1344
      %v1383 = vpack.c.b16 %v1349, %v1347
      %v1384 = vpack.c.b16 %v1350, %v1348
      %v1385 = vpack.c.b16 %v1353, %v1351
      %v1386 = vpack.c.b16 %v1354, %v1352
      %1419 = vmatprep.subr.bf16.mxu0 %v1356
      %1420 = vmatpush1.bf16.msra.mxu0 %v1355
      %1421 = vmatprep.subr.bf16.mxu0 %v1358
      %1422 = vmatpush1.bf16.msra.mxu0 %v1357
      %1423 = vmatprep.subr.bf16.mxu0 %v1360
      %1424 = vmatpush1.bf16.msra.mxu0 %v1359
      %1425 = vmatprep.subr.bf16.mxu0 %v1362
      %1426 = vmatpush1.bf16.msra.mxu0 %v1361
      %1427 = vmatprep.subr.bf16.mxu0 %v1364
      %1428 = vmatpush1.bf16.msra.mxu0 %v1363
      %1429 = vmatprep.subr.bf16.mxu0 %v1366
      %1430 = vmatpush1.bf16.msra.mxu0 %v1365
      %1431 = vmatprep.subr.bf16.mxu0 %v1368
      %1432 = vmatpush1.bf16.msra.mxu0 %v1367
      %1433 = vmatprep.subr.bf16.mxu0 %v1370
      %1434 = vmatpush1.bf16.msra.mxu0 %v1369
      %1435 = vmatprep.subr.bf16.mxu0 %v1372
      %1436 = vmatpush1.bf16.msra.mxu0 %v1371
      %1437 = vmatprep.subr.bf16.mxu0 %v1374
      %1438 = vmatpush1.bf16.msra.mxu0 %v1373
      %1439 = vmatprep.subr.bf16.mxu0 %v1376
      %1440 = vmatpush1.bf16.msra.mxu0 %v1375
      %1441 = vmatprep.subr.bf16.mxu0 %v1378
      %1442 = vmatpush1.bf16.msra.mxu0 %v1377
      %1443 = vmatprep.subr.bf16.mxu0 %v1380
      %1444 = vmatpush1.bf16.msra.mxu0 %v1379
      %1445 = vmatprep.subr.bf16.mxu0 %v1382
      %1446 = vmatpush1.bf16.msra.mxu0 %v1381
      %1447 = vmatprep.subr.bf16.mxu0 %v1384
      %1448 = vmatpush1.bf16.msra.mxu0 %v1383
      %1449 = vmatprep.subr.bf16.mxu0 %v1386
      %1450 = vmatpush1.bf16.msra.mxu0 %v1385
      %1451 = vmatprep.mubr.bf16.mxu0 %v1256
      %1452 = vmatmul.mubr.bf16.gmra.mrb[0].mxu0 %v1255
      %v1453 = vpop.f32.mrb[0].mxu0
      %v1454 = vadd.f32 0.0, %v1453
      %v1455 = vpop.f32.mrb[0].mxu0
      %v1456 = vadd.f32 0.0, %v1455
      %v1457 = vpop.f32.mrb[0].mxu0
      %v1458 = vpop.f32.mrb[0].mxu0
      %1459 = vdwg.mxu0
      %v1460 = vadd.f32 %v1217, %v1454
      %v1461 = vadd.f32 %v1218, %v1456
      %1462 = vst [vmem:[#allocation2] sm:$0xff] %v1460
      %1463 = vst [vmem:[#allocation2 + $0x8] sm:$0xff] %v1461
      %v1464 = vld [vmem:[#allocation2] sm:$0xff]
      %v1465 = vld [vmem:[#allocation2 + $0x8] sm:$0xff]
      %v1466 = vld [vmem:[%s407] sm:$0xff]
      %v1467 = vld [vmem:[%s407 + $0x8] sm:$0x11]
      %s1468 = scalar_lea.vmem %s429, 256
      %v1469 = vld [vmem:[%s1468] sm:$0xff]
      %v1470 = vld [vmem:[%s1468 + $0x8] sm:$0xff]
      %v1471 = vld [vmem:[%s1468 + $0x10] sm:$0xff]
      %v1472 = vld [vmem:[%s1468 + $0x18] sm:$0xff]
      %v1473 = vld [vmem:[%s1468 + $0x20] sm:$0xff]
      %v1474 = vld [vmem:[%s1468 + $0x28] sm:$0xff]
      %v1475 = vld [vmem:[%s1468 + $0x30] sm:$0xff]
      %v1476 = vld [vmem:[%s1468 + $0x38] sm:$0xff]
      %v1477 = vld [vmem:[%s1468 + $0x40] sm:$0xff]
      %v1478 = vld [vmem:[%s1468 + $0x48] sm:$0xff]
      %v1479 = vld [vmem:[%s1468 + $0x50] sm:$0xff]
      %v1480 = vld [vmem:[%s1468 + $0x58] sm:$0xff]
      %v1481 = vld [vmem:[%s1468 + $0x60] sm:$0xff]
      %v1482 = vld [vmem:[%s1468 + $0x68] sm:$0xff]
      %v1483 = vld [vmem:[%s1468 + $0x70] sm:$0xff]
      %v1484 = vld [vmem:[%s1468 + $0x78] sm:$0xff]
      %v1485 = vld [vmem:[%s1468 + $0x80] sm:$0xff]
      %v1486 = vld [vmem:[%s1468 + $0x88] sm:$0xff]
      %v1487 = vld [vmem:[%s1468 + $0x90] sm:$0xff]
      %v1488 = vld [vmem:[%s1468 + $0x98] sm:$0xff]
      %v1489 = vld [vmem:[%s1468 + $0xa0] sm:$0xff]
      %v1490 = vld [vmem:[%s1468 + $0xa8] sm:$0xff]
      %v1491 = vld [vmem:[%s1468 + $0xb0] sm:$0xff]
      %v1492 = vld [vmem:[%s1468 + $0xb8] sm:$0xff]
      %v1493 = vld [vmem:[%s1468 + $0xc0] sm:$0xff]
      %v1494 = vld [vmem:[%s1468 + $0xc8] sm:$0xff]
      %v1495 = vld [vmem:[%s1468 + $0xd0] sm:$0xff]
      %v1496 = vld [vmem:[%s1468 + $0xd8] sm:$0xff]
      %v1497 = vld [vmem:[%s1468 + $0xe0] sm:$0xff]
      %v1498 = vld [vmem:[%s1468 + $0xe8] sm:$0xff]
      %v1499 = vld [vmem:[%s1468 + $0xf0] sm:$0xff]
      %v1500 = vld [vmem:[%s1468 + $0xf8] sm:$0xff]
      %v1503 = vunpack.c.l.b16 %v1466
      %v1504 = vunpack.c.h.b16 %v1466
      %v1505 = vunpack.c.l.b16 %v1467
      %v1506 = vunpack.c.h.b16 %v1467
      %v1507 = vpack.c.b16 %v1505, %v1503
      %v1508 = vpack.c.b16 %v1506, %v1504
      %v1510 = vshrl.u32 %v1507, 16
      %v1512 = vshll.u32 %v1507, 16
      %v1514 = vrot.slane %v1512, 1
      %v1515 = vor.u32 %v1510, %v1514
      %v1517 = vshrl.u32 %v1508, 16
      %v1519 = vshll.u32 %v1508, 16
      %v1521 = vrot.slane %v1519, 1
      %v1522 = vor.u32 %v1517, %v1521
      %v1557 = vunpack.c.l.b16 %v1469
      %v1558 = vunpack.c.h.b16 %v1469
      %v1559 = vunpack.c.l.b16 %v1470
      %v1560 = vunpack.c.h.b16 %v1470
      %v1561 = vunpack.c.l.b16 %v1471
      %v1562 = vunpack.c.h.b16 %v1471
      %v1563 = vunpack.c.l.b16 %v1472
      %v1564 = vunpack.c.h.b16 %v1472
      %v1565 = vunpack.c.l.b16 %v1473
      %v1566 = vunpack.c.h.b16 %v1473
      %v1567 = vunpack.c.l.b16 %v1474
      %v1568 = vunpack.c.h.b16 %v1474
      %v1569 = vunpack.c.l.b16 %v1475
      %v1570 = vunpack.c.h.b16 %v1475
      %v1571 = vunpack.c.l.b16 %v1476
      %v1572 = vunpack.c.h.b16 %v1476
      %v1573 = vunpack.c.l.b16 %v1477
      %v1574 = vunpack.c.h.b16 %v1477
      %v1575 = vunpack.c.l.b16 %v1478
      %v1576 = vunpack.c.h.b16 %v1478
      %v1577 = vunpack.c.l.b16 %v1479
      %v1578 = vunpack.c.h.b16 %v1479
      %v1579 = vunpack.c.l.b16 %v1480
      %v1580 = vunpack.c.h.b16 %v1480
      %v1581 = vunpack.c.l.b16 %v1481
      %v1582 = vunpack.c.h.b16 %v1481
      %v1583 = vunpack.c.l.b16 %v1482
      %v1584 = vunpack.c.h.b16 %v1482
      %v1585 = vunpack.c.l.b16 %v1483
      %v1586 = vunpack.c.h.b16 %v1483
      %v1587 = vunpack.c.l.b16 %v1484
      %v1588 = vunpack.c.h.b16 %v1484
      %v1589 = vunpack.c.l.b16 %v1485
      %v1590 = vunpack.c.h.b16 %v1485
      %v1591 = vunpack.c.l.b16 %v1486
      %v1592 = vunpack.c.h.b16 %v1486
      %v1593 = vunpack.c.l.b16 %v1487
      %v1594 = vunpack.c.h.b16 %v1487
      %v1595 = vunpack.c.l.b16 %v1488
      %v1596 = vunpack.c.h.b16 %v1488
      %v1597 = vunpack.c.l.b16 %v1489
      %v1598 = vunpack.c.h.b16 %v1489
      %v1599 = vunpack.c.l.b16 %v1490
      %v1600 = vunpack.c.h.b16 %v1490
      %v1601 = vunpack.c.l.b16 %v1491
      %v1602 = vunpack.c.h.b16 %v1491
      %v1603 = vunpack.c.l.b16 %v1492
      %v1604 = vunpack.c.h.b16 %v1492
      %v1605 = vunpack.c.l.b16 %v1493
      %v1606 = vunpack.c.h.b16 %v1493
      %v1607 = vunpack.c.l.b16 %v1494
      %v1608 = vunpack.c.h.b16 %v1494
      %v1609 = vunpack.c.l.b16 %v1495
      %v1610 = vunpack.c.h.b16 %v1495
      %v1611 = vunpack.c.l.b16 %v1496
      %v1612 = vunpack.c.h.b16 %v1496
      %v1613 = vunpack.c.l.b16 %v1497
      %v1614 = vunpack.c.h.b16 %v1497
      %v1615 = vunpack.c.l.b16 %v1498
      %v1616 = vunpack.c.h.b16 %v1498
      %v1617 = vunpack.c.l.b16 %v1499
      %v1618 = vunpack.c.h.b16 %v1499
      %v1619 = vunpack.c.l.b16 %v1500
      %v1620 = vunpack.c.h.b16 %v1500
      %v1621 = vpack.c.b16 %v1559, %v1557
      %v1622 = vpack.c.b16 %v1560, %v1558
      %v1623 = vpack.c.b16 %v1563, %v1561
      %v1624 = vpack.c.b16 %v1564, %v1562
      %v1625 = vpack.c.b16 %v1567, %v1565
      %v1626 = vpack.c.b16 %v1568, %v1566
      %v1627 = vpack.c.b16 %v1571, %v1569
      %v1628 = vpack.c.b16 %v1572, %v1570
      %v1629 = vpack.c.b16 %v1575, %v1573
      %v1630 = vpack.c.b16 %v1576, %v1574
      %v1631 = vpack.c.b16 %v1579, %v1577
      %v1632 = vpack.c.b16 %v1580, %v1578
      %v1633 = vpack.c.b16 %v1583, %v1581
      %v1634 = vpack.c.b16 %v1584, %v1582
      %v1635 = vpack.c.b16 %v1587, %v1585
      %v1636 = vpack.c.b16 %v1588, %v1586
      %v1637 = vpack.c.b16 %v1591, %v1589
      %v1638 = vpack.c.b16 %v1592, %v1590
      %v1639 = vpack.c.b16 %v1595, %v1593
      %v1640 = vpack.c.b16 %v1596, %v1594
      %v1641 = vpack.c.b16 %v1599, %v1597
      %v1642 = vpack.c.b16 %v1600, %v1598
      %v1643 = vpack.c.b16 %v1603, %v1601
      %v1644 = vpack.c.b16 %v1604, %v1602
      %v1645 = vpack.c.b16 %v1607, %v1605
      %v1646 = vpack.c.b16 %v1608, %v1606
      %v1647 = vpack.c.b16 %v1611, %v1609
      %v1648 = vpack.c.b16 %v1612, %v1610
      %v1649 = vpack.c.b16 %v1615, %v1613
      %v1650 = vpack.c.b16 %v1616, %v1614
      %v1651 = vpack.c.b16 %v1619, %v1617
      %v1652 = vpack.c.b16 %v1620, %v1618
      %1685 = vmatprep.subr.bf16.mxu0 %v1622
      %1686 = vmatpush1.bf16.msra.mxu0 %v1621
      %1687 = vmatprep.subr.bf16.mxu0 %v1624
      %1688 = vmatpush1.bf16.msra.mxu0 %v1623
      %1689 = vmatprep.subr.bf16.mxu0 %v1626
      %1690 = vmatpush1.bf16.msra.mxu0 %v1625
      %1691 = vmatprep.subr.bf16.mxu0 %v1628
      %1692 = vmatpush1.bf16.msra.mxu0 %v1627
      %1693 = vmatprep.subr.bf16.mxu0 %v1630
      %1694 = vmatpush1.bf16.msra.mxu0 %v1629
      %1695 = vmatprep.subr.bf16.mxu0 %v1632
      %1696 = vmatpush1.bf16.msra.mxu0 %v1631
      %1697 = vmatprep.subr.bf16.mxu0 %v1634
      %1698 = vmatpush1.bf16.msra.mxu0 %v1633
      %1699 = vmatprep.subr.bf16.mxu0 %v1636
      %1700 = vmatpush1.bf16.msra.mxu0 %v1635
      %1701 = vmatprep.subr.bf16.mxu0 %v1638
      %1702 = vmatpush1.bf16.msra.mxu0 %v1637
      %1703 = vmatprep.subr.bf16.mxu0 %v1640
      %1704 = vmatpush1.bf16.msra.mxu0 %v1639
      %1705 = vmatprep.subr.bf16.mxu0 %v1642
      %1706 = vmatpush1.bf16.msra.mxu0 %v1641
      %1707 = vmatprep.subr.bf16.mxu0 %v1644
      %1708 = vmatpush1.bf16.msra.mxu0 %v1643
      %1709 = vmatprep.subr.bf16.mxu0 %v1646
      %1710 = vmatpush1.bf16.msra.mxu0 %v1645
      %1711 = vmatprep.subr.bf16.mxu0 %v1648
      %1712 = vmatpush1.bf16.msra.mxu0 %v1647
      %1713 = vmatprep.subr.bf16.mxu0 %v1650
      %1714 = vmatpush1.bf16.msra.mxu0 %v1649
      %1715 = vmatprep.subr.bf16.mxu0 %v1652
      %1716 = vmatpush1.bf16.msra.mxu0 %v1651
      %1717 = vmatprep.mubr.bf16.mxu0 %v1522
      %1718 = vmatmul.mubr.bf16.gmra.mrb[0].mxu0 %v1515
      %v1719 = vpop.f32.mrb[0].mxu0
      %v1720 = vadd.f32 0.0, %v1719
      %v1721 = vpop.f32.mrb[0].mxu0
      %v1722 = vadd.f32 0.0, %v1721
      %v1723 = vpop.f32.mrb[0].mxu0
      %v1724 = vpop.f32.mrb[0].mxu0
      %1725 = vdwg.mxu0
      %v1726 = vadd.f32 %v1464, %v1720
      %v1727 = vadd.f32 %v1465, %v1722
      %1728 = vst [vmem:[#allocation2] sm:$0xff] %v1726
      %1729 = vst [vmem:[#allocation2 + $0x8] sm:$0xff] %v1727
      %v1730 = vld [vmem:[#allocation2] sm:$0xff]
      %v1731 = vld [vmem:[#allocation2 + $0x8] sm:$0xff]
      %v1732 = vld [vmem:[%s407] sm:$0xee]
      %v1733 = vld [vmem:[%s407 + $0x8] sm:$0x11]
      %s1734 = scalar_lea.vmem %s429, 512
      %v1735 = vld [vmem:[%s1734] sm:$0xff]
      %v1736 = vld [vmem:[%s1734 + $0x8] sm:$0xff]
      %v1737 = vld [vmem:[%s1734 + $0x10] sm:$0xff]
      %v1738 = vld [vmem:[%s1734 + $0x18] sm:$0xff]
      %v1739 = vld [vmem:[%s1734 + $0x20] sm:$0xff]
      %v1740 = vld [vmem:[%s1734 + $0x28] sm:$0xff]
      %v1741 = vld [vmem:[%s1734 + $0x30] sm:$0xff]
      %v1742 = vld [vmem:[%s1734 + $0x38] sm:$0xff]
      %v1743 = vld [vmem:[%s1734 + $0x40] sm:$0xff]
      %v1744 = vld [vmem:[%s1734 + $0x48] sm:$0xff]
      %v1745 = vld [vmem:[%s1734 + $0x50] sm:$0xff]
      %v1746 = vld [vmem:[%s1734 + $0x58] sm:$0xff]
      %v1747 = vld [vmem:[%s1734 + $0x60] sm:$0xff]
      %v1748 = vld [vmem:[%s1734 + $0x68] sm:$0xff]
      %v1749 = vld [vmem:[%s1734 + $0x70] sm:$0xff]
      %v1750 = vld [vmem:[%s1734 + $0x78] sm:$0xff]
      %v1751 = vld [vmem:[%s1734 + $0x80] sm:$0xff]
      %v1752 = vld [vmem:[%s1734 + $0x88] sm:$0xff]
      %v1753 = vld [vmem:[%s1734 + $0x90] sm:$0xff]
      %v1754 = vld [vmem:[%s1734 + $0x98] sm:$0xff]
      %v1755 = vld [vmem:[%s1734 + $0xa0] sm:$0xff]
      %v1756 = vld [vmem:[%s1734 + $0xa8] sm:$0xff]
      %v1757 = vld [vmem:[%s1734 + $0xb0] sm:$0xff]
      %v1758 = vld [vmem:[%s1734 + $0xb8] sm:$0xff]
      %v1759 = vld [vmem:[%s1734 + $0xc0] sm:$0xff]
      %v1760 = vld [vmem:[%s1734 + $0xc8] sm:$0xff]
      %v1761 = vld [vmem:[%s1734 + $0xd0] sm:$0xff]
      %v1762 = vld [vmem:[%s1734 + $0xd8] sm:$0xff]
      %v1763 = vld [vmem:[%s1734 + $0xe0] sm:$0xff]
      %v1764 = vld [vmem:[%s1734 + $0xe8] sm:$0xff]
      %v1765 = vld [vmem:[%s1734 + $0xf0] sm:$0xff]
      %v1766 = vld [vmem:[%s1734 + $0xf8] sm:$0xff]
      %v1769 = vunpack.c.l.b16 %v1732
      %v1770 = vunpack.c.h.b16 %v1732
      %v1771 = vunpack.c.l.b16 %v1733
      %v1772 = vunpack.c.h.b16 %v1733
      %v1773 = vpack.c.b16 %v1771, %v1769
      %v1774 = vpack.c.b16 %v1772, %v1770
      %v1775 = vrot.slane %v1773, 1
      %v1776 = vrot.slane %v1774, 1
      %v1811 = vunpack.c.l.b16 %v1735
      %v1812 = vunpack.c.h.b16 %v1735
      %v1813 = vunpack.c.l.b16 %v1736
      %v1814 = vunpack.c.h.b16 %v1736
      %v1815 = vunpack.c.l.b16 %v1737
      %v1816 = vunpack.c.h.b16 %v1737
      %v1817 = vunpack.c.l.b16 %v1738
      %v1818 = vunpack.c.h.b16 %v1738
      %v1819 = vunpack.c.l.b16 %v1739
      %v1820 = vunpack.c.h.b16 %v1739
      %v1821 = vunpack.c.l.b16 %v1740
      %v1822 = vunpack.c.h.b16 %v1740
      %v1823 = vunpack.c.l.b16 %v1741
      %v1824 = vunpack.c.h.b16 %v1741
      %v1825 = vunpack.c.l.b16 %v1742
      %v1826 = vunpack.c.h.b16 %v1742
      %v1827 = vunpack.c.l.b16 %v1743
      %v1828 = vunpack.c.h.b16 %v1743
      %v1829 = vunpack.c.l.b16 %v1744
      %v1830 = vunpack.c.h.b16 %v1744
      %v1831 = vunpack.c.l.b16 %v1745
      %v1832 = vunpack.c.h.b16 %v1745
      %v1833 = vunpack.c.l.b16 %v1746
      %v1834 = vunpack.c.h.b16 %v1746
      %v1835 = vunpack.c.l.b16 %v1747
      %v1836 = vunpack.c.h.b16 %v1747
      %v1837 = vunpack.c.l.b16 %v1748
      %v1838 = vunpack.c.h.b16 %v1748
      %v1839 = vunpack.c.l.b16 %v1749
      %v1840 = vunpack.c.h.b16 %v1749
      %v1841 = vunpack.c.l.b16 %v1750
      %v1842 = vunpack.c.h.b16 %v1750
      %v1843 = vunpack.c.l.b16 %v1751
      %v1844 = vunpack.c.h.b16 %v1751
      %v1845 = vunpack.c.l.b16 %v1752
      %v1846 = vunpack.c.h.b16 %v1752
      %v1847 = vunpack.c.l.b16 %v1753
      %v1848 = vunpack.c.h.b16 %v1753
      %v1849 = vunpack.c.l.b16 %v1754
      %v1850 = vunpack.c.h.b16 %v1754
      %v1851 = vunpack.c.l.b16 %v1755
      %v1852 = vunpack.c.h.b16 %v1755
      %v1853 = vunpack.c.l.b16 %v1756
      %v1854 = vunpack.c.h.b16 %v1756
      %v1855 = vunpack.c.l.b16 %v1757
      %v1856 = vunpack.c.h.b16 %v1757
      %v1857 = vunpack.c.l.b16 %v1758
      %v1858 = vunpack.c.h.b16 %v1758
      %v1859 = vunpack.c.l.b16 %v1759
      %v1860 = vunpack.c.h.b16 %v1759
      %v1861 = vunpack.c.l.b16 %v1760
      %v1862 = vunpack.c.h.b16 %v1760
      %v1863 = vunpack.c.l.b16 %v1761
      %v1864 = vunpack.c.h.b16 %v1761
      %v1865 = vunpack.c.l.b16 %v1762
      %v1866 = vunpack.c.h.b16 %v1762
      %v1867 = vunpack.c.l.b16 %v1763
      %v1868 = vunpack.c.h.b16 %v1763
      %v1869 = vunpack.c.l.b16 %v1764
      %v1870 = vunpack.c.h.b16 %v1764
      %v1871 = vunpack.c.l.b16 %v1765
      %v1872 = vunpack.c.h.b16 %v1765
      %v1873 = vunpack.c.l.b16 %v1766
      %v1874 = vunpack.c.h.b16 %v1766
      %v1875 = vpack.c.b16 %v1813, %v1811
      %v1876 = vpack.c.b16 %v1814, %v1812
      %v1877 = vpack.c.b16 %v1817, %v1815
      %v1878 = vpack.c.b16 %v1818, %v1816
      %v1879 = vpack.c.b16 %v1821, %v1819
      %v1880 = vpack.c.b16 %v1822, %v1820
      %v1881 = vpack.c.b16 %v1825, %v1823
      %v1882 = vpack.c.b16 %v1826, %v1824
      %v1883 = vpack.c.b16 %v1829, %v1827
      %v1884 = vpack.c.b16 %v1830, %v1828
      %v1885 = vpack.c.b16 %v1833, %v1831
      %v1886 = vpack.c.b16 %v1834, %v1832
      %v1887 = vpack.c.b16 %v1837, %v1835
      %v1888 = vpack.c.b16 %v1838, %v1836
      %v1889 = vpack.c.b16 %v1841, %v1839
      %v1890 = vpack.c.b16 %v1842, %v1840
      %v1891 = vpack.c.b16 %v1845, %v1843
      %v1892 = vpack.c.b16 %v1846, %v1844
      %v1893 = vpack.c.b16 %v1849, %v1847
      %v1894 = vpack.c.b16 %v1850, %v1848
      %v1895 = vpack.c.b16 %v1853, %v1851
      %v1896 = vpack.c.b16 %v1854, %v1852
      %v1897 = vpack.c.b16 %v1857, %v1855
      %v1898 = vpack.c.b16 %v1858, %v1856
      %v1899 = vpack.c.b16 %v1861, %v1859
      %v1900 = vpack.c.b16 %v1862, %v1860
      %v1901 = vpack.c.b16 %v1865, %v1863
      %v1902 = vpack.c.b16 %v1866, %v1864
      %v1903 = vpack.c.b16 %v1869, %v1867
      %v1904 = vpack.c.b16 %v1870, %v1868
      %v1905 = vpack.c.b16 %v1873, %v1871
      %v1906 = vpack.c.b16 %v1874, %v1872
      %1939 = vmatprep.subr.bf16.mxu0 %v1876
      %1940 = vmatpush1.bf16.msra.mxu0 %v1875
      %1941 = vmatprep.subr.bf16.mxu0 %v1878
      %1942 = vmatpush1.bf16.msra.mxu0 %v1877
      %1943 = vmatprep.subr.bf16.mxu0 %v1880
      %1944 = vmatpush1.bf16.msra.mxu0 %v1879
      %1945 = vmatprep.subr.bf16.mxu0 %v1882
      %1946 = vmatpush1.bf16.msra.mxu0 %v1881
      %1947 = vmatprep.subr.bf16.mxu0 %v1884
      %1948 = vmatpush1.bf16.msra.mxu0 %v1883
      %1949 = vmatprep.subr.bf16.mxu0 %v1886
      %1950 = vmatpush1.bf16.msra.mxu0 %v1885
      %1951 = vmatprep.subr.bf16.mxu0 %v1888
      %1952 = vmatpush1.bf16.msra.mxu0 %v1887
      %1953 = vmatprep.subr.bf16.mxu0 %v1890
      %1954 = vmatpush1.bf16.msra.mxu0 %v1889
      %1955 = vmatprep.subr.bf16.mxu0 %v1892
      %1956 = vmatpush1.bf16.msra.mxu0 %v1891
      %1957 = vmatprep.subr.bf16.mxu0 %v1894
      %1958 = vmatpush1.bf16.msra.mxu0 %v1893
      %1959 = vmatprep.subr.bf16.mxu0 %v1896
      %1960 = vmatpush1.bf16.msra.mxu0 %v1895
      %1961 = vmatprep.subr.bf16.mxu0 %v1898
      %1962 = vmatpush1.bf16.msra.mxu0 %v1897
      %1963 = vmatprep.subr.bf16.mxu0 %v1900
      %1964 = vmatpush1.bf16.msra.mxu0 %v1899
      %1965 = vmatprep.subr.bf16.mxu0 %v1902
      %1966 = vmatpush1.bf16.msra.mxu0 %v1901
      %1967 = vmatprep.subr.bf16.mxu0 %v1904
      %1968 = vmatpush1.bf16.msra.mxu0 %v1903
      %1969 = vmatprep.subr.bf16.mxu0 %v1906
      %1970 = vmatpush1.bf16.msra.mxu0 %v1905
      %1971 = vmatprep.mubr.bf16.mxu0 %v1776
      %1972 = vmatmul.mubr.bf16.gmra.mrb[0].mxu0 %v1775
      %v1973 = vpop.f32.mrb[0].mxu0
      %v1974 = vadd.f32 0.0, %v1973
      %v1975 = vpop.f32.mrb[0].mxu0
      %v1976 = vadd.f32 0.0, %v1975
      %v1977 = vpop.f32.mrb[0].mxu0
      %v1978 = vpop.f32.mrb[0].mxu0
      %1979 = vdwg.mxu0
      %v1980 = vadd.f32 %v1730, %v1974
      %v1981 = vadd.f32 %v1731, %v1976
      %1982 = vst [vmem:[#allocation2] sm:$0xff] %v1980
      %1983 = vst [vmem:[#allocation2 + $0x8] sm:$0xff] %v1981
      %v1984 = vld [vmem:[#allocation2] sm:$0xff]
      %v1985 = vld [vmem:[#allocation2 + $0x8] sm:$0xff]
      %v1986 = vld [vmem:[%s418] sm:$0xff]
      %v1987 = vld [vmem:[%s434] sm:$0xff]
      %v1988 = vld [vmem:[%s434 + $0x8] sm:$0xff]
      %v1989 = vld [vmem:[%s434 + $0x10] sm:$0xff]
      %v1990 = vld [vmem:[%s434 + $0x18] sm:$0xff]
      %v1991 = vld [vmem:[%s434 + $0x20] sm:$0xff]
      %v1992 = vld [vmem:[%s434 + $0x28] sm:$0xff]
      %v1993 = vld [vmem:[%s434 + $0x30] sm:$0xff]
      %v1994 = vld [vmem:[%s434 + $0x38] sm:$0xff]
      %v1995 = vld [vmem:[%s434 + $0x40] sm:$0xff]
      %v1996 = vld [vmem:[%s434 + $0x48] sm:$0xff]
      %v1997 = vld [vmem:[%s434 + $0x50] sm:$0xff]
      %v1998 = vld [vmem:[%s434 + $0x58] sm:$0xff]
      %v1999 = vld [vmem:[%s434 + $0x60] sm:$0xff]
      %v2000 = vld [vmem:[%s434 + $0x68] sm:$0xff]
      %v2001 = vld [vmem:[%s434 + $0x70] sm:$0xff]
      %v2002 = vld [vmem:[%s434 + $0x78] sm:$0xff]
      %v2003 = vld [vmem:[%s434 + $0x80] sm:$0xff]
      %v2004 = vld [vmem:[%s434 + $0x88] sm:$0xff]
      %v2005 = vld [vmem:[%s434 + $0x90] sm:$0xff]
      %v2006 = vld [vmem:[%s434 + $0x98] sm:$0xff]
      %v2007 = vld [vmem:[%s434 + $0xa0] sm:$0xff]
      %v2008 = vld [vmem:[%s434 + $0xa8] sm:$0xff]
      %v2009 = vld [vmem:[%s434 + $0xb0] sm:$0xff]
      %v2010 = vld [vmem:[%s434 + $0xb8] sm:$0xff]
      %v2011 = vld [vmem:[%s434 + $0xc0] sm:$0xff]
      %v2012 = vld [vmem:[%s434 + $0xc8] sm:$0xff]
      %v2013 = vld [vmem:[%s434 + $0xd0] sm:$0xff]
      %v2014 = vld [vmem:[%s434 + $0xd8] sm:$0xff]
      %v2015 = vld [vmem:[%s434 + $0xe0] sm:$0xff]
      %v2016 = vld [vmem:[%s434 + $0xe8] sm:$0xff]
      %v2017 = vld [vmem:[%s434 + $0xf0] sm:$0xff]
      %v2018 = vld [vmem:[%s434 + $0xf8] sm:$0xff]
      %v2020 = vunpack.c.l.b16 %v1986
      %v2021 = vunpack.c.h.b16 %v1986
      %v2022 = vpack.c.b16 %v2020, %v2020
      %v2023 = vpack.c.b16 %v2021, %v2021
      %v2058 = vunpack.c.l.b16 %v1987
      %v2059 = vunpack.c.h.b16 %v1987
      %v2060 = vunpack.c.l.b16 %v1988
      %v2061 = vunpack.c.h.b16 %v1988
      %v2062 = vunpack.c.l.b16 %v1989
      %v2063 = vunpack.c.h.b16 %v1989
      %v2064 = vunpack.c.l.b16 %v1990
      %v2065 = vunpack.c.h.b16 %v1990
      %v2066 = vunpack.c.l.b16 %v1991
      %v2067 = vunpack.c.h.b16 %v1991
      %v2068 = vunpack.c.l.b16 %v1992
      %v2069 = vunpack.c.h.b16 %v1992
      %v2070 = vunpack.c.l.b16 %v1993
      %v2071 = vunpack.c.h.b16 %v1993
      %v2072 = vunpack.c.l.b16 %v1994
      %v2073 = vunpack.c.h.b16 %v1994
      %v2074 = vunpack.c.l.b16 %v1995
      %v2075 = vunpack.c.h.b16 %v1995
      %v2076 = vunpack.c.l.b16 %v1996
      %v2077 = vunpack.c.h.b16 %v1996
      %v2078 = vunpack.c.l.b16 %v1997
      %v2079 = vunpack.c.h.b16 %v1997
      %v2080 = vunpack.c.l.b16 %v1998
      %v2081 = vunpack.c.h.b16 %v1998
      %v2082 = vunpack.c.l.b16 %v1999
      %v2083 = vunpack.c.h.b16 %v1999
      %v2084 = vunpack.c.l.b16 %v2000
      %v2085 = vunpack.c.h.b16 %v2000
      %v2086 = vunpack.c.l.b16 %v2001
      %v2087 = vunpack.c.h.b16 %v2001
      %v2088 = vunpack.c.l.b16 %v2002
      %v2089 = vunpack.c.h.b16 %v2002
      %v2090 = vunpack.c.l.b16 %v2003
      %v2091 = vunpack.c.h.b16 %v2003
      %v2092 = vunpack.c.l.b16 %v2004
      %v2093 = vunpack.c.h.b16 %v2004
      %v2094 = vunpack.c.l.b16 %v2005
      %v2095 = vunpack.c.h.b16 %v2005
      %v2096 = vunpack.c.l.b16 %v2006
      %v2097 = vunpack.c.h.b16 %v2006
      %v2098 = vunpack.c.l.b16 %v2007
      %v2099 = vunpack.c.h.b16 %v2007
      %v2100 = vunpack.c.l.b16 %v2008
      %v2101 = vunpack.c.h.b16 %v2008
      %v2102 = vunpack.c.l.b16 %v2009
      %v2103 = vunpack.c.h.b16 %v2009
      %v2104 = vunpack.c.l.b16 %v2010
      %v2105 = vunpack.c.h.b16 %v2010
      %v2106 = vunpack.c.l.b16 %v2011
      %v2107 = vunpack.c.h.b16 %v2011
      %v2108 = vunpack.c.l.b16 %v2012
      %v2109 = vunpack.c.h.b16 %v2012
      %v2110 = vunpack.c.l.b16 %v2013
      %v2111 = vunpack.c.h.b16 %v2013
      %v2112 = vunpack.c.l.b16 %v2014
      %v2113 = vunpack.c.h.b16 %v2014
      %v2114 = vunpack.c.l.b16 %v2015
      %v2115 = vunpack.c.h.b16 %v2015
      %v2116 = vunpack.c.l.b16 %v2016
      %v2117 = vunpack.c.h.b16 %v2016
      %v2118 = vunpack.c.l.b16 %v2017
      %v2119 = vunpack.c.h.b16 %v2017
      %v2120 = vunpack.c.l.b16 %v2018
      %v2121 = vunpack.c.h.b16 %v2018
      %v2122 = vpack.c.b16 %v2060, %v2058
      %v2123 = vpack.c.b16 %v2061, %v2059
      %v2124 = vpack.c.b16 %v2064, %v2062
      %v2125 = vpack.c.b16 %v2065, %v2063
      %v2126 = vpack.c.b16 %v2068, %v2066
      %v2127 = vpack.c.b16 %v2069, %v2067
      %v2128 = vpack.c.b16 %v2072, %v2070
      %v2129 = vpack.c.b16 %v2073, %v2071
      %v2130 = vpack.c.b16 %v2076, %v2074
      %v2131 = vpack.c.b16 %v2077, %v2075
      %v2132 = vpack.c.b16 %v2080, %v2078
      %v2133 = vpack.c.b16 %v2081, %v2079
      %v2134 = vpack.c.b16 %v2084, %v2082
      %v2135 = vpack.c.b16 %v2085, %v2083
      %v2136 = vpack.c.b16 %v2088, %v2086
      %v2137 = vpack.c.b16 %v2089, %v2087
      %v2138 = vpack.c.b16 %v2092, %v2090
      %v2139 = vpack.c.b16 %v2093, %v2091
      %v2140 = vpack.c.b16 %v2096, %v2094
      %v2141 = vpack.c.b16 %v2097, %v2095
      %v2142 = vpack.c.b16 %v2100, %v2098
      %v2143 = vpack.c.b16 %v2101, %v2099
      %v2144 = vpack.c.b16 %v2104, %v2102
      %v2145 = vpack.c.b16 %v2105, %v2103
      %v2146 = vpack.c.b16 %v2108, %v2106
      %v2147 = vpack.c.b16 %v2109, %v2107
      %v2148 = vpack.c.b16 %v2112, %v2110
      %v2149 = vpack.c.b16 %v2113, %v2111
      %v2150 = vpack.c.b16 %v2116, %v2114
      %v2151 = vpack.c.b16 %v2117, %v2115
      %v2152 = vpack.c.b16 %v2120, %v2118
      %v2153 = vpack.c.b16 %v2121, %v2119
      %2186 = vmatprep.subr.bf16.mxu0 %v2123
      %2187 = vmatpush1.bf16.msra.mxu0 %v2122
      %2188 = vmatprep.subr.bf16.mxu0 %v2125
      %2189 = vmatpush1.bf16.msra.mxu0 %v2124
      %2190 = vmatprep.subr.bf16.mxu0 %v2127
      %2191 = vmatpush1.bf16.msra.mxu0 %v2126
      %2192 = vmatprep.subr.bf16.mxu0 %v2129
      %2193 = vmatpush1.bf16.msra.mxu0 %v2128
      %2194 = vmatprep.subr.bf16.mxu0 %v2131
      %2195 = vmatpush1.bf16.msra.mxu0 %v2130
      %2196 = vmatprep.subr.bf16.mxu0 %v2133
      %2197 = vmatpush1.bf16.msra.mxu0 %v2132
      %2198 = vmatprep.subr.bf16.mxu0 %v2135
      %2199 = vmatpush1.bf16.msra.mxu0 %v2134
      %2200 = vmatprep.subr.bf16.mxu0 %v2137
      %2201 = vmatpush1.bf16.msra.mxu0 %v2136
      %2202 = vmatprep.subr.bf16.mxu0 %v2139
      %2203 = vmatpush1.bf16.msra.mxu0 %v2138
      %2204 = vmatprep.subr.bf16.mxu0 %v2141
      %2205 = vmatpush1.bf16.msra.mxu0 %v2140
      %2206 = vmatprep.subr.bf16.mxu0 %v2143
      %2207 = vmatpush1.bf16.msra.mxu0 %v2142
      %2208 = vmatprep.subr.bf16.mxu0 %v2145
      %2209 = vmatpush1.bf16.msra.mxu0 %v2144
      %2210 = vmatprep.subr.bf16.mxu0 %v2147
      %2211 = vmatpush1.bf16.msra.mxu0 %v2146
      %2212 = vmatprep.subr.bf16.mxu0 %v2149
      %2213 = vmatpush1.bf16.msra.mxu0 %v2148
      %2214 = vmatprep.subr.bf16.mxu0 %v2151
      %2215 = vmatpush1.bf16.msra.mxu0 %v2150
      %2216 = vmatprep.subr.bf16.mxu0 %v2153
      %2217 = vmatpush1.bf16.msra.mxu0 %v2152
      %2218 = vmatprep.mubr.bf16.mxu0 %v2023
      %2219 = vmatmul.mubr.bf16.gmra.mrb[0].mxu0 %v2022
      %v2220 = vpop.f32.mrb[0].mxu0
      %v2221 = vadd.f32 0.0, %v2220
      %v2222 = vpop.f32.mrb[0].mxu0
      %v2223 = vadd.f32 0.0, %v2222
      %v2224 = vpop.f32.mrb[0].mxu0
      %v2225 = vpop.f32.mrb[0].mxu0
      %2226 = vdwg.mxu0
      %v2227 = vadd.f32 %v1984, %v2221
      %v2228 = vadd.f32 %v1985, %v2223
      %2229 = vst [vmem:[#allocation2] sm:$0xff] %v2227
      %2230 = vst [vmem:[#allocation2 + $0x8] sm:$0xff] %v2228
      %v2231 = vld [vmem:[#allocation2] sm:$0xff]
      %v2232 = vld [vmem:[#allocation2 + $0x8] sm:$0xff]
      %v2233 = vld [vmem:[%s418] sm:$0xff]
      %v2234 = vld [vmem:[%s418 + $0x8] sm:$0x11]
      %s2235 = scalar_lea.vmem %s434, 256
      %v2236 = vld [vmem:[%s2235] sm:$0xff]
      %v2237 = vld [vmem:[%s2235 + $0x8] sm:$0xff]
      %v2238 = vld [vmem:[%s2235 + $0x10] sm:$0xff]
      %v2239 = vld [vmem:[%s2235 + $0x18] sm:$0xff]
      %v2240 = vld [vmem:[%s2235 + $0x20] sm:$0xff]
      %v2241 = vld [vmem:[%s2235 + $0x28] sm:$0xff]
      %v2242 = vld [vmem:[%s2235 + $0x30] sm:$0xff]
      %v2243 = vld [vmem:[%s2235 + $0x38] sm:$0xff]
      %v2244 = vld [vmem:[%s2235 + $0x40] sm:$0xff]
      %v2245 = vld [vmem:[%s2235 + $0x48] sm:$0xff]
      %v2246 = vld [vmem:[%s2235 + $0x50] sm:$0xff]
      %v2247 = vld [vmem:[%s2235 + $0x58] sm:$0xff]
      %v2248 = vld [vmem:[%s2235 + $0x60] sm:$0xff]
      %v2249 = vld [vmem:[%s2235 + $0x68] sm:$0xff]
      %v2250 = vld [vmem:[%s2235 + $0x70] sm:$0xff]
      %v2251 = vld [vmem:[%s2235 + $0x78] sm:$0xff]
      %v2252 = vld [vmem:[%s2235 + $0x80] sm:$0xff]
      %v2253 = vld [vmem:[%s2235 + $0x88] sm:$0xff]
      %v2254 = vld [vmem:[%s2235 + $0x90] sm:$0xff]
      %v2255 = vld [vmem:[%s2235 + $0x98] sm:$0xff]
      %v2256 = vld [vmem:[%s2235 + $0xa0] sm:$0xff]
      %v2257 = vld [vmem:[%s2235 + $0xa8] sm:$0xff]
      %v2258 = vld [vmem:[%s2235 + $0xb0] sm:$0xff]
      %v2259 = vld [vmem:[%s2235 + $0xb8] sm:$0xff]
      %v2260 = vld [vmem:[%s2235 + $0xc0] sm:$0xff]
      %v2261 = vld [vmem:[%s2235 + $0xc8] sm:$0xff]
      %v2262 = vld [vmem:[%s2235 + $0xd0] sm:$0xff]
      %v2263 = vld [vmem:[%s2235 + $0xd8] sm:$0xff]
      %v2264 = vld [vmem:[%s2235 + $0xe0] sm:$0xff]
      %v2265 = vld [vmem:[%s2235 + $0xe8] sm:$0xff]
      %v2266 = vld [vmem:[%s2235 + $0xf0] sm:$0xff]
      %v2267 = vld [vmem:[%s2235 + $0xf8] sm:$0xff]
      %v2270 = vunpack.c.l.b16 %v2233
      %v2271 = vunpack.c.h.b16 %v2233
      %v2272 = vunpack.c.l.b16 %v2234
      %v2273 = vunpack.c.h.b16 %v2234
      %v2274 = vpack.c.b16 %v2272, %v2270
      %v2275 = vpack.c.b16 %v2273, %v2271
      %v2277 = vshrl.u32 %v2274, 16
      %v2279 = vshll.u32 %v2274, 16
      %v2281 = vrot.slane %v2279, 1
      %v2282 = vor.u32 %v2277, %v2281
      %v2284 = vshrl.u32 %v2275, 16
      %v2286 = vshll.u32 %v2275, 16
      %v2288 = vrot.slane %v2286, 1
      %v2289 = vor.u32 %v2284, %v2288
      %v2324 = vunpack.c.l.b16 %v2236
      %v2325 = vunpack.c.h.b16 %v2236
      %v2326 = vunpack.c.l.b16 %v2237
      %v2327 = vunpack.c.h.b16 %v2237
      %v2328 = vunpack.c.l.b16 %v2238
      %v2329 = vunpack.c.h.b16 %v2238
      %v2330 = vunpack.c.l.b16 %v2239
      %v2331 = vunpack.c.h.b16 %v2239
      %v2332 = vunpack.c.l.b16 %v2240
      %v2333 = vunpack.c.h.b16 %v2240
      %v2334 = vunpack.c.l.b16 %v2241
      %v2335 = vunpack.c.h.b16 %v2241
      %v2336 = vunpack.c.l.b16 %v2242
      %v2337 = vunpack.c.h.b16 %v2242
      %v2338 = vunpack.c.l.b16 %v2243
      %v2339 = vunpack.c.h.b16 %v2243
      %v2340 = vunpack.c.l.b16 %v2244
      %v2341 = vunpack.c.h.b16 %v2244
      %v2342 = vunpack.c.l.b16 %v2245
      %v2343 = vunpack.c.h.b16 %v2245
      %v2344 = vunpack.c.l.b16 %v2246
      %v2345 = vunpack.c.h.b16 %v2246
      %v2346 = vunpack.c.l.b16 %v2247
      %v2347 = vunpack.c.h.b16 %v2247
      %v2348 = vunpack.c.l.b16 %v2248
      %v2349 = vunpack.c.h.b16 %v2248
      %v2350 = vunpack.c.l.b16 %v2249
      %v2351 = vunpack.c.h.b16 %v2249
      %v2352 = vunpack.c.l.b16 %v2250
      %v2353 = vunpack.c.h.b16 %v2250
      %v2354 = vunpack.c.l.b16 %v2251
      %v2355 = vunpack.c.h.b16 %v2251
      %v2356 = vunpack.c.l.b16 %v2252
      %v2357 = vunpack.c.h.b16 %v2252
      %v2358 = vunpack.c.l.b16 %v2253
      %v2359 = vunpack.c.h.b16 %v2253
      %v2360 = vunpack.c.l.b16 %v2254
      %v2361 = vunpack.c.h.b16 %v2254
      %v2362 = vunpack.c.l.b16 %v2255
      %v2363 = vunpack.c.h.b16 %v2255
      %v2364 = vunpack.c.l.b16 %v2256
      %v2365 = vunpack.c.h.b16 %v2256
      %v2366 = vunpack.c.l.b16 %v2257
      %v2367 = vunpack.c.h.b16 %v2257
      %v2368 = vunpack.c.l.b16 %v2258
      %v2369 = vunpack.c.h.b16 %v2258
      %v2370 = vunpack.c.l.b16 %v2259
      %v2371 = vunpack.c.h.b16 %v2259
      %v2372 = vunpack.c.l.b16 %v2260
      %v2373 = vunpack.c.h.b16 %v2260
      %v2374 = vunpack.c.l.b16 %v2261
      %v2375 = vunpack.c.h.b16 %v2261
      %v2376 = vunpack.c.l.b16 %v2262
      %v2377 = vunpack.c.h.b16 %v2262
      %v2378 = vunpack.c.l.b16 %v2263
      %v2379 = vunpack.c.h.b16 %v2263
      %v2380 = vunpack.c.l.b16 %v2264
      %v2381 = vunpack.c.h.b16 %v2264
      %v2382 = vunpack.c.l.b16 %v2265
      %v2383 = vunpack.c.h.b16 %v2265
      %v2384 = vunpack.c.l.b16 %v2266
      %v2385 = vunpack.c.h.b16 %v2266
      %v2386 = vunpack.c.l.b16 %v2267
      %v2387 = vunpack.c.h.b16 %v2267
      %v2388 = vpack.c.b16 %v2326, %v2324
      %v2389 = vpack.c.b16 %v2327, %v2325
      %v2390 = vpack.c.b16 %v2330, %v2328
      %v2391 = vpack.c.b16 %v2331, %v2329
      %v2392 = vpack.c.b16 %v2334, %v2332
      %v2393 = vpack.c.b16 %v2335, %v2333
      %v2394 = vpack.c.b16 %v2338, %v2336
      %v2395 = vpack.c.b16 %v2339, %v2337
      %v2396 = vpack.c.b16 %v2342, %v2340
      %v2397 = vpack.c.b16 %v2343, %v2341
      %v2398 = vpack.c.b16 %v2346, %v2344
      %v2399 = vpack.c.b16 %v2347, %v2345
      %v2400 = vpack.c.b16 %v2350, %v2348
      %v2401 = vpack.c.b16 %v2351, %v2349
      %v2402 = vpack.c.b16 %v2354, %v2352
      %v2403 = vpack.c.b16 %v2355, %v2353
      %v2404 = vpack.c.b16 %v2358, %v2356
      %v2405 = vpack.c.b16 %v2359, %v2357
      %v2406 = vpack.c.b16 %v2362, %v2360
      %v2407 = vpack.c.b16 %v2363, %v2361
      %v2408 = vpack.c.b16 %v2366, %v2364
      %v2409 = vpack.c.b16 %v2367, %v2365
      %v2410 = vpack.c.b16 %v2370, %v2368
      %v2411 = vpack.c.b16 %v2371, %v2369
      %v2412 = vpack.c.b16 %v2374, %v2372
      %v2413 = vpack.c.b16 %v2375, %v2373
      %v2414 = vpack.c.b16 %v2378, %v2376
      %v2415 = vpack.c.b16 %v2379, %v2377
      %v2416 = vpack.c.b16 %v2382, %v2380
      %v2417 = vpack.c.b16 %v2383, %v2381
      %v2418 = vpack.c.b16 %v2386, %v2384
      %v2419 = vpack.c.b16 %v2387, %v2385
      %2452 = vmatprep.subr.bf16.mxu0 %v2389
      %2453 = vmatpush1.bf16.msra.mxu0 %v2388
      %2454 = vmatprep.subr.bf16.mxu0 %v2391
      %2455 = vmatpush1.bf16.msra.mxu0 %v2390
      %2456 = vmatprep.subr.bf16.mxu0 %v2393
      %2457 = vmatpush1.bf16.msra.mxu0 %v2392
      %2458 = vmatprep.subr.bf16.mxu0 %v2395
      %2459 = vmatpush1.bf16.msra.mxu0 %v2394
      %2460 = vmatprep.subr.bf16.mxu0 %v2397
      %2461 = vmatpush1.bf16.msra.mxu0 %v2396
      %2462 = vmatprep.subr.bf16.mxu0 %v2399
      %2463 = vmatpush1.bf16.msra.mxu0 %v2398
      %2464 = vmatprep.subr.bf16.mxu0 %v2401
      %2465 = vmatpush1.bf16.msra.mxu0 %v2400
      %2466 = vmatprep.subr.bf16.mxu0 %v2403
      %2467 = vmatpush1.bf16.msra.mxu0 %v2402
      %2468 = vmatprep.subr.bf16.mxu0 %v2405
      %2469 = vmatpush1.bf16.msra.mxu0 %v2404
      %2470 = vmatprep.subr.bf16.mxu0 %v2407
      %2471 = vmatpush1.bf16.msra.mxu0 %v2406
      %2472 = vmatprep.subr.bf16.mxu0 %v2409
      %2473 = vmatpush1.bf16.msra.mxu0 %v2408
      %2474 = vmatprep.subr.bf16.mxu0 %v2411
      %2475 = vmatpush1.bf16.msra.mxu0 %v2410
      %2476 = vmatprep.subr.bf16.mxu0 %v2413
      %2477 = vmatpush1.bf16.msra.mxu0 %v2412
      %2478 = vmatprep.subr.bf16.mxu0 %v2415
      %2479 = vmatpush1.bf16.msra.mxu0 %v2414
      %2480 = vmatprep.subr.bf16.mxu0 %v2417
      %2481 = vmatpush1.bf16.msra.mxu0 %v2416
      %2482 = vmatprep.subr.bf16.mxu0 %v2419
      %2483 = vmatpush1.bf16.msra.mxu0 %v2418
      %2484 = vmatprep.mubr.bf16.mxu0 %v2289
      %2485 = vmatmul.mubr.bf16.gmra.mrb[0].mxu0 %v2282
      %v2486 = vpop.f32.mrb[0].mxu0
      %v2487 = vadd.f32 0.0, %v2486
      %v2488 = vpop.f32.mrb[0].mxu0
      %v2489 = vadd.f32 0.0, %v2488
      %v2490 = vpop.f32.mrb[0].mxu0
      %v2491 = vpop.f32.mrb[0].mxu0
      %2492 = vdwg.mxu0
      %v2493 = vadd.f32 %v2231, %v2487
      %v2494 = vadd.f32 %v2232, %v2489
      %2495 = vst [vmem:[#allocation2] sm:$0xff] %v2493
      %2496 = vst [vmem:[#allocation2 + $0x8] sm:$0xff] %v2494
      %v2497 = vld [vmem:[#allocation2] sm:$0xff]
      %v2498 = vld [vmem:[#allocation2 + $0x8] sm:$0xff]
      %v2499 = vld [vmem:[%s418] sm:$0xee]
      %v2500 = vld [vmem:[%s418 + $0x8] sm:$0x11]
      %s2501 = scalar_lea.vmem %s434, 512
      %v2502 = vld [vmem:[%s2501] sm:$0xff]
      %v2503 = vld [vmem:[%s2501 + $0x8] sm:$0xff]
      %v2504 = vld [vmem:[%s2501 + $0x10] sm:$0xff]
      %v2505 = vld [vmem:[%s2501 + $0x18] sm:$0xff]
      %v2506 = vld [vmem:[%s2501 + $0x20] sm:$0xff]
      %v2507 = vld [vmem:[%s2501 + $0x28] sm:$0xff]
      %v2508 = vld [vmem:[%s2501 + $0x30] sm:$0xff]
      %v2509 = vld [vmem:[%s2501 + $0x38] sm:$0xff]
      %v2510 = vld [vmem:[%s2501 + $0x40] sm:$0xff]
      %v2511 = vld [vmem:[%s2501 + $0x48] sm:$0xff]
      %v2512 = vld [vmem:[%s2501 + $0x50] sm:$0xff]
      %v2513 = vld [vmem:[%s2501 + $0x58] sm:$0xff]
      %v2514 = vld [vmem:[%s2501 + $0x60] sm:$0xff]
      %v2515 = vld [vmem:[%s2501 + $0x68] sm:$0xff]
      %v2516 = vld [vmem:[%s2501 + $0x70] sm:$0xff]
      %v2517 = vld [vmem:[%s2501 + $0x78] sm:$0xff]
      %v2518 = vld [vmem:[%s2501 + $0x80] sm:$0xff]
      %v2519 = vld [vmem:[%s2501 + $0x88] sm:$0xff]
      %v2520 = vld [vmem:[%s2501 + $0x90] sm:$0xff]
      %v2521 = vld [vmem:[%s2501 + $0x98] sm:$0xff]
      %v2522 = vld [vmem:[%s2501 + $0xa0] sm:$0xff]
      %v2523 = vld [vmem:[%s2501 + $0xa8] sm:$0xff]
      %v2524 = vld [vmem:[%s2501 + $0xb0] sm:$0xff]
      %v2525 = vld [vmem:[%s2501 + $0xb8] sm:$0xff]
      %v2526 = vld [vmem:[%s2501 + $0xc0] sm:$0xff]
      %v2527 = vld [vmem:[%s2501 + $0xc8] sm:$0xff]
      %v2528 = vld [vmem:[%s2501 + $0xd0] sm:$0xff]
      %v2529 = vld [vmem:[%s2501 + $0xd8] sm:$0xff]
      %v2530 = vld [vmem:[%s2501 + $0xe0] sm:$0xff]
      %v2531 = vld [vmem:[%s2501 + $0xe8] sm:$0xff]
      %v2532 = vld [vmem:[%s2501 + $0xf0] sm:$0xff]
      %v2533 = vld [vmem:[%s2501 + $0xf8] sm:$0xff]
      %v2536 = vunpack.c.l.b16 %v2499
      %v2537 = vunpack.c.h.b16 %v2499
      %v2538 = vunpack.c.l.b16 %v2500
      %v2539 = vunpack.c.h.b16 %v2500
      %v2540 = vpack.c.b16 %v2538, %v2536
      %v2541 = vpack.c.b16 %v2539, %v2537
      %v2542 = vrot.slane %v2540, 1
      %v2543 = vrot.slane %v2541, 1
      %v2578 = vunpack.c.l.b16 %v2502
      %v2579 = vunpack.c.h.b16 %v2502
      %v2580 = vunpack.c.l.b16 %v2503
      %v2581 = vunpack.c.h.b16 %v2503
      %v2582 = vunpack.c.l.b16 %v2504
      %v2583 = vunpack.c.h.b16 %v2504
      %v2584 = vunpack.c.l.b16 %v2505
      %v2585 = vunpack.c.h.b16 %v2505
      %v2586 = vunpack.c.l.b16 %v2506
      %v2587 = vunpack.c.h.b16 %v2506
      %v2588 = vunpack.c.l.b16 %v2507
      %v2589 = vunpack.c.h.b16 %v2507
      %v2590 = vunpack.c.l.b16 %v2508
      %v2591 = vunpack.c.h.b16 %v2508
      %v2592 = vunpack.c.l.b16 %v2509
      %v2593 = vunpack.c.h.b16 %v2509
      %v2594 = vunpack.c.l.b16 %v2510
      %v2595 = vunpack.c.h.b16 %v2510
      %v2596 = vunpack.c.l.b16 %v2511
      %v2597 = vunpack.c.h.b16 %v2511
      %v2598 = vunpack.c.l.b16 %v2512
      %v2599 = vunpack.c.h.b16 %v2512
      %v2600 = vunpack.c.l.b16 %v2513
      %v2601 = vunpack.c.h.b16 %v2513
      %v2602 = vunpack.c.l.b16 %v2514
      %v2603 = vunpack.c.h.b16 %v2514
      %v2604 = vunpack.c.l.b16 %v2515
      %v2605 = vunpack.c.h.b16 %v2515
      %v2606 = vunpack.c.l.b16 %v2516
      %v2607 = vunpack.c.h.b16 %v2516
      %v2608 = vunpack.c.l.b16 %v2517
      %v2609 = vunpack.c.h.b16 %v2517
      %v2610 = vunpack.c.l.b16 %v2518
      %v2611 = vunpack.c.h.b16 %v2518
      %v2612 = vunpack.c.l.b16 %v2519
      %v2613 = vunpack.c.h.b16 %v2519
      %v2614 = vunpack.c.l.b16 %v2520
      %v2615 = vunpack.c.h.b16 %v2520
      %v2616 = vunpack.c.l.b16 %v2521
      %v2617 = vunpack.c.h.b16 %v2521
      %v2618 = vunpack.c.l.b16 %v2522
      %v2619 = vunpack.c.h.b16 %v2522
      %v2620 = vunpack.c.l.b16 %v2523
      %v2621 = vunpack.c.h.b16 %v2523
      %v2622 = vunpack.c.l.b16 %v2524
      %v2623 = vunpack.c.h.b16 %v2524
      %v2624 = vunpack.c.l.b16 %v2525
      %v2625 = vunpack.c.h.b16 %v2525
      %v2626 = vunpack.c.l.b16 %v2526
      %v2627 = vunpack.c.h.b16 %v2526
      %v2628 = vunpack.c.l.b16 %v2527
      %v2629 = vunpack.c.h.b16 %v2527
      %v2630 = vunpack.c.l.b16 %v2528
      %v2631 = vunpack.c.h.b16 %v2528
      %v2632 = vunpack.c.l.b16 %v2529
      %v2633 = vunpack.c.h.b16 %v2529
      %v2634 = vunpack.c.l.b16 %v2530
      %v2635 = vunpack.c.h.b16 %v2530
      %v2636 = vunpack.c.l.b16 %v2531
      %v2637 = vunpack.c.h.b16 %v2531
      %v2638 = vunpack.c.l.b16 %v2532
      %v2639 = vunpack.c.h.b16 %v2532
      %v2640 = vunpack.c.l.b16 %v2533
      %v2641 = vunpack.c.h.b16 %v2533
      %v2642 = vpack.c.b16 %v2580, %v2578
      %v2643 = vpack.c.b16 %v2581, %v2579
      %v2644 = vpack.c.b16 %v2584, %v2582
      %v2645 = vpack.c.b16 %v2585, %v2583
      %v2646 = vpack.c.b16 %v2588, %v2586
      %v2647 = vpack.c.b16 %v2589, %v2587
      %v2648 = vpack.c.b16 %v2592, %v2590
      %v2649 = vpack.c.b16 %v2593, %v2591
      %v2650 = vpack.c.b16 %v2596, %v2594
      %v2651 = vpack.c.b16 %v2597, %v2595
      %v2652 = vpack.c.b16 %v2600, %v2598
      %v2653 = vpack.c.b16 %v2601, %v2599
      %v2654 = vpack.c.b16 %v2604, %v2602
      %v2655 = vpack.c.b16 %v2605, %v2603
      %v2656 = vpack.c.b16 %v2608, %v2606
      %v2657 = vpack.c.b16 %v2609, %v2607
      %v2658 = vpack.c.b16 %v2612, %v2610
      %v2659 = vpack.c.b16 %v2613, %v2611
      %v2660 = vpack.c.b16 %v2616, %v2614
      %v2661 = vpack.c.b16 %v2617, %v2615
      %v2662 = vpack.c.b16 %v2620, %v2618
      %v2663 = vpack.c.b16 %v2621, %v2619
      %v2664 = vpack.c.b16 %v2624, %v2622
      %v2665 = vpack.c.b16 %v2625, %v2623
      %v2666 = vpack.c.b16 %v2628, %v2626
      %v2667 = vpack.c.b16 %v2629, %v2627
      %v2668 = vpack.c.b16 %v2632, %v2630
      %v2669 = vpack.c.b16 %v2633, %v2631
      %v2670 = vpack.c.b16 %v2636, %v2634
      %v2671 = vpack.c.b16 %v2637, %v2635
      %v2672 = vpack.c.b16 %v2640, %v2638
      %v2673 = vpack.c.b16 %v2641, %v2639
      %2706 = vmatprep.subr.bf16.mxu0 %v2643
      %2707 = vmatpush1.bf16.msra.mxu0 %v2642
      %2708 = vmatprep.subr.bf16.mxu0 %v2645
      %2709 = vmatpush1.bf16.msra.mxu0 %v2644
      %2710 = vmatprep.subr.bf16.mxu0 %v2647
      %2711 = vmatpush1.bf16.msra.mxu0 %v2646
      %2712 = vmatprep.subr.bf16.mxu0 %v2649
      %2713 = vmatpush1.bf16.msra.mxu0 %v2648
      %2714 = vmatprep.subr.bf16.mxu0 %v2651
      %2715 = vmatpush1.bf16.msra.mxu0 %v2650
      %2716 = vmatprep.subr.bf16.mxu0 %v2653
      %2717 = vmatpush1.bf16.msra.mxu0 %v2652
      %2718 = vmatprep.subr.bf16.mxu0 %v2655
      %2719 = vmatpush1.bf16.msra.mxu0 %v2654
      %2720 = vmatprep.subr.bf16.mxu0 %v2657
      %2721 = vmatpush1.bf16.msra.mxu0 %v2656
      %2722 = vmatprep.subr.bf16.mxu0 %v2659
      %2723 = vmatpush1.bf16.msra.mxu0 %v2658
      %2724 = vmatprep.subr.bf16.mxu0 %v2661
      %2725 = vmatpush1.bf16.msra.mxu0 %v2660
      %2726 = vmatprep.subr.bf16.mxu0 %v2663
      %2727 = vmatpush1.bf16.msra.mxu0 %v2662
      %2728 = vmatprep.subr.bf16.mxu0 %v2665
      %2729 = vmatpush1.bf16.msra.mxu0 %v2664
      %2730 = vmatprep.subr.bf16.mxu0 %v2667
      %2731 = vmatpush1.bf16.msra.mxu0 %v2666
      %2732 = vmatprep.subr.bf16.mxu0 %v2669
      %2733 = vmatpush1.bf16.msra.mxu0 %v2668
      %2734 = vmatprep.subr.bf16.mxu0 %v2671
      %2735 = vmatpush1.bf16.msra.mxu0 %v2670
      %2736 = vmatprep.subr.bf16.mxu0 %v2673
      %2737 = vmatpush1.bf16.msra.mxu0 %v2672
      %2738 = vmatprep.mubr.bf16.mxu0 %v2543
      %2739 = vmatmul.mubr.bf16.gmra.mrb[0].mxu0 %v2542
      %v2740 = vpop.f32.mrb[0].mxu0
      %v2741 = vadd.f32 0.0, %v2740
      %v2742 = vpop.f32.mrb[0].mxu0
      %v2743 = vadd.f32 0.0, %v2742
      %v2744 = vpop.f32.mrb[0].mxu0
      %v2745 = vpop.f32.mrb[0].mxu0
      %2746 = vdwg.mxu0
      %v2747 = vadd.f32 %v2497, %v2741
      %v2748 = vadd.f32 %v2498, %v2743
      %2749 = vst [vmem:[#allocation2] sm:$0xff] %v2747
      %2750 = vst [vmem:[#allocation2 + $0x8] sm:$0xff] %v2748
      %p2751 = scmp.eq.s32.totalorder %s24, 2
      // Predicated region
      $region49: #{dncnet_forward.15} parent=43 // pred_check
        %p2752 = pneg %p2751
      $region50: #{dncnet_forward.15} parent=43 // pred_check_branch
        %2754 = sbr.rel (%p2752) target = $region52
      $region51: #{dncnet_forward.15} parent=43 // pred_region
        %v2755 = vld [vmem:[#allocation2] sm:$0xff]
        %v2756 = vld [vmem:[#allocation2 + $0x8] sm:$0xff]
        %v2757 = vpack.c.bf16 %v2755, %v2755
        %v2758 = vpack.c.bf16 %v2756, %v2756
        %v2761 = vunpack.c.l.b16 %v2757
        %v2762 = vunpack.c.l.b16 %v2758
        %v2763 = vpack.c.b16 %v2762, %v2761
        %2765 = vst [vmem:[%s443] sm:$0xff] %v2763
      $region52: #{dncnet_forward.15} parent=43 // pred_fallthru
        _
      %p2766 = scmp.lt.s32.totalorder %s22, 1
      %s2767 = scalar_select %p2766, %s22, 1
      %p2768 = scmp.lt.s32.totalorder %s23, 7
      %s2769 = scalar_select %p2768, %s23, 7
      %s2770 = smul.addr %s2769, 2
      %s2771 = smul.addr %s2767, 16
      %s2772 = sadd.s32 %s2770, %s2771
      %s2773 = smul.addr %s2772, 4
      %s2774 = scalar_lea.vmem %s6, %s2773
      // Predicated region
      $region53: #{dncnet_forward.15} parent=43 // pred_check
        %p2775 = pneg %p224
      $region54: #{dncnet_forward.15} parent=43 // pred_check_branch
        %2777 = sbr.rel (%p2775) target = $region56
      $region55: #{dncnet_forward.15} parent=43 // pred_region
        _
      $region56: #{dncnet_forward.15} parent=43 // pred_fallthru
        _
    $region44: #{dncnet_forward.15} parent=5 // pred_fallthru
      _
    %p2778 = scmp.le.s32.totalorder 2, %s12
    // Predicated region
    $region57: #{dncnet_forward.15} parent=5 // pred_check
      %p2779 = pneg %p2778
    $region58: #{dncnet_forward.15} parent=5 // pred_check_branch
      %2781 = sbr.rel (%p2779) target = $region60
    $region59: #{dncnet_forward.15} parent=5 // pred_region
      %s2782 = ssub.s32 %s12, 2
      // Predicated region
      $region61: #{dncnet_forward.15} parent=59 // pred_check
        %p2783 = pneg %p230
      $region62: #{dncnet_forward.15} parent=59 // pred_check_branch
        %2785 = sbr.rel (%p2783) target = $region64
      $region63: #{dncnet_forward.15} parent=59 // pred_region
        %p2786 = scmp.lt.s32.totalorder %s25, 1
        %s2787 = scalar_select %p2786, %s25, 1
        %p2788 = scmp.lt.s32.totalorder %s26, 7
        %s2789 = scalar_select %p2788, %s26, 7
        %s2790 = smul.addr %s2789, 2
        %s2791 = smul.addr %s2787, 16
        %s2792 = sadd.s32 %s2790, %s2791
        %s2793 = smul.addr %s2792, 4
        %s2794 = scalar_lea.vmem %s6, %s2793
      $region64: #{dncnet_forward.15} parent=59 // pred_fallthru
        _
    $region60: #{dncnet_forward.15} parent=5 // pred_fallthru
      _
  $region6: #{dncnet_forward.15} parent=0 // loop_footer
    %s16 = sadd.s32 1, %s12
  $region7: #{dncnet_forward.15} parent=0 // loop_footer_branch
    %11 = sbr.rel target = $region3
  $region8: #{dncnet_forward.15} parent=0 // loop_exit
    _

</llo_original>
